<compile_context>
chip_gen: v7x
topology: tpu7x:2x2x1
jax: 0.10.0
libtpu: 0.0.40
codegen_flags: <defaults>
</compile_context>

<pallas_src>
import functools

import jax
import jax.numpy as jnp
from jax.experimental import pallas as pl
from jax.experimental.pallas import tpu as pltpu


# ------------------------------ small helpers -------------------------------

def _round_up(x, m):
    return (x + m - 1) // m * m


def _pick_tm(M):
    """Largest row tile <= 1024 that keeps >= 2 grid steps (pipelining /
    v7x dual-core); tiny inputs fall back to a single full block."""
    for tm in (1024, 512, 256, 128, 64, 32, 16, 8):
        if M >= 2 * tm:
            return tm
    return max(M, 1)


def _mosaic_params(sem):
    # Explicit VMEM budget: above v5e's 16 MiB scoped default, below v7x's
    # 64 MiB physical.
    return pltpu.CompilerParams(dimension_semantics=sem,
                                vmem_limit_bytes=48 * 1024 * 1024)


# ----------------------------- Pallas kernels ------------------------------

def _mm_bn_relu_kernel(x_ref, w_ref, s_ref, b_ref, o_ref):
    # y = relu((x @ w) * bn_scale + bn_bias); bf16 operands, f32 accumulate.
    y = jnp.dot(x_ref[...], w_ref[...], preferred_element_type=jnp.float32)
    y = y * s_ref[...] + b_ref[...]
    o_ref[...] = jnp.maximum(y, 0.0).astype(o_ref.dtype)


def _mm_bn_add_relu_kernel(x_ref, w_ref, s_ref, b_ref, sc_ref, o_ref):
    # conv3 + BN + identity shortcut + ReLU
    y = jnp.dot(x_ref[...], w_ref[...], preferred_element_type=jnp.float32)
    y = y * s_ref[...] + b_ref[...] + sc_ref[...].astype(jnp.float32)
    o_ref[...] = jnp.maximum(y, 0.0).astype(o_ref.dtype)


def _mm_bn_down_add_relu_kernel(x_ref, w_ref, s_ref, b_ref,
                                xs_ref, wd_ref, sd_ref, bd_ref, o_ref):
    # conv3 + BN + fused downsample(1x1 conv + BN) shortcut + ReLU
    y = jnp.dot(x_ref[...], w_ref[...], preferred_element_type=jnp.float32)
    y = y * s_ref[...] + b_ref[...]
    sc = jnp.dot(xs_ref[...], wd_ref[...], preferred_element_type=jnp.float32)
    sc = sc * sd_ref[...] + bd_ref[...]
    o_ref[...] = jnp.maximum(y + sc, 0.0).astype(o_ref.dtype)


def _conv2_se_kernel(xp_ref, w_ref, s_ref, b_ref, *rest,
                     stride, groups, hps, ho, wo, has_se):
    """Grouped 3x3 conv (stride, pad=1) + BN + ReLU [+ SqueezeExcitation].

    xp_ref: (1, S2*Hps, Wps, C) phase-split zero-padded input for one image
            (for stride s, phase (a, b) holds rows a::s and cols b::s of the
            padded map, so every 3x3 tap is a contiguous stride-1 window).
    w_ref : (9, groups, gw, gw) per-tap / per-group weights.
    """
    if has_se:
        sw1_ref, sb1_ref, sw2_ref, sb2_ref, o_ref = rest
    else:
        (o_ref,) = rest
    C = o_ref.shape[-1]
    gw = C // groups
    m = ho * wo

    # Accumulate the 9 taps directly in VMEM (no im2col slab), per group.
    accs = [jnp.zeros((m, gw), jnp.float32) for _ in range(groups)]
    for ky in range(3):
        for kx in range(3):
            phase = (ky % stride) * stride + (kx % stride)
            dy, dx = ky // stride, kx // stride
            r0 = phase * hps + dy
            tap = xp_ref[0, r0:r0 + ho, dx:dx + wo, :]          # (ho, wo, C) bf16
            tap = tap.reshape(m, C)
            for g in range(groups):
                accs[g] = accs[g] + jnp.dot(
                    tap[:, g * gw:(g + 1) * gw],
                    w_ref[3 * ky + kx, g],
                    preferred_element_type=jnp.float32)

    y = accs[0] if groups == 1 else jnp.concatenate(accs, axis=-1)  # (m, C) f32
    y = jnp.maximum(y * s_ref[...] + b_ref[...], 0.0)

    if has_se:
        # SE on the VMEM-resident activation: pool -> fc1+relu -> fc2+sigmoid.
        pooled = jnp.sum(y, axis=0, keepdims=True) * (1.0 / m)      # (1, C)
        h = jnp.dot(pooled, sw1_ref[...],
                    preferred_element_type=jnp.float32) + sb1_ref[...]
        h = jnp.maximum(h, 0.0)
        z = jnp.dot(h, sw2_ref[...],
                    preferred_element_type=jnp.float32) + sb2_ref[...]
        sig = pl.reciprocal(1.0 + jnp.exp(-z), approx=True)         # sigmoid (EUP)
        y = y * sig

    o_ref[...] = y.reshape(1, m, C).astype(o_ref.dtype)


# ----------------------------- kernel wrappers ------------------------------

def conv1x1_bn_relu(x2d, w, scale, bias):
    """(M, K) @ (K, C) * bn_scale + bn_bias, ReLU; bf16 in/out, row-tiled."""
    M, K = x2d.shape
    C = w.shape[1]
    tm = _pick_tm(M)
    Mp = _round_up(M, tm)
    if Mp != M:
        x2d = jnp.pad(x2d, ((0, Mp - M), (0, 0)))
    out = pl.pallas_call(
        _mm_bn_relu_kernel,
        out_shape=jax.ShapeDtypeStruct((Mp, C), jnp.bfloat16),
        grid=(Mp // tm,),
        in_specs=[
            pl.BlockSpec((tm, K), lambda i: (i, 0)),
            pl.BlockSpec((K, C), lambda i: (0, 0)),
            pl.BlockSpec((1, C), lambda i: (0, 0)),
            pl.BlockSpec((1, C), lambda i: (0, 0)),
        ],
        out_specs=pl.BlockSpec((tm, C), lambda i: (i, 0)),
        compiler_params=_mosaic_params(("parallel",)),
    )(x2d.astype(jnp.bfloat16), w.astype(jnp.bfloat16),
      scale.reshape(1, C).astype(jnp.float32),
      bias.reshape(1, C).astype(jnp.float32))
    return out[:M] if Mp != M else out


def conv3_residual(y2d, w3, s3, b3, *, sc2d=None, xs2d=None, wd=None, sd=None, bd=None):
    """conv3 1x1 + BN + (identity | fused downsample) residual + ReLU."""
    M, C = y2d.shape
    tm = _pick_tm(M)
    Mp = _round_up(M, tm)
    pad = Mp != M
    if pad:
        y2d = jnp.pad(y2d, ((0, Mp - M), (0, 0)))
    grid = (Mp // tm,)
    x_spec = pl.BlockSpec((tm, C), lambda i: (i, 0))
    w_spec = pl.BlockSpec((C, C), lambda i: (0, 0))
    v_spec = pl.BlockSpec((1, C), lambda i: (0, 0))
    o_spec = pl.BlockSpec((tm, C), lambda i: (i, 0))
    cp = _mosaic_params(("parallel",))
    w3b = w3.astype(jnp.bfloat16)
    s3v = s3.reshape(1, C).astype(jnp.float32)
    b3v = b3.reshape(1, C).astype(jnp.float32)

    if xs2d is None:
        if pad:
            sc2d = jnp.pad(sc2d, ((0, Mp - M), (0, 0)))
        out = pl.pallas_call(
            _mm_bn_add_relu_kernel,
            out_shape=jax.ShapeDtypeStruct((Mp, C), jnp.bfloat16),
            grid=grid,
            in_specs=[x_spec, w_spec, v_spec, v_spec, x_spec],
            out_specs=o_spec,
            compiler_params=cp,
        )(y2d.astype(jnp.bfloat16), w3b, s3v, b3v, sc2d.astype(jnp.bfloat16))
    else:
        Kd = xs2d.shape[1]
        if pad:
            xs2d = jnp.pad(xs2d, ((0, Mp - M), (0, 0)))
        out = pl.pallas_call(
            _mm_bn_down_add_relu_kernel,
            out_shape=jax.ShapeDtypeStruct((Mp, C), jnp.bfloat16),
            grid=grid,
            in_specs=[x_spec, w_spec, v_spec, v_spec,
                      pl.BlockSpec((tm, Kd), lambda i: (i, 0)),
                      pl.BlockSpec((Kd, C), lambda i: (0, 0)),
                      v_spec, v_spec],
            out_specs=o_spec,
            compiler_params=cp,
        )(y2d.astype(jnp.bfloat16), w3b, s3v, b3v,
          xs2d.astype(jnp.bfloat16), wd.astype(jnp.bfloat16),
          sd.reshape(1, C).astype(jnp.float32),
          bd.reshape(1, C).astype(jnp.float32))
    return out[:M] if pad else out


def conv2_grouped_bn_relu_se(y_nhwc, p):
    """Fused grouped 3x3 conv + BN + ReLU + SE, one grid step per image.

    Returns (out (N, Ho*Wo, C) bf16, Ho, Wo)."""
    N, H, W, C = y_nhwc.shape
    stride = p["stride"]
    groups = p["groups"]
    gw = C // groups
    Ho = (H + 2 - 3) // stride + 1
    Wo = (W + 2 - 3) // stride + 1

    # Zero-pad (pad=1) and phase-split so that every 3x3 tap becomes a
    # contiguous stride-1 window inside the kernel (no 9x im2col slab and no
    # strided in-kernel loads).  Assumes H, W even when stride == 2 (RegNet).
    yp = jnp.pad(y_nhwc, ((0, 0), (1, 1), (1, 1), (0, 0)))
    if stride == 1:
        phases = yp[:, None]                                       # (N,1,H+2,W+2,C)
    else:
        phases = jnp.stack([yp[:, a::stride, b::stride, :]
                            for a in range(stride) for b in range(stride)],
                           axis=1)                                  # (N,s*s,.,.,C)
    S2, Hps, Wps = phases.shape[1], phases.shape[2], phases.shape[3]
    xp = phases.reshape(N, S2 * Hps, Wps, C)                        # fold phase->rows

    args = [xp.astype(jnp.bfloat16),
            p["w2_taps"].astype(jnp.bfloat16),
            p["s2"].reshape(1, C).astype(jnp.float32),
            p["b2"].reshape(1, C).astype(jnp.float32)]
    in_specs = [
        pl.BlockSpec((1, S2 * Hps, Wps, C), lambda n: (n, 0, 0, 0)),
        pl.BlockSpec((9, groups, gw, gw), lambda n: (0, 0, 0, 0)),
        pl.BlockSpec((1, C), lambda n: (0, 0)),
        pl.BlockSpec((1, C), lambda n: (0, 0)),
    ]
    if p["has_se"]:
        Sq = p["se_w1"].shape[1]
        args += [p["se_w1"].astype(jnp.float32),
                 p["se_b1"].reshape(1, Sq).astype(jnp.float32),
                 p["se_w2"].astype(jnp.float32),
                 p["se_b2"].reshape(1, C).astype(jnp.float32)]
        in_specs += [
            pl.BlockSpec((C, Sq), lambda n: (0, 0)),
            pl.BlockSpec((1, Sq), lambda n: (0, 0)),
            pl.BlockSpec((Sq, C), lambda n: (0, 0)),
            pl.BlockSpec((1, C), lambda n: (0, 0)),
        ]

    kern = functools.partial(_conv2_se_kernel, stride=stride, groups=groups,
                             hps=Hps, ho=Ho, wo=Wo, has_se=p["has_se"])
    out = pl.pallas_call(
        kern,
        out_shape=jax.ShapeDtypeStruct((N, Ho * Wo, C), jnp.bfloat16),
        grid=(N,),
        in_specs=in_specs,
        out_specs=pl.BlockSpec((1, Ho * Wo, C), lambda n: (n, 0, 0)),
        compiler_params=_mosaic_params(("parallel",)),
    )(*args)
    return out, Ho, Wo


# ------------------------------- glue helpers -------------------------------

def grouped_conv_taps(w_oihw, groups):
    """(out_c, gw, 3, 3) grouped weight -> (9, groups, gw_in, gw_out) taps."""
    out_c, gw, kh, kw = w_oihw.shape
    w = w_oihw.reshape(groups, gw, gw, kh, kw)      # (G, o_local, i_local, kh, kw)
    w = jnp.transpose(w, (3, 4, 0, 2, 1))           # (kh, kw, G, i_local, o_local)
    return w.reshape(kh * kw, groups, gw, gw)


# ------------------------------ parameter init ------------------------------

def init_bn(key, c):
    k1, k2, k3, k4 = jax.random.split(key, 4)
    gamma = jax.random.uniform(k1, (c,), jnp.float32, 0.5, 1.5)
    beta = jax.random.normal(k2, (c,), jnp.float32) * 0.1
    mean = jax.random.normal(k3, (c,), jnp.float32) * 0.1
    var = jax.random.uniform(k4, (c,), jnp.float32, 0.5, 1.5)
    return gamma, beta, mean, var


def fold_bn(gamma, beta, mean, var, eps=1e-5):
    s = gamma / jnp.sqrt(var + eps)
    return s, beta - mean * s


def init_block(key, in_c, out_c, group_width, se_ratio, stride):
    groups = out_c // group_width
    sq = int(in_c * se_ratio)
    ks = jax.random.split(key, 12)
    p = {"out_c": out_c, "in_c": in_c, "groups": groups, "stride": stride,
         "has_down": (in_c != out_c) or (stride != 1), "has_se": se_ratio > 0}
    p["w1"] = jax.random.normal(ks[0], (in_c, out_c), jnp.float32) * 0.2
    g, b, m, v = init_bn(ks[1], out_c); p["s1"], p["b1"] = fold_bn(g, b, m, v)
    p["w2_oihw"] = jax.random.normal(ks[2], (out_c, group_width, 3, 3), jnp.float32) * 0.2
    p["w2_taps"] = grouped_conv_taps(p["w2_oihw"], groups)
    g, b, m, v = init_bn(ks[3], out_c); p["s2"], p["b2"] = fold_bn(g, b, m, v)
    if p["has_se"]:
        p["se_w1"] = jax.random.normal(ks[4], (out_c, sq), jnp.float32) * 0.2
        p["se_b1"] = jax.random.normal(ks[5], (sq,), jnp.float32) * 0.1
        p["se_w2"] = jax.random.normal(ks[6], (sq, out_c), jnp.float32) * 0.2
        p["se_b2"] = jax.random.normal(ks[7], (out_c,), jnp.float32) * 0.1
    p["w3"] = jax.random.normal(ks[8], (out_c, out_c), jnp.float32) * 0.2
    g, b, m, v = init_bn(ks[9], out_c); p["s3"], p["b3"] = fold_bn(g, b, m, v)
    if p["has_down"]:
        p["wd"] = jax.random.normal(ks[10], (in_c, out_c), jnp.float32) * 0.2
        g, b, m, v = init_bn(ks[11], out_c); p["sd"], p["bd"] = fold_bn(g, b, m, v)
    return p


def init_regstage(key, in_c, out_c, depth, group_width, se_ratio):
    blocks = []
    keys = jax.random.split(key, depth)
    for i in range(depth):
        stride = 2 if i == 0 else 1
        bic = in_c if i == 0 else out_c
        blocks.append(init_block(keys[i], bic, out_c, group_width, se_ratio, stride))
    return blocks


# ------------------------------ forward (Pallas) ----------------------------

def bottleneck_forward(x_nhwc, p):
    N, H, W, Cin = x_nhwc.shape
    C = p["out_c"]
    stride = p["stride"]

    # conv1: 1x1 + BN + ReLU
    y = conv1x1_bn_relu(x_nhwc.reshape(-1, Cin), p["w1"], p["s1"], p["b1"])
    y = y.reshape(N, H, W, C)

    # conv2 (grouped 3x3, stride, pad 1) + BN + ReLU + SE, fused per image
    y2, Ho, Wo = conv2_grouped_bn_relu_se(y, p)            # (N, Ho*Wo, C) bf16

    # conv3: 1x1 + BN + residual (+ fused downsample) + ReLU
    if p["has_down"]:
        xs = x_nhwc[:, ::stride, ::stride, :].reshape(-1, Cin)
        out = conv3_residual(y2.reshape(-1, C), p["w3"], p["s3"], p["b3"],
                             xs2d=xs, wd=p["wd"], sd=p["sd"], bd=p["bd"])
    else:
        out = conv3_residual(y2.reshape(-1, C), p["w3"], p["s3"], p["b3"],
                             sc2d=x_nhwc.reshape(-1, Cin))
    return out.reshape(N, Ho, Wo, C)


def regstage_forward(x_nchw, blocks):
    x = jnp.transpose(x_nchw, (0, 2, 3, 1)).astype(jnp.bfloat16)   # NCHW -> NHWC
    for p in blocks:
        x = bottleneck_forward(x, p)
    return jnp.transpose(x, (0, 3, 1, 2)).astype(jnp.float32)      # NHWC -> NCHW


# ---------------------------- pure-JAX reference ----------------------------

def _ref_conv_bn(x, w_oihw, scale, bias, stride, padding, groups, relu):
    w = jnp.transpose(w_oihw, (2, 3, 1, 0))  # HWIO
    y = jax.lax.conv_general_dilated(
        x, w, (stride, stride), [(padding, padding), (padding, padding)],
        dimension_numbers=("NHWC", "HWIO", "NHWC"), feature_group_count=groups)
    y = y * scale + bias
    return jnp.maximum(y, 0.0) if relu else y


def _ref_conv1x1_bn(x, w_io, scale, bias, relu):
    y = jnp.einsum("nhwc,cd->nhwd", x, w_io) * scale + bias
    return jnp.maximum(y, 0.0) if relu else y


def ref_bottleneck(x, p):
    stride = p["stride"]
    shortcut = x
    y = _ref_conv1x1_bn(x, p["w1"], p["s1"], p["b1"], relu=True)
    y = _ref_conv_bn(y, p["w2_oihw"], p["s2"], p["b2"], stride, 1, p["groups"], relu=True)
    if p["has_se"]:
        m = y.mean((1, 2))
        h = jnp.maximum(m @ p["se_w1"] + p["se_b1"], 0.0)
        s = 1.0 / (1.0 + jnp.exp(-(h @ p["se_w2"] + p["se_b2"])))
        y = y * s[:, None, None, :]
    y = _ref_conv1x1_bn(y, p["w3"], p["s3"], p["b3"], relu=False)
    if p["has_down"]:
        shortcut = _ref_conv1x1_bn(shortcut[:, ::stride, ::stride, :],
                                   p["wd"], p["sd"], p["bd"], relu=False)
    return jnp.maximum(y + shortcut, 0.0)


def ref_regstage(x_nchw, blocks):
    x = jnp.transpose(x_nchw, (0, 2, 3, 1)).astype(jnp.float32)
    for p in blocks:
        x = ref_bottleneck(x, p)
    return jnp.transpose(x, (0, 3, 1, 2))


# ------------------------------------ main -----------------------------------

if __name__ == "__main__":
    # RegStage(in_c=8, out_c=16, depth=2, group_width=8, se_ratio=0.25)
    in_c, out_c, depth, group_width, se_ratio = 8, 16, 2, 8, 0.25
    N, H, W = 2, 16, 16

    key = jax.random.PRNGKey(0)
    kx, kp = jax.random.split(key)
    x = jax.random.normal(kx, (N, in_c, H, W), jnp.float32)   # PyTorch NCHW input

    blocks = init_regstage(kp, in_c, out_c, depth, group_width, se_ratio)

    fwd = jax.jit(lambda inp: regstage_forward(inp, blocks))
    out = jax.block_until_ready(fwd(x))
    assert out.shape == (N, out_c, H // 2, W // 2), out.shape

    ref_fn = jax.jit(lambda inp: ref_regstage(inp, blocks))
    ref = jax.block_until_ready(ref_fn(x))

    # Tolerance accounts for bf16 MXU operands / bf16 inter-layer activations
    # (f32 reference); real bugs (wrong tap / group / residual wiring) show up
    # as O(1) relative errors.
    max_err = float(jnp.max(jnp.abs(out.astype(jnp.float32) - ref)))
    scale = float(jnp.max(jnp.abs(ref)))
    assert max_err <= 3e-2 * scale + 3e-2, \
        f"max abs error {max_err} too large (ref scale {scale})"

    print("KERNEL_OK")
</pallas_src>

<mosaic_0001>
module attributes {stable_mosaic.version = 11 : i64} {
  func.func @_mm_bn_relu_kernel(%arg0: i32, %arg1: memref<256x8xbf16, #tpu.memory_space<vmem>>, %arg2: memref<8x16xbf16, #tpu.memory_space<vmem>>, %arg3: memref<1x16xf32, #tpu.memory_space<vmem>>, %arg4: memref<1x16xf32, #tpu.memory_space<vmem>>, %arg5: memref<256x16xbf16, #tpu.memory_space<vmem>>) attributes {dimension_semantics = [#tpu.dimension_semantics<parallel>], iteration_bounds = array<i64: 2>, scalar_prefetch = 0 : i64, scratch_operands = 0 : i64, tpu.core_type = #tpu.core_type<tc>, window_params = [{transform_indices = @transform_0, window_bounds = array<i64: 256, 8>}, {pipeline_mode = #tpu.pipeline_mode<synchronous>, transform_indices = @transform_1, window_bounds = array<i64: 8, 16>}, {pipeline_mode = #tpu.pipeline_mode<synchronous>, transform_indices = @transform_2, window_bounds = array<i64: 1, 16>}, {pipeline_mode = #tpu.pipeline_mode<synchronous>, transform_indices = @transform_3, window_bounds = array<i64: 1, 16>}, {transform_indices = @transform_4, window_bounds = array<i64: 256, 16>}]} {
    %c0 = arith.constant 0 : index
    %c0_0 = arith.constant 0 : index
    %0 = vector.load %arg1[%c0, %c0_0] : memref<256x8xbf16, #tpu.memory_space<vmem>>, vector<256x8xbf16>
    %c0_1 = arith.constant 0 : index
    %c0_2 = arith.constant 0 : index
    %1 = vector.load %arg2[%c0_1, %c0_2] : memref<8x16xbf16, #tpu.memory_space<vmem>>, vector<8x16xbf16>
    %cst = arith.constant dense<0.000000e+00> : vector<256x16xf32>
    %2 = tpu.matmul %0, %1, %cst {dimension_numbers = #tpu.dot_dimension_numbers<[1], [0], [0], [1], [0, 0, 1, 1], [], []>} : vector<256x8xbf16>, vector<8x16xbf16>, vector<256x16xf32> -> vector<256x16xf32>
    %c0_3 = arith.constant 0 : index
    %c0_4 = arith.constant 0 : index
    %3 = vector.load %arg3[%c0_3, %c0_4] : memref<1x16xf32, #tpu.memory_space<vmem>>, vector<1x16xf32>
    %4 = vector.broadcast %3 : vector<1x16xf32> to vector<256x16xf32>
    %5 = arith.mulf %2, %4 : vector<256x16xf32>
    %c0_5 = arith.constant 0 : index
    %c0_6 = arith.constant 0 : index
    %6 = vector.load %arg4[%c0_5, %c0_6] : memref<1x16xf32, #tpu.memory_space<vmem>>, vector<1x16xf32>
    %7 = vector.broadcast %6 : vector<1x16xf32> to vector<256x16xf32>
    %8 = arith.addf %5, %7 : vector<256x16xf32>
    %cst_7 = arith.constant 0.000000e+00 : f32
    %9 = vector.broadcast %cst_7 : f32 to vector<256x16xf32>
    %10 = arith.maximumf %8, %9 : vector<256x16xf32>
    %11 = arith.truncf %10 : vector<256x16xf32> to vector<256x16xbf16>
    %c0_8 = arith.constant 0 : index
    %c0_9 = arith.constant 0 : index
    %12 = vector.load %arg5[%c0_8, %c0_9] : memref<256x16xbf16, #tpu.memory_space<vmem>>, vector<256x16xbf16>
    tpu.vector_store %arg5[%c0_8, %c0_9], %11 {strides = array<i32>} : memref<256x16xbf16, #tpu.memory_space<vmem>>, vector<256x16xbf16>,
    return
  }
  func.func @transform_0(%arg0: i32) -> (i32, i32) {
    %c0_i32 = arith.constant 0 : i32
    %c0_i32_0 = arith.constant 0 : i32
    return %arg0, %c0_i32 : i32, i32
  }
  func.func @transform_1(%arg0: i32) -> (i32, i32) {
    %c0_i32 = arith.constant 0 : i32
    %c0_i32_0 = arith.constant 0 : i32
    %c0_i32_1 = arith.constant 0 : i32
    return %c0_i32, %c0_i32_0 : i32, i32
  }
  func.func @transform_2(%arg0: i32) -> (i32, i32) {
    %c0_i32 = arith.constant 0 : i32
    %c0_i32_0 = arith.constant 0 : i32
    %c0_i32_1 = arith.constant 0 : i32
    return %c0_i32, %c0_i32_0 : i32, i32
  }
  func.func @transform_3(%arg0: i32) -> (i32, i32) {
    %c0_i32 = arith.constant 0 : i32
    %c0_i32_0 = arith.constant 0 : i32
    %c0_i32_1 = arith.constant 0 : i32
    return %c0_i32, %c0_i32_0 : i32, i32
  }
  func.func @transform_4(%arg0: i32) -> (i32, i32) {
    %c0_i32 = arith.constant 0 : i32
    %c0_i32_0 = arith.constant 0 : i32
    return %arg0, %c0_i32 : i32, i32
  }
}

module attributes {stable_mosaic.version = 11 : i64} {
  func.func @_conv2_se_kernel(%arg0: i32, %arg1: memref<1x36x9x16xbf16, #tpu.memory_space<vmem>>, %arg2: memref<9x2x8x8xbf16, #tpu.memory_space<vmem>>, %arg3: memref<1x16xf32, #tpu.memory_space<vmem>>, %arg4: memref<1x16xf32, #tpu.memory_space<vmem>>, %arg5: memref<16x2xf32, #tpu.memory_space<vmem>>, %arg6: memref<1x2xf32, #tpu.memory_space<vmem>>, %arg7: memref<2x16xf32, #tpu.memory_space<vmem>>, %arg8: memref<1x16xf32, #tpu.memory_space<vmem>>, %arg9: memref<1x64x16xbf16, #tpu.memory_space<vmem>>) attributes {dimension_semantics = [#tpu.dimension_semantics<parallel>], iteration_bounds = array<i64: 2>, scalar_prefetch = 0 : i64, scratch_operands = 0 : i64, tpu.core_type = #tpu.core_type<tc>, window_params = [{transform_indices = @transform_0, window_bounds = array<i64: 1, 36, 9, 16>}, {pipeline_mode = #tpu.pipeline_mode<synchronous>, transform_indices = @transform_1, window_bounds = array<i64: 9, 2, 8, 8>}, {pipeline_mode = #tpu.pipeline_mode<synchronous>, transform_indices = @transform_2, window_bounds = array<i64: 1, 16>}, {pipeline_mode = #tpu.pipeline_mode<synchronous>, transform_indices = @transform_3, window_bounds = array<i64: 1, 16>}, {pipeline_mode = #tpu.pipeline_mode<synchronous>, transform_indices = @transform_4, window_bounds = array<i64: 16, 2>}, {pipeline_mode = #tpu.pipeline_mode<synchronous>, transform_indices = @transform_5, window_bounds = array<i64: 1, 2>}, {pipeline_mode = #tpu.pipeline_mode<synchronous>, transform_indices = @transform_6, window_bounds = array<i64: 2, 16>}, {pipeline_mode = #tpu.pipeline_mode<synchronous>, transform_indices = @transform_7, window_bounds = array<i64: 1, 16>}, {transform_indices = @transform_8, window_bounds = array<i64: 1, 64, 16>}]} {
    %cst = arith.constant 0.000000e+00 : f32
    %0 = vector.broadcast %cst : f32 to vector<64x8xf32>
    %cst_0 = arith.constant 0.000000e+00 : f32
    %1 = vector.broadcast %cst_0 : f32 to vector<64x8xf32>
    %c0 = arith.constant 0 : index
    %c0_1 = arith.constant 0 : index
    %c0_2 = arith.constant 0 : index
    %c0_3 = arith.constant 0 : index
    %2 = vector.load %arg1[%c0, %c0_1, %c0_2, %c0_3] : memref<1x36x9x16xbf16, #tpu.memory_space<vmem>>, vector<1x8x8x16xbf16>
    %3 = vector.shape_cast %2 : vector<1x8x8x16xbf16> to vector<8x8x16xbf16>
    %4 = vector.shape_cast %3 : vector<8x8x16xbf16> to vector<64x16xbf16>
    %5 = vector.extract_strided_slice %4 {offsets = [0, 0], sizes = [64, 8], strides = [1, 1]} : vector<64x16xbf16> to vector<64x8xbf16>
    %c0_4 = arith.constant 0 : index
    %c0_5 = arith.constant 0 : index
    %c0_6 = arith.constant 0 : index
    %c0_7 = arith.constant 0 : index
    %6 = vector.load %arg2[%c0_4, %c0_5, %c0_6, %c0_7] : memref<9x2x8x8xbf16, #tpu.memory_space<vmem>>, vector<1x1x8x8xbf16>
    %7 = vector.shape_cast %6 : vector<1x1x8x8xbf16> to vector<8x8xbf16>
    %cst_8 = arith.constant dense<0.000000e+00> : vector<64x8xf32>
    %8 = tpu.matmul %5, %7, %cst_8 {dimension_numbers = #tpu.dot_dimension_numbers<[1], [0], [0], [1], [0, 0, 1, 1], [], []>} : vector<64x8xbf16>, vector<8x8xbf16>, vector<64x8xf32> -> vector<64x8xf32>
    %9 = arith.addf %0, %8 : vector<64x8xf32>
    %10 = vector.extract_strided_slice %4 {offsets = [0, 8], sizes = [64, 8], strides = [1, 1]} : vector<64x16xbf16> to vector<64x8xbf16>
    %c0_9 = arith.constant 0 : index
    %c1 = arith.constant 1 : index
    %c0_10 = arith.constant 0 : index
    %c0_11 = arith.constant 0 : index
    %11 = vector.load %arg2[%c0_9, %c1, %c0_10, %c0_11] : memref<9x2x8x8xbf16, #tpu.memory_space<vmem>>, vector<1x1x8x8xbf16>
    %12 = vector.shape_cast %11 : vector<1x1x8x8xbf16> to vector<8x8xbf16>
    %cst_12 = arith.constant dense<0.000000e+00> : vector<64x8xf32>
    %13 = tpu.matmul %10, %12, %cst_12 {dimension_numbers = #tpu.dot_dimension_numbers<[1], [0], [0], [1], [0, 0, 1, 1], [], []>} : vector<64x8xbf16>, vector<8x8xbf16>, vector<64x8xf32> -> vector<64x8xf32>
    %14 = arith.addf %1, %13 : vector<64x8xf32>
    %c0_13 = arith.constant 0 : index
    %c9 = arith.constant 9 : index
    %c0_14 = arith.constant 0 : index
    %c0_15 = arith.constant 0 : index
    %15 = vector.load %arg1[%c0_13, %c9, %c0_14, %c0_15] : memref<1x36x9x16xbf16, #tpu.memory_space<vmem>>, vector<1x8x8x16xbf16>
    %16 = vector.shape_cast %15 : vector<1x8x8x16xbf16> to vector<8x8x16xbf16>
    %17 = vector.shape_cast %16 : vector<8x8x16xbf16> to vector<64x16xbf16>
    %18 = vector.extract_strided_slice %17 {offsets = [0, 0], sizes = [64, 8], strides = [1, 1]} : vector<64x16xbf16> to vector<64x8xbf16>
    %c1_16 = arith.constant 1 : index
    %c0_17 = arith.constant 0 : index
    %c0_18 = arith.constant 0 : index
    %c0_19 = arith.constant 0 : index
    %19 = vector.load %arg2[%c1_16, %c0_17, %c0_18, %c0_19] : memref<9x2x8x8xbf16, #tpu.memory_space<vmem>>, vector<1x1x8x8xbf16>
    %20 = vector.shape_cast %19 : vector<1x1x8x8xbf16> to vector<8x8xbf16>
    %cst_20 = arith.constant dense<0.000000e+00> : vector<64x8xf32>
    %21 = tpu.matmul %18, %20, %cst_20 {dimension_numbers = #tpu.dot_dimension_numbers<[1], [0], [0], [1], [0, 0, 1, 1], [], []>} : vector<64x8xbf16>, vector<8x8xbf16>, vector<64x8xf32> -> vector<64x8xf32>
    %22 = arith.addf %9, %21 : vector<64x8xf32>
    %23 = vector.extract_strided_slice %17 {offsets = [0, 8], sizes = [64, 8], strides = [1, 1]} : vector<64x16xbf16> to vector<64x8xbf16>
    %c1_21 = arith.constant 1 : index
    %c1_22 = arith.constant 1 : index
    %c0_23 = arith.constant 0 : index
    %c0_24 = arith.constant 0 : index
    %24 = vector.load %arg2[%c1_21, %c1_22, %c0_23, %c0_24] : memref<9x2x8x8xbf16, #tpu.memory_space<vmem>>, vector<1x1x8x8xbf16>
    %25 = vector.shape_cast %24 : vector<1x1x8x8xbf16> to vector<8x8xbf16>
    %cst_25 = arith.constant dense<0.000000e+00> : vector<64x8xf32>
    %26 = tpu.matmul %23, %25, %cst_25 {dimension_numbers = #tpu.dot_dimension_numbers<[1], [0], [0], [1], [0, 0, 1, 1], [], []>} : vector<64x8xbf16>, vector<8x8xbf16>, vector<64x8xf32> -> vector<64x8xf32>
    %27 = arith.addf %14, %26 : vector<64x8xf32>
    %c0_26 = arith.constant 0 : index
    %c0_27 = arith.constant 0 : index
    %c1_28 = arith.constant 1 : index
    %c0_29 = arith.constant 0 : index
    %28 = vector.load %arg1[%c0_26, %c0_27, %c1_28, %c0_29] : memref<1x36x9x16xbf16, #tpu.memory_space<vmem>>, vector<1x8x8x16xbf16>
    %29 = vector.shape_cast %28 : vector<1x8x8x16xbf16> to vector<8x8x16xbf16>
    %30 = vector.shape_cast %29 : vector<8x8x16xbf16> to vector<64x16xbf16>
    %31 = vector.extract_strided_slice %30 {offsets = [0, 0], sizes = [64, 8], strides = [1, 1]} : vector<64x16xbf16> to vector<64x8xbf16>
    %c2 = arith.constant 2 : index
    %c0_30 = arith.constant 0 : index
    %c0_31 = arith.constant 0 : index
    %c0_32 = arith.constant 0 : index
    %32 = vector.load %arg2[%c2, %c0_30, %c0_31, %c0_32] : memref<9x2x8x8xbf16, #tpu.memory_space<vmem>>, vector<1x1x8x8xbf16>
    %33 = vector.shape_cast %32 : vector<1x1x8x8xbf16> to vector<8x8xbf16>
    %cst_33 = arith.constant dense<0.000000e+00> : vector<64x8xf32>
    %34 = tpu.matmul %31, %33, %cst_33 {dimension_numbers = #tpu.dot_dimension_numbers<[1], [0], [0], [1], [0, 0, 1, 1], [], []>} : vector<64x8xbf16>, vector<8x8xbf16>, vector<64x8xf32> -> vector<64x8xf32>
    %35 = arith.addf %22, %34 : vector<64x8xf32>
    %36 = vector.extract_strided_slice %30 {offsets = [0, 8], sizes = [64, 8], strides = [1, 1]} : vector<64x16xbf16> to vector<64x8xbf16>
    %c2_34 = arith.constant 2 : index
    %c1_35 = arith.constant 1 : index
    %c0_36 = arith.constant 0 : index
    %c0_37 = arith.constant 0 : index
    %37 = vector.load %arg2[%c2_34, %c1_35, %c0_36, %c0_37] : memref<9x2x8x8xbf16, #tpu.memory_space<vmem>>, vector<1x1x8x8xbf16>
    %38 = vector.shape_cast %37 : vector<1x1x8x8xbf16> to vector<8x8xbf16>
    %cst_38 = arith.constant dense<0.000000e+00> : vector<64x8xf32>
    %39 = tpu.matmul %36, %38, %cst_38 {dimension_numbers = #tpu.dot_dimension_numbers<[1], [0], [0], [1], [0, 0, 1, 1], [], []>} : vector<64x8xbf16>, vector<8x8xbf16>, vector<64x8xf32> -> vector<64x8xf32>
    %40 = arith.addf %27, %39 : vector<64x8xf32>
    %c0_39 = arith.constant 0 : index
    %c18 = arith.constant 18 : index
    %c0_40 = arith.constant 0 : index
    %c0_41 = arith.constant 0 : index
    %41 = vector.load %arg1[%c0_39, %c18, %c0_40, %c0_41] : memref<1x36x9x16xbf16, #tpu.memory_space<vmem>>, vector<1x8x8x16xbf16>
    %42 = vector.shape_cast %41 : vector<1x8x8x16xbf16> to vector<8x8x16xbf16>
    %43 = vector.shape_cast %42 : vector<8x8x16xbf16> to vector<64x16xbf16>
    %44 = vector.extract_strided_slice %43 {offsets = [0, 0], sizes = [64, 8], strides = [1, 1]} : vector<64x16xbf16> to vector<64x8xbf16>
    %c3 = arith.constant 3 : index
    %c0_42 = arith.constant 0 : index
    %c0_43 = arith.constant 0 : index
    %c0_44 = arith.constant 0 : index
    %45 = vector.load %arg2[%c3, %c0_42, %c0_43, %c0_44] : memref<9x2x8x8xbf16, #tpu.memory_space<vmem>>, vector<1x1x8x8xbf16>
    %46 = vector.shape_cast %45 : vector<1x1x8x8xbf16> to vector<8x8xbf16>
    %cst_45 = arith.constant dense<0.000000e+00> : vector<64x8xf32>
    %47 = tpu.matmul %44, %46, %cst_45 {dimension_numbers = #tpu.dot_dimension_numbers<[1], [0], [0], [1], [0, 0, 1, 1], [], []>} : vector<64x8xbf16>, vector<8x8xbf16>, vector<64x8xf32> -> vector<64x8xf32>
    %48 = arith.addf %35, %47 : vector<64x8xf32>
    %49 = vector.extract_strided_slice %43 {offsets = [0, 8], sizes = [64, 8], strides = [1, 1]} : vector<64x16xbf16> to vector<64x8xbf16>
    %c3_46 = arith.constant 3 : index
    %c1_47 = arith.constant 1 : index
    %c0_48 = arith.constant 0 : index
    %c0_49 = arith.constant 0 : index
    %50 = vector.load %arg2[%c3_46, %c1_47, %c0_48, %c0_49] : memref<9x2x8x8xbf16, #tpu.memory_space<vmem>>, vector<1x1x8x8xbf16>
    %51 = vector.shape_cast %50 : vector<1x1x8x8xbf16> to vector<8x8xbf16>
    %cst_50 = arith.constant dense<0.000000e+00> : vector<64x8xf32>
    %52 = tpu.matmul %49, %51, %cst_50 {dimension_numbers = #tpu.dot_dimension_numbers<[1], [0], [0], [1], [0, 0, 1, 1], [], []>} : vector<64x8xbf16>, vector<8x8xbf16>, vector<64x8xf32> -> vector<64x8xf32>
    %53 = arith.addf %40, %52 : vector<64x8xf32>
    %c0_51 = arith.constant 0 : index
    %c27 = arith.constant 27 : index
    %c0_52 = arith.constant 0 : index
    %c0_53 = arith.constant 0 : index
    %54 = vector.load %arg1[%c0_51, %c27, %c0_52, %c0_53] : memref<1x36x9x16xbf16, #tpu.memory_space<vmem>>, vector<1x8x8x16xbf16>
    %55 = vector.shape_cast %54 : vector<1x8x8x16xbf16> to vector<8x8x16xbf16>
    %56 = vector.shape_cast %55 : vector<8x8x16xbf16> to vector<64x16xbf16>
    %57 = vector.extract_strided_slice %56 {offsets = [0, 0], sizes = [64, 8], strides = [1, 1]} : vector<64x16xbf16> to vector<64x8xbf16>
    %c4 = arith.constant 4 : index
    %c0_54 = arith.constant 0 : index
    %c0_55 = arith.constant 0 : index
    %c0_56 = arith.constant 0 : index
    %58 = vector.load %arg2[%c4, %c0_54, %c0_55, %c0_56] : memref<9x2x8x8xbf16, #tpu.memory_space<vmem>>, vector<1x1x8x8xbf16>
    %59 = vector.shape_cast %58 : vector<1x1x8x8xbf16> to vector<8x8xbf16>
    %cst_57 = arith.constant dense<0.000000e+00> : vector<64x8xf32>
    %60 = tpu.matmul %57, %59, %cst_57 {dimension_numbers = #tpu.dot_dimension_numbers<[1], [0], [0], [1], [0, 0, 1, 1], [], []>} : vector<64x8xbf16>, vector<8x8xbf16>, vector<64x8xf32> -> vector<64x8xf32>
    %61 = arith.addf %48, %60 : vector<64x8xf32>
    %62 = vector.extract_strided_slice %56 {offsets = [0, 8], sizes = [64, 8], strides = [1, 1]} : vector<64x16xbf16> to vector<64x8xbf16>
    %c4_58 = arith.constant 4 : index
    %c1_59 = arith.constant 1 : index
    %c0_60 = arith.constant 0 : index
    %c0_61 = arith.constant 0 : index
    %63 = vector.load %arg2[%c4_58, %c1_59, %c0_60, %c0_61] : memref<9x2x8x8xbf16, #tpu.memory_space<vmem>>, vector<1x1x8x8xbf16>
    %64 = vector.shape_cast %63 : vector<1x1x8x8xbf16> to vector<8x8xbf16>
    %cst_62 = arith.constant dense<0.000000e+00> : vector<64x8xf32>
    %65 = tpu.matmul %62, %64, %cst_62 {dimension_numbers = #tpu.dot_dimension_numbers<[1], [0], [0], [1], [0, 0, 1, 1], [], []>} : vector<64x8xbf16>, vector<8x8xbf16>, vector<64x8xf32> -> vector<64x8xf32>
    %66 = arith.addf %53, %65 : vector<64x8xf32>
    %c0_63 = arith.constant 0 : index
    %c18_64 = arith.constant 18 : index
    %c1_65 = arith.constant 1 : index
    %c0_66 = arith.constant 0 : index
    %67 = vector.load %arg1[%c0_63, %c18_64, %c1_65, %c0_66] : memref<1x36x9x16xbf16, #tpu.memory_space<vmem>>, vector<1x8x8x16xbf16>
    %68 = vector.shape_cast %67 : vector<1x8x8x16xbf16> to vector<8x8x16xbf16>
    %69 = vector.shape_cast %68 : vector<8x8x16xbf16> to vector<64x16xbf16>
    %70 = vector.extract_strided_slice %69 {offsets = [0, 0], sizes = [64, 8], strides = [1, 1]} : vector<64x16xbf16> to vector<64x8xbf16>
    %c5 = arith.constant 5 : index
    %c0_67 = arith.constant 0 : index
    %c0_68 = arith.constant 0 : index
    %c0_69 = arith.constant 0 : index
    %71 = vector.load %arg2[%c5, %c0_67, %c0_68, %c0_69] : memref<9x2x8x8xbf16, #tpu.memory_space<vmem>>, vector<1x1x8x8xbf16>
    %72 = vector.shape_cast %71 : vector<1x1x8x8xbf16> to vector<8x8xbf16>
    %cst_70 = arith.constant dense<0.000000e+00> : vector<64x8xf32>
    %73 = tpu.matmul %70, %72, %cst_70 {dimension_numbers = #tpu.dot_dimension_numbers<[1], [0], [0], [1], [0, 0, 1, 1], [], []>} : vector<64x8xbf16>, vector<8x8xbf16>, vector<64x8xf32> -> vector<64x8xf32>
    %74 = arith.addf %61, %73 : vector<64x8xf32>
    %75 = vector.extract_strided_slice %69 {offsets = [0, 8], sizes = [64, 8], strides = [1, 1]} : vector<64x16xbf16> to vector<64x8xbf16>
    %c5_71 = arith.constant 5 : index
    %c1_72 = arith.constant 1 : index
    %c0_73 = arith.constant 0 : index
    %c0_74 = arith.constant 0 : index
    %76 = vector.load %arg2[%c5_71, %c1_72, %c0_73, %c0_74] : memref<9x2x8x8xbf16, #tpu.memory_space<vmem>>, vector<1x1x8x8xbf16>
    %77 = vector.shape_cast %76 : vector<1x1x8x8xbf16> to vector<8x8xbf16>
    %cst_75 = arith.constant dense<0.000000e+00> : vector<64x8xf32>
    %78 = tpu.matmul %75, %77, %cst_75 {dimension_numbers = #tpu.dot_dimension_numbers<[1], [0], [0], [1], [0, 0, 1, 1], [], []>} : vector<64x8xbf16>, vector<8x8xbf16>, vector<64x8xf32> -> vector<64x8xf32>
    %79 = arith.addf %66, %78 : vector<64x8xf32>
    %c0_76 = arith.constant 0 : index
    %c1_77 = arith.constant 1 : index
    %c0_78 = arith.constant 0 : index
    %c0_79 = arith.constant 0 : index
    %80 = vector.load %arg1[%c0_76, %c1_77, %c0_78, %c0_79] : memref<1x36x9x16xbf16, #tpu.memory_space<vmem>>, vector<1x8x8x16xbf16>
    %81 = vector.shape_cast %80 : vector<1x8x8x16xbf16> to vector<8x8x16xbf16>
    %82 = vector.shape_cast %81 : vector<8x8x16xbf16> to vector<64x16xbf16>
    %83 = vector.extract_strided_slice %82 {offsets = [0, 0], sizes = [64, 8], strides = [1, 1]} : vector<64x16xbf16> to vector<64x8xbf16>
    %c6 = arith.constant 6 : index
    %c0_80 = arith.constant 0 : index
    %c0_81 = arith.constant 0 : index
    %c0_82 = arith.constant 0 : index
    %84 = vector.load %arg2[%c6, %c0_80, %c0_81, %c0_82] : memref<9x2x8x8xbf16, #tpu.memory_space<vmem>>, vector<1x1x8x8xbf16>
    %85 = vector.shape_cast %84 : vector<1x1x8x8xbf16> to vector<8x8xbf16>
    %cst_83 = arith.constant dense<0.000000e+00> : vector<64x8xf32>
    %86 = tpu.matmul %83, %85, %cst_83 {dimension_numbers = #tpu.dot_dimension_numbers<[1], [0], [0], [1], [0, 0, 1, 1], [], []>} : vector<64x8xbf16>, vector<8x8xbf16>, vector<64x8xf32> -> vector<64x8xf32>
    %87 = arith.addf %74, %86 : vector<64x8xf32>
    %88 = vector.extract_strided_slice %82 {offsets = [0, 8], sizes = [64, 8], strides = [1, 1]} : vector<64x16xbf16> to vector<64x8xbf16>
    %c6_84 = arith.constant 6 : index
    %c1_85 = arith.constant 1 : index
    %c0_86 = arith.constant 0 : index
    %c0_87 = arith.constant 0 : index
    %89 = vector.load %arg2[%c6_84, %c1_85, %c0_86, %c0_87] : memref<9x2x8x8xbf16, #tpu.memory_space<vmem>>, vector<1x1x8x8xbf16>
    %90 = vector.shape_cast %89 : vector<1x1x8x8xbf16> to vector<8x8xbf16>
    %cst_88 = arith.constant dense<0.000000e+00> : vector<64x8xf32>
    %91 = tpu.matmul %88, %90, %cst_88 {dimension_numbers = #tpu.dot_dimension_numbers<[1], [0], [0], [1], [0, 0, 1, 1], [], []>} : vector<64x8xbf16>, vector<8x8xbf16>, vector<64x8xf32> -> vector<64x8xf32>
    %92 = arith.addf %79, %91 : vector<64x8xf32>
    %c0_89 = arith.constant 0 : index
    %c10 = arith.constant 10 : index
    %c0_90 = arith.constant 0 : index
    %c0_91 = arith.constant 0 : index
    %93 = vector.load %arg1[%c0_89, %c10, %c0_90, %c0_91] : memref<1x36x9x16xbf16, #tpu.memory_space<vmem>>, vector<1x8x8x16xbf16>
    %94 = vector.shape_cast %93 : vector<1x8x8x16xbf16> to vector<8x8x16xbf16>
    %95 = vector.shape_cast %94 : vector<8x8x16xbf16> to vector<64x16xbf16>
    %96 = vector.extract_strided_slice %95 {offsets = [0, 0], sizes = [64, 8], strides = [1, 1]} : vector<64x16xbf16> to vector<64x8xbf16>
    %c7 = arith.constant 7 : index
    %c0_92 = arith.constant 0 : index
    %c0_93 = arith.constant 0 : index
    %c0_94 = arith.constant 0 : index
    %97 = vector.load %arg2[%c7, %c0_92, %c0_93, %c0_94] : memref<9x2x8x8xbf16, #tpu.memory_space<vmem>>, vector<1x1x8x8xbf16>
    %98 = vector.shape_cast %97 : vector<1x1x8x8xbf16> to vector<8x8xbf16>
    %cst_95 = arith.constant dense<0.000000e+00> : vector<64x8xf32>
    %99 = tpu.matmul %96, %98, %cst_95 {dimension_numbers = #tpu.dot_dimension_numbers<[1], [0], [0], [1], [0, 0, 1, 1], [], []>} : vector<64x8xbf16>, vector<8x8xbf16>, vector<64x8xf32> -> vector<64x8xf32>
    %100 = arith.addf %87, %99 : vector<64x8xf32>
    %101 = vector.extract_strided_slice %95 {offsets = [0, 8], sizes = [64, 8], strides = [1, 1]} : vector<64x16xbf16> to vector<64x8xbf16>
    %c7_96 = arith.constant 7 : index
    %c1_97 = arith.constant 1 : index
    %c0_98 = arith.constant 0 : index
    %c0_99 = arith.constant 0 : index
    %102 = vector.load %arg2[%c7_96, %c1_97, %c0_98, %c0_99] : memref<9x2x8x8xbf16, #tpu.memory_space<vmem>>, vector<1x1x8x8xbf16>
    %103 = vector.shape_cast %102 : vector<1x1x8x8xbf16> to vector<8x8xbf16>
    %cst_100 = arith.constant dense<0.000000e+00> : vector<64x8xf32>
    %104 = tpu.matmul %101, %103, %cst_100 {dimension_numbers = #tpu.dot_dimension_numbers<[1], [0], [0], [1], [0, 0, 1, 1], [], []>} : vector<64x8xbf16>, vector<8x8xbf16>, vector<64x8xf32> -> vector<64x8xf32>
    %105 = arith.addf %92, %104 : vector<64x8xf32>
    %c0_101 = arith.constant 0 : index
    %c1_102 = arith.constant 1 : index
    %c1_103 = arith.constant 1 : index
    %c0_104 = arith.constant 0 : index
    %106 = vector.load %arg1[%c0_101, %c1_102, %c1_103, %c0_104] : memref<1x36x9x16xbf16, #tpu.memory_space<vmem>>, vector<1x8x8x16xbf16>
    %107 = vector.shape_cast %106 : vector<1x8x8x16xbf16> to vector<8x8x16xbf16>
    %108 = vector.shape_cast %107 : vector<8x8x16xbf16> to vector<64x16xbf16>
    %109 = vector.extract_strided_slice %108 {offsets = [0, 0], sizes = [64, 8], strides = [1, 1]} : vector<64x16xbf16> to vector<64x8xbf16>
    %c8 = arith.constant 8 : index
    %c0_105 = arith.constant 0 : index
    %c0_106 = arith.constant 0 : index
    %c0_107 = arith.constant 0 : index
    %110 = vector.load %arg2[%c8, %c0_105, %c0_106, %c0_107] : memref<9x2x8x8xbf16, #tpu.memory_space<vmem>>, vector<1x1x8x8xbf16>
    %111 = vector.shape_cast %110 : vector<1x1x8x8xbf16> to vector<8x8xbf16>
    %cst_108 = arith.constant dense<0.000000e+00> : vector<64x8xf32>
    %112 = tpu.matmul %109, %111, %cst_108 {dimension_numbers = #tpu.dot_dimension_numbers<[1], [0], [0], [1], [0, 0, 1, 1], [], []>} : vector<64x8xbf16>, vector<8x8xbf16>, vector<64x8xf32> -> vector<64x8xf32>
    %113 = arith.addf %100, %112 : vector<64x8xf32>
    %114 = vector.extract_strided_slice %108 {offsets = [0, 8], sizes = [64, 8], strides = [1, 1]} : vector<64x16xbf16> to vector<64x8xbf16>
    %c8_109 = arith.constant 8 : index
    %c1_110 = arith.constant 1 : index
    %c0_111 = arith.constant 0 : index
    %c0_112 = arith.constant 0 : index
    %115 = vector.load %arg2[%c8_109, %c1_110, %c0_111, %c0_112] : memref<9x2x8x8xbf16, #tpu.memory_space<vmem>>, vector<1x1x8x8xbf16>
    %116 = vector.shape_cast %115 : vector<1x1x8x8xbf16> to vector<8x8xbf16>
    %cst_113 = arith.constant dense<0.000000e+00> : vector<64x8xf32>
    %117 = tpu.matmul %114, %116, %cst_113 {dimension_numbers = #tpu.dot_dimension_numbers<[1], [0], [0], [1], [0, 0, 1, 1], [], []>} : vector<64x8xbf16>, vector<8x8xbf16>, vector<64x8xf32> -> vector<64x8xf32>
    %118 = arith.addf %105, %117 : vector<64x8xf32>
    %119 = tpu.concatenate %113, %118 in 1 : vector<64x8xf32>, vector<64x8xf32> -> vector<64x16xf32>
    %c0_114 = arith.constant 0 : index
    %c0_115 = arith.constant 0 : index
    %120 = vector.load %arg3[%c0_114, %c0_115] : memref<1x16xf32, #tpu.memory_space<vmem>>, vector<1x16xf32>
    %121 = vector.broadcast %120 : vector<1x16xf32> to vector<64x16xf32>
    %122 = arith.mulf %119, %121 : vector<64x16xf32>
    %c0_116 = arith.constant 0 : index
    %c0_117 = arith.constant 0 : index
    %123 = vector.load %arg4[%c0_116, %c0_117] : memref<1x16xf32, #tpu.memory_space<vmem>>, vector<1x16xf32>
    %124 = vector.broadcast %123 : vector<1x16xf32> to vector<64x16xf32>
    %125 = arith.addf %122, %124 : vector<64x16xf32>
    %cst_118 = arith.constant 0.000000e+00 : f32
    %126 = vector.broadcast %cst_118 : f32 to vector<64x16xf32>
    %127 = arith.maximumf %125, %126 : vector<64x16xf32>
    %cst_119 = arith.constant dense<0.000000e+00> : vector<16xf32>
    %128 = vector.multi_reduction <add>, %127, %cst_119 [0] : vector<64x16xf32> to vector<16xf32>
    %129 = vector.shape_cast %128 : vector<16xf32> to vector<1x16xf32>
    %cst_120 = arith.constant 1.562500e-02 : f32
    %130 = vector.broadcast %cst_120 : f32 to vector<1x16xf32>
    %131 = arith.mulf %129, %130 : vector<1x16xf32>
    %c0_121 = arith.constant 0 : index
    %c0_122 = arith.constant 0 : index
    %132 = vector.load %arg5[%c0_121, %c0_122] : memref<16x2xf32, #tpu.memory_space<vmem>>, vector<16x2xf32>
    %cst_123 = arith.constant dense<0.000000e+00> : vector<1x2xf32>
    %133 = tpu.matmul %131, %132, %cst_123 {dimension_numbers = #tpu.dot_dimension_numbers<[1], [0], [0], [1], [0, 0, 1, 1], [], []>} : vector<1x16xf32>, vector<16x2xf32>, vector<1x2xf32> -> vector<1x2xf32>
    %c0_124 = arith.constant 0 : index
    %c0_125 = arith.constant 0 : index
    %134 = vector.load %arg6[%c0_124, %c0_125] : memref<1x2xf32, #tpu.memory_space<vmem>>, vector<1x2xf32>
    %135 = arith.addf %133, %134 : vector<1x2xf32>
    %cst_126 = arith.constant 0.000000e+00 : f32
    %136 = vector.broadcast %cst_126 : f32 to vector<1x2xf32>
    %137 = arith.maximumf %135, %136 : vector<1x2xf32>
    %c0_127 = arith.constant 0 : index
    %c0_128 = arith.constant 0 : index
    %138 = vector.load %arg7[%c0_127, %c0_128] : memref<2x16xf32, #tpu.memory_space<vmem>>, vector<2x16xf32>
    %cst_129 = arith.constant dense<0.000000e+00> : vector<1x16xf32>
    %139 = tpu.matmul %137, %138, %cst_129 {dimension_numbers = #tpu.dot_dimension_numbers<[1], [0], [0], [1], [0, 0, 1, 1], [], []>} : vector<1x2xf32>, vector<2x16xf32>, vector<1x16xf32> -> vector<1x16xf32>
    %c0_130 = arith.constant 0 : index
    %c0_131 = arith.constant 0 : index
    %140 = vector.load %arg8[%c0_130, %c0_131] : memref<1x16xf32, #tpu.memory_space<vmem>>, vector<1x16xf32>
    %141 = arith.addf %139, %140 : vector<1x16xf32>
    %cst_132 = arith.constant 0.000000e+00 : f32
    %142 = vector.broadcast %cst_132 : f32 to vector<1x16xf32>
    %143 = arith.subf %142, %141 : vector<1x16xf32>
    %144 = math.exp %143 : vector<1x16xf32>
    %cst_133 = arith.constant 1.000000e+00 : f32
    %145 = vector.broadcast %cst_133 : f32 to vector<1x16xf32>
    %146 = arith.addf %145, %144 : vector<1x16xf32>
    %147 = tpu.reciprocal %146 {approx = true} : vector<1x16xf32> -> vector<1x16xf32>
    %148 = vector.broadcast %147 : vector<1x16xf32> to vector<64x16xf32>
    %149 = arith.mulf %127, %148 : vector<64x16xf32>
    %150 = vector.shape_cast %149 : vector<64x16xf32> to vector<1x64x16xf32>
    %151 = arith.truncf %150 : vector<1x64x16xf32> to vector<1x64x16xbf16>
    %c0_134 = arith.constant 0 : index
    %c0_135 = arith.constant 0 : index
    %c0_136 = arith.constant 0 : index
    %152 = vector.load %arg9[%c0_134, %c0_135, %c0_136] : memref<1x64x16xbf16, #tpu.memory_space<vmem>>, vector<1x64x16xbf16>
    tpu.vector_store %arg9[%c0_134, %c0_135, %c0_136], %151 {strides = array<i32>} : memref<1x64x16xbf16, #tpu.memory_space<vmem>>, vector<1x64x16xbf16>,
    return
  }
  func.func @transform_0(%arg0: i32) -> (i32, i32, i32, i32) {
    %c0_i32 = arith.constant 0 : i32
    %c0_i32_0 = arith.constant 0 : i32
    %c0_i32_1 = arith.constant 0 : i32
    %c0_i32_2 = arith.constant 0 : i32
    return %arg0, %c0_i32, %c0_i32_0, %c0_i32_1 : i32, i32, i32, i32
  }
  func.func @transform_1(%arg0: i32) -> (i32, i32, i32, i32) {
    %c0_i32 = arith.constant 0 : i32
    %c0_i32_0 = arith.constant 0 : i32
    %c0_i32_1 = arith.constant 0 : i32
    %c0_i32_2 = arith.constant 0 : i32
    %c0_i32_3 = arith.constant 0 : i32
    return %c0_i32, %c0_i32_0, %c0_i32_1, %c0_i32_2 : i32, i32, i32, i32
  }
  func.func @transform_2(%arg0: i32) -> (i32, i32) {
    %c0_i32 = arith.constant 0 : i32
    %c0_i32_0 = arith.constant 0 : i32
    %c0_i32_1 = arith.constant 0 : i32
    return %c0_i32, %c0_i32_0 : i32, i32
  }
  func.func @transform_3(%arg0: i32) -> (i32, i32) {
    %c0_i32 = arith.constant 0 : i32
    %c0_i32_0 = arith.constant 0 : i32
    %c0_i32_1 = arith.constant 0 : i32
    return %c0_i32, %c0_i32_0 : i32, i32
  }
  func.func @transform_4(%arg0: i32) -> (i32, i32) {
    %c0_i32 = arith.constant 0 : i32
    %c0_i32_0 = arith.constant 0 : i32
    %c0_i32_1 = arith.constant 0 : i32
    return %c0_i32, %c0_i32_0 : i32, i32
  }
  func.func @transform_5(%arg0: i32) -> (i32, i32) {
    %c0_i32 = arith.constant 0 : i32
    %c0_i32_0 = arith.constant 0 : i32
    %c0_i32_1 = arith.constant 0 : i32
    return %c0_i32, %c0_i32_0 : i32, i32
  }
  func.func @transform_6(%arg0: i32) -> (i32, i32) {
    %c0_i32 = arith.constant 0 : i32
    %c0_i32_0 = arith.constant 0 : i32
    %c0_i32_1 = arith.constant 0 : i32
    return %c0_i32, %c0_i32_0 : i32, i32
  }
  func.func @transform_7(%arg0: i32) -> (i32, i32) {
    %c0_i32 = arith.constant 0 : i32
    %c0_i32_0 = arith.constant 0 : i32
    %c0_i32_1 = arith.constant 0 : i32
    return %c0_i32, %c0_i32_0 : i32, i32
  }
  func.func @transform_8(%arg0: i32) -> (i32, i32, i32) {
    %c0_i32 = arith.constant 0 : i32
    %c0_i32_0 = arith.constant 0 : i32
    %c0_i32_1 = arith.constant 0 : i32
    return %arg0, %c0_i32, %c0_i32_0 : i32, i32, i32
  }
}

module attributes {stable_mosaic.version = 11 : i64} {
  func.func @_mm_bn_down_add_relu_kernel(%arg0: i32, %arg1: memref<64x16xbf16, #tpu.memory_space<vmem>>, %arg2: memref<16x16xbf16, #tpu.memory_space<vmem>>, %arg3: memref<1x16xf32, #tpu.memory_space<vmem>>, %arg4: memref<1x16xf32, #tpu.memory_space<vmem>>, %arg5: memref<64x8xbf16, #tpu.memory_space<vmem>>, %arg6: memref<8x16xbf16, #tpu.memory_space<vmem>>, %arg7: memref<1x16xf32, #tpu.memory_space<vmem>>, %arg8: memref<1x16xf32, #tpu.memory_space<vmem>>, %arg9: memref<64x16xbf16, #tpu.memory_space<vmem>>) attributes {dimension_semantics = [#tpu.dimension_semantics<parallel>], iteration_bounds = array<i64: 2>, scalar_prefetch = 0 : i64, scratch_operands = 0 : i64, tpu.core_type = #tpu.core_type<tc>, window_params = [{transform_indices = @transform_0, window_bounds = array<i64: 64, 16>}, {pipeline_mode = #tpu.pipeline_mode<synchronous>, transform_indices = @transform_1, window_bounds = array<i64: 16, 16>}, {pipeline_mode = #tpu.pipeline_mode<synchronous>, transform_indices = @transform_2, window_bounds = array<i64: 1, 16>}, {pipeline_mode = #tpu.pipeline_mode<synchronous>, transform_indices = @transform_3, window_bounds = array<i64: 1, 16>}, {transform_indices = @transform_4, window_bounds = array<i64: 64, 8>}, {pipeline_mode = #tpu.pipeline_mode<synchronous>, transform_indices = @transform_5, window_bounds = array<i64: 8, 16>}, {pipeline_mode = #tpu.pipeline_mode<synchronous>, transform_indices = @transform_6, window_bounds = array<i64: 1, 16>}, {pipeline_mode = #tpu.pipeline_mode<synchronous>, transform_indices = @transform_7, window_bounds = array<i64: 1, 16>}, {transform_indices = @transform_8, window_bounds = array<i64: 64, 16>}]} {
    %c0 = arith.constant 0 : index
    %c0_0 = arith.constant 0 : index
    %0 = vector.load %arg1[%c0, %c0_0] : memref<64x16xbf16, #tpu.memory_space<vmem>>, vector<64x16xbf16>
    %c0_1 = arith.constant 0 : index
    %c0_2 = arith.constant 0 : index
    %1 = vector.load %arg2[%c0_1, %c0_2] : memref<16x16xbf16, #tpu.memory_space<vmem>>, vector<16x16xbf16>
    %cst = arith.constant dense<0.000000e+00> : vector<64x16xf32>
    %2 = tpu.matmul %0, %1, %cst {dimension_numbers = #tpu.dot_dimension_numbers<[1], [0], [0], [1], [0, 0, 1, 1], [], []>} : vector<64x16xbf16>, vector<16x16xbf16>, vector<64x16xf32> -> vector<64x16xf32>
    %c0_3 = arith.constant 0 : index
    %c0_4 = arith.constant 0 : index
    %3 = vector.load %arg3[%c0_3, %c0_4] : memref<1x16xf32, #tpu.memory_space<vmem>>, vector<1x16xf32>
    %4 = vector.broadcast %3 : vector<1x16xf32> to vector<64x16xf32>
    %5 = arith.mulf %2, %4 : vector<64x16xf32>
    %c0_5 = arith.constant 0 : index
    %c0_6 = arith.constant 0 : index
    %6 = vector.load %arg4[%c0_5, %c0_6] : memref<1x16xf32, #tpu.memory_space<vmem>>, vector<1x16xf32>
    %7 = vector.broadcast %6 : vector<1x16xf32> to vector<64x16xf32>
    %8 = arith.addf %5, %7 : vector<64x16xf32>
    %c0_7 = arith.constant 0 : index
    %c0_8 = arith.constant 0 : index
    %9 = vector.load %arg5[%c0_7, %c0_8] : memref<64x8xbf16, #tpu.memory_space<vmem>>, vector<64x8xbf16>
    %c0_9 = arith.constant 0 : index
    %c0_10 = arith.constant 0 : index
    %10 = vector.load %arg6[%c0_9, %c0_10] : memref<8x16xbf16, #tpu.memory_space<vmem>>, vector<8x16xbf16>
    %cst_11 = arith.constant dense<0.000000e+00> : vector<64x16xf32>
    %11 = tpu.matmul %9, %10, %cst_11 {dimension_numbers = #tpu.dot_dimension_numbers<[1], [0], [0], [1], [0, 0, 1, 1], [], []>} : vector<64x8xbf16>, vector<8x16xbf16>, vector<64x16xf32> -> vector<64x16xf32>
    %c0_12 = arith.constant 0 : index
    %c0_13 = arith.constant 0 : index
    %12 = vector.load %arg7[%c0_12, %c0_13] : memref<1x16xf32, #tpu.memory_space<vmem>>, vector<1x16xf32>
    %13 = vector.broadcast %12 : vector<1x16xf32> to vector<64x16xf32>
    %14 = arith.mulf %11, %13 : vector<64x16xf32>
    %c0_14 = arith.constant 0 : index
    %c0_15 = arith.constant 0 : index
    %15 = vector.load %arg8[%c0_14, %c0_15] : memref<1x16xf32, #tpu.memory_space<vmem>>, vector<1x16xf32>
    %16 = vector.broadcast %15 : vector<1x16xf32> to vector<64x16xf32>
    %17 = arith.addf %14, %16 : vector<64x16xf32>
    %18 = arith.addf %8, %17 : vector<64x16xf32>
    %cst_16 = arith.constant 0.000000e+00 : f32
    %19 = vector.broadcast %cst_16 : f32 to vector<64x16xf32>
    %20 = arith.maximumf %18, %19 : vector<64x16xf32>
    %21 = arith.truncf %20 : vector<64x16xf32> to vector<64x16xbf16>
    %c0_17 = arith.constant 0 : index
    %c0_18 = arith.constant 0 : index
    %22 = vector.load %arg9[%c0_17, %c0_18] : memref<64x16xbf16, #tpu.memory_space<vmem>>, vector<64x16xbf16>
    tpu.vector_store %arg9[%c0_17, %c0_18], %21 {strides = array<i32>} : memref<64x16xbf16, #tpu.memory_space<vmem>>, vector<64x16xbf16>,
    return
  }
  func.func @transform_0(%arg0: i32) -> (i32, i32) {
    %c0_i32 = arith.constant 0 : i32
    %c0_i32_0 = arith.constant 0 : i32
    return %arg0, %c0_i32 : i32, i32
  }
  func.func @transform_1(%arg0: i32) -> (i32, i32) {
    %c0_i32 = arith.constant 0 : i32
    %c0_i32_0 = arith.constant 0 : i32
    %c0_i32_1 = arith.constant 0 : i32
    return %c0_i32, %c0_i32_0 : i32, i32
  }
  func.func @transform_2(%arg0: i32) -> (i32, i32) {
    %c0_i32 = arith.constant 0 : i32
    %c0_i32_0 = arith.constant 0 : i32
    %c0_i32_1 = arith.constant 0 : i32
    return %c0_i32, %c0_i32_0 : i32, i32
  }
  func.func @transform_3(%arg0: i32) -> (i32, i32) {
    %c0_i32 = arith.constant 0 : i32
    %c0_i32_0 = arith.constant 0 : i32
    %c0_i32_1 = arith.constant 0 : i32
    return %c0_i32, %c0_i32_0 : i32, i32
  }
  func.func @transform_4(%arg0: i32) -> (i32, i32) {
    %c0_i32 = arith.constant 0 : i32
    %c0_i32_0 = arith.constant 0 : i32
    return %arg0, %c0_i32 : i32, i32
  }
  func.func @transform_5(%arg0: i32) -> (i32, i32) {
    %c0_i32 = arith.constant 0 : i32
    %c0_i32_0 = arith.constant 0 : i32
    %c0_i32_1 = arith.constant 0 : i32
    return %c0_i32, %c0_i32_0 : i32, i32
  }
  func.func @transform_6(%arg0: i32) -> (i32, i32) {
    %c0_i32 = arith.constant 0 : i32
    %c0_i32_0 = arith.constant 0 : i32
    %c0_i32_1 = arith.constant 0 : i32
    return %c0_i32, %c0_i32_0 : i32, i32
  }
  func.func @transform_7(%arg0: i32) -> (i32, i32) {
    %c0_i32 = arith.constant 0 : i32
    %c0_i32_0 = arith.constant 0 : i32
    %c0_i32_1 = arith.constant 0 : i32
    return %c0_i32, %c0_i32_0 : i32, i32
  }
  func.func @transform_8(%arg0: i32) -> (i32, i32) {
    %c0_i32 = arith.constant 0 : i32
    %c0_i32_0 = arith.constant 0 : i32
    return %arg0, %c0_i32 : i32, i32
  }
}

module attributes {stable_mosaic.version = 11 : i64} {
  func.func @_mm_bn_relu_kernel(%arg0: i32, %arg1: memref<64x16xbf16, #tpu.memory_space<vmem>>, %arg2: memref<16x16xbf16, #tpu.memory_space<vmem>>, %arg3: memref<1x16xf32, #tpu.memory_space<vmem>>, %arg4: memref<1x16xf32, #tpu.memory_space<vmem>>, %arg5: memref<64x16xbf16, #tpu.memory_space<vmem>>) attributes {dimension_semantics = [#tpu.dimension_semantics<parallel>], iteration_bounds = array<i64: 2>, scalar_prefetch = 0 : i64, scratch_operands = 0 : i64, tpu.core_type = #tpu.core_type<tc>, window_params = [{transform_indices = @transform_0, window_bounds = array<i64: 64, 16>}, {pipeline_mode = #tpu.pipeline_mode<synchronous>, transform_indices = @transform_1, window_bounds = array<i64: 16, 16>}, {pipeline_mode = #tpu.pipeline_mode<synchronous>, transform_indices = @transform_2, window_bounds = array<i64: 1, 16>}, {pipeline_mode = #tpu.pipeline_mode<synchronous>, transform_indices = @transform_3, window_bounds = array<i64: 1, 16>}, {transform_indices = @transform_4, window_bounds = array<i64: 64, 16>}]} {
    %c0 = arith.constant 0 : index
    %c0_0 = arith.constant 0 : index
    %0 = vector.load %arg1[%c0, %c0_0] : memref<64x16xbf16, #tpu.memory_space<vmem>>, vector<64x16xbf16>
    %c0_1 = arith.constant 0 : index
    %c0_2 = arith.constant 0 : index
    %1 = vector.load %arg2[%c0_1, %c0_2] : memref<16x16xbf16, #tpu.memory_space<vmem>>, vector<16x16xbf16>
    %cst = arith.constant dense<0.000000e+00> : vector<64x16xf32>
    %2 = tpu.matmul %0, %1, %cst {dimension_numbers = #tpu.dot_dimension_numbers<[1], [0], [0], [1], [0, 0, 1, 1], [], []>} : vector<64x16xbf16>, vector<16x16xbf16>, vector<64x16xf32> -> vector<64x16xf32>
    %c0_3 = arith.constant 0 : index
    %c0_4 = arith.constant 0 : index
    %3 = vector.load %arg3[%c0_3, %c0_4] : memref<1x16xf32, #tpu.memory_space<vmem>>, vector<1x16xf32>
    %4 = vector.broadcast %3 : vector<1x16xf32> to vector<64x16xf32>
    %5 = arith.mulf %2, %4 : vector<64x16xf32>
    %c0_5 = arith.constant 0 : index
    %c0_6 = arith.constant 0 : index
    %6 = vector.load %arg4[%c0_5, %c0_6] : memref<1x16xf32, #tpu.memory_space<vmem>>, vector<1x16xf32>
    %7 = vector.broadcast %6 : vector<1x16xf32> to vector<64x16xf32>
    %8 = arith.addf %5, %7 : vector<64x16xf32>
    %cst_7 = arith.constant 0.000000e+00 : f32
    %9 = vector.broadcast %cst_7 : f32 to vector<64x16xf32>
    %10 = arith.maximumf %8, %9 : vector<64x16xf32>
    %11 = arith.truncf %10 : vector<64x16xf32> to vector<64x16xbf16>
    %c0_8 = arith.constant 0 : index
    %c0_9 = arith.constant 0 : index
    %12 = vector.load %arg5[%c0_8, %c0_9] : memref<64x16xbf16, #tpu.memory_space<vmem>>, vector<64x16xbf16>
    tpu.vector_store %arg5[%c0_8, %c0_9], %11 {strides = array<i32>} : memref<64x16xbf16, #tpu.memory_space<vmem>>, vector<64x16xbf16>,
    return
  }
  func.func @transform_0(%arg0: i32) -> (i32, i32) {
    %c0_i32 = arith.constant 0 : i32
    %c0_i32_0 = arith.constant 0 : i32
    return %arg0, %c0_i32 : i32, i32
  }
  func.func @transform_1(%arg0: i32) -> (i32, i32) {
    %c0_i32 = arith.constant 0 : i32
    %c0_i32_0 = arith.constant 0 : i32
    %c0_i32_1 = arith.constant 0 : i32
    return %c0_i32, %c0_i32_0 : i32, i32
  }
  func.func @transform_2(%arg0: i32) -> (i32, i32) {
    %c0_i32 = arith.constant 0 : i32
    %c0_i32_0 = arith.constant 0 : i32
    %c0_i32_1 = arith.constant 0 : i32
    return %c0_i32, %c0_i32_0 : i32, i32
  }
  func.func @transform_3(%arg0: i32) -> (i32, i32) {
    %c0_i32 = arith.constant 0 : i32
    %c0_i32_0 = arith.constant 0 : i32
    %c0_i32_1 = arith.constant 0 : i32
    return %c0_i32, %c0_i32_0 : i32, i32
  }
  func.func @transform_4(%arg0: i32) -> (i32, i32) {
    %c0_i32 = arith.constant 0 : i32
    %c0_i32_0 = arith.constant 0 : i32
    return %arg0, %c0_i32 : i32, i32
  }
}

module attributes {stable_mosaic.version = 11 : i64} {
  func.func @_mm_bn_add_relu_kernel(%arg0: i32, %arg1: memref<64x16xbf16, #tpu.memory_space<vmem>>, %arg2: memref<16x16xbf16, #tpu.memory_space<vmem>>, %arg3: memref<1x16xf32, #tpu.memory_space<vmem>>, %arg4: memref<1x16xf32, #tpu.memory_space<vmem>>, %arg5: memref<64x16xbf16, #tpu.memory_space<vmem>>, %arg6: memref<64x16xbf16, #tpu.memory_space<vmem>>) attributes {dimension_semantics = [#tpu.dimension_semantics<parallel>], iteration_bounds = array<i64: 2>, scalar_prefetch = 0 : i64, scratch_operands = 0 : i64, tpu.core_type = #tpu.core_type<tc>, window_params = [{transform_indices = @transform_0, window_bounds = array<i64: 64, 16>}, {pipeline_mode = #tpu.pipeline_mode<synchronous>, transform_indices = @transform_1, window_bounds = array<i64: 16, 16>}, {pipeline_mode = #tpu.pipeline_mode<synchronous>, transform_indices = @transform_2, window_bounds = array<i64: 1, 16>}, {pipeline_mode = #tpu.pipeline_mode<synchronous>, transform_indices = @transform_3, window_bounds = array<i64: 1, 16>}, {transform_indices = @transform_4, window_bounds = array<i64: 64, 16>}, {transform_indices = @transform_5, window_bounds = array<i64: 64, 16>}]} {
    %c0 = arith.constant 0 : index
    %c0_0 = arith.constant 0 : index
    %0 = vector.load %arg1[%c0, %c0_0] : memref<64x16xbf16, #tpu.memory_space<vmem>>, vector<64x16xbf16>
    %c0_1 = arith.constant 0 : index
    %c0_2 = arith.constant 0 : index
    %1 = vector.load %arg2[%c0_1, %c0_2] : memref<16x16xbf16, #tpu.memory_space<vmem>>, vector<16x16xbf16>
    %cst = arith.constant dense<0.000000e+00> : vector<64x16xf32>
    %2 = tpu.matmul %0, %1, %cst {dimension_numbers = #tpu.dot_dimension_numbers<[1], [0], [0], [1], [0, 0, 1, 1], [], []>} : vector<64x16xbf16>, vector<16x16xbf16>, vector<64x16xf32> -> vector<64x16xf32>
    %c0_3 = arith.constant 0 : index
    %c0_4 = arith.constant 0 : index
    %3 = vector.load %arg3[%c0_3, %c0_4] : memref<1x16xf32, #tpu.memory_space<vmem>>, vector<1x16xf32>
    %4 = vector.broadcast %3 : vector<1x16xf32> to vector<64x16xf32>
    %5 = arith.mulf %2, %4 : vector<64x16xf32>
    %c0_5 = arith.constant 0 : index
    %c0_6 = arith.constant 0 : index
    %6 = vector.load %arg4[%c0_5, %c0_6] : memref<1x16xf32, #tpu.memory_space<vmem>>, vector<1x16xf32>
    %7 = vector.broadcast %6 : vector<1x16xf32> to vector<64x16xf32>
    %8 = arith.addf %5, %7 : vector<64x16xf32>
    %c0_7 = arith.constant 0 : index
    %c0_8 = arith.constant 0 : index
    %9 = vector.load %arg5[%c0_7, %c0_8] : memref<64x16xbf16, #tpu.memory_space<vmem>>, vector<64x16xbf16>
    %10 = arith.extf %9 : vector<64x16xbf16> to vector<64x16xf32>
    %11 = arith.addf %8, %10 : vector<64x16xf32>
    %cst_9 = arith.constant 0.000000e+00 : f32
    %12 = vector.broadcast %cst_9 : f32 to vector<64x16xf32>
    %13 = arith.maximumf %11, %12 : vector<64x16xf32>
    %14 = arith.truncf %13 : vector<64x16xf32> to vector<64x16xbf16>
    %c0_10 = arith.constant 0 : index
    %c0_11 = arith.constant 0 : index
    %15 = vector.load %arg6[%c0_10, %c0_11] : memref<64x16xbf16, #tpu.memory_space<vmem>>, vector<64x16xbf16>
    tpu.vector_store %arg6[%c0_10, %c0_11], %14 {strides = array<i32>} : memref<64x16xbf16, #tpu.memory_space<vmem>>, vector<64x16xbf16>,
    return
  }
  func.func @transform_0(%arg0: i32) -> (i32, i32) {
    %c0_i32 = arith.constant 0 : i32
    %c0_i32_0 = arith.constant 0 : i32
    return %arg0, %c0_i32 : i32, i32
  }
  func.func @transform_1(%arg0: i32) -> (i32, i32) {
    %c0_i32 = arith.constant 0 : i32
    %c0_i32_0 = arith.constant 0 : i32
    %c0_i32_1 = arith.constant 0 : i32
    return %c0_i32, %c0_i32_0 : i32, i32
  }
  func.func @transform_2(%arg0: i32) -> (i32, i32) {
    %c0_i32 = arith.constant 0 : i32
    %c0_i32_0 = arith.constant 0 : i32
    %c0_i32_1 = arith.constant 0 : i32
    return %c0_i32, %c0_i32_0 : i32, i32
  }
  func.func @transform_3(%arg0: i32) -> (i32, i32) {
    %c0_i32 = arith.constant 0 : i32
    %c0_i32_0 = arith.constant 0 : i32
    %c0_i32_1 = arith.constant 0 : i32
    return %c0_i32, %c0_i32_0 : i32, i32
  }
  func.func @transform_4(%arg0: i32) -> (i32, i32) {
    %c0_i32 = arith.constant 0 : i32
    %c0_i32_0 = arith.constant 0 : i32
    return %arg0, %c0_i32 : i32, i32
  }
  func.func @transform_5(%arg0: i32) -> (i32, i32) {
    %c0_i32 = arith.constant 0 : i32
    %c0_i32_0 = arith.constant 0 : i32
    return %arg0, %c0_i32 : i32, i32
  }
}

module attributes {stable_mosaic.version = 11 : i64} {
  func.func @_conv2_se_kernel(%arg0: i32, %arg1: memref<1x10x10x16xbf16, #tpu.memory_space<vmem>>, %arg2: memref<9x2x8x8xbf16, #tpu.memory_space<vmem>>, %arg3: memref<1x16xf32, #tpu.memory_space<vmem>>, %arg4: memref<1x16xf32, #tpu.memory_space<vmem>>, %arg5: memref<16x4xf32, #tpu.memory_space<vmem>>, %arg6: memref<1x4xf32, #tpu.memory_space<vmem>>, %arg7: memref<4x16xf32, #tpu.memory_space<vmem>>, %arg8: memref<1x16xf32, #tpu.memory_space<vmem>>, %arg9: memref<1x64x16xbf16, #tpu.memory_space<vmem>>) attributes {dimension_semantics = [#tpu.dimension_semantics<parallel>], iteration_bounds = array<i64: 2>, scalar_prefetch = 0 : i64, scratch_operands = 0 : i64, tpu.core_type = #tpu.core_type<tc>, window_params = [{transform_indices = @transform_0, window_bounds = array<i64: 1, 10, 10, 16>}, {pipeline_mode = #tpu.pipeline_mode<synchronous>, transform_indices = @transform_1, window_bounds = array<i64: 9, 2, 8, 8>}, {pipeline_mode = #tpu.pipeline_mode<synchronous>, transform_indices = @transform_2, window_bounds = array<i64: 1, 16>}, {pipeline_mode = #tpu.pipeline_mode<synchronous>, transform_indices = @transform_3, window_bounds = array<i64: 1, 16>}, {pipeline_mode = #tpu.pipeline_mode<synchronous>, transform_indices = @transform_4, window_bounds = array<i64: 16, 4>}, {pipeline_mode = #tpu.pipeline_mode<synchronous>, transform_indices = @transform_5, window_bounds = array<i64: 1, 4>}, {pipeline_mode = #tpu.pipeline_mode<synchronous>, transform_indices = @transform_6, window_bounds = array<i64: 4, 16>}, {pipeline_mode = #tpu.pipeline_mode<synchronous>, transform_indices = @transform_7, window_bounds = array<i64: 1, 16>}, {transform_indices = @transform_8, window_bounds = array<i64: 1, 64, 16>}]} {
    %cst = arith.constant 0.000000e+00 : f32
    %0 = vector.broadcast %cst : f32 to vector<64x8xf32>
    %cst_0 = arith.constant 0.000000e+00 : f32
    %1 = vector.broadcast %cst_0 : f32 to vector<64x8xf32>
    %c0 = arith.constant 0 : index
    %c0_1 = arith.constant 0 : index
    %c0_2 = arith.constant 0 : index
    %c0_3 = arith.constant 0 : index
    %2 = vector.load %arg1[%c0, %c0_1, %c0_2, %c0_3] : memref<1x10x10x16xbf16, #tpu.memory_space<vmem>>, vector<1x8x8x16xbf16>
    %3 = vector.shape_cast %2 : vector<1x8x8x16xbf16> to vector<8x8x16xbf16>
    %4 = vector.shape_cast %3 : vector<8x8x16xbf16> to vector<64x16xbf16>
    %5 = vector.extract_strided_slice %4 {offsets = [0, 0], sizes = [64, 8], strides = [1, 1]} : vector<64x16xbf16> to vector<64x8xbf16>
    %c0_4 = arith.constant 0 : index
    %c0_5 = arith.constant 0 : index
    %c0_6 = arith.constant 0 : index
    %c0_7 = arith.constant 0 : index
    %6 = vector.load %arg2[%c0_4, %c0_5, %c0_6, %c0_7] : memref<9x2x8x8xbf16, #tpu.memory_space<vmem>>, vector<1x1x8x8xbf16>
    %7 = vector.shape_cast %6 : vector<1x1x8x8xbf16> to vector<8x8xbf16>
    %cst_8 = arith.constant dense<0.000000e+00> : vector<64x8xf32>
    %8 = tpu.matmul %5, %7, %cst_8 {dimension_numbers = #tpu.dot_dimension_numbers<[1], [0], [0], [1], [0, 0, 1, 1], [], []>} : vector<64x8xbf16>, vector<8x8xbf16>, vector<64x8xf32> -> vector<64x8xf32>
    %9 = arith.addf %0, %8 : vector<64x8xf32>
    %10 = vector.extract_strided_slice %4 {offsets = [0, 8], sizes = [64, 8], strides = [1, 1]} : vector<64x16xbf16> to vector<64x8xbf16>
    %c0_9 = arith.constant 0 : index
    %c1 = arith.constant 1 : index
    %c0_10 = arith.constant 0 : index
    %c0_11 = arith.constant 0 : index
    %11 = vector.load %arg2[%c0_9, %c1, %c0_10, %c0_11] : memref<9x2x8x8xbf16, #tpu.memory_space<vmem>>, vector<1x1x8x8xbf16>
    %12 = vector.shape_cast %11 : vector<1x1x8x8xbf16> to vector<8x8xbf16>
    %cst_12 = arith.constant dense<0.000000e+00> : vector<64x8xf32>
    %13 = tpu.matmul %10, %12, %cst_12 {dimension_numbers = #tpu.dot_dimension_numbers<[1], [0], [0], [1], [0, 0, 1, 1], [], []>} : vector<64x8xbf16>, vector<8x8xbf16>, vector<64x8xf32> -> vector<64x8xf32>
    %14 = arith.addf %1, %13 : vector<64x8xf32>
    %c0_13 = arith.constant 0 : index
    %c0_14 = arith.constant 0 : index
    %c1_15 = arith.constant 1 : index
    %c0_16 = arith.constant 0 : index
    %15 = vector.load %arg1[%c0_13, %c0_14, %c1_15, %c0_16] : memref<1x10x10x16xbf16, #tpu.memory_space<vmem>>, vector<1x8x8x16xbf16>
    %16 = vector.shape_cast %15 : vector<1x8x8x16xbf16> to vector<8x8x16xbf16>
    %17 = vector.shape_cast %16 : vector<8x8x16xbf16> to vector<64x16xbf16>
    %18 = vector.extract_strided_slice %17 {offsets = [0, 0], sizes = [64, 8], strides = [1, 1]} : vector<64x16xbf16> to vector<64x8xbf16>
    %c1_17 = arith.constant 1 : index
    %c0_18 = arith.constant 0 : index
    %c0_19 = arith.constant 0 : index
    %c0_20 = arith.constant 0 : index
    %19 = vector.load %arg2[%c1_17, %c0_18, %c0_19, %c0_20] : memref<9x2x8x8xbf16, #tpu.memory_space<vmem>>, vector<1x1x8x8xbf16>
    %20 = vector.shape_cast %19 : vector<1x1x8x8xbf16> to vector<8x8xbf16>
    %cst_21 = arith.constant dense<0.000000e+00> : vector<64x8xf32>
    %21 = tpu.matmul %18, %20, %cst_21 {dimension_numbers = #tpu.dot_dimension_numbers<[1], [0], [0], [1], [0, 0, 1, 1], [], []>} : vector<64x8xbf16>, vector<8x8xbf16>, vector<64x8xf32> -> vector<64x8xf32>
    %22 = arith.addf %9, %21 : vector<64x8xf32>
    %23 = vector.extract_strided_slice %17 {offsets = [0, 8], sizes = [64, 8], strides = [1, 1]} : vector<64x16xbf16> to vector<64x8xbf16>
    %c1_22 = arith.constant 1 : index
    %c1_23 = arith.constant 1 : index
    %c0_24 = arith.constant 0 : index
    %c0_25 = arith.constant 0 : index
    %24 = vector.load %arg2[%c1_22, %c1_23, %c0_24, %c0_25] : memref<9x2x8x8xbf16, #tpu.memory_space<vmem>>, vector<1x1x8x8xbf16>
    %25 = vector.shape_cast %24 : vector<1x1x8x8xbf16> to vector<8x8xbf16>
    %cst_26 = arith.constant dense<0.000000e+00> : vector<64x8xf32>
    %26 = tpu.matmul %23, %25, %cst_26 {dimension_numbers = #tpu.dot_dimension_numbers<[1], [0], [0], [1], [0, 0, 1, 1], [], []>} : vector<64x8xbf16>, vector<8x8xbf16>, vector<64x8xf32> -> vector<64x8xf32>
    %27 = arith.addf %14, %26 : vector<64x8xf32>
    %c0_27 = arith.constant 0 : index
    %c0_28 = arith.constant 0 : index
    %c2 = arith.constant 2 : index
    %c0_29 = arith.constant 0 : index
    %28 = vector.load %arg1[%c0_27, %c0_28, %c2, %c0_29] : memref<1x10x10x16xbf16, #tpu.memory_space<vmem>>, vector<1x8x8x16xbf16>
    %29 = vector.shape_cast %28 : vector<1x8x8x16xbf16> to vector<8x8x16xbf16>
    %30 = vector.shape_cast %29 : vector<8x8x16xbf16> to vector<64x16xbf16>
    %31 = vector.extract_strided_slice %30 {offsets = [0, 0], sizes = [64, 8], strides = [1, 1]} : vector<64x16xbf16> to vector<64x8xbf16>
    %c2_30 = arith.constant 2 : index
    %c0_31 = arith.constant 0 : index
    %c0_32 = arith.constant 0 : index
    %c0_33 = arith.constant 0 : index
    %32 = vector.load %arg2[%c2_30, %c0_31, %c0_32, %c0_33] : memref<9x2x8x8xbf16, #tpu.memory_space<vmem>>, vector<1x1x8x8xbf16>
    %33 = vector.shape_cast %32 : vector<1x1x8x8xbf16> to vector<8x8xbf16>
    %cst_34 = arith.constant dense<0.000000e+00> : vector<64x8xf32>
    %34 = tpu.matmul %31, %33, %cst_34 {dimension_numbers = #tpu.dot_dimension_numbers<[1], [0], [0], [1], [0, 0, 1, 1], [], []>} : vector<64x8xbf16>, vector<8x8xbf16>, vector<64x8xf32> -> vector<64x8xf32>
    %35 = arith.addf %22, %34 : vector<64x8xf32>
    %36 = vector.extract_strided_slice %30 {offsets = [0, 8], sizes = [64, 8], strides = [1, 1]} : vector<64x16xbf16> to vector<64x8xbf16>
    %c2_35 = arith.constant 2 : index
    %c1_36 = arith.constant 1 : index
    %c0_37 = arith.constant 0 : index
    %c0_38 = arith.constant 0 : index
    %37 = vector.load %arg2[%c2_35, %c1_36, %c0_37, %c0_38] : memref<9x2x8x8xbf16, #tpu.memory_space<vmem>>, vector<1x1x8x8xbf16>
    %38 = vector.shape_cast %37 : vector<1x1x8x8xbf16> to vector<8x8xbf16>
    %cst_39 = arith.constant dense<0.000000e+00> : vector<64x8xf32>
    %39 = tpu.matmul %36, %38, %cst_39 {dimension_numbers = #tpu.dot_dimension_numbers<[1], [0], [0], [1], [0, 0, 1, 1], [], []>} : vector<64x8xbf16>, vector<8x8xbf16>, vector<64x8xf32> -> vector<64x8xf32>
    %40 = arith.addf %27, %39 : vector<64x8xf32>
    %c0_40 = arith.constant 0 : index
    %c1_41 = arith.constant 1 : index
    %c0_42 = arith.constant 0 : index
    %c0_43 = arith.constant 0 : index
    %41 = vector.load %arg1[%c0_40, %c1_41, %c0_42, %c0_43] : memref<1x10x10x16xbf16, #tpu.memory_space<vmem>>, vector<1x8x8x16xbf16>
    %42 = vector.shape_cast %41 : vector<1x8x8x16xbf16> to vector<8x8x16xbf16>
    %43 = vector.shape_cast %42 : vector<8x8x16xbf16> to vector<64x16xbf16>
    %44 = vector.extract_strided_slice %43 {offsets = [0, 0], sizes = [64, 8], strides = [1, 1]} : vector<64x16xbf16> to vector<64x8xbf16>
    %c3 = arith.constant 3 : index
    %c0_44 = arith.constant 0 : index
    %c0_45 = arith.constant 0 : index
    %c0_46 = arith.constant 0 : index
    %45 = vector.load %arg2[%c3, %c0_44, %c0_45, %c0_46] : memref<9x2x8x8xbf16, #tpu.memory_space<vmem>>, vector<1x1x8x8xbf16>
    %46 = vector.shape_cast %45 : vector<1x1x8x8xbf16> to vector<8x8xbf16>
    %cst_47 = arith.constant dense<0.000000e+00> : vector<64x8xf32>
    %47 = tpu.matmul %44, %46, %cst_47 {dimension_numbers = #tpu.dot_dimension_numbers<[1], [0], [0], [1], [0, 0, 1, 1], [], []>} : vector<64x8xbf16>, vector<8x8xbf16>, vector<64x8xf32> -> vector<64x8xf32>
    %48 = arith.addf %35, %47 : vector<64x8xf32>
    %49 = vector.extract_strided_slice %43 {offsets = [0, 8], sizes = [64, 8], strides = [1, 1]} : vector<64x16xbf16> to vector<64x8xbf16>
    %c3_48 = arith.constant 3 : index
    %c1_49 = arith.constant 1 : index
    %c0_50 = arith.constant 0 : index
    %c0_51 = arith.constant 0 : index
    %50 = vector.load %arg2[%c3_48, %c1_49, %c0_50, %c0_51] : memref<9x2x8x8xbf16, #tpu.memory_space<vmem>>, vector<1x1x8x8xbf16>
    %51 = vector.shape_cast %50 : vector<1x1x8x8xbf16> to vector<8x8xbf16>
    %cst_52 = arith.constant dense<0.000000e+00> : vector<64x8xf32>
    %52 = tpu.matmul %49, %51, %cst_52 {dimension_numbers = #tpu.dot_dimension_numbers<[1], [0], [0], [1], [0, 0, 1, 1], [], []>} : vector<64x8xbf16>, vector<8x8xbf16>, vector<64x8xf32> -> vector<64x8xf32>
    %53 = arith.addf %40, %52 : vector<64x8xf32>
    %c0_53 = arith.constant 0 : index
    %c1_54 = arith.constant 1 : index
    %c1_55 = arith.constant 1 : index
    %c0_56 = arith.constant 0 : index
    %54 = vector.load %arg1[%c0_53, %c1_54, %c1_55, %c0_56] : memref<1x10x10x16xbf16, #tpu.memory_space<vmem>>, vector<1x8x8x16xbf16>
    %55 = vector.shape_cast %54 : vector<1x8x8x16xbf16> to vector<8x8x16xbf16>
    %56 = vector.shape_cast %55 : vector<8x8x16xbf16> to vector<64x16xbf16>
    %57 = vector.extract_strided_slice %56 {offsets = [0, 0], sizes = [64, 8], strides = [1, 1]} : vector<64x16xbf16> to vector<64x8xbf16>
    %c4 = arith.constant 4 : index
    %c0_57 = arith.constant 0 : index
    %c0_58 = arith.constant 0 : index
    %c0_59 = arith.constant 0 : index
    %58 = vector.load %arg2[%c4, %c0_57, %c0_58, %c0_59] : memref<9x2x8x8xbf16, #tpu.memory_space<vmem>>, vector<1x1x8x8xbf16>
    %59 = vector.shape_cast %58 : vector<1x1x8x8xbf16> to vector<8x8xbf16>
    %cst_60 = arith.constant dense<0.000000e+00> : vector<64x8xf32>
    %60 = tpu.matmul %57, %59, %cst_60 {dimension_numbers = #tpu.dot_dimension_numbers<[1], [0], [0], [1], [0, 0, 1, 1], [], []>} : vector<64x8xbf16>, vector<8x8xbf16>, vector<64x8xf32> -> vector<64x8xf32>
    %61 = arith.addf %48, %60 : vector<64x8xf32>
    %62 = vector.extract_strided_slice %56 {offsets = [0, 8], sizes = [64, 8], strides = [1, 1]} : vector<64x16xbf16> to vector<64x8xbf16>
    %c4_61 = arith.constant 4 : index
    %c1_62 = arith.constant 1 : index
    %c0_63 = arith.constant 0 : index
    %c0_64 = arith.constant 0 : index
    %63 = vector.load %arg2[%c4_61, %c1_62, %c0_63, %c0_64] : memref<9x2x8x8xbf16, #tpu.memory_space<vmem>>, vector<1x1x8x8xbf16>
    %64 = vector.shape_cast %63 : vector<1x1x8x8xbf16> to vector<8x8xbf16>
    %cst_65 = arith.constant dense<0.000000e+00> : vector<64x8xf32>
    %65 = tpu.matmul %62, %64, %cst_65 {dimension_numbers = #tpu.dot_dimension_numbers<[1], [0], [0], [1], [0, 0, 1, 1], [], []>} : vector<64x8xbf16>, vector<8x8xbf16>, vector<64x8xf32> -> vector<64x8xf32>
    %66 = arith.addf %53, %65 : vector<64x8xf32>
    %c0_66 = arith.constant 0 : index
    %c1_67 = arith.constant 1 : index
    %c2_68 = arith.constant 2 : index
    %c0_69 = arith.constant 0 : index
    %67 = vector.load %arg1[%c0_66, %c1_67, %c2_68, %c0_69] : memref<1x10x10x16xbf16, #tpu.memory_space<vmem>>, vector<1x8x8x16xbf16>
    %68 = vector.shape_cast %67 : vector<1x8x8x16xbf16> to vector<8x8x16xbf16>
    %69 = vector.shape_cast %68 : vector<8x8x16xbf16> to vector<64x16xbf16>
    %70 = vector.extract_strided_slice %69 {offsets = [0, 0], sizes = [64, 8], strides = [1, 1]} : vector<64x16xbf16> to vector<64x8xbf16>
    %c5 = arith.constant 5 : index
    %c0_70 = arith.constant 0 : index
    %c0_71 = arith.constant 0 : index
    %c0_72 = arith.constant 0 : index
    %71 = vector.load %arg2[%c5, %c0_70, %c0_71, %c0_72] : memref<9x2x8x8xbf16, #tpu.memory_space<vmem>>, vector<1x1x8x8xbf16>
    %72 = vector.shape_cast %71 : vector<1x1x8x8xbf16> to vector<8x8xbf16>
    %cst_73 = arith.constant dense<0.000000e+00> : vector<64x8xf32>
    %73 = tpu.matmul %70, %72, %cst_73 {dimension_numbers = #tpu.dot_dimension_numbers<[1], [0], [0], [1], [0, 0, 1, 1], [], []>} : vector<64x8xbf16>, vector<8x8xbf16>, vector<64x8xf32> -> vector<64x8xf32>
    %74 = arith.addf %61, %73 : vector<64x8xf32>
    %75 = vector.extract_strided_slice %69 {offsets = [0, 8], sizes = [64, 8], strides = [1, 1]} : vector<64x16xbf16> to vector<64x8xbf16>
    %c5_74 = arith.constant 5 : index
    %c1_75 = arith.constant 1 : index
    %c0_76 = arith.constant 0 : index
    %c0_77 = arith.constant 0 : index
    %76 = vector.load %arg2[%c5_74, %c1_75, %c0_76, %c0_77] : memref<9x2x8x8xbf16, #tpu.memory_space<vmem>>, vector<1x1x8x8xbf16>
    %77 = vector.shape_cast %76 : vector<1x1x8x8xbf16> to vector<8x8xbf16>
    %cst_78 = arith.constant dense<0.000000e+00> : vector<64x8xf32>
    %78 = tpu.matmul %75, %77, %cst_78 {dimension_numbers = #tpu.dot_dimension_numbers<[1], [0], [0], [1], [0, 0, 1, 1], [], []>} : vector<64x8xbf16>, vector<8x8xbf16>, vector<64x8xf32> -> vector<64x8xf32>
    %79 = arith.addf %66, %78 : vector<64x8xf32>
    %c0_79 = arith.constant 0 : index
    %c2_80 = arith.constant 2 : index
    %c0_81 = arith.constant 0 : index
    %c0_82 = arith.constant 0 : index
    %80 = vector.load %arg1[%c0_79, %c2_80, %c0_81, %c0_82] : memref<1x10x10x16xbf16, #tpu.memory_space<vmem>>, vector<1x8x8x16xbf16>
    %81 = vector.shape_cast %80 : vector<1x8x8x16xbf16> to vector<8x8x16xbf16>
    %82 = vector.shape_cast %81 : vector<8x8x16xbf16> to vector<64x16xbf16>
    %83 = vector.extract_strided_slice %82 {offsets = [0, 0], sizes = [64, 8], strides = [1, 1]} : vector<64x16xbf16> to vector<64x8xbf16>
    %c6 = arith.constant 6 : index
    %c0_83 = arith.constant 0 : index
    %c0_84 = arith.constant 0 : index
    %c0_85 = arith.constant 0 : index
    %84 = vector.load %arg2[%c6, %c0_83, %c0_84, %c0_85] : memref<9x2x8x8xbf16, #tpu.memory_space<vmem>>, vector<1x1x8x8xbf16>
    %85 = vector.shape_cast %84 : vector<1x1x8x8xbf16> to vector<8x8xbf16>
    %cst_86 = arith.constant dense<0.000000e+00> : vector<64x8xf32>
    %86 = tpu.matmul %83, %85, %cst_86 {dimension_numbers = #tpu.dot_dimension_numbers<[1], [0], [0], [1], [0, 0, 1, 1], [], []>} : vector<64x8xbf16>, vector<8x8xbf16>, vector<64x8xf32> -> vector<64x8xf32>
    %87 = arith.addf %74, %86 : vector<64x8xf32>
    %88 = vector.extract_strided_slice %82 {offsets = [0, 8], sizes = [64, 8], strides = [1, 1]} : vector<64x16xbf16> to vector<64x8xbf16>
    %c6_87 = arith.constant 6 : index
    %c1_88 = arith.constant 1 : index
    %c0_89 = arith.constant 0 : index
    %c0_90 = arith.constant 0 : index
    %89 = vector.load %arg2[%c6_87, %c1_88, %c0_89, %c0_90] : memref<9x2x8x8xbf16, #tpu.memory_space<vmem>>, vector<1x1x8x8xbf16>
    %90 = vector.shape_cast %89 : vector<1x1x8x8xbf16> to vector<8x8xbf16>
    %cst_91 = arith.constant dense<0.000000e+00> : vector<64x8xf32>
    %91 = tpu.matmul %88, %90, %cst_91 {dimension_numbers = #tpu.dot_dimension_numbers<[1], [0], [0], [1], [0, 0, 1, 1], [], []>} : vector<64x8xbf16>, vector<8x8xbf16>, vector<64x8xf32> -> vector<64x8xf32>
    %92 = arith.addf %79, %91 : vector<64x8xf32>
    %c0_92 = arith.constant 0 : index
    %c2_93 = arith.constant 2 : index
    %c1_94 = arith.constant 1 : index
    %c0_95 = arith.constant 0 : index
    %93 = vector.load %arg1[%c0_92, %c2_93, %c1_94, %c0_95] : memref<1x10x10x16xbf16, #tpu.memory_space<vmem>>, vector<1x8x8x16xbf16>
    %94 = vector.shape_cast %93 : vector<1x8x8x16xbf16> to vector<8x8x16xbf16>
    %95 = vector.shape_cast %94 : vector<8x8x16xbf16> to vector<64x16xbf16>
    %96 = vector.extract_strided_slice %95 {offsets = [0, 0], sizes = [64, 8], strides = [1, 1]} : vector<64x16xbf16> to vector<64x8xbf16>
    %c7 = arith.constant 7 : index
    %c0_96 = arith.constant 0 : index
    %c0_97 = arith.constant 0 : index
    %c0_98 = arith.constant 0 : index
    %97 = vector.load %arg2[%c7, %c0_96, %c0_97, %c0_98] : memref<9x2x8x8xbf16, #tpu.memory_space<vmem>>, vector<1x1x8x8xbf16>
    %98 = vector.shape_cast %97 : vector<1x1x8x8xbf16> to vector<8x8xbf16>
    %cst_99 = arith.constant dense<0.000000e+00> : vector<64x8xf32>
    %99 = tpu.matmul %96, %98, %cst_99 {dimension_numbers = #tpu.dot_dimension_numbers<[1], [0], [0], [1], [0, 0, 1, 1], [], []>} : vector<64x8xbf16>, vector<8x8xbf16>, vector<64x8xf32> -> vector<64x8xf32>
    %100 = arith.addf %87, %99 : vector<64x8xf32>
    %101 = vector.extract_strided_slice %95 {offsets = [0, 8], sizes = [64, 8], strides = [1, 1]} : vector<64x16xbf16> to vector<64x8xbf16>
    %c7_100 = arith.constant 7 : index
    %c1_101 = arith.constant 1 : index
    %c0_102 = arith.constant 0 : index
    %c0_103 = arith.constant 0 : index
    %102 = vector.load %arg2[%c7_100, %c1_101, %c0_102, %c0_103] : memref<9x2x8x8xbf16, #tpu.memory_space<vmem>>, vector<1x1x8x8xbf16>
    %103 = vector.shape_cast %102 : vector<1x1x8x8xbf16> to vector<8x8xbf16>
    %cst_104 = arith.constant dense<0.000000e+00> : vector<64x8xf32>
    %104 = tpu.matmul %101, %103, %cst_104 {dimension_numbers = #tpu.dot_dimension_numbers<[1], [0], [0], [1], [0, 0, 1, 1], [], []>} : vector<64x8xbf16>, vector<8x8xbf16>, vector<64x8xf32> -> vector<64x8xf32>
    %105 = arith.addf %92, %104 : vector<64x8xf32>
    %c0_105 = arith.constant 0 : index
    %c2_106 = arith.constant 2 : index
    %c2_107 = arith.constant 2 : index
    %c0_108 = arith.constant 0 : index
    %106 = vector.load %arg1[%c0_105, %c2_106, %c2_107, %c0_108] : memref<1x10x10x16xbf16, #tpu.memory_space<vmem>>, vector<1x8x8x16xbf16>
    %107 = vector.shape_cast %106 : vector<1x8x8x16xbf16> to vector<8x8x16xbf16>
    %108 = vector.shape_cast %107 : vector<8x8x16xbf16> to vector<64x16xbf16>
    %109 = vector.extract_strided_slice %108 {offsets = [0, 0], sizes = [64, 8], strides = [1, 1]} : vector<64x16xbf16> to vector<64x8xbf16>
    %c8 = arith.constant 8 : index
    %c0_109 = arith.constant 0 : index
    %c0_110 = arith.constant 0 : index
    %c0_111 = arith.constant 0 : index
    %110 = vector.load %arg2[%c8, %c0_109, %c0_110, %c0_111] : memref<9x2x8x8xbf16, #tpu.memory_space<vmem>>, vector<1x1x8x8xbf16>
    %111 = vector.shape_cast %110 : vector<1x1x8x8xbf16> to vector<8x8xbf16>
    %cst_112 = arith.constant dense<0.000000e+00> : vector<64x8xf32>
    %112 = tpu.matmul %109, %111, %cst_112 {dimension_numbers = #tpu.dot_dimension_numbers<[1], [0], [0], [1], [0, 0, 1, 1], [], []>} : vector<64x8xbf16>, vector<8x8xbf16>, vector<64x8xf32> -> vector<64x8xf32>
    %113 = arith.addf %100, %112 : vector<64x8xf32>
    %114 = vector.extract_strided_slice %108 {offsets = [0, 8], sizes = [64, 8], strides = [1, 1]} : vector<64x16xbf16> to vector<64x8xbf16>
    %c8_113 = arith.constant 8 : index
    %c1_114 = arith.constant 1 : index
    %c0_115 = arith.constant 0 : index
    %c0_116 = arith.constant 0 : index
    %115 = vector.load %arg2[%c8_113, %c1_114, %c0_115, %c0_116] : memref<9x2x8x8xbf16, #tpu.memory_space<vmem>>, vector<1x1x8x8xbf16>
    %116 = vector.shape_cast %115 : vector<1x1x8x8xbf16> to vector<8x8xbf16>
    %cst_117 = arith.constant dense<0.000000e+00> : vector<64x8xf32>
    %117 = tpu.matmul %114, %116, %cst_117 {dimension_numbers = #tpu.dot_dimension_numbers<[1], [0], [0], [1], [0, 0, 1, 1], [], []>} : vector<64x8xbf16>, vector<8x8xbf16>, vector<64x8xf32> -> vector<64x8xf32>
    %118 = arith.addf %105, %117 : vector<64x8xf32>
    %119 = tpu.concatenate %113, %118 in 1 : vector<64x8xf32>, vector<64x8xf32> -> vector<64x16xf32>
    %c0_118 = arith.constant 0 : index
    %c0_119 = arith.constant 0 : index
    %120 = vector.load %arg3[%c0_118, %c0_119] : memref<1x16xf32, #tpu.memory_space<vmem>>, vector<1x16xf32>
    %121 = vector.broadcast %120 : vector<1x16xf32> to vector<64x16xf32>
    %122 = arith.mulf %119, %121 : vector<64x16xf32>
    %c0_120 = arith.constant 0 : index
    %c0_121 = arith.constant 0 : index
    %123 = vector.load %arg4[%c0_120, %c0_121] : memref<1x16xf32, #tpu.memory_space<vmem>>, vector<1x16xf32>
    %124 = vector.broadcast %123 : vector<1x16xf32> to vector<64x16xf32>
    %125 = arith.addf %122, %124 : vector<64x16xf32>
    %cst_122 = arith.constant 0.000000e+00 : f32
    %126 = vector.broadcast %cst_122 : f32 to vector<64x16xf32>
    %127 = arith.maximumf %125, %126 : vector<64x16xf32>
    %cst_123 = arith.constant dense<0.000000e+00> : vector<16xf32>
    %128 = vector.multi_reduction <add>, %127, %cst_123 [0] : vector<64x16xf32> to vector<16xf32>
    %129 = vector.shape_cast %128 : vector<16xf32> to vector<1x16xf32>
    %cst_124 = arith.constant 1.562500e-02 : f32
    %130 = vector.broadcast %cst_124 : f32 to vector<1x16xf32>
    %131 = arith.mulf %129, %130 : vector<1x16xf32>
    %c0_125 = arith.constant 0 : index
    %c0_126 = arith.constant 0 : index
    %132 = vector.load %arg5[%c0_125, %c0_126] : memref<16x4xf32, #tpu.memory_space<vmem>>, vector<16x4xf32>
    %cst_127 = arith.constant dense<0.000000e+00> : vector<1x4xf32>
    %133 = tpu.matmul %131, %132, %cst_127 {dimension_numbers = #tpu.dot_dimension_numbers<[1], [0], [0], [1], [0, 0, 1, 1], [], []>} : vector<1x16xf32>, vector<16x4xf32>, vector<1x4xf32> -> vector<1x4xf32>
    %c0_128 = arith.constant 0 : index
    %c0_129 = arith.constant 0 : index
    %134 = vector.load %arg6[%c0_128, %c0_129] : memref<1x4xf32, #tpu.memory_space<vmem>>, vector<1x4xf32>
    %135 = arith.addf %133, %134 : vector<1x4xf32>
    %cst_130 = arith.constant 0.000000e+00 : f32
    %136 = vector.broadcast %cst_130 : f32 to vector<1x4xf32>
    %137 = arith.maximumf %135, %136 : vector<1x4xf32>
    %c0_131 = arith.constant 0 : index
    %c0_132 = arith.constant 0 : index
    %138 = vector.load %arg7[%c0_131, %c0_132] : memref<4x16xf32, #tpu.memory_space<vmem>>, vector<4x16xf32>
    %cst_133 = arith.constant dense<0.000000e+00> : vector<1x16xf32>
    %139 = tpu.matmul %137, %138, %cst_133 {dimension_numbers = #tpu.dot_dimension_numbers<[1], [0], [0], [1], [0, 0, 1, 1], [], []>} : vector<1x4xf32>, vector<4x16xf32>, vector<1x16xf32> -> vector<1x16xf32>
    %c0_134 = arith.constant 0 : index
    %c0_135 = arith.constant 0 : index
    %140 = vector.load %arg8[%c0_134, %c0_135] : memref<1x16xf32, #tpu.memory_space<vmem>>, vector<1x16xf32>
    %141 = arith.addf %139, %140 : vector<1x16xf32>
    %cst_136 = arith.constant 0.000000e+00 : f32
    %142 = vector.broadcast %cst_136 : f32 to vector<1x16xf32>
    %143 = arith.subf %142, %141 : vector<1x16xf32>
    %144 = math.exp %143 : vector<1x16xf32>
    %cst_137 = arith.constant 1.000000e+00 : f32
    %145 = vector.broadcast %cst_137 : f32 to vector<1x16xf32>
    %146 = arith.addf %145, %144 : vector<1x16xf32>
    %147 = tpu.reciprocal %146 {approx = true} : vector<1x16xf32> -> vector<1x16xf32>
    %148 = vector.broadcast %147 : vector<1x16xf32> to vector<64x16xf32>
    %149 = arith.mulf %127, %148 : vector<64x16xf32>
    %150 = vector.shape_cast %149 : vector<64x16xf32> to vector<1x64x16xf32>
    %151 = arith.truncf %150 : vector<1x64x16xf32> to vector<1x64x16xbf16>
    %c0_138 = arith.constant 0 : index
    %c0_139 = arith.constant 0 : index
    %c0_140 = arith.constant 0 : index
    %152 = vector.load %arg9[%c0_138, %c0_139, %c0_140] : memref<1x64x16xbf16, #tpu.memory_space<vmem>>, vector<1x64x16xbf16>
    tpu.vector_store %arg9[%c0_138, %c0_139, %c0_140], %151 {strides = array<i32>} : memref<1x64x16xbf16, #tpu.memory_space<vmem>>, vector<1x64x16xbf16>,
    return
  }
  func.func @transform_0(%arg0: i32) -> (i32, i32, i32, i32) {
    %c0_i32 = arith.constant 0 : i32
    %c0_i32_0 = arith.constant 0 : i32
    %c0_i32_1 = arith.constant 0 : i32
    %c0_i32_2 = arith.constant 0 : i32
    return %arg0, %c0_i32, %c0_i32_0, %c0_i32_1 : i32, i32, i32, i32
  }
  func.func @transform_1(%arg0: i32) -> (i32, i32, i32, i32) {
    %c0_i32 = arith.constant 0 : i32
    %c0_i32_0 = arith.constant 0 : i32
    %c0_i32_1 = arith.constant 0 : i32
    %c0_i32_2 = arith.constant 0 : i32
    %c0_i32_3 = arith.constant 0 : i32
    return %c0_i32, %c0_i32_0, %c0_i32_1, %c0_i32_2 : i32, i32, i32, i32
  }
  func.func @transform_2(%arg0: i32) -> (i32, i32) {
    %c0_i32 = arith.constant 0 : i32
    %c0_i32_0 = arith.constant 0 : i32
    %c0_i32_1 = arith.constant 0 : i32
    return %c0_i32, %c0_i32_0 : i32, i32
  }
  func.func @transform_3(%arg0: i32) -> (i32, i32) {
    %c0_i32 = arith.constant 0 : i32
    %c0_i32_0 = arith.constant 0 : i32
    %c0_i32_1 = arith.constant 0 : i32
    return %c0_i32, %c0_i32_0 : i32, i32
  }
  func.func @transform_4(%arg0: i32) -> (i32, i32) {
    %c0_i32 = arith.constant 0 : i32
    %c0_i32_0 = arith.constant 0 : i32
    %c0_i32_1 = arith.constant 0 : i32
    return %c0_i32, %c0_i32_0 : i32, i32
  }
  func.func @transform_5(%arg0: i32) -> (i32, i32) {
    %c0_i32 = arith.constant 0 : i32
    %c0_i32_0 = arith.constant 0 : i32
    %c0_i32_1 = arith.constant 0 : i32
    return %c0_i32, %c0_i32_0 : i32, i32
  }
  func.func @transform_6(%arg0: i32) -> (i32, i32) {
    %c0_i32 = arith.constant 0 : i32
    %c0_i32_0 = arith.constant 0 : i32
    %c0_i32_1 = arith.constant 0 : i32
    return %c0_i32, %c0_i32_0 : i32, i32
  }
  func.func @transform_7(%arg0: i32) -> (i32, i32) {
    %c0_i32 = arith.constant 0 : i32
    %c0_i32_0 = arith.constant 0 : i32
    %c0_i32_1 = arith.constant 0 : i32
    return %c0_i32, %c0_i32_0 : i32, i32
  }
  func.func @transform_8(%arg0: i32) -> (i32, i32, i32) {
    %c0_i32 = arith.constant 0 : i32
    %c0_i32_0 = arith.constant 0 : i32
    %c0_i32_1 = arith.constant 0 : i32
    return %arg0, %c0_i32, %c0_i32_0 : i32, i32, i32
  }
}

</mosaic_0001>

<llo_original>
// kernel: _lambda_.6
$region0: #{_lambda_.6}
  #allocation0 [shape = 'u32[]', space=smem, size = 0x4, offset = 0x4, fixed_abs, tag = 'smem constant byte address 0x4 - core index']
  #allocation1 [shape = 'u32[144,128]{1,0:T(1,128)}', space=vmem, size = 0x12000, scoped, tag = 'internal scratch']
  %s0 = inlined_call_operand.vmem [shape: bf16[512,8], index: 0, kind: input, shape index: {}]
  %s1 = inlined_call_operand.vmem [shape: bf16[8,16], index: 1, kind: input, shape index: {}]
  %s2 = inlined_call_operand.vmem [shape: f32[1,16], index: 2, kind: input, shape index: {}]
  %s3 = inlined_call_operand.vmem [shape: f32[1,16], index: 3, kind: input, shape index: {}]
  %s4 = inlined_call_operand.vmem [shape: bf16[512,16], index: 4, kind: output, shape index: {}]
  %s5 = sld [smem:[#allocation0]]
  $region49: #{_lambda_.6} parent=0
    _
  %s7 = ssub.s32 1, %s5
  %s8 = scalar_select 0, %s7, %s5
  loop: start=0, step=1, limit=4
  $region2: #{_lambda_.6} parent=0 // loop_pre_header
    _
  $region3: #{_lambda_.6} parent=0 // loop_header
    %s10 = sphi 0, %s14
    %p11 = scmp.ge.s32.totalorder %s10, 4
    %s20 = sphi 0, %s22
    %s23 = sphi 0, %s20
    %s24 = sphi 0, %s23
    %s40 = sphi 0, %s24
    %s44 = sphi 0, %s44
    %s46 = sphi 0, %s44
    %s47 = sphi 0, %s46
    %s61 = sphi 0, %s47
    %s65 = sphi 0, %s65
    %s67 = sphi 0, %s65
    %s68 = sphi 0, %s67
    %s82 = sphi 0, %s68
    %s86 = sphi 0, %s86
    %s88 = sphi 0, %s86
    %s89 = sphi 0, %s88
    %s103 = sphi 0, %s89
    %s109 = sphi 0, %s111
    %s112 = sphi 0, %s109
    %s113 = sphi 0, %s112
    %s129 = sphi 0, %s113
  $region4: #{_lambda_.6} parent=0 // loop_header_branch
    %13 = sbr.rel (%p11) target = $region8
  $region5: #{_lambda_.6} parent=0 // loop_body
    %s15 = ssub.s32 %s10, 1
    %s16 = ssub.s32 %s10, 2
    %s17 = sadd.s32 %s10, 1
    %s18 = ssub.s32 %s10, %s17
    %p19 = scmp.eq.s32.totalorder %s18, 0
    %s21 = sadd.s32 %s20, 1
    %s22 = scalar_select %p19, %s20, %s21
    %p25 = pneg %p19
    %p26 = scmp.eq.s32.totalorder %s10, 1
    %p27 = por %p25, %p26
    %p28 = scmp.ne.s32.totalorder %s20, %s23
    %p29 = scmp.eq.s32.totalorder %s10, 0
    %p30 = por %p28, %p29
    %p31 = scmp.ne.s32.totalorder %s20, %s23
    %p32 = scmp.eq.s32.totalorder %s15, 1
    %p33 = por %p31, %p32
    %p34 = scmp.ne.s32.totalorder %s23, %s24
    %p35 = scmp.eq.s32.totalorder %s15, 0
    %p36 = por %p34, %p35
    %p37 = scmp.ne.s32.totalorder %s23, %s24
    %p38 = scmp.eq.s32.totalorder %s16, 1
    %p39 = por %p37, %p38
    %p41 = scmp.ne.s32.totalorder %s24, %s40
    %p42 = scmp.eq.s32.totalorder %s16, 0
    %p43 = por %p41, %p42
    %s45 = sadd.s32 %s44, 1
    %p48 = scmp.eq.s32.totalorder %s10, 1
    %p49 = scmp.ne.s32.totalorder %s44, %s46
    %p50 = scmp.eq.s32.totalorder %s10, 0
    %p51 = por %p49, %p50
    %p52 = scmp.ne.s32.totalorder %s44, %s46
    %p53 = scmp.eq.s32.totalorder %s15, 1
    %p54 = por %p52, %p53
    %p55 = scmp.ne.s32.totalorder %s46, %s47
    %p56 = scmp.eq.s32.totalorder %s15, 0
    %p57 = por %p55, %p56
    %p58 = scmp.ne.s32.totalorder %s46, %s47
    %p59 = scmp.eq.s32.totalorder %s16, 1
    %p60 = por %p58, %p59
    %p62 = scmp.ne.s32.totalorder %s47, %s61
    %p63 = scmp.eq.s32.totalorder %s16, 0
    %p64 = por %p62, %p63
    %s66 = sadd.s32 %s65, 1
    %p69 = scmp.eq.s32.totalorder %s10, 1
    %p70 = scmp.ne.s32.totalorder %s65, %s67
    %p71 = scmp.eq.s32.totalorder %s10, 0
    %p72 = por %p70, %p71
    %p73 = scmp.ne.s32.totalorder %s65, %s67
    %p74 = scmp.eq.s32.totalorder %s15, 1
    %p75 = por %p73, %p74
    %p76 = scmp.ne.s32.totalorder %s67, %s68
    %p77 = scmp.eq.s32.totalorder %s15, 0
    %p78 = por %p76, %p77
    %p79 = scmp.ne.s32.totalorder %s67, %s68
    %p80 = scmp.eq.s32.totalorder %s16, 1
    %p81 = por %p79, %p80
    %p83 = scmp.ne.s32.totalorder %s68, %s82
    %p84 = scmp.eq.s32.totalorder %s16, 0
    %p85 = por %p83, %p84
    %s87 = sadd.s32 %s86, 1
    %p90 = scmp.eq.s32.totalorder %s10, 1
    %p91 = scmp.ne.s32.totalorder %s86, %s88
    %p92 = scmp.eq.s32.totalorder %s10, 0
    %p93 = por %p91, %p92
    %p94 = scmp.ne.s32.totalorder %s86, %s88
    %p95 = scmp.eq.s32.totalorder %s15, 1
    %p96 = por %p94, %p95
    %p97 = scmp.ne.s32.totalorder %s88, %s89
    %p98 = scmp.eq.s32.totalorder %s15, 0
    %p99 = por %p97, %p98
    %p100 = scmp.ne.s32.totalorder %s88, %s89
    %p101 = scmp.eq.s32.totalorder %s16, 1
    %p102 = por %p100, %p101
    %p104 = scmp.ne.s32.totalorder %s89, %s103
    %p105 = scmp.eq.s32.totalorder %s16, 0
    %p106 = por %p104, %p105
    %s107 = ssub.s32 %s10, %s17
    %p108 = scmp.eq.s32.totalorder %s107, 0
    %s110 = sadd.s32 %s109, 1
    %s111 = scalar_select %p108, %s109, %s110
    %p114 = pneg %p108
    %p115 = scmp.eq.s32.totalorder %s10, 1
    %p116 = por %p114, %p115
    %p117 = scmp.ne.s32.totalorder %s109, %s112
    %p118 = scmp.eq.s32.totalorder %s10, 0
    %p119 = por %p117, %p118
    %p120 = scmp.ne.s32.totalorder %s109, %s112
    %p121 = scmp.eq.s32.totalorder %s15, 1
    %p122 = por %p120, %p121
    %p123 = scmp.ne.s32.totalorder %s112, %s113
    %p124 = scmp.eq.s32.totalorder %s15, 0
    %p125 = por %p123, %p124
    %p126 = scmp.ne.s32.totalorder %s112, %s113
    %p127 = scmp.eq.s32.totalorder %s16, 1
    %p128 = por %p126, %p127
    %p130 = scmp.ne.s32.totalorder %s113, %s129
    %p131 = scmp.eq.s32.totalorder %s16, 0
    %p132 = por %p130, %p131
    %p133 = scmp.le.s32.totalorder 1, %s10
    %p134 = scmp.lt.s32.totalorder %s10, 3
    %p135 = pnand %p133, %p134
    %p136 = pneg %p135
    // Predicated region
    $region9: #{_lambda_.6} parent=5 // pred_check
      _
    $region10: #{_lambda_.6} parent=5 // pred_check_branch
      %138 = sbr.rel (%p135) target = $region12
    $region11: #{_lambda_.6} parent=5 // pred_region
      %s139 = ssub.s32 %s10, 1
      // Predicated region
      $region13: #{_lambda_.6} parent=11 // pred_check
        %p140 = pneg %p57
      $region14: #{_lambda_.6} parent=11 // pred_check_branch
        %142 = sbr.rel (%p140) target = $region16
      $region15: #{_lambda_.6} parent=11 // pred_region
        _
      $region16: #{_lambda_.6} parent=11 // pred_fallthru
        _
      // Predicated region
      $region17: #{_lambda_.6} parent=11 // pred_check
        %p143 = pneg %p78
      $region18: #{_lambda_.6} parent=11 // pred_check_branch
        %145 = sbr.rel (%p143) target = $region20
      $region19: #{_lambda_.6} parent=11 // pred_region
        _
      $region20: #{_lambda_.6} parent=11 // pred_fallthru
        _
      // Predicated region
      $region21: #{_lambda_.6} parent=11 // pred_check
        %p146 = pneg %p99
      $region22: #{_lambda_.6} parent=11 // pred_check_branch
        %148 = sbr.rel (%p146) target = $region24
      $region23: #{_lambda_.6} parent=11 // pred_region
        _
      $region24: #{_lambda_.6} parent=11 // pred_fallthru
        _
    $region12: #{_lambda_.6} parent=5 // pred_fallthru
      _
    %p149 = scmp.lt.s32.totalorder %s10, 2
    // Predicated region
    $region25: #{_lambda_.6} parent=5 // pred_check
      %p150 = pneg %p149
    $region26: #{_lambda_.6} parent=5 // pred_check_branch
      %152 = sbr.rel (%p150) target = $region28
    $region27: #{_lambda_.6} parent=5 // pred_region
      // Predicated region
      $region29: #{_lambda_.6} parent=27 // pred_check
        %p153 = pneg %p30
      $region30: #{_lambda_.6} parent=27 // pred_check_branch
        %155 = sbr.rel (%p153) target = $region32
      $region31: #{_lambda_.6} parent=27 // pred_region
        %s156 = smul.u32 32, %s10
        %p157 = scmp.lt.s32.totalorder %s156, 63
        %s158 = scalar_select %p157, %s156, 63
        %s159 = smul.addr %s158, 4
        %s160 = scalar_lea.vmem %s0, %s159
        %s161 = smul.u32 32, %s10
      $region32: #{_lambda_.6} parent=27 // pred_fallthru
        _
    $region28: #{_lambda_.6} parent=5 // pred_fallthru
      _
    %p162 = scmp.le.s32.totalorder 1, %s10
    %p163 = scmp.lt.s32.totalorder %s10, 3
    %p164 = pnand %p162, %p163
    %p165 = pneg %p164
    // Predicated region
    $region33: #{_lambda_.6} parent=5 // pred_check
      _
    $region34: #{_lambda_.6} parent=5 // pred_check_branch
      %167 = sbr.rel (%p164) target = $region36
    $region35: #{_lambda_.6} parent=5 // pred_region
      %s168 = ssub.s32 %s10, 1
      %s169 = smul.u32 32, %s15
      %p170 = scmp.lt.s32.totalorder %s169, 63
      %s171 = scalar_select %p170, %s169, 63
      %s172 = smul.addr %s171, 4
      %s173 = scalar_lea.vmem %s0, %s172
      %p174 = pneg %p36
      %p175 = pneg %p33
      %p176 = pneg %p57
      %p177 = pneg %p54
      %p178 = pneg %p78
      %p179 = pneg %p75
      %p180 = pneg %p99
      %p181 = pneg %p96
      %p182 = pneg %p125
      %p183 = pneg %p122
      %s184 = smul.u32 32, %s15
      %p185 = scmp.lt.s32.totalorder %s184, 63
      %s186 = scalar_select %p185, %s184, 63
      %s187 = smul.addr %s186, 4
      %s188 = scalar_lea.vmem %s4, %s187
      %s189 = smul.u32 32, %s15
      %p190 = scmp.lt.s32.totalorder %s189, 63
      %s191 = scalar_select %p190, %s189, 63
      %s192 = smul.addr %s191, 4
      %s193 = scalar_lea.vmem %s0, %s192
      %s194 = smul.u32 32, %s15
      %s195 = smul.u32 32, %s15
      %p196 = scmp.lt.s32.totalorder %s195, 63
      %s197 = scalar_select %p196, %s195, 63
      %s198 = smul.addr %s197, 4
      %s199 = scalar_lea.vmem %s4, %s198
      %s200 = smul.u32 32, %s15
      %v202 = vld [vmem:[%s193] sm:$0xf]
      %v203 = vld [vmem:[%s193 + $0x4] sm:$0xf]
      %v204 = vld [vmem:[%s193 + $0x8] sm:$0xf]
      %v205 = vld [vmem:[%s193 + $0xc] sm:$0xf]
      %v206 = vld [vmem:[%s193 + $0x10] sm:$0xf]
      %v207 = vld [vmem:[%s193 + $0x14] sm:$0xf]
      %v208 = vld [vmem:[%s193 + $0x18] sm:$0xf]
      %v209 = vld [vmem:[%s193 + $0x1c] sm:$0xf]
      %v210 = vld [vmem:[%s193 + $0x20] sm:$0xf]
      %v211 = vld [vmem:[%s193 + $0x24] sm:$0xf]
      %v212 = vld [vmem:[%s193 + $0x28] sm:$0xf]
      %v213 = vld [vmem:[%s193 + $0x2c] sm:$0xf]
      %v214 = vld [vmem:[%s193 + $0x30] sm:$0xf]
      %v215 = vld [vmem:[%s193 + $0x34] sm:$0xf]
      %v216 = vld [vmem:[%s193 + $0x38] sm:$0xf]
      %v217 = vld [vmem:[%s193 + $0x3c] sm:$0xf]
      %v218 = vld [vmem:[%s193 + $0x40] sm:$0xf]
      %v219 = vld [vmem:[%s193 + $0x44] sm:$0xf]
      %v220 = vld [vmem:[%s193 + $0x48] sm:$0xf]
      %v221 = vld [vmem:[%s193 + $0x4c] sm:$0xf]
      %v222 = vld [vmem:[%s193 + $0x50] sm:$0xf]
      %v223 = vld [vmem:[%s193 + $0x54] sm:$0xf]
      %v224 = vld [vmem:[%s193 + $0x58] sm:$0xf]
      %v225 = vld [vmem:[%s193 + $0x5c] sm:$0xf]
      %v226 = vld [vmem:[%s193 + $0x60] sm:$0xf]
      %v227 = vld [vmem:[%s193 + $0x64] sm:$0xf]
      %v228 = vld [vmem:[%s193 + $0x68] sm:$0xf]
      %v229 = vld [vmem:[%s193 + $0x6c] sm:$0xf]
      %v230 = vld [vmem:[%s193 + $0x70] sm:$0xf]
      %v231 = vld [vmem:[%s193 + $0x74] sm:$0xf]
      %v232 = vld [vmem:[%s193 + $0x78] sm:$0xf]
      %v233 = vld [vmem:[%s193 + $0x7c] sm:$0xf]
      %v234 = vld [vmem:[%s1] sm:$0xf]
      %v267 = vunpack.c.l.b16 %v202
      %v268 = vunpack.c.l.b16 %v203
      %v269 = vunpack.c.l.b16 %v204
      %v270 = vunpack.c.l.b16 %v205
      %v271 = vunpack.c.l.b16 %v206
      %v272 = vunpack.c.l.b16 %v207
      %v273 = vunpack.c.l.b16 %v208
      %v274 = vunpack.c.l.b16 %v209
      %v275 = vunpack.c.l.b16 %v210
      %v276 = vunpack.c.l.b16 %v211
      %v277 = vunpack.c.l.b16 %v212
      %v278 = vunpack.c.l.b16 %v213
      %v279 = vunpack.c.l.b16 %v214
      %v280 = vunpack.c.l.b16 %v215
      %v281 = vunpack.c.l.b16 %v216
      %v282 = vunpack.c.l.b16 %v217
      %v283 = vunpack.c.l.b16 %v218
      %v284 = vunpack.c.l.b16 %v219
      %v285 = vunpack.c.l.b16 %v220
      %v286 = vunpack.c.l.b16 %v221
      %v287 = vunpack.c.l.b16 %v222
      %v288 = vunpack.c.l.b16 %v223
      %v289 = vunpack.c.l.b16 %v224
      %v290 = vunpack.c.l.b16 %v225
      %v291 = vunpack.c.l.b16 %v226
      %v292 = vunpack.c.l.b16 %v227
      %v293 = vunpack.c.l.b16 %v228
      %v294 = vunpack.c.l.b16 %v229
      %v295 = vunpack.c.l.b16 %v230
      %v296 = vunpack.c.l.b16 %v231
      %v297 = vunpack.c.l.b16 %v232
      %v298 = vunpack.c.l.b16 %v233
      %v299 = vpack.c.b16 %v268, %v267
      %v300 = vpack.c.b16 %v270, %v269
      %v301 = vpack.c.b16 %v272, %v271
      %v302 = vpack.c.b16 %v274, %v273
      %v303 = vpack.c.b16 %v276, %v275
      %v304 = vpack.c.b16 %v278, %v277
      %v305 = vpack.c.b16 %v280, %v279
      %v306 = vpack.c.b16 %v282, %v281
      %v307 = vpack.c.b16 %v284, %v283
      %v308 = vpack.c.b16 %v286, %v285
      %v309 = vpack.c.b16 %v288, %v287
      %v310 = vpack.c.b16 %v290, %v289
      %v311 = vpack.c.b16 %v292, %v291
      %v312 = vpack.c.b16 %v294, %v293
      %v313 = vpack.c.b16 %v296, %v295
      %v314 = vpack.c.b16 %v298, %v297
      %vm315 = vcmask 64512
      %v317 = vsel %vm315, %v299, 0
      %v320 = vsel %vm315, %v300, 0
      %v323 = vsel %vm315, %v301, 0
      %v326 = vsel %vm315, %v302, 0
      %v329 = vsel %vm315, %v303, 0
      %v332 = vsel %vm315, %v304, 0
      %v335 = vsel %vm315, %v305, 0
      %v338 = vsel %vm315, %v306, 0
      %v341 = vsel %vm315, %v307, 0
      %v344 = vsel %vm315, %v308, 0
      %v347 = vsel %vm315, %v309, 0
      %v350 = vsel %vm315, %v310, 0
      %v353 = vsel %vm315, %v311, 0
      %v356 = vsel %vm315, %v312, 0
      %v359 = vsel %vm315, %v313, 0
      %v362 = vsel %vm315, %v314, 0
      %vm364 = vcmask 1043456
      %v366 = vsel %vm364, %v234, 0
      %368 = vmatprep.subr.bf16.mxu0 0
      %369 = vmatpush1.bf16.msra.mxu0 %v366
      %370 = vmatprep.subr.bf16.mxu0 0
      %371 = vmatpush1.bf16.msra.mxu0 0
      %372 = vmatprep.subr.bf16.mxu0 0
      %373 = vmatpush1.bf16.msra.mxu0 0
      %374 = vmatprep.subr.bf16.mxu0 0
      %375 = vmatpush1.bf16.msra.mxu0 0
      %376 = vmatprep.subr.bf16.mxu0 0
      %377 = vmatpush1.bf16.msra.mxu0 0
      %378 = vmatprep.subr.bf16.mxu0 0
      %379 = vmatpush1.bf16.msra.mxu0 0
      %380 = vmatprep.subr.bf16.mxu0 0
      %381 = vmatpush1.bf16.msra.mxu0 0
      %382 = vmatprep.subr.bf16.mxu0 0
      %383 = vmatpush1.bf16.msra.mxu0 0
      %384 = vmatprep.subr.bf16.mxu0 0
      %385 = vmatpush1.bf16.msra.mxu0 0
      %386 = vmatprep.subr.bf16.mxu0 0
      %387 = vmatpush1.bf16.msra.mxu0 0
      %388 = vmatprep.subr.bf16.mxu0 0
      %389 = vmatpush1.bf16.msra.mxu0 0
      %390 = vmatprep.subr.bf16.mxu0 0
      %391 = vmatpush1.bf16.msra.mxu0 0
      %392 = vmatprep.subr.bf16.mxu0 0
      %393 = vmatpush1.bf16.msra.mxu0 0
      %394 = vmatprep.subr.bf16.mxu0 0
      %395 = vmatpush1.bf16.msra.mxu0 0
      %396 = vmatprep.subr.bf16.mxu0 0
      %397 = vmatpush1.bf16.msra.mxu0 0
      %398 = vmatprep.subr.bf16.mxu0 0
      %399 = vmatpush1.bf16.msra.mxu0 0
      %400 = vmatprep.mubr.bf16.mxu0 0
      %401 = vmatmul.mubr.bf16.gmra.mrb[0].mxu0 %v317
      %v402 = vpop.f32.mrb[0].mxu0
      %v403 = vadd.f32 0.0, %v402
      %v404 = vpop.f32.mrb[0].mxu0
      %v405 = vpop.f32.mrb[0].mxu0
      %v406 = vadd.f32 0.0, %v405
      %v407 = vpop.f32.mrb[0].mxu0
      %408 = vmatprep.mubr.bf16.mxu0 0
      %409 = vmatmul.mubr.bf16.gmra.mrb[0].mxu0 %v320
      %v410 = vpop.f32.mrb[0].mxu0
      %v411 = vadd.f32 0.0, %v410
      %v412 = vpop.f32.mrb[0].mxu0
      %v413 = vpop.f32.mrb[0].mxu0
      %v414 = vadd.f32 0.0, %v413
      %v415 = vpop.f32.mrb[0].mxu0
      %416 = vmatprep.mubr.bf16.mxu0 0
      %417 = vmatmul.mubr.bf16.gmra.mrb[0].mxu0 %v323
      %v418 = vpop.f32.mrb[0].mxu0
      %v419 = vadd.f32 0.0, %v418
      %v420 = vpop.f32.mrb[0].mxu0
      %v421 = vpop.f32.mrb[0].mxu0
      %v422 = vadd.f32 0.0, %v421
      %v423 = vpop.f32.mrb[0].mxu0
      %424 = vmatprep.mubr.bf16.mxu0 0
      %425 = vmatmul.mubr.bf16.gmra.mrb[0].mxu0 %v326
      %v426 = vpop.f32.mrb[0].mxu0
      %v427 = vadd.f32 0.0, %v426
      %v428 = vpop.f32.mrb[0].mxu0
      %v429 = vpop.f32.mrb[0].mxu0
      %v430 = vadd.f32 0.0, %v429
      %v431 = vpop.f32.mrb[0].mxu0
      %432 = vmatprep.mubr.bf16.mxu0 0
      %433 = vmatmul.mubr.bf16.gmra.mrb[0].mxu0 %v329
      %v434 = vpop.f32.mrb[0].mxu0
      %v435 = vadd.f32 0.0, %v434
      %v436 = vpop.f32.mrb[0].mxu0
      %v437 = vpop.f32.mrb[0].mxu0
      %v438 = vadd.f32 0.0, %v437
      %v439 = vpop.f32.mrb[0].mxu0
      %440 = vmatprep.mubr.bf16.mxu0 0
      %441 = vmatmul.mubr.bf16.gmra.mrb[0].mxu0 %v332
      %v442 = vpop.f32.mrb[0].mxu0
      %v443 = vadd.f32 0.0, %v442
      %v444 = vpop.f32.mrb[0].mxu0
      %v445 = vpop.f32.mrb[0].mxu0
      %v446 = vadd.f32 0.0, %v445
      %v447 = vpop.f32.mrb[0].mxu0
      %448 = vmatprep.mubr.bf16.mxu0 0
      %449 = vmatmul.mubr.bf16.gmra.mrb[0].mxu0 %v335
      %v450 = vpop.f32.mrb[0].mxu0
      %v451 = vadd.f32 0.0, %v450
      %v452 = vpop.f32.mrb[0].mxu0
      %v453 = vpop.f32.mrb[0].mxu0
      %v454 = vadd.f32 0.0, %v453
      %v455 = vpop.f32.mrb[0].mxu0
      %456 = vmatprep.mubr.bf16.mxu0 0
      %457 = vmatmul.mubr.bf16.gmra.mrb[0].mxu0 %v338
      %v458 = vpop.f32.mrb[0].mxu0
      %v459 = vadd.f32 0.0, %v458
      %v460 = vpop.f32.mrb[0].mxu0
      %v461 = vpop.f32.mrb[0].mxu0
      %v462 = vadd.f32 0.0, %v461
      %v463 = vpop.f32.mrb[0].mxu0
      %464 = vmatprep.mubr.bf16.mxu0 0
      %465 = vmatmul.mubr.bf16.gmra.mrb[0].mxu0 %v341
      %v466 = vpop.f32.mrb[0].mxu0
      %v467 = vadd.f32 0.0, %v466
      %v468 = vpop.f32.mrb[0].mxu0
      %v469 = vpop.f32.mrb[0].mxu0
      %v470 = vadd.f32 0.0, %v469
      %v471 = vpop.f32.mrb[0].mxu0
      %472 = vmatprep.mubr.bf16.mxu0 0
      %473 = vmatmul.mubr.bf16.gmra.mrb[0].mxu0 %v344
      %v474 = vpop.f32.mrb[0].mxu0
      %v475 = vadd.f32 0.0, %v474
      %v476 = vpop.f32.mrb[0].mxu0
      %v477 = vpop.f32.mrb[0].mxu0
      %v478 = vadd.f32 0.0, %v477
      %v479 = vpop.f32.mrb[0].mxu0
      %480 = vmatprep.mubr.bf16.mxu0 0
      %481 = vmatmul.mubr.bf16.gmra.mrb[0].mxu0 %v347
      %v482 = vpop.f32.mrb[0].mxu0
      %v483 = vadd.f32 0.0, %v482
      %v484 = vpop.f32.mrb[0].mxu0
      %v485 = vpop.f32.mrb[0].mxu0
      %v486 = vadd.f32 0.0, %v485
      %v487 = vpop.f32.mrb[0].mxu0
      %488 = vmatprep.mubr.bf16.mxu0 0
      %489 = vmatmul.mubr.bf16.gmra.mrb[0].mxu0 %v350
      %v490 = vpop.f32.mrb[0].mxu0
      %v491 = vadd.f32 0.0, %v490
      %v492 = vpop.f32.mrb[0].mxu0
      %v493 = vpop.f32.mrb[0].mxu0
      %v494 = vadd.f32 0.0, %v493
      %v495 = vpop.f32.mrb[0].mxu0
      %496 = vmatprep.mubr.bf16.mxu0 0
      %497 = vmatmul.mubr.bf16.gmra.mrb[0].mxu0 %v353
      %v498 = vpop.f32.mrb[0].mxu0
      %v499 = vadd.f32 0.0, %v498
      %v500 = vpop.f32.mrb[0].mxu0
      %v501 = vpop.f32.mrb[0].mxu0
      %v502 = vadd.f32 0.0, %v501
      %v503 = vpop.f32.mrb[0].mxu0
      %504 = vmatprep.mubr.bf16.mxu0 0
      %505 = vmatmul.mubr.bf16.gmra.mrb[0].mxu0 %v356
      %v506 = vpop.f32.mrb[0].mxu0
      %v507 = vadd.f32 0.0, %v506
      %v508 = vpop.f32.mrb[0].mxu0
      %v509 = vpop.f32.mrb[0].mxu0
      %v510 = vadd.f32 0.0, %v509
      %v511 = vpop.f32.mrb[0].mxu0
      %512 = vmatprep.mubr.bf16.mxu0 0
      %513 = vmatmul.mubr.bf16.gmra.mrb[0].mxu0 %v359
      %v514 = vpop.f32.mrb[0].mxu0
      %v515 = vadd.f32 0.0, %v514
      %v516 = vpop.f32.mrb[0].mxu0
      %v517 = vpop.f32.mrb[0].mxu0
      %v518 = vadd.f32 0.0, %v517
      %v519 = vpop.f32.mrb[0].mxu0
      %520 = vmatprep.mubr.bf16.mxu0 0
      %521 = vmatmul.mubr.bf16.gmra.mrb[0].mxu0 %v362
      %v522 = vpop.f32.mrb[0].mxu0
      %v523 = vadd.f32 0.0, %v522
      %v524 = vpop.f32.mrb[0].mxu0
      %v525 = vpop.f32.mrb[0].mxu0
      %v526 = vadd.f32 0.0, %v525
      %v527 = vpop.f32.mrb[0].mxu0
      %528 = vdwg.mxu0
      %v529 = vld [vmem:[%s2] sm:$0x1]
      %v531 = vlaneseq
      %v532 = vshrl.u32 %v531, 7
      %v533 = vsub.s32 0, %v532
      %v534 = vrot.slane %v529, %v533
      %v536 = vmul.f32 %v403, %v534
      %v537 = vmul.f32 %v406, %v534
      %v538 = vmul.f32 %v411, %v534
      %v539 = vmul.f32 %v414, %v534
      %v540 = vmul.f32 %v419, %v534
      %v541 = vmul.f32 %v422, %v534
      %v542 = vmul.f32 %v427, %v534
      %v543 = vmul.f32 %v430, %v534
      %v544 = vmul.f32 %v435, %v534
      %v545 = vmul.f32 %v438, %v534
      %v546 = vmul.f32 %v443, %v534
      %v547 = vmul.f32 %v446, %v534
      %v548 = vmul.f32 %v451, %v534
      %v549 = vmul.f32 %v454, %v534
      %v550 = vmul.f32 %v459, %v534
      %v551 = vmul.f32 %v462, %v534
      %v552 = vmul.f32 %v467, %v534
      %v553 = vmul.f32 %v470, %v534
      %v554 = vmul.f32 %v475, %v534
      %v555 = vmul.f32 %v478, %v534
      %v556 = vmul.f32 %v483, %v534
      %v557 = vmul.f32 %v486, %v534
      %v558 = vmul.f32 %v491, %v534
      %v559 = vmul.f32 %v494, %v534
      %v560 = vmul.f32 %v499, %v534
      %v561 = vmul.f32 %v502, %v534
      %v562 = vmul.f32 %v507, %v534
      %v563 = vmul.f32 %v510, %v534
      %v564 = vmul.f32 %v515, %v534
      %v565 = vmul.f32 %v518, %v534
      %v566 = vmul.f32 %v523, %v534
      %v567 = vmul.f32 %v526, %v534
      %v568 = vld [vmem:[%s3] sm:$0x1]
      %v570 = vlaneseq
      %v571 = vshrl.u32 %v570, 7
      %v572 = vsub.s32 0, %v571
      %v573 = vrot.slane %v568, %v572
      %v575 = vadd.f32 %v536, %v573
      %v576 = vadd.f32 %v537, %v573
      %v577 = vadd.f32 %v538, %v573
      %v578 = vadd.f32 %v539, %v573
      %v579 = vadd.f32 %v540, %v573
      %v580 = vadd.f32 %v541, %v573
      %v581 = vadd.f32 %v542, %v573
      %v582 = vadd.f32 %v543, %v573
      %v583 = vadd.f32 %v544, %v573
      %v584 = vadd.f32 %v545, %v573
      %v585 = vadd.f32 %v546, %v573
      %v586 = vadd.f32 %v547, %v573
      %v587 = vadd.f32 %v548, %v573
      %v588 = vadd.f32 %v549, %v573
      %v589 = vadd.f32 %v550, %v573
      %v590 = vadd.f32 %v551, %v573
      %v591 = vadd.f32 %v552, %v573
      %v592 = vadd.f32 %v553, %v573
      %v593 = vadd.f32 %v554, %v573
      %v594 = vadd.f32 %v555, %v573
      %v595 = vadd.f32 %v556, %v573
      %v596 = vadd.f32 %v557, %v573
      %v597 = vadd.f32 %v558, %v573
      %v598 = vadd.f32 %v559, %v573
      %v599 = vadd.f32 %v560, %v573
      %v600 = vadd.f32 %v561, %v573
      %v601 = vadd.f32 %v562, %v573
      %v602 = vadd.f32 %v563, %v573
      %v603 = vadd.f32 %v564, %v573
      %v604 = vadd.f32 %v565, %v573
      %v605 = vadd.f32 %v566, %v573
      %v606 = vadd.f32 %v567, %v573
      %v607 = vmax.f32 %v575, 0.0
      %v608 = vmax.f32 %v576, 0.0
      %v609 = vmax.f32 %v577, 0.0
      %v610 = vmax.f32 %v578, 0.0
      %v611 = vmax.f32 %v579, 0.0
      %v612 = vmax.f32 %v580, 0.0
      %v613 = vmax.f32 %v581, 0.0
      %v614 = vmax.f32 %v582, 0.0
      %v615 = vmax.f32 %v583, 0.0
      %v616 = vmax.f32 %v584, 0.0
      %v617 = vmax.f32 %v585, 0.0
      %v618 = vmax.f32 %v586, 0.0
      %v619 = vmax.f32 %v587, 0.0
      %v620 = vmax.f32 %v588, 0.0
      %v621 = vmax.f32 %v589, 0.0
      %v622 = vmax.f32 %v590, 0.0
      %v623 = vmax.f32 %v591, 0.0
      %v624 = vmax.f32 %v592, 0.0
      %v625 = vmax.f32 %v593, 0.0
      %v626 = vmax.f32 %v594, 0.0
      %v627 = vmax.f32 %v595, 0.0
      %v628 = vmax.f32 %v596, 0.0
      %v629 = vmax.f32 %v597, 0.0
      %v630 = vmax.f32 %v598, 0.0
      %v631 = vmax.f32 %v599, 0.0
      %v632 = vmax.f32 %v600, 0.0
      %v633 = vmax.f32 %v601, 0.0
      %v634 = vmax.f32 %v602, 0.0
      %v635 = vmax.f32 %v603, 0.0
      %v636 = vmax.f32 %v604, 0.0
      %v637 = vmax.f32 %v605, 0.0
      %v638 = vmax.f32 %v606, 0.0
      %v639 = vpack.c.bf16 %v608, %v607
      %v640 = vpack.c.bf16 %v610, %v609
      %v641 = vpack.c.bf16 %v612, %v611
      %v642 = vpack.c.bf16 %v614, %v613
      %v643 = vpack.c.bf16 %v616, %v615
      %v644 = vpack.c.bf16 %v618, %v617
      %v645 = vpack.c.bf16 %v620, %v619
      %v646 = vpack.c.bf16 %v622, %v621
      %v647 = vpack.c.bf16 %v624, %v623
      %v648 = vpack.c.bf16 %v626, %v625
      %v649 = vpack.c.bf16 %v628, %v627
      %v650 = vpack.c.bf16 %v630, %v629
      %v651 = vpack.c.bf16 %v632, %v631
      %v652 = vpack.c.bf16 %v634, %v633
      %v653 = vpack.c.bf16 %v636, %v635
      %v654 = vpack.c.bf16 %v638, %v637
      %v671 = vunpack.c.l.b16 %v639
      %v672 = vunpack.c.h.b16 %v639
      %v673 = vunpack.c.l.b16 %v640
      %v674 = vunpack.c.h.b16 %v640
      %v675 = vunpack.c.l.b16 %v641
      %v676 = vunpack.c.h.b16 %v641
      %v677 = vunpack.c.l.b16 %v642
      %v678 = vunpack.c.h.b16 %v642
      %v679 = vunpack.c.l.b16 %v643
      %v680 = vunpack.c.h.b16 %v643
      %v681 = vunpack.c.l.b16 %v644
      %v682 = vunpack.c.h.b16 %v644
      %v683 = vunpack.c.l.b16 %v645
      %v684 = vunpack.c.h.b16 %v645
      %v685 = vunpack.c.l.b16 %v646
      %v686 = vunpack.c.h.b16 %v646
      %v687 = vunpack.c.l.b16 %v647
      %v688 = vunpack.c.h.b16 %v647
      %v689 = vunpack.c.l.b16 %v648
      %v690 = vunpack.c.h.b16 %v648
      %v691 = vunpack.c.l.b16 %v649
      %v692 = vunpack.c.h.b16 %v649
      %v693 = vunpack.c.l.b16 %v650
      %v694 = vunpack.c.h.b16 %v650
      %v695 = vunpack.c.l.b16 %v651
      %v696 = vunpack.c.h.b16 %v651
      %v697 = vunpack.c.l.b16 %v652
      %v698 = vunpack.c.h.b16 %v652
      %v699 = vunpack.c.l.b16 %v653
      %v700 = vunpack.c.h.b16 %v653
      %v701 = vunpack.c.l.b16 %v654
      %v702 = vunpack.c.h.b16 %v654
      %v703 = vpack.c.b16 %v671, %v671
      %v704 = vpack.c.b16 %v672, %v672
      %v705 = vpack.c.b16 %v673, %v673
      %v706 = vpack.c.b16 %v674, %v674
      %v707 = vpack.c.b16 %v675, %v675
      %v708 = vpack.c.b16 %v676, %v676
      %v709 = vpack.c.b16 %v677, %v677
      %v710 = vpack.c.b16 %v678, %v678
      %v711 = vpack.c.b16 %v679, %v679
      %v712 = vpack.c.b16 %v680, %v680
      %v713 = vpack.c.b16 %v681, %v681
      %v714 = vpack.c.b16 %v682, %v682
      %v715 = vpack.c.b16 %v683, %v683
      %v716 = vpack.c.b16 %v684, %v684
      %v717 = vpack.c.b16 %v685, %v685
      %v718 = vpack.c.b16 %v686, %v686
      %v719 = vpack.c.b16 %v687, %v687
      %v720 = vpack.c.b16 %v688, %v688
      %v721 = vpack.c.b16 %v689, %v689
      %v722 = vpack.c.b16 %v690, %v690
      %v723 = vpack.c.b16 %v691, %v691
      %v724 = vpack.c.b16 %v692, %v692
      %v725 = vpack.c.b16 %v693, %v693
      %v726 = vpack.c.b16 %v694, %v694
      %v727 = vpack.c.b16 %v695, %v695
      %v728 = vpack.c.b16 %v696, %v696
      %v729 = vpack.c.b16 %v697, %v697
      %v730 = vpack.c.b16 %v698, %v698
      %v731 = vpack.c.b16 %v699, %v699
      %v732 = vpack.c.b16 %v700, %v700
      %v733 = vpack.c.b16 %v701, %v701
      %v734 = vpack.c.b16 %v702, %v702
      %vm767 = vcmask 125952
      %768 = vst.msk [vmem:[%s199] sm:$0xf] %vm767, %v703
      %769 = vst.msk [vmem:[%s199 + $0x4] sm:$0xf] %vm767, %v704
      %770 = vst.msk [vmem:[%s199 + $0x8] sm:$0xf] %vm767, %v705
      %771 = vst.msk [vmem:[%s199 + $0xc] sm:$0xf] %vm767, %v706
      %772 = vst.msk [vmem:[%s199 + $0x10] sm:$0xf] %vm767, %v707
      %773 = vst.msk [vmem:[%s199 + $0x14] sm:$0xf] %vm767, %v708
      %774 = vst.msk [vmem:[%s199 + $0x18] sm:$0xf] %vm767, %v709
      %775 = vst.msk [vmem:[%s199 + $0x1c] sm:$0xf] %vm767, %v710
      %776 = vst.msk [vmem:[%s199 + $0x20] sm:$0xf] %vm767, %v711
      %777 = vst.msk [vmem:[%s199 + $0x24] sm:$0xf] %vm767, %v712
      %778 = vst.msk [vmem:[%s199 + $0x28] sm:$0xf] %vm767, %v713
      %779 = vst.msk [vmem:[%s199 + $0x2c] sm:$0xf] %vm767, %v714
      %780 = vst.msk [vmem:[%s199 + $0x30] sm:$0xf] %vm767, %v715
      %781 = vst.msk [vmem:[%s199 + $0x34] sm:$0xf] %vm767, %v716
      %782 = vst.msk [vmem:[%s199 + $0x38] sm:$0xf] %vm767, %v717
      %783 = vst.msk [vmem:[%s199 + $0x3c] sm:$0xf] %vm767, %v718
      %784 = vst.msk [vmem:[%s199 + $0x40] sm:$0xf] %vm767, %v719
      %785 = vst.msk [vmem:[%s199 + $0x44] sm:$0xf] %vm767, %v720
      %786 = vst.msk [vmem:[%s199 + $0x48] sm:$0xf] %vm767, %v721
      %787 = vst.msk [vmem:[%s199 + $0x4c] sm:$0xf] %vm767, %v722
      %788 = vst.msk [vmem:[%s199 + $0x50] sm:$0xf] %vm767, %v723
      %789 = vst.msk [vmem:[%s199 + $0x54] sm:$0xf] %vm767, %v724
      %790 = vst.msk [vmem:[%s199 + $0x58] sm:$0xf] %vm767, %v725
      %791 = vst.msk [vmem:[%s199 + $0x5c] sm:$0xf] %vm767, %v726
      %792 = vst.msk [vmem:[%s199 + $0x60] sm:$0xf] %vm767, %v727
      %793 = vst.msk [vmem:[%s199 + $0x64] sm:$0xf] %vm767, %v728
      %794 = vst.msk [vmem:[%s199 + $0x68] sm:$0xf] %vm767, %v729
      %795 = vst.msk [vmem:[%s199 + $0x6c] sm:$0xf] %vm767, %v730
      %796 = vst.msk [vmem:[%s199 + $0x70] sm:$0xf] %vm767, %v731
      %797 = vst.msk [vmem:[%s199 + $0x74] sm:$0xf] %vm767, %v732
      %798 = vst.msk [vmem:[%s199 + $0x78] sm:$0xf] %vm767, %v733
      %799 = vst.msk [vmem:[%s199 + $0x7c] sm:$0xf] %vm767, %v734
      %s800 = smul.u32 32, %s15
      %p801 = scmp.lt.s32.totalorder %s800, 63
      %s802 = scalar_select %p801, %s800, 63
      %s803 = smul.addr %s802, 4
      %s804 = scalar_lea.vmem %s4, %s803
      // Predicated region
      $region37: #{_lambda_.6} parent=35 // pred_check
        %p805 = pneg %p122
      $region38: #{_lambda_.6} parent=35 // pred_check_branch
        %807 = sbr.rel (%p805) target = $region40
      $region39: #{_lambda_.6} parent=35 // pred_region
        %s808 = smul.u32 32, %s15
      $region40: #{_lambda_.6} parent=35 // pred_fallthru
        _
    $region36: #{_lambda_.6} parent=5 // pred_fallthru
      _
    %p809 = scmp.le.s32.totalorder 2, %s10
    // Predicated region
    $region41: #{_lambda_.6} parent=5 // pred_check
      %p810 = pneg %p809
    $region42: #{_lambda_.6} parent=5 // pred_check_branch
      %812 = sbr.rel (%p810) target = $region44
    $region43: #{_lambda_.6} parent=5 // pred_region
      %s813 = ssub.s32 %s10, 2
      // Predicated region
      $region45: #{_lambda_.6} parent=43 // pred_check
        %p814 = pneg %p128
      $region46: #{_lambda_.6} parent=43 // pred_check_branch
        %816 = sbr.rel (%p814) target = $region48
      $region47: #{_lambda_.6} parent=43 // pred_region
        %s817 = smul.u32 32, %s16
        %p818 = scmp.lt.s32.totalorder %s817, 63
        %s819 = scalar_select %p818, %s817, 63
        %s820 = smul.addr %s819, 4
        %s821 = scalar_lea.vmem %s4, %s820
      $region48: #{_lambda_.6} parent=43 // pred_fallthru
        _
    $region44: #{_lambda_.6} parent=5 // pred_fallthru
      _
  $region6: #{_lambda_.6} parent=0 // loop_footer
    %s14 = sadd.s32 1, %s10
  $region7: #{_lambda_.6} parent=0 // loop_footer_branch
    %9 = sbr.rel target = $region3
  $region8: #{_lambda_.6} parent=0 // loop_exit
    _

// kernel: _lambda_.8
$region0: #{_lambda_.8}
  #allocation0 [shape = 'u32[]', space=smem, size = 0x4, offset = 0x4, fixed_abs, tag = 'smem constant byte address 0x4 - core index']
  #allocation1 [shape = 'u32[144,128]{1,0:T(1,128)}', space=vmem, size = 0x12000, scoped, tag = 'internal scratch']
  %s0 = inlined_call_operand.vmem [shape: bf16[128,16], index: 0, kind: input, shape index: {}]
  %s1 = inlined_call_operand.vmem [shape: bf16[16,16], index: 1, kind: input, shape index: {}]
  %s2 = inlined_call_operand.vmem [shape: f32[1,16], index: 2, kind: input, shape index: {}]
  %s3 = inlined_call_operand.vmem [shape: f32[1,16], index: 3, kind: input, shape index: {}]
  %s4 = inlined_call_operand.vmem [shape: bf16[128,8], index: 4, kind: input, shape index: {}]
  %s5 = inlined_call_operand.vmem [shape: bf16[8,16], index: 5, kind: input, shape index: {}]
  %s6 = inlined_call_operand.vmem [shape: f32[1,16], index: 6, kind: input, shape index: {}]
  %s7 = inlined_call_operand.vmem [shape: f32[1,16], index: 7, kind: input, shape index: {}]
  %s8 = inlined_call_operand.vmem [shape: bf16[128,16], index: 8, kind: output, shape index: {}]
  %s9 = sld [smem:[#allocation0]]
  $region65: #{_lambda_.8} parent=0
    _
  %s11 = ssub.s32 1, %s9
  %s12 = scalar_select 0, %s11, %s9
  loop: start=0, step=1, limit=4
  $region2: #{_lambda_.8} parent=0 // loop_pre_header
    _
  $region3: #{_lambda_.8} parent=0 // loop_header
    %s14 = sphi 0, %s18
    %p15 = scmp.ge.s32.totalorder %s14, 4
    %s24 = sphi 0, %s26
    %s27 = sphi 0, %s24
    %s28 = sphi 0, %s27
    %s44 = sphi 0, %s28
    %s48 = sphi 0, %s48
    %s50 = sphi 0, %s48
    %s51 = sphi 0, %s50
    %s65 = sphi 0, %s51
    %s69 = sphi 0, %s69
    %s71 = sphi 0, %s69
    %s72 = sphi 0, %s71
    %s86 = sphi 0, %s72
    %s90 = sphi 0, %s90
    %s92 = sphi 0, %s90
    %s93 = sphi 0, %s92
    %s107 = sphi 0, %s93
    %s113 = sphi 0, %s115
    %s116 = sphi 0, %s113
    %s117 = sphi 0, %s116
    %s133 = sphi 0, %s117
    %s137 = sphi 0, %s137
    %s139 = sphi 0, %s137
    %s140 = sphi 0, %s139
    %s154 = sphi 0, %s140
    %s158 = sphi 0, %s158
    %s160 = sphi 0, %s158
    %s161 = sphi 0, %s160
    %s175 = sphi 0, %s161
    %s179 = sphi 0, %s179
    %s181 = sphi 0, %s179
    %s182 = sphi 0, %s181
    %s196 = sphi 0, %s182
    %s202 = sphi 0, %s204
    %s205 = sphi 0, %s202
    %s206 = sphi 0, %s205
    %s222 = sphi 0, %s206
  $region4: #{_lambda_.8} parent=0 // loop_header_branch
    %17 = sbr.rel (%p15) target = $region8
  $region5: #{_lambda_.8} parent=0 // loop_body
    %s19 = ssub.s32 %s14, 1
    %s20 = ssub.s32 %s14, 2
    %s21 = sadd.s32 %s14, 1
    %s22 = ssub.s32 %s14, %s21
    %p23 = scmp.eq.s32.totalorder %s22, 0
    %s25 = sadd.s32 %s24, 1
    %s26 = scalar_select %p23, %s24, %s25
    %p29 = pneg %p23
    %p30 = scmp.eq.s32.totalorder %s14, 1
    %p31 = por %p29, %p30
    %p32 = scmp.ne.s32.totalorder %s24, %s27
    %p33 = scmp.eq.s32.totalorder %s14, 0
    %p34 = por %p32, %p33
    %p35 = scmp.ne.s32.totalorder %s24, %s27
    %p36 = scmp.eq.s32.totalorder %s19, 1
    %p37 = por %p35, %p36
    %p38 = scmp.ne.s32.totalorder %s27, %s28
    %p39 = scmp.eq.s32.totalorder %s19, 0
    %p40 = por %p38, %p39
    %p41 = scmp.ne.s32.totalorder %s27, %s28
    %p42 = scmp.eq.s32.totalorder %s20, 1
    %p43 = por %p41, %p42
    %p45 = scmp.ne.s32.totalorder %s28, %s44
    %p46 = scmp.eq.s32.totalorder %s20, 0
    %p47 = por %p45, %p46
    %s49 = sadd.s32 %s48, 1
    %p52 = scmp.eq.s32.totalorder %s14, 1
    %p53 = scmp.ne.s32.totalorder %s48, %s50
    %p54 = scmp.eq.s32.totalorder %s14, 0
    %p55 = por %p53, %p54
    %p56 = scmp.ne.s32.totalorder %s48, %s50
    %p57 = scmp.eq.s32.totalorder %s19, 1
    %p58 = por %p56, %p57
    %p59 = scmp.ne.s32.totalorder %s50, %s51
    %p60 = scmp.eq.s32.totalorder %s19, 0
    %p61 = por %p59, %p60
    %p62 = scmp.ne.s32.totalorder %s50, %s51
    %p63 = scmp.eq.s32.totalorder %s20, 1
    %p64 = por %p62, %p63
    %p66 = scmp.ne.s32.totalorder %s51, %s65
    %p67 = scmp.eq.s32.totalorder %s20, 0
    %p68 = por %p66, %p67
    %s70 = sadd.s32 %s69, 1
    %p73 = scmp.eq.s32.totalorder %s14, 1
    %p74 = scmp.ne.s32.totalorder %s69, %s71
    %p75 = scmp.eq.s32.totalorder %s14, 0
    %p76 = por %p74, %p75
    %p77 = scmp.ne.s32.totalorder %s69, %s71
    %p78 = scmp.eq.s32.totalorder %s19, 1
    %p79 = por %p77, %p78
    %p80 = scmp.ne.s32.totalorder %s71, %s72
    %p81 = scmp.eq.s32.totalorder %s19, 0
    %p82 = por %p80, %p81
    %p83 = scmp.ne.s32.totalorder %s71, %s72
    %p84 = scmp.eq.s32.totalorder %s20, 1
    %p85 = por %p83, %p84
    %p87 = scmp.ne.s32.totalorder %s72, %s86
    %p88 = scmp.eq.s32.totalorder %s20, 0
    %p89 = por %p87, %p88
    %s91 = sadd.s32 %s90, 1
    %p94 = scmp.eq.s32.totalorder %s14, 1
    %p95 = scmp.ne.s32.totalorder %s90, %s92
    %p96 = scmp.eq.s32.totalorder %s14, 0
    %p97 = por %p95, %p96
    %p98 = scmp.ne.s32.totalorder %s90, %s92
    %p99 = scmp.eq.s32.totalorder %s19, 1
    %p100 = por %p98, %p99
    %p101 = scmp.ne.s32.totalorder %s92, %s93
    %p102 = scmp.eq.s32.totalorder %s19, 0
    %p103 = por %p101, %p102
    %p104 = scmp.ne.s32.totalorder %s92, %s93
    %p105 = scmp.eq.s32.totalorder %s20, 1
    %p106 = por %p104, %p105
    %p108 = scmp.ne.s32.totalorder %s93, %s107
    %p109 = scmp.eq.s32.totalorder %s20, 0
    %p110 = por %p108, %p109
    %s111 = ssub.s32 %s14, %s21
    %p112 = scmp.eq.s32.totalorder %s111, 0
    %s114 = sadd.s32 %s113, 1
    %s115 = scalar_select %p112, %s113, %s114
    %p118 = pneg %p112
    %p119 = scmp.eq.s32.totalorder %s14, 1
    %p120 = por %p118, %p119
    %p121 = scmp.ne.s32.totalorder %s113, %s116
    %p122 = scmp.eq.s32.totalorder %s14, 0
    %p123 = por %p121, %p122
    %p124 = scmp.ne.s32.totalorder %s113, %s116
    %p125 = scmp.eq.s32.totalorder %s19, 1
    %p126 = por %p124, %p125
    %p127 = scmp.ne.s32.totalorder %s116, %s117
    %p128 = scmp.eq.s32.totalorder %s19, 0
    %p129 = por %p127, %p128
    %p130 = scmp.ne.s32.totalorder %s116, %s117
    %p131 = scmp.eq.s32.totalorder %s20, 1
    %p132 = por %p130, %p131
    %p134 = scmp.ne.s32.totalorder %s117, %s133
    %p135 = scmp.eq.s32.totalorder %s20, 0
    %p136 = por %p134, %p135
    %s138 = sadd.s32 %s137, 1
    %p141 = scmp.eq.s32.totalorder %s14, 1
    %p142 = scmp.ne.s32.totalorder %s137, %s139
    %p143 = scmp.eq.s32.totalorder %s14, 0
    %p144 = por %p142, %p143
    %p145 = scmp.ne.s32.totalorder %s137, %s139
    %p146 = scmp.eq.s32.totalorder %s19, 1
    %p147 = por %p145, %p146
    %p148 = scmp.ne.s32.totalorder %s139, %s140
    %p149 = scmp.eq.s32.totalorder %s19, 0
    %p150 = por %p148, %p149
    %p151 = scmp.ne.s32.totalorder %s139, %s140
    %p152 = scmp.eq.s32.totalorder %s20, 1
    %p153 = por %p151, %p152
    %p155 = scmp.ne.s32.totalorder %s140, %s154
    %p156 = scmp.eq.s32.totalorder %s20, 0
    %p157 = por %p155, %p156
    %s159 = sadd.s32 %s158, 1
    %p162 = scmp.eq.s32.totalorder %s14, 1
    %p163 = scmp.ne.s32.totalorder %s158, %s160
    %p164 = scmp.eq.s32.totalorder %s14, 0
    %p165 = por %p163, %p164
    %p166 = scmp.ne.s32.totalorder %s158, %s160
    %p167 = scmp.eq.s32.totalorder %s19, 1
    %p168 = por %p166, %p167
    %p169 = scmp.ne.s32.totalorder %s160, %s161
    %p170 = scmp.eq.s32.totalorder %s19, 0
    %p171 = por %p169, %p170
    %p172 = scmp.ne.s32.totalorder %s160, %s161
    %p173 = scmp.eq.s32.totalorder %s20, 1
    %p174 = por %p172, %p173
    %p176 = scmp.ne.s32.totalorder %s161, %s175
    %p177 = scmp.eq.s32.totalorder %s20, 0
    %p178 = por %p176, %p177
    %s180 = sadd.s32 %s179, 1
    %p183 = scmp.eq.s32.totalorder %s14, 1
    %p184 = scmp.ne.s32.totalorder %s179, %s181
    %p185 = scmp.eq.s32.totalorder %s14, 0
    %p186 = por %p184, %p185
    %p187 = scmp.ne.s32.totalorder %s179, %s181
    %p188 = scmp.eq.s32.totalorder %s19, 1
    %p189 = por %p187, %p188
    %p190 = scmp.ne.s32.totalorder %s181, %s182
    %p191 = scmp.eq.s32.totalorder %s19, 0
    %p192 = por %p190, %p191
    %p193 = scmp.ne.s32.totalorder %s181, %s182
    %p194 = scmp.eq.s32.totalorder %s20, 1
    %p195 = por %p193, %p194
    %p197 = scmp.ne.s32.totalorder %s182, %s196
    %p198 = scmp.eq.s32.totalorder %s20, 0
    %p199 = por %p197, %p198
    %s200 = ssub.s32 %s14, %s21
    %p201 = scmp.eq.s32.totalorder %s200, 0
    %s203 = sadd.s32 %s202, 1
    %s204 = scalar_select %p201, %s202, %s203
    %p207 = pneg %p201
    %p208 = scmp.eq.s32.totalorder %s14, 1
    %p209 = por %p207, %p208
    %p210 = scmp.ne.s32.totalorder %s202, %s205
    %p211 = scmp.eq.s32.totalorder %s14, 0
    %p212 = por %p210, %p211
    %p213 = scmp.ne.s32.totalorder %s202, %s205
    %p214 = scmp.eq.s32.totalorder %s19, 1
    %p215 = por %p213, %p214
    %p216 = scmp.ne.s32.totalorder %s205, %s206
    %p217 = scmp.eq.s32.totalorder %s19, 0
    %p218 = por %p216, %p217
    %p219 = scmp.ne.s32.totalorder %s205, %s206
    %p220 = scmp.eq.s32.totalorder %s20, 1
    %p221 = por %p219, %p220
    %p223 = scmp.ne.s32.totalorder %s206, %s222
    %p224 = scmp.eq.s32.totalorder %s20, 0
    %p225 = por %p223, %p224
    %p226 = scmp.le.s32.totalorder 1, %s14
    %p227 = scmp.lt.s32.totalorder %s14, 3
    %p228 = pnand %p226, %p227
    %p229 = pneg %p228
    // Predicated region
    $region9: #{_lambda_.8} parent=5 // pred_check
      _
    $region10: #{_lambda_.8} parent=5 // pred_check_branch
      %231 = sbr.rel (%p228) target = $region12
    $region11: #{_lambda_.8} parent=5 // pred_region
      %s232 = ssub.s32 %s14, 1
      // Predicated region
      $region13: #{_lambda_.8} parent=11 // pred_check
        %p233 = pneg %p61
      $region14: #{_lambda_.8} parent=11 // pred_check_branch
        %235 = sbr.rel (%p233) target = $region16
      $region15: #{_lambda_.8} parent=11 // pred_region
        _
      $region16: #{_lambda_.8} parent=11 // pred_fallthru
        _
      // Predicated region
      $region17: #{_lambda_.8} parent=11 // pred_check
        %p236 = pneg %p82
      $region18: #{_lambda_.8} parent=11 // pred_check_branch
        %238 = sbr.rel (%p236) target = $region20
      $region19: #{_lambda_.8} parent=11 // pred_region
        _
      $region20: #{_lambda_.8} parent=11 // pred_fallthru
        _
      // Predicated region
      $region21: #{_lambda_.8} parent=11 // pred_check
        %p239 = pneg %p103
      $region22: #{_lambda_.8} parent=11 // pred_check_branch
        %241 = sbr.rel (%p239) target = $region24
      $region23: #{_lambda_.8} parent=11 // pred_region
        _
      $region24: #{_lambda_.8} parent=11 // pred_fallthru
        _
      // Predicated region
      $region25: #{_lambda_.8} parent=11 // pred_check
        %p242 = pneg %p150
      $region26: #{_lambda_.8} parent=11 // pred_check_branch
        %244 = sbr.rel (%p242) target = $region28
      $region27: #{_lambda_.8} parent=11 // pred_region
        _
      $region28: #{_lambda_.8} parent=11 // pred_fallthru
        _
      // Predicated region
      $region29: #{_lambda_.8} parent=11 // pred_check
        %p245 = pneg %p171
      $region30: #{_lambda_.8} parent=11 // pred_check_branch
        %247 = sbr.rel (%p245) target = $region32
      $region31: #{_lambda_.8} parent=11 // pred_region
        _
      $region32: #{_lambda_.8} parent=11 // pred_fallthru
        _
      // Predicated region
      $region33: #{_lambda_.8} parent=11 // pred_check
        %p248 = pneg %p192
      $region34: #{_lambda_.8} parent=11 // pred_check_branch
        %250 = sbr.rel (%p248) target = $region36
      $region35: #{_lambda_.8} parent=11 // pred_region
        _
      $region36: #{_lambda_.8} parent=11 // pred_fallthru
        _
    $region12: #{_lambda_.8} parent=5 // pred_fallthru
      _
    %p251 = scmp.lt.s32.totalorder %s14, 2
    // Predicated region
    $region37: #{_lambda_.8} parent=5 // pred_check
      %p252 = pneg %p251
    $region38: #{_lambda_.8} parent=5 // pred_check_branch
      %254 = sbr.rel (%p252) target = $region40
    $region39: #{_lambda_.8} parent=5 // pred_region
      // Predicated region
      $region41: #{_lambda_.8} parent=39 // pred_check
        %p255 = pneg %p34
      $region42: #{_lambda_.8} parent=39 // pred_check_branch
        %257 = sbr.rel (%p255) target = $region44
      $region43: #{_lambda_.8} parent=39 // pred_region
        %s258 = smul.u32 8, %s14
        %p259 = scmp.lt.s32.totalorder %s258, 15
        %s260 = scalar_select %p259, %s258, 15
        %s261 = smul.addr %s260, 4
        %s262 = scalar_lea.vmem %s0, %s261
        %s263 = smul.u32 8, %s14
      $region44: #{_lambda_.8} parent=39 // pred_fallthru
        _
      // Predicated region
      $region45: #{_lambda_.8} parent=39 // pred_check
        %p264 = pneg %p123
      $region46: #{_lambda_.8} parent=39 // pred_check_branch
        %266 = sbr.rel (%p264) target = $region48
      $region47: #{_lambda_.8} parent=39 // pred_region
        %s267 = smul.u32 8, %s14
        %p268 = scmp.lt.s32.totalorder %s267, 15
        %s269 = scalar_select %p268, %s267, 15
        %s270 = smul.addr %s269, 4
        %s271 = scalar_lea.vmem %s4, %s270
        %s272 = smul.u32 8, %s14
      $region48: #{_lambda_.8} parent=39 // pred_fallthru
        _
    $region40: #{_lambda_.8} parent=5 // pred_fallthru
      _
    %p273 = scmp.le.s32.totalorder 1, %s14
    %p274 = scmp.lt.s32.totalorder %s14, 3
    %p275 = pnand %p273, %p274
    %p276 = pneg %p275
    // Predicated region
    $region49: #{_lambda_.8} parent=5 // pred_check
      _
    $region50: #{_lambda_.8} parent=5 // pred_check_branch
      %278 = sbr.rel (%p275) target = $region52
    $region51: #{_lambda_.8} parent=5 // pred_region
      %s279 = ssub.s32 %s14, 1
      %s280 = smul.u32 8, %s19
      %p281 = scmp.lt.s32.totalorder %s280, 15
      %s282 = scalar_select %p281, %s280, 15
      %s283 = smul.addr %s282, 4
      %s284 = scalar_lea.vmem %s0, %s283
      %p285 = pneg %p40
      %p286 = pneg %p37
      %p287 = pneg %p61
      %p288 = pneg %p58
      %p289 = pneg %p82
      %p290 = pneg %p79
      %p291 = pneg %p103
      %p292 = pneg %p100
      %s293 = smul.u32 8, %s19
      %p294 = scmp.lt.s32.totalorder %s293, 15
      %s295 = scalar_select %p294, %s293, 15
      %s296 = smul.addr %s295, 4
      %s297 = scalar_lea.vmem %s4, %s296
      %p298 = pneg %p129
      %p299 = pneg %p126
      %p300 = pneg %p150
      %p301 = pneg %p147
      %p302 = pneg %p171
      %p303 = pneg %p168
      %p304 = pneg %p192
      %p305 = pneg %p189
      %p306 = pneg %p218
      %p307 = pneg %p215
      %s308 = smul.u32 8, %s19
      %p309 = scmp.lt.s32.totalorder %s308, 15
      %s310 = scalar_select %p309, %s308, 15
      %s311 = smul.addr %s310, 4
      %s312 = scalar_lea.vmem %s8, %s311
      %s313 = smul.u32 8, %s19
      %p314 = scmp.lt.s32.totalorder %s313, 15
      %s315 = scalar_select %p314, %s313, 15
      %s316 = smul.addr %s315, 4
      %s317 = scalar_lea.vmem %s0, %s316
      %s318 = smul.u32 8, %s19
      %s319 = smul.u32 8, %s19
      %p320 = scmp.lt.s32.totalorder %s319, 15
      %s321 = scalar_select %p320, %s319, 15
      %s322 = smul.addr %s321, 4
      %s323 = scalar_lea.vmem %s4, %s322
      %s324 = smul.u32 8, %s19
      %s325 = smul.u32 8, %s19
      %p326 = scmp.lt.s32.totalorder %s325, 15
      %s327 = scalar_select %p326, %s325, 15
      %s328 = smul.addr %s327, 4
      %s329 = scalar_lea.vmem %s8, %s328
      %s330 = smul.u32 8, %s19
      %v332 = vld [vmem:[%s317] sm:$0xf]
      %v333 = vld [vmem:[%s317 + $0x4] sm:$0xf]
      %v334 = vld [vmem:[%s317 + $0x8] sm:$0xf]
      %v335 = vld [vmem:[%s317 + $0xc] sm:$0xf]
      %v336 = vld [vmem:[%s317 + $0x10] sm:$0xf]
      %v337 = vld [vmem:[%s317 + $0x14] sm:$0xf]
      %v338 = vld [vmem:[%s317 + $0x18] sm:$0xf]
      %v339 = vld [vmem:[%s317 + $0x1c] sm:$0xf]
      %v340 = vld [vmem:[%s1] sm:$0xf]
      %v341 = vld [vmem:[%s1 + $0x4] sm:$0xf]
      %v350 = vunpack.c.l.b16 %v332
      %v351 = vunpack.c.l.b16 %v333
      %v352 = vunpack.c.l.b16 %v334
      %v353 = vunpack.c.l.b16 %v335
      %v354 = vunpack.c.l.b16 %v336
      %v355 = vunpack.c.l.b16 %v337
      %v356 = vunpack.c.l.b16 %v338
      %v357 = vunpack.c.l.b16 %v339
      %v358 = vpack.c.b16 %v351, %v350
      %v359 = vpack.c.b16 %v353, %v352
      %v360 = vpack.c.b16 %v355, %v354
      %v361 = vpack.c.b16 %v357, %v356
      %v364 = vunpack.c.l.b16 %v340
      %v365 = vunpack.c.l.b16 %v341
      %v366 = vpack.c.b16 %v365, %v364
      %vm368 = vcmask 130048
      %v370 = vsel %vm368, %v358, 0
      %v373 = vsel %vm368, %v359, 0
      %v376 = vsel %vm368, %v360, 0
      %v379 = vsel %vm368, %v361, 0
      %381 = vmatprep.subr.bf16.mxu0 0
      %382 = vmatpush1.bf16.msra.mxu0 %v366
      %383 = vmatprep.subr.bf16.mxu0 0
      %384 = vmatpush1.bf16.msra.mxu0 0
      %385 = vmatprep.subr.bf16.mxu0 0
      %386 = vmatpush1.bf16.msra.mxu0 0
      %387 = vmatprep.subr.bf16.mxu0 0
      %388 = vmatpush1.bf16.msra.mxu0 0
      %389 = vmatprep.subr.bf16.mxu0 0
      %390 = vmatpush1.bf16.msra.mxu0 0
      %391 = vmatprep.subr.bf16.mxu0 0
      %392 = vmatpush1.bf16.msra.mxu0 0
      %393 = vmatprep.subr.bf16.mxu0 0
      %394 = vmatpush1.bf16.msra.mxu0 0
      %395 = vmatprep.subr.bf16.mxu0 0
      %396 = vmatpush1.bf16.msra.mxu0 0
      %397 = vmatprep.subr.bf16.mxu0 0
      %398 = vmatpush1.bf16.msra.mxu0 0
      %399 = vmatprep.subr.bf16.mxu0 0
      %400 = vmatpush1.bf16.msra.mxu0 0
      %401 = vmatprep.subr.bf16.mxu0 0
      %402 = vmatpush1.bf16.msra.mxu0 0
      %403 = vmatprep.subr.bf16.mxu0 0
      %404 = vmatpush1.bf16.msra.mxu0 0
      %405 = vmatprep.subr.bf16.mxu0 0
      %406 = vmatpush1.bf16.msra.mxu0 0
      %407 = vmatprep.subr.bf16.mxu0 0
      %408 = vmatpush1.bf16.msra.mxu0 0
      %409 = vmatprep.subr.bf16.mxu0 0
      %410 = vmatpush1.bf16.msra.mxu0 0
      %411 = vmatprep.subr.bf16.mxu0 0
      %412 = vmatpush1.bf16.msra.mxu0 0
      %413 = vmatprep.mubr.bf16.mxu0 0
      %414 = vmatmul.mubr.bf16.gmra.mrb[0].mxu0 %v370
      %v415 = vpop.f32.mrb[0].mxu0
      %v416 = vadd.f32 0.0, %v415
      %v417 = vpop.f32.mrb[0].mxu0
      %v418 = vpop.f32.mrb[0].mxu0
      %v419 = vadd.f32 0.0, %v418
      %v420 = vpop.f32.mrb[0].mxu0
      %421 = vmatprep.mubr.bf16.mxu0 0
      %422 = vmatmul.mubr.bf16.gmra.mrb[0].mxu0 %v373
      %v423 = vpop.f32.mrb[0].mxu0
      %v424 = vadd.f32 0.0, %v423
      %v425 = vpop.f32.mrb[0].mxu0
      %v426 = vpop.f32.mrb[0].mxu0
      %v427 = vadd.f32 0.0, %v426
      %v428 = vpop.f32.mrb[0].mxu0
      %429 = vmatprep.mubr.bf16.mxu0 0
      %430 = vmatmul.mubr.bf16.gmra.mrb[0].mxu0 %v376
      %v431 = vpop.f32.mrb[0].mxu0
      %v432 = vadd.f32 0.0, %v431
      %v433 = vpop.f32.mrb[0].mxu0
      %v434 = vpop.f32.mrb[0].mxu0
      %v435 = vadd.f32 0.0, %v434
      %v436 = vpop.f32.mrb[0].mxu0
      %437 = vmatprep.mubr.bf16.mxu0 0
      %438 = vmatmul.mubr.bf16.gmra.mrb[0].mxu0 %v379
      %v439 = vpop.f32.mrb[0].mxu0
      %v440 = vadd.f32 0.0, %v439
      %v441 = vpop.f32.mrb[0].mxu0
      %v442 = vpop.f32.mrb[0].mxu0
      %v443 = vadd.f32 0.0, %v442
      %v444 = vpop.f32.mrb[0].mxu0
      %445 = vdwg.mxu0
      %v446 = vld [vmem:[%s2] sm:$0x1]
      %v448 = vlaneseq
      %v449 = vshrl.u32 %v448, 7
      %v450 = vsub.s32 0, %v449
      %v451 = vrot.slane %v446, %v450
      %v453 = vmul.f32 %v416, %v451
      %v454 = vmul.f32 %v419, %v451
      %v455 = vmul.f32 %v424, %v451
      %v456 = vmul.f32 %v427, %v451
      %v457 = vmul.f32 %v432, %v451
      %v458 = vmul.f32 %v435, %v451
      %v459 = vmul.f32 %v440, %v451
      %v460 = vmul.f32 %v443, %v451
      %v461 = vld [vmem:[%s3] sm:$0x1]
      %v463 = vlaneseq
      %v464 = vshrl.u32 %v463, 7
      %v465 = vsub.s32 0, %v464
      %v466 = vrot.slane %v461, %v465
      %v468 = vadd.f32 %v453, %v466
      %v469 = vadd.f32 %v454, %v466
      %v470 = vadd.f32 %v455, %v466
      %v471 = vadd.f32 %v456, %v466
      %v472 = vadd.f32 %v457, %v466
      %v473 = vadd.f32 %v458, %v466
      %v474 = vadd.f32 %v459, %v466
      %v475 = vadd.f32 %v460, %v466
      %v476 = vld [vmem:[%s323] sm:$0xf]
      %v477 = vld [vmem:[%s323 + $0x4] sm:$0xf]
      %v478 = vld [vmem:[%s323 + $0x8] sm:$0xf]
      %v479 = vld [vmem:[%s323 + $0xc] sm:$0xf]
      %v480 = vld [vmem:[%s323 + $0x10] sm:$0xf]
      %v481 = vld [vmem:[%s323 + $0x14] sm:$0xf]
      %v482 = vld [vmem:[%s323 + $0x18] sm:$0xf]
      %v483 = vld [vmem:[%s323 + $0x1c] sm:$0xf]
      %v484 = vld [vmem:[%s5] sm:$0xf]
      %v493 = vunpack.c.l.b16 %v476
      %v494 = vunpack.c.l.b16 %v477
      %v495 = vunpack.c.l.b16 %v478
      %v496 = vunpack.c.l.b16 %v479
      %v497 = vunpack.c.l.b16 %v480
      %v498 = vunpack.c.l.b16 %v481
      %v499 = vunpack.c.l.b16 %v482
      %v500 = vunpack.c.l.b16 %v483
      %v501 = vpack.c.b16 %v494, %v493
      %v502 = vpack.c.b16 %v496, %v495
      %v503 = vpack.c.b16 %v498, %v497
      %v504 = vpack.c.b16 %v500, %v499
      %vm505 = vcmask 64512
      %v507 = vsel %vm505, %v501, 0
      %v510 = vsel %vm505, %v502, 0
      %v513 = vsel %vm505, %v503, 0
      %v516 = vsel %vm505, %v504, 0
      %vm518 = vcmask 1043456
      %v520 = vsel %vm518, %v484, 0
      %522 = vmatprep.subr.bf16.mxu0 0
      %523 = vmatpush1.bf16.msra.mxu0 %v520
      %524 = vmatprep.subr.bf16.mxu0 0
      %525 = vmatpush1.bf16.msra.mxu0 0
      %526 = vmatprep.subr.bf16.mxu0 0
      %527 = vmatpush1.bf16.msra.mxu0 0
      %528 = vmatprep.subr.bf16.mxu0 0
      %529 = vmatpush1.bf16.msra.mxu0 0
      %530 = vmatprep.subr.bf16.mxu0 0
      %531 = vmatpush1.bf16.msra.mxu0 0
      %532 = vmatprep.subr.bf16.mxu0 0
      %533 = vmatpush1.bf16.msra.mxu0 0
      %534 = vmatprep.subr.bf16.mxu0 0
      %535 = vmatpush1.bf16.msra.mxu0 0
      %536 = vmatprep.subr.bf16.mxu0 0
      %537 = vmatpush1.bf16.msra.mxu0 0
      %538 = vmatprep.subr.bf16.mxu0 0
      %539 = vmatpush1.bf16.msra.mxu0 0
      %540 = vmatprep.subr.bf16.mxu0 0
      %541 = vmatpush1.bf16.msra.mxu0 0
      %542 = vmatprep.subr.bf16.mxu0 0
      %543 = vmatpush1.bf16.msra.mxu0 0
      %544 = vmatprep.subr.bf16.mxu0 0
      %545 = vmatpush1.bf16.msra.mxu0 0
      %546 = vmatprep.subr.bf16.mxu0 0
      %547 = vmatpush1.bf16.msra.mxu0 0
      %548 = vmatprep.subr.bf16.mxu0 0
      %549 = vmatpush1.bf16.msra.mxu0 0
      %550 = vmatprep.subr.bf16.mxu0 0
      %551 = vmatpush1.bf16.msra.mxu0 0
      %552 = vmatprep.subr.bf16.mxu0 0
      %553 = vmatpush1.bf16.msra.mxu0 0
      %554 = vmatprep.mubr.bf16.mxu0 0
      %555 = vmatmul.mubr.bf16.gmra.mrb[0].mxu0 %v507
      %v556 = vpop.f32.mrb[0].mxu0
      %v557 = vadd.f32 0.0, %v556
      %v558 = vpop.f32.mrb[0].mxu0
      %v559 = vpop.f32.mrb[0].mxu0
      %v560 = vadd.f32 0.0, %v559
      %v561 = vpop.f32.mrb[0].mxu0
      %562 = vmatprep.mubr.bf16.mxu0 0
      %563 = vmatmul.mubr.bf16.gmra.mrb[0].mxu0 %v510
      %v564 = vpop.f32.mrb[0].mxu0
      %v565 = vadd.f32 0.0, %v564
      %v566 = vpop.f32.mrb[0].mxu0
      %v567 = vpop.f32.mrb[0].mxu0
      %v568 = vadd.f32 0.0, %v567
      %v569 = vpop.f32.mrb[0].mxu0
      %570 = vmatprep.mubr.bf16.mxu0 0
      %571 = vmatmul.mubr.bf16.gmra.mrb[0].mxu0 %v513
      %v572 = vpop.f32.mrb[0].mxu0
      %v573 = vadd.f32 0.0, %v572
      %v574 = vpop.f32.mrb[0].mxu0
      %v575 = vpop.f32.mrb[0].mxu0
      %v576 = vadd.f32 0.0, %v575
      %v577 = vpop.f32.mrb[0].mxu0
      %578 = vmatprep.mubr.bf16.mxu0 0
      %579 = vmatmul.mubr.bf16.gmra.mrb[0].mxu0 %v516
      %v580 = vpop.f32.mrb[0].mxu0
      %v581 = vadd.f32 0.0, %v580
      %v582 = vpop.f32.mrb[0].mxu0
      %v583 = vpop.f32.mrb[0].mxu0
      %v584 = vadd.f32 0.0, %v583
      %v585 = vpop.f32.mrb[0].mxu0
      %586 = vdwg.mxu0
      %v587 = vld [vmem:[%s6] sm:$0x1]
      %v589 = vlaneseq
      %v590 = vshrl.u32 %v589, 7
      %v591 = vsub.s32 0, %v590
      %v592 = vrot.slane %v587, %v591
      %v594 = vmul.f32 %v557, %v592
      %v595 = vmul.f32 %v560, %v592
      %v596 = vmul.f32 %v565, %v592
      %v597 = vmul.f32 %v568, %v592
      %v598 = vmul.f32 %v573, %v592
      %v599 = vmul.f32 %v576, %v592
      %v600 = vmul.f32 %v581, %v592
      %v601 = vmul.f32 %v584, %v592
      %v602 = vld [vmem:[%s7] sm:$0x1]
      %v604 = vlaneseq
      %v605 = vshrl.u32 %v604, 7
      %v606 = vsub.s32 0, %v605
      %v607 = vrot.slane %v602, %v606
      %v609 = vadd.f32 %v594, %v607
      %v610 = vadd.f32 %v595, %v607
      %v611 = vadd.f32 %v596, %v607
      %v612 = vadd.f32 %v597, %v607
      %v613 = vadd.f32 %v598, %v607
      %v614 = vadd.f32 %v599, %v607
      %v615 = vadd.f32 %v600, %v607
      %v616 = vadd.f32 %v601, %v607
      %v617 = vadd.f32 %v468, %v609
      %v618 = vadd.f32 %v469, %v610
      %v619 = vadd.f32 %v470, %v611
      %v620 = vadd.f32 %v471, %v612
      %v621 = vadd.f32 %v472, %v613
      %v622 = vadd.f32 %v473, %v614
      %v623 = vadd.f32 %v474, %v615
      %v624 = vadd.f32 %v475, %v616
      %v625 = vmax.f32 %v617, 0.0
      %v626 = vmax.f32 %v618, 0.0
      %v627 = vmax.f32 %v619, 0.0
      %v628 = vmax.f32 %v620, 0.0
      %v629 = vmax.f32 %v621, 0.0
      %v630 = vmax.f32 %v622, 0.0
      %v631 = vmax.f32 %v623, 0.0
      %v632 = vmax.f32 %v624, 0.0
      %v633 = vpack.c.bf16 %v626, %v625
      %v634 = vpack.c.bf16 %v628, %v627
      %v635 = vpack.c.bf16 %v630, %v629
      %v636 = vpack.c.bf16 %v632, %v631
      %v641 = vunpack.c.l.b16 %v633
      %v642 = vunpack.c.h.b16 %v633
      %v643 = vunpack.c.l.b16 %v634
      %v644 = vunpack.c.h.b16 %v634
      %v645 = vunpack.c.l.b16 %v635
      %v646 = vunpack.c.h.b16 %v635
      %v647 = vunpack.c.l.b16 %v636
      %v648 = vunpack.c.h.b16 %v636
      %v649 = vpack.c.b16 %v641, %v641
      %v650 = vpack.c.b16 %v642, %v642
      %v651 = vpack.c.b16 %v643, %v643
      %v652 = vpack.c.b16 %v644, %v644
      %v653 = vpack.c.b16 %v645, %v645
      %v654 = vpack.c.b16 %v646, %v646
      %v655 = vpack.c.b16 %v647, %v647
      %v656 = vpack.c.b16 %v648, %v648
      %vm665 = vcmask 125952
      %666 = vst.msk [vmem:[%s329] sm:$0xf] %vm665, %v649
      %667 = vst.msk [vmem:[%s329 + $0x4] sm:$0xf] %vm665, %v650
      %668 = vst.msk [vmem:[%s329 + $0x8] sm:$0xf] %vm665, %v651
      %669 = vst.msk [vmem:[%s329 + $0xc] sm:$0xf] %vm665, %v652
      %670 = vst.msk [vmem:[%s329 + $0x10] sm:$0xf] %vm665, %v653
      %671 = vst.msk [vmem:[%s329 + $0x14] sm:$0xf] %vm665, %v654
      %672 = vst.msk [vmem:[%s329 + $0x18] sm:$0xf] %vm665, %v655
      %673 = vst.msk [vmem:[%s329 + $0x1c] sm:$0xf] %vm665, %v656
      %s674 = smul.u32 8, %s19
      %p675 = scmp.lt.s32.totalorder %s674, 15
      %s676 = scalar_select %p675, %s674, 15
      %s677 = smul.addr %s676, 4
      %s678 = scalar_lea.vmem %s8, %s677
      // Predicated region
      $region53: #{_lambda_.8} parent=51 // pred_check
        %p679 = pneg %p215
      $region54: #{_lambda_.8} parent=51 // pred_check_branch
        %681 = sbr.rel (%p679) target = $region56
      $region55: #{_lambda_.8} parent=51 // pred_region
        %s682 = smul.u32 8, %s19
      $region56: #{_lambda_.8} parent=51 // pred_fallthru
        _
    $region52: #{_lambda_.8} parent=5 // pred_fallthru
      _
    %p683 = scmp.le.s32.totalorder 2, %s14
    // Predicated region
    $region57: #{_lambda_.8} parent=5 // pred_check
      %p684 = pneg %p683
    $region58: #{_lambda_.8} parent=5 // pred_check_branch
      %686 = sbr.rel (%p684) target = $region60
    $region59: #{_lambda_.8} parent=5 // pred_region
      %s687 = ssub.s32 %s14, 2
      // Predicated region
      $region61: #{_lambda_.8} parent=59 // pred_check
        %p688 = pneg %p221
      $region62: #{_lambda_.8} parent=59 // pred_check_branch
        %690 = sbr.rel (%p688) target = $region64
      $region63: #{_lambda_.8} parent=59 // pred_region
        %s691 = smul.u32 8, %s20
        %p692 = scmp.lt.s32.totalorder %s691, 15
        %s693 = scalar_select %p692, %s691, 15
        %s694 = smul.addr %s693, 4
        %s695 = scalar_lea.vmem %s8, %s694
      $region64: #{_lambda_.8} parent=59 // pred_fallthru
        _
    $region60: #{_lambda_.8} parent=5 // pred_fallthru
      _
  $region6: #{_lambda_.8} parent=0 // loop_footer
    %s18 = sadd.s32 1, %s14
  $region7: #{_lambda_.8} parent=0 // loop_footer_branch
    %13 = sbr.rel target = $region3
  $region8: #{_lambda_.8} parent=0 // loop_exit
    _

// kernel: _lambda_.9
$region0: #{_lambda_.9}
  #allocation0 [shape = 'u32[]', space=smem, size = 0x4, offset = 0x4, fixed_abs, tag = 'smem constant byte address 0x4 - core index']
  #allocation1 [shape = 'u32[144,128]{1,0:T(1,128)}', space=vmem, size = 0x12000, scoped, tag = 'internal scratch']
  %s0 = inlined_call_operand.vmem [shape: bf16[128,16], index: 0, kind: input, shape index: {}]
  %s1 = inlined_call_operand.vmem [shape: bf16[16,16], index: 1, kind: input, shape index: {}]
  %s2 = inlined_call_operand.vmem [shape: f32[1,16], index: 2, kind: input, shape index: {}]
  %s3 = inlined_call_operand.vmem [shape: f32[1,16], index: 3, kind: input, shape index: {}]
  %s4 = inlined_call_operand.vmem [shape: bf16[128,16], index: 4, kind: output, shape index: {}]
  %s5 = sld [smem:[#allocation0]]
  $region49: #{_lambda_.9} parent=0
    _
  %s7 = ssub.s32 1, %s5
  %s8 = scalar_select 0, %s7, %s5
  loop: start=0, step=1, limit=4
  $region2: #{_lambda_.9} parent=0 // loop_pre_header
    _
  $region3: #{_lambda_.9} parent=0 // loop_header
    %s10 = sphi 0, %s14
    %p11 = scmp.ge.s32.totalorder %s10, 4
    %s20 = sphi 0, %s22
    %s23 = sphi 0, %s20
    %s24 = sphi 0, %s23
    %s40 = sphi 0, %s24
    %s44 = sphi 0, %s44
    %s46 = sphi 0, %s44
    %s47 = sphi 0, %s46
    %s61 = sphi 0, %s47
    %s65 = sphi 0, %s65
    %s67 = sphi 0, %s65
    %s68 = sphi 0, %s67
    %s82 = sphi 0, %s68
    %s86 = sphi 0, %s86
    %s88 = sphi 0, %s86
    %s89 = sphi 0, %s88
    %s103 = sphi 0, %s89
    %s109 = sphi 0, %s111
    %s112 = sphi 0, %s109
    %s113 = sphi 0, %s112
    %s129 = sphi 0, %s113
  $region4: #{_lambda_.9} parent=0 // loop_header_branch
    %13 = sbr.rel (%p11) target = $region8
  $region5: #{_lambda_.9} parent=0 // loop_body
    %s15 = ssub.s32 %s10, 1
    %s16 = ssub.s32 %s10, 2
    %s17 = sadd.s32 %s10, 1
    %s18 = ssub.s32 %s10, %s17
    %p19 = scmp.eq.s32.totalorder %s18, 0
    %s21 = sadd.s32 %s20, 1
    %s22 = scalar_select %p19, %s20, %s21
    %p25 = pneg %p19
    %p26 = scmp.eq.s32.totalorder %s10, 1
    %p27 = por %p25, %p26
    %p28 = scmp.ne.s32.totalorder %s20, %s23
    %p29 = scmp.eq.s32.totalorder %s10, 0
    %p30 = por %p28, %p29
    %p31 = scmp.ne.s32.totalorder %s20, %s23
    %p32 = scmp.eq.s32.totalorder %s15, 1
    %p33 = por %p31, %p32
    %p34 = scmp.ne.s32.totalorder %s23, %s24
    %p35 = scmp.eq.s32.totalorder %s15, 0
    %p36 = por %p34, %p35
    %p37 = scmp.ne.s32.totalorder %s23, %s24
    %p38 = scmp.eq.s32.totalorder %s16, 1
    %p39 = por %p37, %p38
    %p41 = scmp.ne.s32.totalorder %s24, %s40
    %p42 = scmp.eq.s32.totalorder %s16, 0
    %p43 = por %p41, %p42
    %s45 = sadd.s32 %s44, 1
    %p48 = scmp.eq.s32.totalorder %s10, 1
    %p49 = scmp.ne.s32.totalorder %s44, %s46
    %p50 = scmp.eq.s32.totalorder %s10, 0
    %p51 = por %p49, %p50
    %p52 = scmp.ne.s32.totalorder %s44, %s46
    %p53 = scmp.eq.s32.totalorder %s15, 1
    %p54 = por %p52, %p53
    %p55 = scmp.ne.s32.totalorder %s46, %s47
    %p56 = scmp.eq.s32.totalorder %s15, 0
    %p57 = por %p55, %p56
    %p58 = scmp.ne.s32.totalorder %s46, %s47
    %p59 = scmp.eq.s32.totalorder %s16, 1
    %p60 = por %p58, %p59
    %p62 = scmp.ne.s32.totalorder %s47, %s61
    %p63 = scmp.eq.s32.totalorder %s16, 0
    %p64 = por %p62, %p63
    %s66 = sadd.s32 %s65, 1
    %p69 = scmp.eq.s32.totalorder %s10, 1
    %p70 = scmp.ne.s32.totalorder %s65, %s67
    %p71 = scmp.eq.s32.totalorder %s10, 0
    %p72 = por %p70, %p71
    %p73 = scmp.ne.s32.totalorder %s65, %s67
    %p74 = scmp.eq.s32.totalorder %s15, 1
    %p75 = por %p73, %p74
    %p76 = scmp.ne.s32.totalorder %s67, %s68
    %p77 = scmp.eq.s32.totalorder %s15, 0
    %p78 = por %p76, %p77
    %p79 = scmp.ne.s32.totalorder %s67, %s68
    %p80 = scmp.eq.s32.totalorder %s16, 1
    %p81 = por %p79, %p80
    %p83 = scmp.ne.s32.totalorder %s68, %s82
    %p84 = scmp.eq.s32.totalorder %s16, 0
    %p85 = por %p83, %p84
    %s87 = sadd.s32 %s86, 1
    %p90 = scmp.eq.s32.totalorder %s10, 1
    %p91 = scmp.ne.s32.totalorder %s86, %s88
    %p92 = scmp.eq.s32.totalorder %s10, 0
    %p93 = por %p91, %p92
    %p94 = scmp.ne.s32.totalorder %s86, %s88
    %p95 = scmp.eq.s32.totalorder %s15, 1
    %p96 = por %p94, %p95
    %p97 = scmp.ne.s32.totalorder %s88, %s89
    %p98 = scmp.eq.s32.totalorder %s15, 0
    %p99 = por %p97, %p98
    %p100 = scmp.ne.s32.totalorder %s88, %s89
    %p101 = scmp.eq.s32.totalorder %s16, 1
    %p102 = por %p100, %p101
    %p104 = scmp.ne.s32.totalorder %s89, %s103
    %p105 = scmp.eq.s32.totalorder %s16, 0
    %p106 = por %p104, %p105
    %s107 = ssub.s32 %s10, %s17
    %p108 = scmp.eq.s32.totalorder %s107, 0
    %s110 = sadd.s32 %s109, 1
    %s111 = scalar_select %p108, %s109, %s110
    %p114 = pneg %p108
    %p115 = scmp.eq.s32.totalorder %s10, 1
    %p116 = por %p114, %p115
    %p117 = scmp.ne.s32.totalorder %s109, %s112
    %p118 = scmp.eq.s32.totalorder %s10, 0
    %p119 = por %p117, %p118
    %p120 = scmp.ne.s32.totalorder %s109, %s112
    %p121 = scmp.eq.s32.totalorder %s15, 1
    %p122 = por %p120, %p121
    %p123 = scmp.ne.s32.totalorder %s112, %s113
    %p124 = scmp.eq.s32.totalorder %s15, 0
    %p125 = por %p123, %p124
    %p126 = scmp.ne.s32.totalorder %s112, %s113
    %p127 = scmp.eq.s32.totalorder %s16, 1
    %p128 = por %p126, %p127
    %p130 = scmp.ne.s32.totalorder %s113, %s129
    %p131 = scmp.eq.s32.totalorder %s16, 0
    %p132 = por %p130, %p131
    %p133 = scmp.le.s32.totalorder 1, %s10
    %p134 = scmp.lt.s32.totalorder %s10, 3
    %p135 = pnand %p133, %p134
    %p136 = pneg %p135
    // Predicated region
    $region9: #{_lambda_.9} parent=5 // pred_check
      _
    $region10: #{_lambda_.9} parent=5 // pred_check_branch
      %138 = sbr.rel (%p135) target = $region12
    $region11: #{_lambda_.9} parent=5 // pred_region
      %s139 = ssub.s32 %s10, 1
      // Predicated region
      $region13: #{_lambda_.9} parent=11 // pred_check
        %p140 = pneg %p57
      $region14: #{_lambda_.9} parent=11 // pred_check_branch
        %142 = sbr.rel (%p140) target = $region16
      $region15: #{_lambda_.9} parent=11 // pred_region
        _
      $region16: #{_lambda_.9} parent=11 // pred_fallthru
        _
      // Predicated region
      $region17: #{_lambda_.9} parent=11 // pred_check
        %p143 = pneg %p78
      $region18: #{_lambda_.9} parent=11 // pred_check_branch
        %145 = sbr.rel (%p143) target = $region20
      $region19: #{_lambda_.9} parent=11 // pred_region
        _
      $region20: #{_lambda_.9} parent=11 // pred_fallthru
        _
      // Predicated region
      $region21: #{_lambda_.9} parent=11 // pred_check
        %p146 = pneg %p99
      $region22: #{_lambda_.9} parent=11 // pred_check_branch
        %148 = sbr.rel (%p146) target = $region24
      $region23: #{_lambda_.9} parent=11 // pred_region
        _
      $region24: #{_lambda_.9} parent=11 // pred_fallthru
        _
    $region12: #{_lambda_.9} parent=5 // pred_fallthru
      _
    %p149 = scmp.lt.s32.totalorder %s10, 2
    // Predicated region
    $region25: #{_lambda_.9} parent=5 // pred_check
      %p150 = pneg %p149
    $region26: #{_lambda_.9} parent=5 // pred_check_branch
      %152 = sbr.rel (%p150) target = $region28
    $region27: #{_lambda_.9} parent=5 // pred_region
      // Predicated region
      $region29: #{_lambda_.9} parent=27 // pred_check
        %p153 = pneg %p30
      $region30: #{_lambda_.9} parent=27 // pred_check_branch
        %155 = sbr.rel (%p153) target = $region32
      $region31: #{_lambda_.9} parent=27 // pred_region
        %s156 = smul.u32 8, %s10
        %p157 = scmp.lt.s32.totalorder %s156, 15
        %s158 = scalar_select %p157, %s156, 15
        %s159 = smul.addr %s158, 4
        %s160 = scalar_lea.vmem %s0, %s159
        %s161 = smul.u32 8, %s10
      $region32: #{_lambda_.9} parent=27 // pred_fallthru
        _
    $region28: #{_lambda_.9} parent=5 // pred_fallthru
      _
    %p162 = scmp.le.s32.totalorder 1, %s10
    %p163 = scmp.lt.s32.totalorder %s10, 3
    %p164 = pnand %p162, %p163
    %p165 = pneg %p164
    // Predicated region
    $region33: #{_lambda_.9} parent=5 // pred_check
      _
    $region34: #{_lambda_.9} parent=5 // pred_check_branch
      %167 = sbr.rel (%p164) target = $region36
    $region35: #{_lambda_.9} parent=5 // pred_region
      %s168 = ssub.s32 %s10, 1
      %s169 = smul.u32 8, %s15
      %p170 = scmp.lt.s32.totalorder %s169, 15
      %s171 = scalar_select %p170, %s169, 15
      %s172 = smul.addr %s171, 4
      %s173 = scalar_lea.vmem %s0, %s172
      %p174 = pneg %p36
      %p175 = pneg %p33
      %p176 = pneg %p57
      %p177 = pneg %p54
      %p178 = pneg %p78
      %p179 = pneg %p75
      %p180 = pneg %p99
      %p181 = pneg %p96
      %p182 = pneg %p125
      %p183 = pneg %p122
      %s184 = smul.u32 8, %s15
      %p185 = scmp.lt.s32.totalorder %s184, 15
      %s186 = scalar_select %p185, %s184, 15
      %s187 = smul.addr %s186, 4
      %s188 = scalar_lea.vmem %s4, %s187
      %s189 = smul.u32 8, %s15
      %p190 = scmp.lt.s32.totalorder %s189, 15
      %s191 = scalar_select %p190, %s189, 15
      %s192 = smul.addr %s191, 4
      %s193 = scalar_lea.vmem %s0, %s192
      %s194 = smul.u32 8, %s15
      %s195 = smul.u32 8, %s15
      %p196 = scmp.lt.s32.totalorder %s195, 15
      %s197 = scalar_select %p196, %s195, 15
      %s198 = smul.addr %s197, 4
      %s199 = scalar_lea.vmem %s4, %s198
      %s200 = smul.u32 8, %s15
      %v202 = vld [vmem:[%s193] sm:$0xf]
      %v203 = vld [vmem:[%s193 + $0x4] sm:$0xf]
      %v204 = vld [vmem:[%s193 + $0x8] sm:$0xf]
      %v205 = vld [vmem:[%s193 + $0xc] sm:$0xf]
      %v206 = vld [vmem:[%s193 + $0x10] sm:$0xf]
      %v207 = vld [vmem:[%s193 + $0x14] sm:$0xf]
      %v208 = vld [vmem:[%s193 + $0x18] sm:$0xf]
      %v209 = vld [vmem:[%s193 + $0x1c] sm:$0xf]
      %v210 = vld [vmem:[%s1] sm:$0xf]
      %v211 = vld [vmem:[%s1 + $0x4] sm:$0xf]
      %v220 = vunpack.c.l.b16 %v202
      %v221 = vunpack.c.l.b16 %v203
      %v222 = vunpack.c.l.b16 %v204
      %v223 = vunpack.c.l.b16 %v205
      %v224 = vunpack.c.l.b16 %v206
      %v225 = vunpack.c.l.b16 %v207
      %v226 = vunpack.c.l.b16 %v208
      %v227 = vunpack.c.l.b16 %v209
      %v228 = vpack.c.b16 %v221, %v220
      %v229 = vpack.c.b16 %v223, %v222
      %v230 = vpack.c.b16 %v225, %v224
      %v231 = vpack.c.b16 %v227, %v226
      %v234 = vunpack.c.l.b16 %v210
      %v235 = vunpack.c.l.b16 %v211
      %v236 = vpack.c.b16 %v235, %v234
      %vm238 = vcmask 130048
      %v240 = vsel %vm238, %v228, 0
      %v243 = vsel %vm238, %v229, 0
      %v246 = vsel %vm238, %v230, 0
      %v249 = vsel %vm238, %v231, 0
      %251 = vmatprep.subr.bf16.mxu0 0
      %252 = vmatpush1.bf16.msra.mxu0 %v236
      %253 = vmatprep.subr.bf16.mxu0 0
      %254 = vmatpush1.bf16.msra.mxu0 0
      %255 = vmatprep.subr.bf16.mxu0 0
      %256 = vmatpush1.bf16.msra.mxu0 0
      %257 = vmatprep.subr.bf16.mxu0 0
      %258 = vmatpush1.bf16.msra.mxu0 0
      %259 = vmatprep.subr.bf16.mxu0 0
      %260 = vmatpush1.bf16.msra.mxu0 0
      %261 = vmatprep.subr.bf16.mxu0 0
      %262 = vmatpush1.bf16.msra.mxu0 0
      %263 = vmatprep.subr.bf16.mxu0 0
      %264 = vmatpush1.bf16.msra.mxu0 0
      %265 = vmatprep.subr.bf16.mxu0 0
      %266 = vmatpush1.bf16.msra.mxu0 0
      %267 = vmatprep.subr.bf16.mxu0 0
      %268 = vmatpush1.bf16.msra.mxu0 0
      %269 = vmatprep.subr.bf16.mxu0 0
      %270 = vmatpush1.bf16.msra.mxu0 0
      %271 = vmatprep.subr.bf16.mxu0 0
      %272 = vmatpush1.bf16.msra.mxu0 0
      %273 = vmatprep.subr.bf16.mxu0 0
      %274 = vmatpush1.bf16.msra.mxu0 0
      %275 = vmatprep.subr.bf16.mxu0 0
      %276 = vmatpush1.bf16.msra.mxu0 0
      %277 = vmatprep.subr.bf16.mxu0 0
      %278 = vmatpush1.bf16.msra.mxu0 0
      %279 = vmatprep.subr.bf16.mxu0 0
      %280 = vmatpush1.bf16.msra.mxu0 0
      %281 = vmatprep.subr.bf16.mxu0 0
      %282 = vmatpush1.bf16.msra.mxu0 0
      %283 = vmatprep.mubr.bf16.mxu0 0
      %284 = vmatmul.mubr.bf16.gmra.mrb[0].mxu0 %v240
      %v285 = vpop.f32.mrb[0].mxu0
      %v286 = vadd.f32 0.0, %v285
      %v287 = vpop.f32.mrb[0].mxu0
      %v288 = vpop.f32.mrb[0].mxu0
      %v289 = vadd.f32 0.0, %v288
      %v290 = vpop.f32.mrb[0].mxu0
      %291 = vmatprep.mubr.bf16.mxu0 0
      %292 = vmatmul.mubr.bf16.gmra.mrb[0].mxu0 %v243
      %v293 = vpop.f32.mrb[0].mxu0
      %v294 = vadd.f32 0.0, %v293
      %v295 = vpop.f32.mrb[0].mxu0
      %v296 = vpop.f32.mrb[0].mxu0
      %v297 = vadd.f32 0.0, %v296
      %v298 = vpop.f32.mrb[0].mxu0
      %299 = vmatprep.mubr.bf16.mxu0 0
      %300 = vmatmul.mubr.bf16.gmra.mrb[0].mxu0 %v246
      %v301 = vpop.f32.mrb[0].mxu0
      %v302 = vadd.f32 0.0, %v301
      %v303 = vpop.f32.mrb[0].mxu0
      %v304 = vpop.f32.mrb[0].mxu0
      %v305 = vadd.f32 0.0, %v304
      %v306 = vpop.f32.mrb[0].mxu0
      %307 = vmatprep.mubr.bf16.mxu0 0
      %308 = vmatmul.mubr.bf16.gmra.mrb[0].mxu0 %v249
      %v309 = vpop.f32.mrb[0].mxu0
      %v310 = vadd.f32 0.0, %v309
      %v311 = vpop.f32.mrb[0].mxu0
      %v312 = vpop.f32.mrb[0].mxu0
      %v313 = vadd.f32 0.0, %v312
      %v314 = vpop.f32.mrb[0].mxu0
      %315 = vdwg.mxu0
      %v316 = vld [vmem:[%s2] sm:$0x1]
      %v318 = vlaneseq
      %v319 = vshrl.u32 %v318, 7
      %v320 = vsub.s32 0, %v319
      %v321 = vrot.slane %v316, %v320
      %v323 = vmul.f32 %v286, %v321
      %v324 = vmul.f32 %v289, %v321
      %v325 = vmul.f32 %v294, %v321
      %v326 = vmul.f32 %v297, %v321
      %v327 = vmul.f32 %v302, %v321
      %v328 = vmul.f32 %v305, %v321
      %v329 = vmul.f32 %v310, %v321
      %v330 = vmul.f32 %v313, %v321
      %v331 = vld [vmem:[%s3] sm:$0x1]
      %v333 = vlaneseq
      %v334 = vshrl.u32 %v333, 7
      %v335 = vsub.s32 0, %v334
      %v336 = vrot.slane %v331, %v335
      %v338 = vadd.f32 %v323, %v336
      %v339 = vadd.f32 %v324, %v336
      %v340 = vadd.f32 %v325, %v336
      %v341 = vadd.f32 %v326, %v336
      %v342 = vadd.f32 %v327, %v336
      %v343 = vadd.f32 %v328, %v336
      %v344 = vadd.f32 %v329, %v336
      %v345 = vadd.f32 %v330, %v336
      %v346 = vmax.f32 %v338, 0.0
      %v347 = vmax.f32 %v339, 0.0
      %v348 = vmax.f32 %v340, 0.0
      %v349 = vmax.f32 %v341, 0.0
      %v350 = vmax.f32 %v342, 0.0
      %v351 = vmax.f32 %v343, 0.0
      %v352 = vmax.f32 %v344, 0.0
      %v353 = vmax.f32 %v345, 0.0
      %v354 = vpack.c.bf16 %v347, %v346
      %v355 = vpack.c.bf16 %v349, %v348
      %v356 = vpack.c.bf16 %v351, %v350
      %v357 = vpack.c.bf16 %v353, %v352
      %v362 = vunpack.c.l.b16 %v354
      %v363 = vunpack.c.h.b16 %v354
      %v364 = vunpack.c.l.b16 %v355
      %v365 = vunpack.c.h.b16 %v355
      %v366 = vunpack.c.l.b16 %v356
      %v367 = vunpack.c.h.b16 %v356
      %v368 = vunpack.c.l.b16 %v357
      %v369 = vunpack.c.h.b16 %v357
      %v370 = vpack.c.b16 %v362, %v362
      %v371 = vpack.c.b16 %v363, %v363
      %v372 = vpack.c.b16 %v364, %v364
      %v373 = vpack.c.b16 %v365, %v365
      %v374 = vpack.c.b16 %v366, %v366
      %v375 = vpack.c.b16 %v367, %v367
      %v376 = vpack.c.b16 %v368, %v368
      %v377 = vpack.c.b16 %v369, %v369
      %vm386 = vcmask 125952
      %387 = vst.msk [vmem:[%s199] sm:$0xf] %vm386, %v370
      %388 = vst.msk [vmem:[%s199 + $0x4] sm:$0xf] %vm386, %v371
      %389 = vst.msk [vmem:[%s199 + $0x8] sm:$0xf] %vm386, %v372
      %390 = vst.msk [vmem:[%s199 + $0xc] sm:$0xf] %vm386, %v373
      %391 = vst.msk [vmem:[%s199 + $0x10] sm:$0xf] %vm386, %v374
      %392 = vst.msk [vmem:[%s199 + $0x14] sm:$0xf] %vm386, %v375
      %393 = vst.msk [vmem:[%s199 + $0x18] sm:$0xf] %vm386, %v376
      %394 = vst.msk [vmem:[%s199 + $0x1c] sm:$0xf] %vm386, %v377
      %s395 = smul.u32 8, %s15
      %p396 = scmp.lt.s32.totalorder %s395, 15
      %s397 = scalar_select %p396, %s395, 15
      %s398 = smul.addr %s397, 4
      %s399 = scalar_lea.vmem %s4, %s398
      // Predicated region
      $region37: #{_lambda_.9} parent=35 // pred_check
        %p400 = pneg %p122
      $region38: #{_lambda_.9} parent=35 // pred_check_branch
        %402 = sbr.rel (%p400) target = $region40
      $region39: #{_lambda_.9} parent=35 // pred_region
        %s403 = smul.u32 8, %s15
      $region40: #{_lambda_.9} parent=35 // pred_fallthru
        _
    $region36: #{_lambda_.9} parent=5 // pred_fallthru
      _
    %p404 = scmp.le.s32.totalorder 2, %s10
    // Predicated region
    $region41: #{_lambda_.9} parent=5 // pred_check
      %p405 = pneg %p404
    $region42: #{_lambda_.9} parent=5 // pred_check_branch
      %407 = sbr.rel (%p405) target = $region44
    $region43: #{_lambda_.9} parent=5 // pred_region
      %s408 = ssub.s32 %s10, 2
      // Predicated region
      $region45: #{_lambda_.9} parent=43 // pred_check
        %p409 = pneg %p128
      $region46: #{_lambda_.9} parent=43 // pred_check_branch
        %411 = sbr.rel (%p409) target = $region48
      $region47: #{_lambda_.9} parent=43 // pred_region
        %s412 = smul.u32 8, %s16
        %p413 = scmp.lt.s32.totalorder %s412, 15
        %s414 = scalar_select %p413, %s412, 15
        %s415 = smul.addr %s414, 4
        %s416 = scalar_lea.vmem %s4, %s415
      $region48: #{_lambda_.9} parent=43 // pred_fallthru
        _
    $region44: #{_lambda_.9} parent=5 // pred_fallthru
      _
  $region6: #{_lambda_.9} parent=0 // loop_footer
    %s14 = sadd.s32 1, %s10
  $region7: #{_lambda_.9} parent=0 // loop_footer_branch
    %9 = sbr.rel target = $region3
  $region8: #{_lambda_.9} parent=0 // loop_exit
    _

// kernel: _lambda_.11
$region0: #{_lambda_.11}
  #allocation0 [shape = 'u32[]', space=smem, size = 0x4, offset = 0x4, fixed_abs, tag = 'smem constant byte address 0x4 - core index']
  #allocation1 [shape = 'u32[144,128]{1,0:T(1,128)}', space=vmem, size = 0x12000, scoped, tag = 'internal scratch']
  %s0 = inlined_call_operand.vmem [shape: bf16[128,16], index: 0, kind: input, shape index: {}]
  %s1 = inlined_call_operand.vmem [shape: bf16[16,16], index: 1, kind: input, shape index: {}]
  %s2 = inlined_call_operand.vmem [shape: f32[1,16], index: 2, kind: input, shape index: {}]
  %s3 = inlined_call_operand.vmem [shape: f32[1,16], index: 3, kind: input, shape index: {}]
  %s4 = inlined_call_operand.vmem [shape: bf16[128,16], index: 4, kind: input, shape index: {}]
  %s5 = inlined_call_operand.vmem [shape: bf16[128,16], index: 5, kind: output, shape index: {}]
  %s6 = sld [smem:[#allocation0]]
  $region53: #{_lambda_.11} parent=0
    _
  %s8 = ssub.s32 1, %s6
  %s9 = scalar_select 0, %s8, %s6
  loop: start=0, step=1, limit=4
  $region2: #{_lambda_.11} parent=0 // loop_pre_header
    _
  $region3: #{_lambda_.11} parent=0 // loop_header
    %s11 = sphi 0, %s15
    %p12 = scmp.ge.s32.totalorder %s11, 4
    %s21 = sphi 0, %s23
    %s24 = sphi 0, %s21
    %s25 = sphi 0, %s24
    %s41 = sphi 0, %s25
    %s45 = sphi 0, %s45
    %s47 = sphi 0, %s45
    %s48 = sphi 0, %s47
    %s62 = sphi 0, %s48
    %s66 = sphi 0, %s66
    %s68 = sphi 0, %s66
    %s69 = sphi 0, %s68
    %s83 = sphi 0, %s69
    %s87 = sphi 0, %s87
    %s89 = sphi 0, %s87
    %s90 = sphi 0, %s89
    %s104 = sphi 0, %s90
    %s110 = sphi 0, %s112
    %s113 = sphi 0, %s110
    %s114 = sphi 0, %s113
    %s130 = sphi 0, %s114
    %s136 = sphi 0, %s138
    %s139 = sphi 0, %s136
    %s140 = sphi 0, %s139
    %s156 = sphi 0, %s140
  $region4: #{_lambda_.11} parent=0 // loop_header_branch
    %14 = sbr.rel (%p12) target = $region8
  $region5: #{_lambda_.11} parent=0 // loop_body
    %s16 = ssub.s32 %s11, 1
    %s17 = ssub.s32 %s11, 2
    %s18 = sadd.s32 %s11, 1
    %s19 = ssub.s32 %s11, %s18
    %p20 = scmp.eq.s32.totalorder %s19, 0
    %s22 = sadd.s32 %s21, 1
    %s23 = scalar_select %p20, %s21, %s22
    %p26 = pneg %p20
    %p27 = scmp.eq.s32.totalorder %s11, 1
    %p28 = por %p26, %p27
    %p29 = scmp.ne.s32.totalorder %s21, %s24
    %p30 = scmp.eq.s32.totalorder %s11, 0
    %p31 = por %p29, %p30
    %p32 = scmp.ne.s32.totalorder %s21, %s24
    %p33 = scmp.eq.s32.totalorder %s16, 1
    %p34 = por %p32, %p33
    %p35 = scmp.ne.s32.totalorder %s24, %s25
    %p36 = scmp.eq.s32.totalorder %s16, 0
    %p37 = por %p35, %p36
    %p38 = scmp.ne.s32.totalorder %s24, %s25
    %p39 = scmp.eq.s32.totalorder %s17, 1
    %p40 = por %p38, %p39
    %p42 = scmp.ne.s32.totalorder %s25, %s41
    %p43 = scmp.eq.s32.totalorder %s17, 0
    %p44 = por %p42, %p43
    %s46 = sadd.s32 %s45, 1
    %p49 = scmp.eq.s32.totalorder %s11, 1
    %p50 = scmp.ne.s32.totalorder %s45, %s47
    %p51 = scmp.eq.s32.totalorder %s11, 0
    %p52 = por %p50, %p51
    %p53 = scmp.ne.s32.totalorder %s45, %s47
    %p54 = scmp.eq.s32.totalorder %s16, 1
    %p55 = por %p53, %p54
    %p56 = scmp.ne.s32.totalorder %s47, %s48
    %p57 = scmp.eq.s32.totalorder %s16, 0
    %p58 = por %p56, %p57
    %p59 = scmp.ne.s32.totalorder %s47, %s48
    %p60 = scmp.eq.s32.totalorder %s17, 1
    %p61 = por %p59, %p60
    %p63 = scmp.ne.s32.totalorder %s48, %s62
    %p64 = scmp.eq.s32.totalorder %s17, 0
    %p65 = por %p63, %p64
    %s67 = sadd.s32 %s66, 1
    %p70 = scmp.eq.s32.totalorder %s11, 1
    %p71 = scmp.ne.s32.totalorder %s66, %s68
    %p72 = scmp.eq.s32.totalorder %s11, 0
    %p73 = por %p71, %p72
    %p74 = scmp.ne.s32.totalorder %s66, %s68
    %p75 = scmp.eq.s32.totalorder %s16, 1
    %p76 = por %p74, %p75
    %p77 = scmp.ne.s32.totalorder %s68, %s69
    %p78 = scmp.eq.s32.totalorder %s16, 0
    %p79 = por %p77, %p78
    %p80 = scmp.ne.s32.totalorder %s68, %s69
    %p81 = scmp.eq.s32.totalorder %s17, 1
    %p82 = por %p80, %p81
    %p84 = scmp.ne.s32.totalorder %s69, %s83
    %p85 = scmp.eq.s32.totalorder %s17, 0
    %p86 = por %p84, %p85
    %s88 = sadd.s32 %s87, 1
    %p91 = scmp.eq.s32.totalorder %s11, 1
    %p92 = scmp.ne.s32.totalorder %s87, %s89
    %p93 = scmp.eq.s32.totalorder %s11, 0
    %p94 = por %p92, %p93
    %p95 = scmp.ne.s32.totalorder %s87, %s89
    %p96 = scmp.eq.s32.totalorder %s16, 1
    %p97 = por %p95, %p96
    %p98 = scmp.ne.s32.totalorder %s89, %s90
    %p99 = scmp.eq.s32.totalorder %s16, 0
    %p100 = por %p98, %p99
    %p101 = scmp.ne.s32.totalorder %s89, %s90
    %p102 = scmp.eq.s32.totalorder %s17, 1
    %p103 = por %p101, %p102
    %p105 = scmp.ne.s32.totalorder %s90, %s104
    %p106 = scmp.eq.s32.totalorder %s17, 0
    %p107 = por %p105, %p106
    %s108 = ssub.s32 %s11, %s18
    %p109 = scmp.eq.s32.totalorder %s108, 0
    %s111 = sadd.s32 %s110, 1
    %s112 = scalar_select %p109, %s110, %s111
    %p115 = pneg %p109
    %p116 = scmp.eq.s32.totalorder %s11, 1
    %p117 = por %p115, %p116
    %p118 = scmp.ne.s32.totalorder %s110, %s113
    %p119 = scmp.eq.s32.totalorder %s11, 0
    %p120 = por %p118, %p119
    %p121 = scmp.ne.s32.totalorder %s110, %s113
    %p122 = scmp.eq.s32.totalorder %s16, 1
    %p123 = por %p121, %p122
    %p124 = scmp.ne.s32.totalorder %s113, %s114
    %p125 = scmp.eq.s32.totalorder %s16, 0
    %p126 = por %p124, %p125
    %p127 = scmp.ne.s32.totalorder %s113, %s114
    %p128 = scmp.eq.s32.totalorder %s17, 1
    %p129 = por %p127, %p128
    %p131 = scmp.ne.s32.totalorder %s114, %s130
    %p132 = scmp.eq.s32.totalorder %s17, 0
    %p133 = por %p131, %p132
    %s134 = ssub.s32 %s11, %s18
    %p135 = scmp.eq.s32.totalorder %s134, 0
    %s137 = sadd.s32 %s136, 1
    %s138 = scalar_select %p135, %s136, %s137
    %p141 = pneg %p135
    %p142 = scmp.eq.s32.totalorder %s11, 1
    %p143 = por %p141, %p142
    %p144 = scmp.ne.s32.totalorder %s136, %s139
    %p145 = scmp.eq.s32.totalorder %s11, 0
    %p146 = por %p144, %p145
    %p147 = scmp.ne.s32.totalorder %s136, %s139
    %p148 = scmp.eq.s32.totalorder %s16, 1
    %p149 = por %p147, %p148
    %p150 = scmp.ne.s32.totalorder %s139, %s140
    %p151 = scmp.eq.s32.totalorder %s16, 0
    %p152 = por %p150, %p151
    %p153 = scmp.ne.s32.totalorder %s139, %s140
    %p154 = scmp.eq.s32.totalorder %s17, 1
    %p155 = por %p153, %p154
    %p157 = scmp.ne.s32.totalorder %s140, %s156
    %p158 = scmp.eq.s32.totalorder %s17, 0
    %p159 = por %p157, %p158
    %p160 = scmp.le.s32.totalorder 1, %s11
    %p161 = scmp.lt.s32.totalorder %s11, 3
    %p162 = pnand %p160, %p161
    %p163 = pneg %p162
    // Predicated region
    $region9: #{_lambda_.11} parent=5 // pred_check
      _
    $region10: #{_lambda_.11} parent=5 // pred_check_branch
      %165 = sbr.rel (%p162) target = $region12
    $region11: #{_lambda_.11} parent=5 // pred_region
      %s166 = ssub.s32 %s11, 1
      // Predicated region
      $region13: #{_lambda_.11} parent=11 // pred_check
        %p167 = pneg %p58
      $region14: #{_lambda_.11} parent=11 // pred_check_branch
        %169 = sbr.rel (%p167) target = $region16
      $region15: #{_lambda_.11} parent=11 // pred_region
        _
      $region16: #{_lambda_.11} parent=11 // pred_fallthru
        _
      // Predicated region
      $region17: #{_lambda_.11} parent=11 // pred_check
        %p170 = pneg %p79
      $region18: #{_lambda_.11} parent=11 // pred_check_branch
        %172 = sbr.rel (%p170) target = $region20
      $region19: #{_lambda_.11} parent=11 // pred_region
        _
      $region20: #{_lambda_.11} parent=11 // pred_fallthru
        _
      // Predicated region
      $region21: #{_lambda_.11} parent=11 // pred_check
        %p173 = pneg %p100
      $region22: #{_lambda_.11} parent=11 // pred_check_branch
        %175 = sbr.rel (%p173) target = $region24
      $region23: #{_lambda_.11} parent=11 // pred_region
        _
      $region24: #{_lambda_.11} parent=11 // pred_fallthru
        _
    $region12: #{_lambda_.11} parent=5 // pred_fallthru
      _
    %p176 = scmp.lt.s32.totalorder %s11, 2
    // Predicated region
    $region25: #{_lambda_.11} parent=5 // pred_check
      %p177 = pneg %p176
    $region26: #{_lambda_.11} parent=5 // pred_check_branch
      %179 = sbr.rel (%p177) target = $region28
    $region27: #{_lambda_.11} parent=5 // pred_region
      // Predicated region
      $region29: #{_lambda_.11} parent=27 // pred_check
        %p180 = pneg %p31
      $region30: #{_lambda_.11} parent=27 // pred_check_branch
        %182 = sbr.rel (%p180) target = $region32
      $region31: #{_lambda_.11} parent=27 // pred_region
        %s183 = smul.u32 8, %s11
        %p184 = scmp.lt.s32.totalorder %s183, 15
        %s185 = scalar_select %p184, %s183, 15
        %s186 = smul.addr %s185, 4
        %s187 = scalar_lea.vmem %s0, %s186
        %s188 = smul.u32 8, %s11
      $region32: #{_lambda_.11} parent=27 // pred_fallthru
        _
      // Predicated region
      $region33: #{_lambda_.11} parent=27 // pred_check
        %p189 = pneg %p120
      $region34: #{_lambda_.11} parent=27 // pred_check_branch
        %191 = sbr.rel (%p189) target = $region36
      $region35: #{_lambda_.11} parent=27 // pred_region
        %s192 = smul.u32 8, %s11
        %p193 = scmp.lt.s32.totalorder %s192, 15
        %s194 = scalar_select %p193, %s192, 15
        %s195 = smul.addr %s194, 4
        %s196 = scalar_lea.vmem %s4, %s195
        %s197 = smul.u32 8, %s11
      $region36: #{_lambda_.11} parent=27 // pred_fallthru
        _
    $region28: #{_lambda_.11} parent=5 // pred_fallthru
      _
    %p198 = scmp.le.s32.totalorder 1, %s11
    %p199 = scmp.lt.s32.totalorder %s11, 3
    %p200 = pnand %p198, %p199
    %p201 = pneg %p200
    // Predicated region
    $region37: #{_lambda_.11} parent=5 // pred_check
      _
    $region38: #{_lambda_.11} parent=5 // pred_check_branch
      %203 = sbr.rel (%p200) target = $region40
    $region39: #{_lambda_.11} parent=5 // pred_region
      %s204 = ssub.s32 %s11, 1
      %s205 = smul.u32 8, %s16
      %p206 = scmp.lt.s32.totalorder %s205, 15
      %s207 = scalar_select %p206, %s205, 15
      %s208 = smul.addr %s207, 4
      %s209 = scalar_lea.vmem %s0, %s208
      %p210 = pneg %p37
      %p211 = pneg %p34
      %p212 = pneg %p58
      %p213 = pneg %p55
      %p214 = pneg %p79
      %p215 = pneg %p76
      %p216 = pneg %p100
      %p217 = pneg %p97
      %s218 = smul.u32 8, %s16
      %p219 = scmp.lt.s32.totalorder %s218, 15
      %s220 = scalar_select %p219, %s218, 15
      %s221 = smul.addr %s220, 4
      %s222 = scalar_lea.vmem %s4, %s221
      %p223 = pneg %p126
      %p224 = pneg %p123
      %p225 = pneg %p152
      %p226 = pneg %p149
      %s227 = smul.u32 8, %s16
      %p228 = scmp.lt.s32.totalorder %s227, 15
      %s229 = scalar_select %p228, %s227, 15
      %s230 = smul.addr %s229, 4
      %s231 = scalar_lea.vmem %s5, %s230
      %s232 = smul.u32 8, %s16
      %p233 = scmp.lt.s32.totalorder %s232, 15
      %s234 = scalar_select %p233, %s232, 15
      %s235 = smul.addr %s234, 4
      %s236 = scalar_lea.vmem %s0, %s235
      %s237 = smul.u32 8, %s16
      %s238 = smul.u32 8, %s16
      %p239 = scmp.lt.s32.totalorder %s238, 15
      %s240 = scalar_select %p239, %s238, 15
      %s241 = smul.addr %s240, 4
      %s242 = scalar_lea.vmem %s4, %s241
      %s243 = smul.u32 8, %s16
      %s244 = smul.u32 8, %s16
      %p245 = scmp.lt.s32.totalorder %s244, 15
      %s246 = scalar_select %p245, %s244, 15
      %s247 = smul.addr %s246, 4
      %s248 = scalar_lea.vmem %s5, %s247
      %s249 = smul.u32 8, %s16
      %v251 = vld [vmem:[%s236] sm:$0xf]
      %v252 = vld [vmem:[%s236 + $0x4] sm:$0xf]
      %v253 = vld [vmem:[%s236 + $0x8] sm:$0xf]
      %v254 = vld [vmem:[%s236 + $0xc] sm:$0xf]
      %v255 = vld [vmem:[%s236 + $0x10] sm:$0xf]
      %v256 = vld [vmem:[%s236 + $0x14] sm:$0xf]
      %v257 = vld [vmem:[%s236 + $0x18] sm:$0xf]
      %v258 = vld [vmem:[%s236 + $0x1c] sm:$0xf]
      %v259 = vld [vmem:[%s1] sm:$0xf]
      %v260 = vld [vmem:[%s1 + $0x4] sm:$0xf]
      %v269 = vunpack.c.l.b16 %v251
      %v270 = vunpack.c.l.b16 %v252
      %v271 = vunpack.c.l.b16 %v253
      %v272 = vunpack.c.l.b16 %v254
      %v273 = vunpack.c.l.b16 %v255
      %v274 = vunpack.c.l.b16 %v256
      %v275 = vunpack.c.l.b16 %v257
      %v276 = vunpack.c.l.b16 %v258
      %v277 = vpack.c.b16 %v270, %v269
      %v278 = vpack.c.b16 %v272, %v271
      %v279 = vpack.c.b16 %v274, %v273
      %v280 = vpack.c.b16 %v276, %v275
      %v283 = vunpack.c.l.b16 %v259
      %v284 = vunpack.c.l.b16 %v260
      %v285 = vpack.c.b16 %v284, %v283
      %vm287 = vcmask 130048
      %v289 = vsel %vm287, %v277, 0
      %v292 = vsel %vm287, %v278, 0
      %v295 = vsel %vm287, %v279, 0
      %v298 = vsel %vm287, %v280, 0
      %300 = vmatprep.subr.bf16.mxu0 0
      %301 = vmatpush1.bf16.msra.mxu0 %v285
      %302 = vmatprep.subr.bf16.mxu0 0
      %303 = vmatpush1.bf16.msra.mxu0 0
      %304 = vmatprep.subr.bf16.mxu0 0
      %305 = vmatpush1.bf16.msra.mxu0 0
      %306 = vmatprep.subr.bf16.mxu0 0
      %307 = vmatpush1.bf16.msra.mxu0 0
      %308 = vmatprep.subr.bf16.mxu0 0
      %309 = vmatpush1.bf16.msra.mxu0 0
      %310 = vmatprep.subr.bf16.mxu0 0
      %311 = vmatpush1.bf16.msra.mxu0 0
      %312 = vmatprep.subr.bf16.mxu0 0
      %313 = vmatpush1.bf16.msra.mxu0 0
      %314 = vmatprep.subr.bf16.mxu0 0
      %315 = vmatpush1.bf16.msra.mxu0 0
      %316 = vmatprep.subr.bf16.mxu0 0
      %317 = vmatpush1.bf16.msra.mxu0 0
      %318 = vmatprep.subr.bf16.mxu0 0
      %319 = vmatpush1.bf16.msra.mxu0 0
      %320 = vmatprep.subr.bf16.mxu0 0
      %321 = vmatpush1.bf16.msra.mxu0 0
      %322 = vmatprep.subr.bf16.mxu0 0
      %323 = vmatpush1.bf16.msra.mxu0 0
      %324 = vmatprep.subr.bf16.mxu0 0
      %325 = vmatpush1.bf16.msra.mxu0 0
      %326 = vmatprep.subr.bf16.mxu0 0
      %327 = vmatpush1.bf16.msra.mxu0 0
      %328 = vmatprep.subr.bf16.mxu0 0
      %329 = vmatpush1.bf16.msra.mxu0 0
      %330 = vmatprep.subr.bf16.mxu0 0
      %331 = vmatpush1.bf16.msra.mxu0 0
      %332 = vmatprep.mubr.bf16.mxu0 0
      %333 = vmatmul.mubr.bf16.gmra.mrb[0].mxu0 %v289
      %v334 = vpop.f32.mrb[0].mxu0
      %v335 = vadd.f32 0.0, %v334
      %v336 = vpop.f32.mrb[0].mxu0
      %v337 = vpop.f32.mrb[0].mxu0
      %v338 = vadd.f32 0.0, %v337
      %v339 = vpop.f32.mrb[0].mxu0
      %340 = vmatprep.mubr.bf16.mxu0 0
      %341 = vmatmul.mubr.bf16.gmra.mrb[0].mxu0 %v292
      %v342 = vpop.f32.mrb[0].mxu0
      %v343 = vadd.f32 0.0, %v342
      %v344 = vpop.f32.mrb[0].mxu0
      %v345 = vpop.f32.mrb[0].mxu0
      %v346 = vadd.f32 0.0, %v345
      %v347 = vpop.f32.mrb[0].mxu0
      %348 = vmatprep.mubr.bf16.mxu0 0
      %349 = vmatmul.mubr.bf16.gmra.mrb[0].mxu0 %v295
      %v350 = vpop.f32.mrb[0].mxu0
      %v351 = vadd.f32 0.0, %v350
      %v352 = vpop.f32.mrb[0].mxu0
      %v353 = vpop.f32.mrb[0].mxu0
      %v354 = vadd.f32 0.0, %v353
      %v355 = vpop.f32.mrb[0].mxu0
      %356 = vmatprep.mubr.bf16.mxu0 0
      %357 = vmatmul.mubr.bf16.gmra.mrb[0].mxu0 %v298
      %v358 = vpop.f32.mrb[0].mxu0
      %v359 = vadd.f32 0.0, %v358
      %v360 = vpop.f32.mrb[0].mxu0
      %v361 = vpop.f32.mrb[0].mxu0
      %v362 = vadd.f32 0.0, %v361
      %v363 = vpop.f32.mrb[0].mxu0
      %364 = vdwg.mxu0
      %v365 = vld [vmem:[%s2] sm:$0x1]
      %v367 = vlaneseq
      %v368 = vshrl.u32 %v367, 7
      %v369 = vsub.s32 0, %v368
      %v370 = vrot.slane %v365, %v369
      %v372 = vmul.f32 %v335, %v370
      %v373 = vmul.f32 %v338, %v370
      %v374 = vmul.f32 %v343, %v370
      %v375 = vmul.f32 %v346, %v370
      %v376 = vmul.f32 %v351, %v370
      %v377 = vmul.f32 %v354, %v370
      %v378 = vmul.f32 %v359, %v370
      %v379 = vmul.f32 %v362, %v370
      %v380 = vld [vmem:[%s3] sm:$0x1]
      %v382 = vlaneseq
      %v383 = vshrl.u32 %v382, 7
      %v384 = vsub.s32 0, %v383
      %v385 = vrot.slane %v380, %v384
      %v387 = vadd.f32 %v372, %v385
      %v388 = vadd.f32 %v373, %v385
      %v389 = vadd.f32 %v374, %v385
      %v390 = vadd.f32 %v375, %v385
      %v391 = vadd.f32 %v376, %v385
      %v392 = vadd.f32 %v377, %v385
      %v393 = vadd.f32 %v378, %v385
      %v394 = vadd.f32 %v379, %v385
      %v395 = vld [vmem:[%s242] sm:$0xf]
      %v396 = vld [vmem:[%s242 + $0x4] sm:$0xf]
      %v397 = vld [vmem:[%s242 + $0x8] sm:$0xf]
      %v398 = vld [vmem:[%s242 + $0xc] sm:$0xf]
      %v399 = vld [vmem:[%s242 + $0x10] sm:$0xf]
      %v400 = vld [vmem:[%s242 + $0x14] sm:$0xf]
      %v401 = vld [vmem:[%s242 + $0x18] sm:$0xf]
      %v402 = vld [vmem:[%s242 + $0x1c] sm:$0xf]
      %v403 = vunpack.c.l.bf16 %v395
      %v404 = vunpack.c.l.bf16 %v396
      %v405 = vunpack.c.l.bf16 %v397
      %v406 = vunpack.c.l.bf16 %v398
      %v407 = vunpack.c.l.bf16 %v399
      %v408 = vunpack.c.l.bf16 %v400
      %v409 = vunpack.c.l.bf16 %v401
      %v410 = vunpack.c.l.bf16 %v402
      %v411 = vadd.f32 %v387, %v403
      %v412 = vadd.f32 %v388, %v404
      %v413 = vadd.f32 %v389, %v405
      %v414 = vadd.f32 %v390, %v406
      %v415 = vadd.f32 %v391, %v407
      %v416 = vadd.f32 %v392, %v408
      %v417 = vadd.f32 %v393, %v409
      %v418 = vadd.f32 %v394, %v410
      %v419 = vmax.f32 %v411, 0.0
      %v420 = vmax.f32 %v412, 0.0
      %v421 = vmax.f32 %v413, 0.0
      %v422 = vmax.f32 %v414, 0.0
      %v423 = vmax.f32 %v415, 0.0
      %v424 = vmax.f32 %v416, 0.0
      %v425 = vmax.f32 %v417, 0.0
      %v426 = vmax.f32 %v418, 0.0
      %v427 = vpack.c.bf16 %v420, %v419
      %v428 = vpack.c.bf16 %v422, %v421
      %v429 = vpack.c.bf16 %v424, %v423
      %v430 = vpack.c.bf16 %v426, %v425
      %v435 = vunpack.c.l.b16 %v427
      %v436 = vunpack.c.h.b16 %v427
      %v437 = vunpack.c.l.b16 %v428
      %v438 = vunpack.c.h.b16 %v428
      %v439 = vunpack.c.l.b16 %v429
      %v440 = vunpack.c.h.b16 %v429
      %v441 = vunpack.c.l.b16 %v430
      %v442 = vunpack.c.h.b16 %v430
      %v443 = vpack.c.b16 %v435, %v435
      %v444 = vpack.c.b16 %v436, %v436
      %v445 = vpack.c.b16 %v437, %v437
      %v446 = vpack.c.b16 %v438, %v438
      %v447 = vpack.c.b16 %v439, %v439
      %v448 = vpack.c.b16 %v440, %v440
      %v449 = vpack.c.b16 %v441, %v441
      %v450 = vpack.c.b16 %v442, %v442
      %vm459 = vcmask 125952
      %460 = vst.msk [vmem:[%s248] sm:$0xf] %vm459, %v443
      %461 = vst.msk [vmem:[%s248 + $0x4] sm:$0xf] %vm459, %v444
      %462 = vst.msk [vmem:[%s248 + $0x8] sm:$0xf] %vm459, %v445
      %463 = vst.msk [vmem:[%s248 + $0xc] sm:$0xf] %vm459, %v446
      %464 = vst.msk [vmem:[%s248 + $0x10] sm:$0xf] %vm459, %v447
      %465 = vst.msk [vmem:[%s248 + $0x14] sm:$0xf] %vm459, %v448
      %466 = vst.msk [vmem:[%s248 + $0x18] sm:$0xf] %vm459, %v449
      %467 = vst.msk [vmem:[%s248 + $0x1c] sm:$0xf] %vm459, %v450
      %s468 = smul.u32 8, %s16
      %p469 = scmp.lt.s32.totalorder %s468, 15
      %s470 = scalar_select %p469, %s468, 15
      %s471 = smul.addr %s470, 4
      %s472 = scalar_lea.vmem %s5, %s471
      // Predicated region
      $region41: #{_lambda_.11} parent=39 // pred_check
        %p473 = pneg %p149
      $region42: #{_lambda_.11} parent=39 // pred_check_branch
        %475 = sbr.rel (%p473) target = $region44
      $region43: #{_lambda_.11} parent=39 // pred_region
        %s476 = smul.u32 8, %s16
      $region44: #{_lambda_.11} parent=39 // pred_fallthru
        _
    $region40: #{_lambda_.11} parent=5 // pred_fallthru
      _
    %p477 = scmp.le.s32.totalorder 2, %s11
    // Predicated region
    $region45: #{_lambda_.11} parent=5 // pred_check
      %p478 = pneg %p477
    $region46: #{_lambda_.11} parent=5 // pred_check_branch
      %480 = sbr.rel (%p478) target = $region48
    $region47: #{_lambda_.11} parent=5 // pred_region
      %s481 = ssub.s32 %s11, 2
      // Predicated region
      $region49: #{_lambda_.11} parent=47 // pred_check
        %p482 = pneg %p155
      $region50: #{_lambda_.11} parent=47 // pred_check_branch
        %484 = sbr.rel (%p482) target = $region52
      $region51: #{_lambda_.11} parent=47 // pred_region
        %s485 = smul.u32 8, %s17
        %p486 = scmp.lt.s32.totalorder %s485, 15
        %s487 = scalar_select %p486, %s485, 15
        %s488 = smul.addr %s487, 4
        %s489 = scalar_lea.vmem %s5, %s488
      $region52: #{_lambda_.11} parent=47 // pred_fallthru
        _
    $region48: #{_lambda_.11} parent=5 // pred_fallthru
      _
  $region6: #{_lambda_.11} parent=0 // loop_footer
    %s15 = sadd.s32 1, %s11
  $region7: #{_lambda_.11} parent=0 // loop_footer_branch
    %10 = sbr.rel target = $region3
  $region8: #{_lambda_.11} parent=0 // loop_exit
    _

// kernel: _lambda_.7
$region0: #{_lambda_.7}
  #allocation0 [shape = 'u32[]', space=smem, size = 0x4, offset = 0x4, fixed_abs, tag = 'smem constant byte address 0x4 - core index']
  #allocation1 [shape = 'u32[144,128]{1,0:T(1,128)}', space=vmem, size = 0x12000, scoped, tag = 'internal scratch']
  %s0 = inlined_call_operand.vmem [shape: bf16[2,36,9,16], index: 0, kind: input, shape index: {}]
  %s1 = inlined_call_operand.vmem [shape: bf16[9,2,8,8], index: 1, kind: input, shape index: {}]
  %s2 = inlined_call_operand.vmem [shape: f32[1,16], index: 2, kind: input, shape index: {}]
  %s3 = inlined_call_operand.vmem [shape: f32[1,16], index: 3, kind: input, shape index: {}]
  %s4 = inlined_call_operand.vmem [shape: f32[16,2], index: 4, kind: input, shape index: {}]
  %s5 = inlined_call_operand.vmem [shape: f32[1,2], index: 5, kind: input, shape index: {}]
  %s6 = inlined_call_operand.vmem [shape: f32[2,16], index: 6, kind: input, shape index: {}]
  %s7 = inlined_call_operand.vmem [shape: f32[1,16], index: 7, kind: input, shape index: {}]
  %s8 = inlined_call_operand.vmem [shape: bf16[2,64,16], index: 8, kind: output, shape index: {}]
  %s9 = sld [smem:[#allocation0]]
  $region65: #{_lambda_.7} parent=0
    _
  %s11 = ssub.s32 1, %s9
  %s12 = scalar_select 0, %s11, %s9
  loop: start=0, step=1, limit=4
  $region2: #{_lambda_.7} parent=0 // loop_pre_header
    _
  $region3: #{_lambda_.7} parent=0 // loop_header
    %s14 = sphi 0, %s18
    %p15 = scmp.ge.s32.totalorder %s14, 4
    %s24 = sphi 0, %s26
    %s27 = sphi 0, %s24
    %s28 = sphi 0, %s27
    %s44 = sphi 0, %s28
    %s48 = sphi 0, %s48
    %s50 = sphi 0, %s48
    %s51 = sphi 0, %s50
    %s65 = sphi 0, %s51
    %s69 = sphi 0, %s69
    %s71 = sphi 0, %s69
    %s72 = sphi 0, %s71
    %s86 = sphi 0, %s72
    %s90 = sphi 0, %s90
    %s92 = sphi 0, %s90
    %s93 = sphi 0, %s92
    %s107 = sphi 0, %s93
    %s111 = sphi 0, %s111
    %s113 = sphi 0, %s111
    %s114 = sphi 0, %s113
    %s128 = sphi 0, %s114
    %s132 = sphi 0, %s132
    %s134 = sphi 0, %s132
    %s135 = sphi 0, %s134
    %s149 = sphi 0, %s135
    %s153 = sphi 0, %s153
    %s155 = sphi 0, %s153
    %s156 = sphi 0, %s155
    %s170 = sphi 0, %s156
    %s174 = sphi 0, %s174
    %s176 = sphi 0, %s174
    %s177 = sphi 0, %s176
    %s191 = sphi 0, %s177
    %s197 = sphi 0, %s199
    %s200 = sphi 0, %s197
    %s201 = sphi 0, %s200
    %s217 = sphi 0, %s201
  $region4: #{_lambda_.7} parent=0 // loop_header_branch
    %17 = sbr.rel (%p15) target = $region8
  $region5: #{_lambda_.7} parent=0 // loop_body
    %s19 = ssub.s32 %s14, 1
    %s20 = ssub.s32 %s14, 2
    %s21 = sadd.s32 %s14, 1
    %s22 = ssub.s32 %s14, %s21
    %p23 = scmp.eq.s32.totalorder %s22, 0
    %s25 = sadd.s32 %s24, 1
    %s26 = scalar_select %p23, %s24, %s25
    %p29 = pneg %p23
    %p30 = scmp.eq.s32.totalorder %s14, 1
    %p31 = por %p29, %p30
    %p32 = scmp.ne.s32.totalorder %s24, %s27
    %p33 = scmp.eq.s32.totalorder %s14, 0
    %p34 = por %p32, %p33
    %p35 = scmp.ne.s32.totalorder %s24, %s27
    %p36 = scmp.eq.s32.totalorder %s19, 1
    %p37 = por %p35, %p36
    %p38 = scmp.ne.s32.totalorder %s27, %s28
    %p39 = scmp.eq.s32.totalorder %s19, 0
    %p40 = por %p38, %p39
    %p41 = scmp.ne.s32.totalorder %s27, %s28
    %p42 = scmp.eq.s32.totalorder %s20, 1
    %p43 = por %p41, %p42
    %p45 = scmp.ne.s32.totalorder %s28, %s44
    %p46 = scmp.eq.s32.totalorder %s20, 0
    %p47 = por %p45, %p46
    %s49 = sadd.s32 %s48, 1
    %p52 = scmp.eq.s32.totalorder %s14, 1
    %p53 = scmp.ne.s32.totalorder %s48, %s50
    %p54 = scmp.eq.s32.totalorder %s14, 0
    %p55 = por %p53, %p54
    %p56 = scmp.ne.s32.totalorder %s48, %s50
    %p57 = scmp.eq.s32.totalorder %s19, 1
    %p58 = por %p56, %p57
    %p59 = scmp.ne.s32.totalorder %s50, %s51
    %p60 = scmp.eq.s32.totalorder %s19, 0
    %p61 = por %p59, %p60
    %p62 = scmp.ne.s32.totalorder %s50, %s51
    %p63 = scmp.eq.s32.totalorder %s20, 1
    %p64 = por %p62, %p63
    %p66 = scmp.ne.s32.totalorder %s51, %s65
    %p67 = scmp.eq.s32.totalorder %s20, 0
    %p68 = por %p66, %p67
    %s70 = sadd.s32 %s69, 1
    %p73 = scmp.eq.s32.totalorder %s14, 1
    %p74 = scmp.ne.s32.totalorder %s69, %s71
    %p75 = scmp.eq.s32.totalorder %s14, 0
    %p76 = por %p74, %p75
    %p77 = scmp.ne.s32.totalorder %s69, %s71
    %p78 = scmp.eq.s32.totalorder %s19, 1
    %p79 = por %p77, %p78
    %p80 = scmp.ne.s32.totalorder %s71, %s72
    %p81 = scmp.eq.s32.totalorder %s19, 0
    %p82 = por %p80, %p81
    %p83 = scmp.ne.s32.totalorder %s71, %s72
    %p84 = scmp.eq.s32.totalorder %s20, 1
    %p85 = por %p83, %p84
    %p87 = scmp.ne.s32.totalorder %s72, %s86
    %p88 = scmp.eq.s32.totalorder %s20, 0
    %p89 = por %p87, %p88
    %s91 = sadd.s32 %s90, 1
    %p94 = scmp.eq.s32.totalorder %s14, 1
    %p95 = scmp.ne.s32.totalorder %s90, %s92
    %p96 = scmp.eq.s32.totalorder %s14, 0
    %p97 = por %p95, %p96
    %p98 = scmp.ne.s32.totalorder %s90, %s92
    %p99 = scmp.eq.s32.totalorder %s19, 1
    %p100 = por %p98, %p99
    %p101 = scmp.ne.s32.totalorder %s92, %s93
    %p102 = scmp.eq.s32.totalorder %s19, 0
    %p103 = por %p101, %p102
    %p104 = scmp.ne.s32.totalorder %s92, %s93
    %p105 = scmp.eq.s32.totalorder %s20, 1
    %p106 = por %p104, %p105
    %p108 = scmp.ne.s32.totalorder %s93, %s107
    %p109 = scmp.eq.s32.totalorder %s20, 0
    %p110 = por %p108, %p109
    %s112 = sadd.s32 %s111, 1
    %p115 = scmp.eq.s32.totalorder %s14, 1
    %p116 = scmp.ne.s32.totalorder %s111, %s113
    %p117 = scmp.eq.s32.totalorder %s14, 0
    %p118 = por %p116, %p117
    %p119 = scmp.ne.s32.totalorder %s111, %s113
    %p120 = scmp.eq.s32.totalorder %s19, 1
    %p121 = por %p119, %p120
    %p122 = scmp.ne.s32.totalorder %s113, %s114
    %p123 = scmp.eq.s32.totalorder %s19, 0
    %p124 = por %p122, %p123
    %p125 = scmp.ne.s32.totalorder %s113, %s114
    %p126 = scmp.eq.s32.totalorder %s20, 1
    %p127 = por %p125, %p126
    %p129 = scmp.ne.s32.totalorder %s114, %s128
    %p130 = scmp.eq.s32.totalorder %s20, 0
    %p131 = por %p129, %p130
    %s133 = sadd.s32 %s132, 1
    %p136 = scmp.eq.s32.totalorder %s14, 1
    %p137 = scmp.ne.s32.totalorder %s132, %s134
    %p138 = scmp.eq.s32.totalorder %s14, 0
    %p139 = por %p137, %p138
    %p140 = scmp.ne.s32.totalorder %s132, %s134
    %p141 = scmp.eq.s32.totalorder %s19, 1
    %p142 = por %p140, %p141
    %p143 = scmp.ne.s32.totalorder %s134, %s135
    %p144 = scmp.eq.s32.totalorder %s19, 0
    %p145 = por %p143, %p144
    %p146 = scmp.ne.s32.totalorder %s134, %s135
    %p147 = scmp.eq.s32.totalorder %s20, 1
    %p148 = por %p146, %p147
    %p150 = scmp.ne.s32.totalorder %s135, %s149
    %p151 = scmp.eq.s32.totalorder %s20, 0
    %p152 = por %p150, %p151
    %s154 = sadd.s32 %s153, 1
    %p157 = scmp.eq.s32.totalorder %s14, 1
    %p158 = scmp.ne.s32.totalorder %s153, %s155
    %p159 = scmp.eq.s32.totalorder %s14, 0
    %p160 = por %p158, %p159
    %p161 = scmp.ne.s32.totalorder %s153, %s155
    %p162 = scmp.eq.s32.totalorder %s19, 1
    %p163 = por %p161, %p162
    %p164 = scmp.ne.s32.totalorder %s155, %s156
    %p165 = scmp.eq.s32.totalorder %s19, 0
    %p166 = por %p164, %p165
    %p167 = scmp.ne.s32.totalorder %s155, %s156
    %p168 = scmp.eq.s32.totalorder %s20, 1
    %p169 = por %p167, %p168
    %p171 = scmp.ne.s32.totalorder %s156, %s170
    %p172 = scmp.eq.s32.totalorder %s20, 0
    %p173 = por %p171, %p172
    %s175 = sadd.s32 %s174, 1
    %p178 = scmp.eq.s32.totalorder %s14, 1
    %p179 = scmp.ne.s32.totalorder %s174, %s176
    %p180 = scmp.eq.s32.totalorder %s14, 0
    %p181 = por %p179, %p180
    %p182 = scmp.ne.s32.totalorder %s174, %s176
    %p183 = scmp.eq.s32.totalorder %s19, 1
    %p184 = por %p182, %p183
    %p185 = scmp.ne.s32.totalorder %s176, %s177
    %p186 = scmp.eq.s32.totalorder %s19, 0
    %p187 = por %p185, %p186
    %p188 = scmp.ne.s32.totalorder %s176, %s177
    %p189 = scmp.eq.s32.totalorder %s20, 1
    %p190 = por %p188, %p189
    %p192 = scmp.ne.s32.totalorder %s177, %s191
    %p193 = scmp.eq.s32.totalorder %s20, 0
    %p194 = por %p192, %p193
    %s195 = ssub.s32 %s14, %s21
    %p196 = scmp.eq.s32.totalorder %s195, 0
    %s198 = sadd.s32 %s197, 1
    %s199 = scalar_select %p196, %s197, %s198
    %p202 = pneg %p196
    %p203 = scmp.eq.s32.totalorder %s14, 1
    %p204 = por %p202, %p203
    %p205 = scmp.ne.s32.totalorder %s197, %s200
    %p206 = scmp.eq.s32.totalorder %s14, 0
    %p207 = por %p205, %p206
    %p208 = scmp.ne.s32.totalorder %s197, %s200
    %p209 = scmp.eq.s32.totalorder %s19, 1
    %p210 = por %p208, %p209
    %p211 = scmp.ne.s32.totalorder %s200, %s201
    %p212 = scmp.eq.s32.totalorder %s19, 0
    %p213 = por %p211, %p212
    %p214 = scmp.ne.s32.totalorder %s200, %s201
    %p215 = scmp.eq.s32.totalorder %s20, 1
    %p216 = por %p214, %p215
    %p218 = scmp.ne.s32.totalorder %s201, %s217
    %p219 = scmp.eq.s32.totalorder %s20, 0
    %p220 = por %p218, %p219
    %p221 = scmp.le.s32.totalorder 1, %s14
    %p222 = scmp.lt.s32.totalorder %s14, 3
    %p223 = pnand %p221, %p222
    %p224 = pneg %p223
    // Predicated region
    $region9: #{_lambda_.7} parent=5 // pred_check
      _
    $region10: #{_lambda_.7} parent=5 // pred_check_branch
      %226 = sbr.rel (%p223) target = $region12
    $region11: #{_lambda_.7} parent=5 // pred_region
      %s227 = ssub.s32 %s14, 1
      // Predicated region
      $region13: #{_lambda_.7} parent=11 // pred_check
        %p228 = pneg %p61
      $region14: #{_lambda_.7} parent=11 // pred_check_branch
        %230 = sbr.rel (%p228) target = $region16
      $region15: #{_lambda_.7} parent=11 // pred_region
        _
      $region16: #{_lambda_.7} parent=11 // pred_fallthru
        _
      // Predicated region
      $region17: #{_lambda_.7} parent=11 // pred_check
        %p231 = pneg %p82
      $region18: #{_lambda_.7} parent=11 // pred_check_branch
        %233 = sbr.rel (%p231) target = $region20
      $region19: #{_lambda_.7} parent=11 // pred_region
        _
      $region20: #{_lambda_.7} parent=11 // pred_fallthru
        _
      // Predicated region
      $region21: #{_lambda_.7} parent=11 // pred_check
        %p234 = pneg %p103
      $region22: #{_lambda_.7} parent=11 // pred_check_branch
        %236 = sbr.rel (%p234) target = $region24
      $region23: #{_lambda_.7} parent=11 // pred_region
        _
      $region24: #{_lambda_.7} parent=11 // pred_fallthru
        _
      // Predicated region
      $region25: #{_lambda_.7} parent=11 // pred_check
        %p237 = pneg %p124
      $region26: #{_lambda_.7} parent=11 // pred_check_branch
        %239 = sbr.rel (%p237) target = $region28
      $region27: #{_lambda_.7} parent=11 // pred_region
        _
      $region28: #{_lambda_.7} parent=11 // pred_fallthru
        _
      // Predicated region
      $region29: #{_lambda_.7} parent=11 // pred_check
        %p240 = pneg %p145
      $region30: #{_lambda_.7} parent=11 // pred_check_branch
        %242 = sbr.rel (%p240) target = $region32
      $region31: #{_lambda_.7} parent=11 // pred_region
        _
      $region32: #{_lambda_.7} parent=11 // pred_fallthru
        _
      // Predicated region
      $region33: #{_lambda_.7} parent=11 // pred_check
        %p243 = pneg %p166
      $region34: #{_lambda_.7} parent=11 // pred_check_branch
        %245 = sbr.rel (%p243) target = $region36
      $region35: #{_lambda_.7} parent=11 // pred_region
        _
      $region36: #{_lambda_.7} parent=11 // pred_fallthru
        _
      // Predicated region
      $region37: #{_lambda_.7} parent=11 // pred_check
        %p246 = pneg %p187
      $region38: #{_lambda_.7} parent=11 // pred_check_branch
        %248 = sbr.rel (%p246) target = $region40
      $region39: #{_lambda_.7} parent=11 // pred_region
        _
      $region40: #{_lambda_.7} parent=11 // pred_fallthru
        _
    $region12: #{_lambda_.7} parent=5 // pred_fallthru
      _
    %p249 = scmp.lt.s32.totalorder %s14, 2
    // Predicated region
    $region41: #{_lambda_.7} parent=5 // pred_check
      %p250 = pneg %p249
    $region42: #{_lambda_.7} parent=5 // pred_check_branch
      %252 = sbr.rel (%p250) target = $region44
    $region43: #{_lambda_.7} parent=5 // pred_region
      // Predicated region
      $region45: #{_lambda_.7} parent=43 // pred_check
        %p253 = pneg %p34
      $region46: #{_lambda_.7} parent=43 // pred_check_branch
        %255 = sbr.rel (%p253) target = $region48
      $region47: #{_lambda_.7} parent=43 // pred_region
        %p256 = scmp.lt.s32.totalorder %s14, 1
        %s257 = scalar_select %p256, %s14, 1
        %s258 = smul.addr %s257, 72
        %s259 = smul.addr %s258, 4
        %s260 = scalar_lea.vmem %s0, %s259
      $region48: #{_lambda_.7} parent=43 // pred_fallthru
        _
    $region44: #{_lambda_.7} parent=5 // pred_fallthru
      _
    %p261 = scmp.le.s32.totalorder 1, %s14
    %p262 = scmp.lt.s32.totalorder %s14, 3
    %p263 = pnand %p261, %p262
    %p264 = pneg %p263
    // Predicated region
    $region49: #{_lambda_.7} parent=5 // pred_check
      _
    $region50: #{_lambda_.7} parent=5 // pred_check_branch
      %266 = sbr.rel (%p263) target = $region52
    $region51: #{_lambda_.7} parent=5 // pred_region
      %s267 = ssub.s32 %s14, 1
      %p268 = scmp.lt.s32.totalorder %s19, 1
      %s269 = scalar_select %p268, %s19, 1
      %s270 = smul.addr %s269, 72
      %s271 = smul.addr %s270, 4
      %s272 = scalar_lea.vmem %s0, %s271
      %p273 = pneg %p40
      %p274 = pneg %p37
      %p275 = pneg %p61
      %p276 = pneg %p58
      %p277 = pneg %p82
      %p278 = pneg %p79
      %p279 = pneg %p103
      %p280 = pneg %p100
      %p281 = pneg %p124
      %p282 = pneg %p121
      %p283 = pneg %p145
      %p284 = pneg %p142
      %p285 = pneg %p166
      %p286 = pneg %p163
      %p287 = pneg %p187
      %p288 = pneg %p184
      %p289 = pneg %p213
      %p290 = pneg %p210
      %p291 = scmp.lt.s32.totalorder %s19, 1
      %s292 = scalar_select %p291, %s19, 1
      %s293 = smul.addr %s292, 8
      %s294 = smul.addr %s293, 4
      %s295 = scalar_lea.vmem %s8, %s294
      %p296 = scmp.lt.s32.totalorder %s19, 1
      %s297 = scalar_select %p296, %s19, 1
      %s298 = smul.addr %s297, 72
      %s299 = smul.addr %s298, 4
      %s300 = scalar_lea.vmem %s0, %s299
      %p301 = scmp.lt.s32.totalorder %s19, 1
      %s302 = scalar_select %p301, %s19, 1
      %s303 = smul.addr %s302, 8
      %s304 = smul.addr %s303, 4
      %s305 = scalar_lea.vmem %s8, %s304
      %v307 = vld [vmem:[%s300] sm:$0xf]
      %v308 = vld [vmem:[%s300 + $0x8] sm:$0xf]
      %v309 = vld [vmem:[%s300 + $0x10] sm:$0xf]
      %v310 = vld [vmem:[%s300 + $0x18] sm:$0xf]
      %v311 = vld [vmem:[%s300 + $0x20] sm:$0xf]
      %v312 = vld [vmem:[%s300 + $0x28] sm:$0xf]
      %v313 = vld [vmem:[%s300 + $0x30] sm:$0xf]
      %v314 = vld [vmem:[%s300 + $0x38] sm:$0xf]
      %v315 = vld [vmem:[%s1] sm:$0xf]
      %s316 = scalar_lea.vmem %s1, 4
      %v317 = vld [vmem:[%s316] sm:$0xf]
      %s318 = scalar_lea.vmem %s300, 72
      %v319 = vld [vmem:[%s318] sm:$0xf]
      %v320 = vld [vmem:[%s318 + $0x8] sm:$0xf]
      %v321 = vld [vmem:[%s318 + $0x10] sm:$0xf]
      %v322 = vld [vmem:[%s318 + $0x18] sm:$0xf]
      %v323 = vld [vmem:[%s318 + $0x20] sm:$0xf]
      %v324 = vld [vmem:[%s318 + $0x28] sm:$0xf]
      %v325 = vld [vmem:[%s318 + $0x30] sm:$0xf]
      %v326 = vld [vmem:[%s318 + $0x38] sm:$0xf]
      %s327 = scalar_lea.vmem %s1, 8
      %v328 = vld [vmem:[%s327] sm:$0xf]
      %v337 = vunpack.c.l.b16 %v319
      %v338 = vunpack.c.l.b16 %v320
      %v339 = vunpack.c.l.b16 %v321
      %v340 = vunpack.c.l.b16 %v322
      %v341 = vunpack.c.l.b16 %v323
      %v342 = vunpack.c.l.b16 %v324
      %v343 = vunpack.c.l.b16 %v325
      %v344 = vunpack.c.l.b16 %v326
      %v345 = vpack.c.b16 %v338, %v337
      %v346 = vpack.c.b16 %v340, %v339
      %v347 = vpack.c.b16 %v342, %v341
      %v348 = vpack.c.b16 %v344, %v343
      %vm349 = vcmask 64512
      %v351 = vsel %vm349, %v345, 0
      %v354 = vsel %vm349, %v346, 0
      %v357 = vsel %vm349, %v347, 0
      %v360 = vsel %vm349, %v348, 0
      %vm362 = vcmask 1043456
      %v364 = vsel %vm362, %v328, 0
      %366 = vmatprep.subr.bf16.mxu0 0
      %367 = vmatpush1.bf16.msra.mxu0 %v364
      %368 = vmatprep.subr.bf16.mxu0 0
      %369 = vmatpush1.bf16.msra.mxu0 0
      %370 = vmatprep.subr.bf16.mxu0 0
      %371 = vmatpush1.bf16.msra.mxu0 0
      %372 = vmatprep.subr.bf16.mxu0 0
      %373 = vmatpush1.bf16.msra.mxu0 0
      %374 = vmatprep.subr.bf16.mxu0 0
      %375 = vmatpush1.bf16.msra.mxu0 0
      %376 = vmatprep.subr.bf16.mxu0 0
      %377 = vmatpush1.bf16.msra.mxu0 0
      %378 = vmatprep.subr.bf16.mxu0 0
      %379 = vmatpush1.bf16.msra.mxu0 0
      %380 = vmatprep.subr.bf16.mxu0 0
      %381 = vmatpush1.bf16.msra.mxu0 0
      %382 = vmatprep.subr.bf16.mxu0 0
      %383 = vmatpush1.bf16.msra.mxu0 0
      %384 = vmatprep.subr.bf16.mxu0 0
      %385 = vmatpush1.bf16.msra.mxu0 0
      %386 = vmatprep.subr.bf16.mxu0 0
      %387 = vmatpush1.bf16.msra.mxu0 0
      %388 = vmatprep.subr.bf16.mxu0 0
      %389 = vmatpush1.bf16.msra.mxu0 0
      %390 = vmatprep.subr.bf16.mxu0 0
      %391 = vmatpush1.bf16.msra.mxu0 0
      %392 = vmatprep.subr.bf16.mxu0 0
      %393 = vmatpush1.bf16.msra.mxu0 0
      %394 = vmatprep.subr.bf16.mxu0 0
      %395 = vmatpush1.bf16.msra.mxu0 0
      %396 = vmatprep.subr.bf16.mxu0 0
      %397 = vmatpush1.bf16.msra.mxu0 0
      %398 = vmatprep.mubr.bf16.mxu0 0
      %399 = vmatmul.mubr.bf16.gmra.mrb[0].mxu0 %v351
      %v400 = vpop.f32.mrb[0].mxu0
      %v401 = vadd.f32 0.0, %v400
      %v402 = vpop.f32.mrb[0].mxu0
      %v403 = vpop.f32.mrb[0].mxu0
      %v404 = vadd.f32 0.0, %v403
      %v405 = vpop.f32.mrb[0].mxu0
      %406 = vmatprep.mubr.bf16.mxu0 0
      %407 = vmatmul.mubr.bf16.gmra.mrb[0].mxu0 %v354
      %v408 = vpop.f32.mrb[0].mxu0
      %v409 = vadd.f32 0.0, %v408
      %v410 = vpop.f32.mrb[0].mxu0
      %v411 = vpop.f32.mrb[0].mxu0
      %v412 = vadd.f32 0.0, %v411
      %v413 = vpop.f32.mrb[0].mxu0
      %414 = vmatprep.mubr.bf16.mxu0 0
      %415 = vmatmul.mubr.bf16.gmra.mrb[0].mxu0 %v357
      %v416 = vpop.f32.mrb[0].mxu0
      %v417 = vadd.f32 0.0, %v416
      %v418 = vpop.f32.mrb[0].mxu0
      %v419 = vpop.f32.mrb[0].mxu0
      %v420 = vadd.f32 0.0, %v419
      %v421 = vpop.f32.mrb[0].mxu0
      %422 = vmatprep.mubr.bf16.mxu0 0
      %423 = vmatmul.mubr.bf16.gmra.mrb[0].mxu0 %v360
      %v424 = vpop.f32.mrb[0].mxu0
      %v425 = vadd.f32 0.0, %v424
      %v426 = vpop.f32.mrb[0].mxu0
      %v427 = vpop.f32.mrb[0].mxu0
      %v428 = vadd.f32 0.0, %v427
      %v429 = vpop.f32.mrb[0].mxu0
      %430 = vdwg.mxu0
      %v439 = vunpack.c.l.b16 %v307
      %v440 = vunpack.c.l.b16 %v308
      %v441 = vunpack.c.l.b16 %v309
      %v442 = vunpack.c.l.b16 %v310
      %v443 = vunpack.c.l.b16 %v311
      %v444 = vunpack.c.l.b16 %v312
      %v445 = vunpack.c.l.b16 %v313
      %v446 = vunpack.c.l.b16 %v314
      %v447 = vpack.c.b16 %v440, %v439
      %v448 = vpack.c.b16 %v442, %v441
      %v449 = vpack.c.b16 %v444, %v443
      %v450 = vpack.c.b16 %v446, %v445
      %v452 = vsel %vm349, %v447, 0
      %v455 = vsel %vm349, %v448, 0
      %v458 = vsel %vm349, %v449, 0
      %v461 = vsel %vm349, %v450, 0
      %v464 = vsel %vm362, %v315, 0
      %466 = vmatprep.subr.bf16.mxu0 0
      %467 = vmatpush1.bf16.msra.mxu0 %v464
      %468 = vmatprep.subr.bf16.mxu0 0
      %469 = vmatpush1.bf16.msra.mxu0 0
      %470 = vmatprep.subr.bf16.mxu0 0
      %471 = vmatpush1.bf16.msra.mxu0 0
      %472 = vmatprep.subr.bf16.mxu0 0
      %473 = vmatpush1.bf16.msra.mxu0 0
      %474 = vmatprep.subr.bf16.mxu0 0
      %475 = vmatpush1.bf16.msra.mxu0 0
      %476 = vmatprep.subr.bf16.mxu0 0
      %477 = vmatpush1.bf16.msra.mxu0 0
      %478 = vmatprep.subr.bf16.mxu0 0
      %479 = vmatpush1.bf16.msra.mxu0 0
      %480 = vmatprep.subr.bf16.mxu0 0
      %481 = vmatpush1.bf16.msra.mxu0 0
      %482 = vmatprep.subr.bf16.mxu0 0
      %483 = vmatpush1.bf16.msra.mxu0 0
      %484 = vmatprep.subr.bf16.mxu0 0
      %485 = vmatpush1.bf16.msra.mxu0 0
      %486 = vmatprep.subr.bf16.mxu0 0
      %487 = vmatpush1.bf16.msra.mxu0 0
      %488 = vmatprep.subr.bf16.mxu0 0
      %489 = vmatpush1.bf16.msra.mxu0 0
      %490 = vmatprep.subr.bf16.mxu0 0
      %491 = vmatpush1.bf16.msra.mxu0 0
      %492 = vmatprep.subr.bf16.mxu0 0
      %493 = vmatpush1.bf16.msra.mxu0 0
      %494 = vmatprep.subr.bf16.mxu0 0
      %495 = vmatpush1.bf16.msra.mxu0 0
      %496 = vmatprep.subr.bf16.mxu0 0
      %497 = vmatpush1.bf16.msra.mxu0 0
      %498 = vmatprep.mubr.bf16.mxu0 0
      %499 = vmatmul.mubr.bf16.gmra.mrb[0].mxu0 %v452
      %v500 = vpop.f32.mrb[0].mxu0
      %v501 = vadd.f32 %v401, %v500
      %v502 = vpop.f32.mrb[0].mxu0
      %v503 = vpop.f32.mrb[0].mxu0
      %v504 = vadd.f32 %v404, %v503
      %v505 = vpop.f32.mrb[0].mxu0
      %506 = vmatprep.mubr.bf16.mxu0 0
      %507 = vmatmul.mubr.bf16.gmra.mrb[0].mxu0 %v455
      %v508 = vpop.f32.mrb[0].mxu0
      %v509 = vadd.f32 %v409, %v508
      %v510 = vpop.f32.mrb[0].mxu0
      %v511 = vpop.f32.mrb[0].mxu0
      %v512 = vadd.f32 %v412, %v511
      %v513 = vpop.f32.mrb[0].mxu0
      %514 = vmatprep.mubr.bf16.mxu0 0
      %515 = vmatmul.mubr.bf16.gmra.mrb[0].mxu0 %v458
      %v516 = vpop.f32.mrb[0].mxu0
      %v517 = vadd.f32 %v417, %v516
      %v518 = vpop.f32.mrb[0].mxu0
      %v519 = vpop.f32.mrb[0].mxu0
      %v520 = vadd.f32 %v420, %v519
      %v521 = vpop.f32.mrb[0].mxu0
      %522 = vmatprep.mubr.bf16.mxu0 0
      %523 = vmatmul.mubr.bf16.gmra.mrb[0].mxu0 %v461
      %v524 = vpop.f32.mrb[0].mxu0
      %v525 = vadd.f32 %v425, %v524
      %v526 = vpop.f32.mrb[0].mxu0
      %v527 = vpop.f32.mrb[0].mxu0
      %v528 = vadd.f32 %v428, %v527
      %v529 = vpop.f32.mrb[0].mxu0
      %530 = vdwg.mxu0
      %s531 = scalar_lea.vmem %s1, 12
      %v532 = vld [vmem:[%s531] sm:$0xf]
      %533 = vrot.lane.b32.xlu0 %v345, 120
      %v534 = vpop.permute.xlu0 %533
      %535 = vrot.lane.b32.xlu0 %v346, 120
      %v536 = vpop.permute.xlu0 %535
      %537 = vrot.lane.b32.xlu0 %v347, 120
      %v538 = vpop.permute.xlu0 %537
      %539 = vrot.lane.b32.xlu0 %v348, 120
      %v540 = vpop.permute.xlu0 %539
      %v542 = vsel %vm349, %v534, 0
      %v545 = vsel %vm349, %v536, 0
      %v548 = vsel %vm349, %v538, 0
      %v551 = vsel %vm349, %v540, 0
      %v554 = vsel %vm362, %v532, 0
      %556 = vmatprep.subr.bf16.mxu0 0
      %557 = vmatpush1.bf16.msra.mxu0 %v554
      %558 = vmatprep.subr.bf16.mxu0 0
      %559 = vmatpush1.bf16.msra.mxu0 0
      %560 = vmatprep.subr.bf16.mxu0 0
      %561 = vmatpush1.bf16.msra.mxu0 0
      %562 = vmatprep.subr.bf16.mxu0 0
      %563 = vmatpush1.bf16.msra.mxu0 0
      %564 = vmatprep.subr.bf16.mxu0 0
      %565 = vmatpush1.bf16.msra.mxu0 0
      %566 = vmatprep.subr.bf16.mxu0 0
      %567 = vmatpush1.bf16.msra.mxu0 0
      %568 = vmatprep.subr.bf16.mxu0 0
      %569 = vmatpush1.bf16.msra.mxu0 0
      %570 = vmatprep.subr.bf16.mxu0 0
      %571 = vmatpush1.bf16.msra.mxu0 0
      %572 = vmatprep.subr.bf16.mxu0 0
      %573 = vmatpush1.bf16.msra.mxu0 0
      %574 = vmatprep.subr.bf16.mxu0 0
      %575 = vmatpush1.bf16.msra.mxu0 0
      %576 = vmatprep.subr.bf16.mxu0 0
      %577 = vmatpush1.bf16.msra.mxu0 0
      %578 = vmatprep.subr.bf16.mxu0 0
      %579 = vmatpush1.bf16.msra.mxu0 0
      %580 = vmatprep.subr.bf16.mxu0 0
      %581 = vmatpush1.bf16.msra.mxu0 0
      %582 = vmatprep.subr.bf16.mxu0 0
      %583 = vmatpush1.bf16.msra.mxu0 0
      %584 = vmatprep.subr.bf16.mxu0 0
      %585 = vmatpush1.bf16.msra.mxu0 0
      %586 = vmatprep.subr.bf16.mxu0 0
      %587 = vmatpush1.bf16.msra.mxu0 0
      %588 = vmatprep.mubr.bf16.mxu0 0
      %589 = vmatmul.mubr.bf16.gmra.mrb[0].mxu0 %v542
      %v590 = vpop.f32.mrb[0].mxu0
      %v591 = vadd.f32 0.0, %v590
      %v592 = vpop.f32.mrb[0].mxu0
      %v593 = vpop.f32.mrb[0].mxu0
      %v594 = vadd.f32 0.0, %v593
      %v595 = vpop.f32.mrb[0].mxu0
      %596 = vmatprep.mubr.bf16.mxu0 0
      %597 = vmatmul.mubr.bf16.gmra.mrb[0].mxu0 %v545
      %v598 = vpop.f32.mrb[0].mxu0
      %v599 = vadd.f32 0.0, %v598
      %v600 = vpop.f32.mrb[0].mxu0
      %v601 = vpop.f32.mrb[0].mxu0
      %v602 = vadd.f32 0.0, %v601
      %v603 = vpop.f32.mrb[0].mxu0
      %604 = vmatprep.mubr.bf16.mxu0 0
      %605 = vmatmul.mubr.bf16.gmra.mrb[0].mxu0 %v548
      %v606 = vpop.f32.mrb[0].mxu0
      %v607 = vadd.f32 0.0, %v606
      %v608 = vpop.f32.mrb[0].mxu0
      %v609 = vpop.f32.mrb[0].mxu0
      %v610 = vadd.f32 0.0, %v609
      %v611 = vpop.f32.mrb[0].mxu0
      %612 = vmatprep.mubr.bf16.mxu0 0
      %613 = vmatmul.mubr.bf16.gmra.mrb[0].mxu0 %v551
      %v614 = vpop.f32.mrb[0].mxu0
      %v615 = vadd.f32 0.0, %v614
      %v616 = vpop.f32.mrb[0].mxu0
      %v617 = vpop.f32.mrb[0].mxu0
      %v618 = vadd.f32 0.0, %v617
      %v619 = vpop.f32.mrb[0].mxu0
      %620 = vdwg.mxu0
      %621 = vrot.lane.b32.xlu0 %v447, 120
      %v622 = vpop.permute.xlu0 %621
      %623 = vrot.lane.b32.xlu0 %v448, 120
      %v624 = vpop.permute.xlu0 %623
      %625 = vrot.lane.b32.xlu0 %v449, 120
      %v626 = vpop.permute.xlu0 %625
      %627 = vrot.lane.b32.xlu0 %v450, 120
      %v628 = vpop.permute.xlu0 %627
      %v630 = vsel %vm349, %v622, 0
      %v633 = vsel %vm349, %v624, 0
      %v636 = vsel %vm349, %v626, 0
      %v639 = vsel %vm349, %v628, 0
      %v642 = vsel %vm362, %v317, 0
      %644 = vmatprep.subr.bf16.mxu0 0
      %645 = vmatpush1.bf16.msra.mxu0 %v642
      %646 = vmatprep.subr.bf16.mxu0 0
      %647 = vmatpush1.bf16.msra.mxu0 0
      %648 = vmatprep.subr.bf16.mxu0 0
      %649 = vmatpush1.bf16.msra.mxu0 0
      %650 = vmatprep.subr.bf16.mxu0 0
      %651 = vmatpush1.bf16.msra.mxu0 0
      %652 = vmatprep.subr.bf16.mxu0 0
      %653 = vmatpush1.bf16.msra.mxu0 0
      %654 = vmatprep.subr.bf16.mxu0 0
      %655 = vmatpush1.bf16.msra.mxu0 0
      %656 = vmatprep.subr.bf16.mxu0 0
      %657 = vmatpush1.bf16.msra.mxu0 0
      %658 = vmatprep.subr.bf16.mxu0 0
      %659 = vmatpush1.bf16.msra.mxu0 0
      %660 = vmatprep.subr.bf16.mxu0 0
      %661 = vmatpush1.bf16.msra.mxu0 0
      %662 = vmatprep.subr.bf16.mxu0 0
      %663 = vmatpush1.bf16.msra.mxu0 0
      %664 = vmatprep.subr.bf16.mxu0 0
      %665 = vmatpush1.bf16.msra.mxu0 0
      %666 = vmatprep.subr.bf16.mxu0 0
      %667 = vmatpush1.bf16.msra.mxu0 0
      %668 = vmatprep.subr.bf16.mxu0 0
      %669 = vmatpush1.bf16.msra.mxu0 0
      %670 = vmatprep.subr.bf16.mxu0 0
      %671 = vmatpush1.bf16.msra.mxu0 0
      %672 = vmatprep.subr.bf16.mxu0 0
      %673 = vmatpush1.bf16.msra.mxu0 0
      %674 = vmatprep.subr.bf16.mxu0 0
      %675 = vmatpush1.bf16.msra.mxu0 0
      %676 = vmatprep.mubr.bf16.mxu0 0
      %677 = vmatmul.mubr.bf16.gmra.mrb[0].mxu0 %v630
      %v678 = vpop.f32.mrb[0].mxu0
      %v679 = vadd.f32 %v591, %v678
      %v680 = vpop.f32.mrb[0].mxu0
      %v681 = vpop.f32.mrb[0].mxu0
      %v682 = vadd.f32 %v594, %v681
      %v683 = vpop.f32.mrb[0].mxu0
      %684 = vmatprep.mubr.bf16.mxu0 0
      %685 = vmatmul.mubr.bf16.gmra.mrb[0].mxu0 %v633
      %v686 = vpop.f32.mrb[0].mxu0
      %v687 = vadd.f32 %v599, %v686
      %v688 = vpop.f32.mrb[0].mxu0
      %v689 = vpop.f32.mrb[0].mxu0
      %v690 = vadd.f32 %v602, %v689
      %v691 = vpop.f32.mrb[0].mxu0
      %692 = vmatprep.mubr.bf16.mxu0 0
      %693 = vmatmul.mubr.bf16.gmra.mrb[0].mxu0 %v636
      %v694 = vpop.f32.mrb[0].mxu0
      %v695 = vadd.f32 %v607, %v694
      %v696 = vpop.f32.mrb[0].mxu0
      %v697 = vpop.f32.mrb[0].mxu0
      %v698 = vadd.f32 %v610, %v697
      %v699 = vpop.f32.mrb[0].mxu0
      %700 = vmatprep.mubr.bf16.mxu0 0
      %701 = vmatmul.mubr.bf16.gmra.mrb[0].mxu0 %v639
      %v702 = vpop.f32.mrb[0].mxu0
      %v703 = vadd.f32 %v615, %v702
      %v704 = vpop.f32.mrb[0].mxu0
      %v705 = vpop.f32.mrb[0].mxu0
      %v706 = vadd.f32 %v618, %v705
      %v707 = vpop.f32.mrb[0].mxu0
      %708 = vdwg.mxu0
      %v709 = vld [vmem:[%s300] sm:$0xf]
      %v710 = vld [vmem:[%s300 + $0x4] sm:$0x1]
      %v711 = vld [vmem:[%s300 + $0x8] sm:$0xf]
      %v712 = vld [vmem:[%s300 + $0xc] sm:$0x1]
      %v713 = vld [vmem:[%s300 + $0x10] sm:$0xf]
      %v714 = vld [vmem:[%s300 + $0x14] sm:$0x1]
      %v715 = vld [vmem:[%s300 + $0x18] sm:$0xf]
      %v716 = vld [vmem:[%s300 + $0x1c] sm:$0x1]
      %v717 = vld [vmem:[%s300 + $0x20] sm:$0xf]
      %v718 = vld [vmem:[%s300 + $0x24] sm:$0x1]
      %v719 = vld [vmem:[%s300 + $0x28] sm:$0xf]
      %v720 = vld [vmem:[%s300 + $0x2c] sm:$0x1]
      %v721 = vld [vmem:[%s300 + $0x30] sm:$0xf]
      %v722 = vld [vmem:[%s300 + $0x34] sm:$0x1]
      %v723 = vld [vmem:[%s300 + $0x38] sm:$0xf]
      %v724 = vld [vmem:[%s300 + $0x3c] sm:$0x1]
      %vm725 = vsmask.f32 3328
      %vm726 = vsmask.f32 7440
      %vm727 = vmor %vm725, %vm726
      %v729 = vshrl.u32 %v709, 16
      %v731 = vrot.slane %v729, 4
      %v732 = vshll.u32 %v709, 16
      %v734 = vrot.slane %v732, 5
      %v735 = vor.u32 %v731, %v734
      %v736 = vrot.slane %v735, 4
      %v738 = vshll.u32 %v710, 16
      %v740 = vrot.slane %v738, 5
      %v741 = vsel %vm727, %v736, %v740
      %v743 = vshrl.u32 %v711, 16
      %v745 = vrot.slane %v743, 4
      %v746 = vshll.u32 %v711, 16
      %v748 = vrot.slane %v746, 5
      %v749 = vor.u32 %v745, %v748
      %v750 = vrot.slane %v749, 4
      %v752 = vshll.u32 %v712, 16
      %v754 = vrot.slane %v752, 5
      %v755 = vsel %vm727, %v750, %v754
      %v757 = vshrl.u32 %v713, 16
      %v759 = vrot.slane %v757, 4
      %v760 = vshll.u32 %v713, 16
      %v762 = vrot.slane %v760, 5
      %v763 = vor.u32 %v759, %v762
      %v764 = vrot.slane %v763, 4
      %v766 = vshll.u32 %v714, 16
      %v768 = vrot.slane %v766, 5
      %v769 = vsel %vm727, %v764, %v768
      %v771 = vshrl.u32 %v715, 16
      %v773 = vrot.slane %v771, 4
      %v774 = vshll.u32 %v715, 16
      %v776 = vrot.slane %v774, 5
      %v777 = vor.u32 %v773, %v776
      %v778 = vrot.slane %v777, 4
      %v780 = vshll.u32 %v716, 16
      %v782 = vrot.slane %v780, 5
      %v783 = vsel %vm727, %v778, %v782
      %v785 = vshrl.u32 %v717, 16
      %v787 = vrot.slane %v785, 4
      %v788 = vshll.u32 %v717, 16
      %v790 = vrot.slane %v788, 5
      %v791 = vor.u32 %v787, %v790
      %v792 = vrot.slane %v791, 4
      %v794 = vshll.u32 %v718, 16
      %v796 = vrot.slane %v794, 5
      %v797 = vsel %vm727, %v792, %v796
      %v799 = vshrl.u32 %v719, 16
      %v801 = vrot.slane %v799, 4
      %v802 = vshll.u32 %v719, 16
      %v804 = vrot.slane %v802, 5
      %v805 = vor.u32 %v801, %v804
      %v806 = vrot.slane %v805, 4
      %v808 = vshll.u32 %v720, 16
      %v810 = vrot.slane %v808, 5
      %v811 = vsel %vm727, %v806, %v810
      %v813 = vshrl.u32 %v721, 16
      %v815 = vrot.slane %v813, 4
      %v816 = vshll.u32 %v721, 16
      %v818 = vrot.slane %v816, 5
      %v819 = vor.u32 %v815, %v818
      %v820 = vrot.slane %v819, 4
      %v822 = vshll.u32 %v722, 16
      %v824 = vrot.slane %v822, 5
      %v825 = vsel %vm727, %v820, %v824
      %v827 = vshrl.u32 %v723, 16
      %v829 = vrot.slane %v827, 4
      %v830 = vshll.u32 %v723, 16
      %v832 = vrot.slane %v830, 5
      %v833 = vor.u32 %v829, %v832
      %v834 = vrot.slane %v833, 4
      %v836 = vshll.u32 %v724, 16
      %v838 = vrot.slane %v836, 5
      %v839 = vsel %vm727, %v834, %v838
      %s840 = scalar_lea.vmem %s1, 16
      %v841 = vld [vmem:[%s840] sm:$0xf]
      %v842 = vunpack.c.l.b16 %v741
      %v843 = vunpack.c.l.b16 %v755
      %v844 = vunpack.c.l.b16 %v769
      %v845 = vunpack.c.l.b16 %v783
      %v846 = vunpack.c.l.b16 %v797
      %v847 = vunpack.c.l.b16 %v811
      %v848 = vunpack.c.l.b16 %v825
      %v849 = vunpack.c.l.b16 %v839
      %v850 = vpack.c.b16 %v843, %v842
      %v851 = vpack.c.b16 %v845, %v844
      %v852 = vpack.c.b16 %v847, %v846
      %v853 = vpack.c.b16 %v849, %v848
      %v855 = vsel %vm349, %v850, 0
      %v858 = vsel %vm349, %v851, 0
      %v861 = vsel %vm349, %v852, 0
      %v864 = vsel %vm349, %v853, 0
      %v867 = vsel %vm362, %v841, 0
      %869 = vmatprep.subr.bf16.mxu0 0
      %870 = vmatpush1.bf16.msra.mxu0 %v867
      %871 = vmatprep.subr.bf16.mxu0 0
      %872 = vmatpush1.bf16.msra.mxu0 0
      %873 = vmatprep.subr.bf16.mxu0 0
      %874 = vmatpush1.bf16.msra.mxu0 0
      %875 = vmatprep.subr.bf16.mxu0 0
      %876 = vmatpush1.bf16.msra.mxu0 0
      %877 = vmatprep.subr.bf16.mxu0 0
      %878 = vmatpush1.bf16.msra.mxu0 0
      %879 = vmatprep.subr.bf16.mxu0 0
      %880 = vmatpush1.bf16.msra.mxu0 0
      %881 = vmatprep.subr.bf16.mxu0 0
      %882 = vmatpush1.bf16.msra.mxu0 0
      %883 = vmatprep.subr.bf16.mxu0 0
      %884 = vmatpush1.bf16.msra.mxu0 0
      %885 = vmatprep.subr.bf16.mxu0 0
      %886 = vmatpush1.bf16.msra.mxu0 0
      %887 = vmatprep.subr.bf16.mxu0 0
      %888 = vmatpush1.bf16.msra.mxu0 0
      %889 = vmatprep.subr.bf16.mxu0 0
      %890 = vmatpush1.bf16.msra.mxu0 0
      %891 = vmatprep.subr.bf16.mxu0 0
      %892 = vmatpush1.bf16.msra.mxu0 0
      %893 = vmatprep.subr.bf16.mxu0 0
      %894 = vmatpush1.bf16.msra.mxu0 0
      %895 = vmatprep.subr.bf16.mxu0 0
      %896 = vmatpush1.bf16.msra.mxu0 0
      %897 = vmatprep.subr.bf16.mxu0 0
      %898 = vmatpush1.bf16.msra.mxu0 0
      %899 = vmatprep.subr.bf16.mxu0 0
      %900 = vmatpush1.bf16.msra.mxu0 0
      %901 = vmatprep.mubr.bf16.mxu0 0
      %902 = vmatmul.mubr.bf16.gmra.mrb[0].mxu0 %v855
      %v903 = vpop.f32.mrb[0].mxu0
      %v904 = vadd.f32 0.0, %v903
      %v905 = vpop.f32.mrb[0].mxu0
      %v906 = vpop.f32.mrb[0].mxu0
      %v907 = vadd.f32 0.0, %v906
      %v908 = vpop.f32.mrb[0].mxu0
      %909 = vmatprep.mubr.bf16.mxu0 0
      %910 = vmatmul.mubr.bf16.gmra.mrb[0].mxu0 %v858
      %v911 = vpop.f32.mrb[0].mxu0
      %v912 = vadd.f32 0.0, %v911
      %v913 = vpop.f32.mrb[0].mxu0
      %v914 = vpop.f32.mrb[0].mxu0
      %v915 = vadd.f32 0.0, %v914
      %v916 = vpop.f32.mrb[0].mxu0
      %917 = vmatprep.mubr.bf16.mxu0 0
      %918 = vmatmul.mubr.bf16.gmra.mrb[0].mxu0 %v861
      %v919 = vpop.f32.mrb[0].mxu0
      %v920 = vadd.f32 0.0, %v919
      %v921 = vpop.f32.mrb[0].mxu0
      %v922 = vpop.f32.mrb[0].mxu0
      %v923 = vadd.f32 0.0, %v922
      %v924 = vpop.f32.mrb[0].mxu0
      %925 = vmatprep.mubr.bf16.mxu0 0
      %926 = vmatmul.mubr.bf16.gmra.mrb[0].mxu0 %v864
      %v927 = vpop.f32.mrb[0].mxu0
      %v928 = vadd.f32 0.0, %v927
      %v929 = vpop.f32.mrb[0].mxu0
      %v930 = vpop.f32.mrb[0].mxu0
      %v931 = vadd.f32 0.0, %v930
      %v932 = vpop.f32.mrb[0].mxu0
      %933 = vdwg.mxu0
      %v934 = vadd.f32 %v501, %v904
      %v935 = vadd.f32 %v504, %v907
      %v936 = vadd.f32 %v509, %v912
      %v937 = vadd.f32 %v512, %v915
      %v938 = vadd.f32 %v517, %v920
      %v939 = vadd.f32 %v520, %v923
      %v940 = vadd.f32 %v525, %v928
      %v941 = vadd.f32 %v528, %v931
      %s942 = scalar_lea.vmem %s1, 20
      %v943 = vld [vmem:[%s942] sm:$0xf]
      %944 = vrot.lane.b32.xlu0 %v850, 120
      %v945 = vpop.permute.xlu0 %944
      %946 = vrot.lane.b32.xlu0 %v851, 120
      %v947 = vpop.permute.xlu0 %946
      %948 = vrot.lane.b32.xlu0 %v852, 120
      %v949 = vpop.permute.xlu0 %948
      %950 = vrot.lane.b32.xlu0 %v853, 120
      %v951 = vpop.permute.xlu0 %950
      %v953 = vsel %vm349, %v945, 0
      %v956 = vsel %vm349, %v947, 0
      %v959 = vsel %vm349, %v949, 0
      %v962 = vsel %vm349, %v951, 0
      %v965 = vsel %vm362, %v943, 0
      %967 = vmatprep.subr.bf16.mxu0 0
      %968 = vmatpush1.bf16.msra.mxu0 %v965
      %969 = vmatprep.subr.bf16.mxu0 0
      %970 = vmatpush1.bf16.msra.mxu0 0
      %971 = vmatprep.subr.bf16.mxu0 0
      %972 = vmatpush1.bf16.msra.mxu0 0
      %973 = vmatprep.subr.bf16.mxu0 0
      %974 = vmatpush1.bf16.msra.mxu0 0
      %975 = vmatprep.subr.bf16.mxu0 0
      %976 = vmatpush1.bf16.msra.mxu0 0
      %977 = vmatprep.subr.bf16.mxu0 0
      %978 = vmatpush1.bf16.msra.mxu0 0
      %979 = vmatprep.subr.bf16.mxu0 0
      %980 = vmatpush1.bf16.msra.mxu0 0
      %981 = vmatprep.subr.bf16.mxu0 0
      %982 = vmatpush1.bf16.msra.mxu0 0
      %983 = vmatprep.subr.bf16.mxu0 0
      %984 = vmatpush1.bf16.msra.mxu0 0
      %985 = vmatprep.subr.bf16.mxu0 0
      %986 = vmatpush1.bf16.msra.mxu0 0
      %987 = vmatprep.subr.bf16.mxu0 0
      %988 = vmatpush1.bf16.msra.mxu0 0
      %989 = vmatprep.subr.bf16.mxu0 0
      %990 = vmatpush1.bf16.msra.mxu0 0
      %991 = vmatprep.subr.bf16.mxu0 0
      %992 = vmatpush1.bf16.msra.mxu0 0
      %993 = vmatprep.subr.bf16.mxu0 0
      %994 = vmatpush1.bf16.msra.mxu0 0
      %995 = vmatprep.subr.bf16.mxu0 0
      %996 = vmatpush1.bf16.msra.mxu0 0
      %997 = vmatprep.subr.bf16.mxu0 0
      %998 = vmatpush1.bf16.msra.mxu0 0
      %999 = vmatprep.mubr.bf16.mxu0 0
      %1000 = vmatmul.mubr.bf16.gmra.mrb[0].mxu0 %v953
      %v1001 = vpop.f32.mrb[0].mxu0
      %v1002 = vadd.f32 0.0, %v1001
      %v1003 = vpop.f32.mrb[0].mxu0
      %v1004 = vpop.f32.mrb[0].mxu0
      %v1005 = vadd.f32 0.0, %v1004
      %v1006 = vpop.f32.mrb[0].mxu0
      %1007 = vmatprep.mubr.bf16.mxu0 0
      %1008 = vmatmul.mubr.bf16.gmra.mrb[0].mxu0 %v956
      %v1009 = vpop.f32.mrb[0].mxu0
      %v1010 = vadd.f32 0.0, %v1009
      %v1011 = vpop.f32.mrb[0].mxu0
      %v1012 = vpop.f32.mrb[0].mxu0
      %v1013 = vadd.f32 0.0, %v1012
      %v1014 = vpop.f32.mrb[0].mxu0
      %1015 = vmatprep.mubr.bf16.mxu0 0
      %1016 = vmatmul.mubr.bf16.gmra.mrb[0].mxu0 %v959
      %v1017 = vpop.f32.mrb[0].mxu0
      %v1018 = vadd.f32 0.0, %v1017
      %v1019 = vpop.f32.mrb[0].mxu0
      %v1020 = vpop.f32.mrb[0].mxu0
      %v1021 = vadd.f32 0.0, %v1020
      %v1022 = vpop.f32.mrb[0].mxu0
      %1023 = vmatprep.mubr.bf16.mxu0 0
      %1024 = vmatmul.mubr.bf16.gmra.mrb[0].mxu0 %v962
      %v1025 = vpop.f32.mrb[0].mxu0
      %v1026 = vadd.f32 0.0, %v1025
      %v1027 = vpop.f32.mrb[0].mxu0
      %v1028 = vpop.f32.mrb[0].mxu0
      %v1029 = vadd.f32 0.0, %v1028
      %v1030 = vpop.f32.mrb[0].mxu0
      %1031 = vdwg.mxu0
      %v1032 = vadd.f32 %v679, %v1002
      %v1033 = vadd.f32 %v682, %v1005
      %v1034 = vadd.f32 %v687, %v1010
      %v1035 = vadd.f32 %v690, %v1013
      %v1036 = vadd.f32 %v695, %v1018
      %v1037 = vadd.f32 %v698, %v1021
      %v1038 = vadd.f32 %v703, %v1026
      %v1039 = vadd.f32 %v706, %v1029
      %s1040 = scalar_lea.vmem %s300, 144
      %v1041 = vld [vmem:[%s1040] sm:$0xf]
      %v1042 = vld [vmem:[%s1040 + $0x8] sm:$0xf]
      %v1043 = vld [vmem:[%s1040 + $0x10] sm:$0xf]
      %v1044 = vld [vmem:[%s1040 + $0x18] sm:$0xf]
      %v1045 = vld [vmem:[%s1040 + $0x20] sm:$0xf]
      %v1046 = vld [vmem:[%s1040 + $0x28] sm:$0xf]
      %v1047 = vld [vmem:[%s1040 + $0x30] sm:$0xf]
      %v1048 = vld [vmem:[%s1040 + $0x38] sm:$0xf]
      %s1049 = scalar_lea.vmem %s1, 24
      %v1050 = vld [vmem:[%s1049] sm:$0xf]
      %v1059 = vunpack.c.l.b16 %v1041
      %v1060 = vunpack.c.l.b16 %v1042
      %v1061 = vunpack.c.l.b16 %v1043
      %v1062 = vunpack.c.l.b16 %v1044
      %v1063 = vunpack.c.l.b16 %v1045
      %v1064 = vunpack.c.l.b16 %v1046
      %v1065 = vunpack.c.l.b16 %v1047
      %v1066 = vunpack.c.l.b16 %v1048
      %v1067 = vpack.c.b16 %v1060, %v1059
      %v1068 = vpack.c.b16 %v1062, %v1061
      %v1069 = vpack.c.b16 %v1064, %v1063
      %v1070 = vpack.c.b16 %v1066, %v1065
      %v1072 = vsel %vm349, %v1067, 0
      %v1075 = vsel %vm349, %v1068, 0
      %v1078 = vsel %vm349, %v1069, 0
      %v1081 = vsel %vm349, %v1070, 0
      %v1084 = vsel %vm362, %v1050, 0
      %1086 = vmatprep.subr.bf16.mxu0 0
      %1087 = vmatpush1.bf16.msra.mxu0 %v1084
      %1088 = vmatprep.subr.bf16.mxu0 0
      %1089 = vmatpush1.bf16.msra.mxu0 0
      %1090 = vmatprep.subr.bf16.mxu0 0
      %1091 = vmatpush1.bf16.msra.mxu0 0
      %1092 = vmatprep.subr.bf16.mxu0 0
      %1093 = vmatpush1.bf16.msra.mxu0 0
      %1094 = vmatprep.subr.bf16.mxu0 0
      %1095 = vmatpush1.bf16.msra.mxu0 0
      %1096 = vmatprep.subr.bf16.mxu0 0
      %1097 = vmatpush1.bf16.msra.mxu0 0
      %1098 = vmatprep.subr.bf16.mxu0 0
      %1099 = vmatpush1.bf16.msra.mxu0 0
      %1100 = vmatprep.subr.bf16.mxu0 0
      %1101 = vmatpush1.bf16.msra.mxu0 0
      %1102 = vmatprep.subr.bf16.mxu0 0
      %1103 = vmatpush1.bf16.msra.mxu0 0
      %1104 = vmatprep.subr.bf16.mxu0 0
      %1105 = vmatpush1.bf16.msra.mxu0 0
      %1106 = vmatprep.subr.bf16.mxu0 0
      %1107 = vmatpush1.bf16.msra.mxu0 0
      %1108 = vmatprep.subr.bf16.mxu0 0
      %1109 = vmatpush1.bf16.msra.mxu0 0
      %1110 = vmatprep.subr.bf16.mxu0 0
      %1111 = vmatpush1.bf16.msra.mxu0 0
      %1112 = vmatprep.subr.bf16.mxu0 0
      %1113 = vmatpush1.bf16.msra.mxu0 0
      %1114 = vmatprep.subr.bf16.mxu0 0
      %1115 = vmatpush1.bf16.msra.mxu0 0
      %1116 = vmatprep.subr.bf16.mxu0 0
      %1117 = vmatpush1.bf16.msra.mxu0 0
      %1118 = vmatprep.mubr.bf16.mxu0 0
      %1119 = vmatmul.mubr.bf16.gmra.mrb[0].mxu0 %v1072
      %v1120 = vpop.f32.mrb[0].mxu0
      %v1121 = vadd.f32 0.0, %v1120
      %v1122 = vpop.f32.mrb[0].mxu0
      %v1123 = vpop.f32.mrb[0].mxu0
      %v1124 = vadd.f32 0.0, %v1123
      %v1125 = vpop.f32.mrb[0].mxu0
      %1126 = vmatprep.mubr.bf16.mxu0 0
      %1127 = vmatmul.mubr.bf16.gmra.mrb[0].mxu0 %v1075
      %v1128 = vpop.f32.mrb[0].mxu0
      %v1129 = vadd.f32 0.0, %v1128
      %v1130 = vpop.f32.mrb[0].mxu0
      %v1131 = vpop.f32.mrb[0].mxu0
      %v1132 = vadd.f32 0.0, %v1131
      %v1133 = vpop.f32.mrb[0].mxu0
      %1134 = vmatprep.mubr.bf16.mxu0 0
      %1135 = vmatmul.mubr.bf16.gmra.mrb[0].mxu0 %v1078
      %v1136 = vpop.f32.mrb[0].mxu0
      %v1137 = vadd.f32 0.0, %v1136
      %v1138 = vpop.f32.mrb[0].mxu0
      %v1139 = vpop.f32.mrb[0].mxu0
      %v1140 = vadd.f32 0.0, %v1139
      %v1141 = vpop.f32.mrb[0].mxu0
      %1142 = vmatprep.mubr.bf16.mxu0 0
      %1143 = vmatmul.mubr.bf16.gmra.mrb[0].mxu0 %v1081
      %v1144 = vpop.f32.mrb[0].mxu0
      %v1145 = vadd.f32 0.0, %v1144
      %v1146 = vpop.f32.mrb[0].mxu0
      %v1147 = vpop.f32.mrb[0].mxu0
      %v1148 = vadd.f32 0.0, %v1147
      %v1149 = vpop.f32.mrb[0].mxu0
      %1150 = vdwg.mxu0
      %v1151 = vadd.f32 %v934, %v1121
      %v1152 = vadd.f32 %v935, %v1124
      %v1153 = vadd.f32 %v936, %v1129
      %v1154 = vadd.f32 %v937, %v1132
      %v1155 = vadd.f32 %v938, %v1137
      %v1156 = vadd.f32 %v939, %v1140
      %v1157 = vadd.f32 %v940, %v1145
      %v1158 = vadd.f32 %v941, %v1148
      %s1159 = scalar_lea.vmem %s1, 28
      %v1160 = vld [vmem:[%s1159] sm:$0xf]
      %1161 = vrot.lane.b32.xlu0 %v1067, 120
      %v1162 = vpop.permute.xlu0 %1161
      %1163 = vrot.lane.b32.xlu0 %v1068, 120
      %v1164 = vpop.permute.xlu0 %1163
      %1165 = vrot.lane.b32.xlu0 %v1069, 120
      %v1166 = vpop.permute.xlu0 %1165
      %1167 = vrot.lane.b32.xlu0 %v1070, 120
      %v1168 = vpop.permute.xlu0 %1167
      %v1170 = vsel %vm349, %v1162, 0
      %v1173 = vsel %vm349, %v1164, 0
      %v1176 = vsel %vm349, %v1166, 0
      %v1179 = vsel %vm349, %v1168, 0
      %v1182 = vsel %vm362, %v1160, 0
      %1184 = vmatprep.subr.bf16.mxu0 0
      %1185 = vmatpush1.bf16.msra.mxu0 %v1182
      %1186 = vmatprep.subr.bf16.mxu0 0
      %1187 = vmatpush1.bf16.msra.mxu0 0
      %1188 = vmatprep.subr.bf16.mxu0 0
      %1189 = vmatpush1.bf16.msra.mxu0 0
      %1190 = vmatprep.subr.bf16.mxu0 0
      %1191 = vmatpush1.bf16.msra.mxu0 0
      %1192 = vmatprep.subr.bf16.mxu0 0
      %1193 = vmatpush1.bf16.msra.mxu0 0
      %1194 = vmatprep.subr.bf16.mxu0 0
      %1195 = vmatpush1.bf16.msra.mxu0 0
      %1196 = vmatprep.subr.bf16.mxu0 0
      %1197 = vmatpush1.bf16.msra.mxu0 0
      %1198 = vmatprep.subr.bf16.mxu0 0
      %1199 = vmatpush1.bf16.msra.mxu0 0
      %1200 = vmatprep.subr.bf16.mxu0 0
      %1201 = vmatpush1.bf16.msra.mxu0 0
      %1202 = vmatprep.subr.bf16.mxu0 0
      %1203 = vmatpush1.bf16.msra.mxu0 0
      %1204 = vmatprep.subr.bf16.mxu0 0
      %1205 = vmatpush1.bf16.msra.mxu0 0
      %1206 = vmatprep.subr.bf16.mxu0 0
      %1207 = vmatpush1.bf16.msra.mxu0 0
      %1208 = vmatprep.subr.bf16.mxu0 0
      %1209 = vmatpush1.bf16.msra.mxu0 0
      %1210 = vmatprep.subr.bf16.mxu0 0
      %1211 = vmatpush1.bf16.msra.mxu0 0
      %1212 = vmatprep.subr.bf16.mxu0 0
      %1213 = vmatpush1.bf16.msra.mxu0 0
      %1214 = vmatprep.subr.bf16.mxu0 0
      %1215 = vmatpush1.bf16.msra.mxu0 0
      %1216 = vmatprep.mubr.bf16.mxu0 0
      %1217 = vmatmul.mubr.bf16.gmra.mrb[0].mxu0 %v1170
      %v1218 = vpop.f32.mrb[0].mxu0
      %v1219 = vadd.f32 0.0, %v1218
      %v1220 = vpop.f32.mrb[0].mxu0
      %v1221 = vpop.f32.mrb[0].mxu0
      %v1222 = vadd.f32 0.0, %v1221
      %v1223 = vpop.f32.mrb[0].mxu0
      %1224 = vmatprep.mubr.bf16.mxu0 0
      %1225 = vmatmul.mubr.bf16.gmra.mrb[0].mxu0 %v1173
      %v1226 = vpop.f32.mrb[0].mxu0
      %v1227 = vadd.f32 0.0, %v1226
      %v1228 = vpop.f32.mrb[0].mxu0
      %v1229 = vpop.f32.mrb[0].mxu0
      %v1230 = vadd.f32 0.0, %v1229
      %v1231 = vpop.f32.mrb[0].mxu0
      %1232 = vmatprep.mubr.bf16.mxu0 0
      %1233 = vmatmul.mubr.bf16.gmra.mrb[0].mxu0 %v1176
      %v1234 = vpop.f32.mrb[0].mxu0
      %v1235 = vadd.f32 0.0, %v1234
      %v1236 = vpop.f32.mrb[0].mxu0
      %v1237 = vpop.f32.mrb[0].mxu0
      %v1238 = vadd.f32 0.0, %v1237
      %v1239 = vpop.f32.mrb[0].mxu0
      %1240 = vmatprep.mubr.bf16.mxu0 0
      %1241 = vmatmul.mubr.bf16.gmra.mrb[0].mxu0 %v1179
      %v1242 = vpop.f32.mrb[0].mxu0
      %v1243 = vadd.f32 0.0, %v1242
      %v1244 = vpop.f32.mrb[0].mxu0
      %v1245 = vpop.f32.mrb[0].mxu0
      %v1246 = vadd.f32 0.0, %v1245
      %v1247 = vpop.f32.mrb[0].mxu0
      %1248 = vdwg.mxu0
      %v1249 = vadd.f32 %v1032, %v1219
      %v1250 = vadd.f32 %v1033, %v1222
      %v1251 = vadd.f32 %v1034, %v1227
      %v1252 = vadd.f32 %v1035, %v1230
      %v1253 = vadd.f32 %v1036, %v1235
      %v1254 = vadd.f32 %v1037, %v1238
      %v1255 = vadd.f32 %v1038, %v1243
      %v1256 = vadd.f32 %v1039, %v1246
      %s1257 = scalar_lea.vmem %s300, 216
      %v1258 = vld [vmem:[%s1257] sm:$0xf]
      %v1259 = vld [vmem:[%s1257 + $0x8] sm:$0xf]
      %v1260 = vld [vmem:[%s1257 + $0x10] sm:$0xf]
      %v1261 = vld [vmem:[%s1257 + $0x18] sm:$0xf]
      %v1262 = vld [vmem:[%s1257 + $0x20] sm:$0xf]
      %v1263 = vld [vmem:[%s1257 + $0x28] sm:$0xf]
      %v1264 = vld [vmem:[%s1257 + $0x30] sm:$0xf]
      %v1265 = vld [vmem:[%s1257 + $0x38] sm:$0xf]
      %s1266 = scalar_lea.vmem %s1, 32
      %v1267 = vld [vmem:[%s1266] sm:$0xf]
      %v1276 = vunpack.c.l.b16 %v1258
      %v1277 = vunpack.c.l.b16 %v1259
      %v1278 = vunpack.c.l.b16 %v1260
      %v1279 = vunpack.c.l.b16 %v1261
      %v1280 = vunpack.c.l.b16 %v1262
      %v1281 = vunpack.c.l.b16 %v1263
      %v1282 = vunpack.c.l.b16 %v1264
      %v1283 = vunpack.c.l.b16 %v1265
      %v1284 = vpack.c.b16 %v1277, %v1276
      %v1285 = vpack.c.b16 %v1279, %v1278
      %v1286 = vpack.c.b16 %v1281, %v1280
      %v1287 = vpack.c.b16 %v1283, %v1282
      %v1289 = vsel %vm349, %v1284, 0
      %v1292 = vsel %vm349, %v1285, 0
      %v1295 = vsel %vm349, %v1286, 0
      %v1298 = vsel %vm349, %v1287, 0
      %v1301 = vsel %vm362, %v1267, 0
      %1303 = vmatprep.subr.bf16.mxu0 0
      %1304 = vmatpush1.bf16.msra.mxu0 %v1301
      %1305 = vmatprep.subr.bf16.mxu0 0
      %1306 = vmatpush1.bf16.msra.mxu0 0
      %1307 = vmatprep.subr.bf16.mxu0 0
      %1308 = vmatpush1.bf16.msra.mxu0 0
      %1309 = vmatprep.subr.bf16.mxu0 0
      %1310 = vmatpush1.bf16.msra.mxu0 0
      %1311 = vmatprep.subr.bf16.mxu0 0
      %1312 = vmatpush1.bf16.msra.mxu0 0
      %1313 = vmatprep.subr.bf16.mxu0 0
      %1314 = vmatpush1.bf16.msra.mxu0 0
      %1315 = vmatprep.subr.bf16.mxu0 0
      %1316 = vmatpush1.bf16.msra.mxu0 0
      %1317 = vmatprep.subr.bf16.mxu0 0
      %1318 = vmatpush1.bf16.msra.mxu0 0
      %1319 = vmatprep.subr.bf16.mxu0 0
      %1320 = vmatpush1.bf16.msra.mxu0 0
      %1321 = vmatprep.subr.bf16.mxu0 0
      %1322 = vmatpush1.bf16.msra.mxu0 0
      %1323 = vmatprep.subr.bf16.mxu0 0
      %1324 = vmatpush1.bf16.msra.mxu0 0
      %1325 = vmatprep.subr.bf16.mxu0 0
      %1326 = vmatpush1.bf16.msra.mxu0 0
      %1327 = vmatprep.subr.bf16.mxu0 0
      %1328 = vmatpush1.bf16.msra.mxu0 0
      %1329 = vmatprep.subr.bf16.mxu0 0
      %1330 = vmatpush1.bf16.msra.mxu0 0
      %1331 = vmatprep.subr.bf16.mxu0 0
      %1332 = vmatpush1.bf16.msra.mxu0 0
      %1333 = vmatprep.subr.bf16.mxu0 0
      %1334 = vmatpush1.bf16.msra.mxu0 0
      %1335 = vmatprep.mubr.bf16.mxu0 0
      %1336 = vmatmul.mubr.bf16.gmra.mrb[0].mxu0 %v1289
      %v1337 = vpop.f32.mrb[0].mxu0
      %v1338 = vadd.f32 0.0, %v1337
      %v1339 = vpop.f32.mrb[0].mxu0
      %v1340 = vpop.f32.mrb[0].mxu0
      %v1341 = vadd.f32 0.0, %v1340
      %v1342 = vpop.f32.mrb[0].mxu0
      %1343 = vmatprep.mubr.bf16.mxu0 0
      %1344 = vmatmul.mubr.bf16.gmra.mrb[0].mxu0 %v1292
      %v1345 = vpop.f32.mrb[0].mxu0
      %v1346 = vadd.f32 0.0, %v1345
      %v1347 = vpop.f32.mrb[0].mxu0
      %v1348 = vpop.f32.mrb[0].mxu0
      %v1349 = vadd.f32 0.0, %v1348
      %v1350 = vpop.f32.mrb[0].mxu0
      %1351 = vmatprep.mubr.bf16.mxu0 0
      %1352 = vmatmul.mubr.bf16.gmra.mrb[0].mxu0 %v1295
      %v1353 = vpop.f32.mrb[0].mxu0
      %v1354 = vadd.f32 0.0, %v1353
      %v1355 = vpop.f32.mrb[0].mxu0
      %v1356 = vpop.f32.mrb[0].mxu0
      %v1357 = vadd.f32 0.0, %v1356
      %v1358 = vpop.f32.mrb[0].mxu0
      %1359 = vmatprep.mubr.bf16.mxu0 0
      %1360 = vmatmul.mubr.bf16.gmra.mrb[0].mxu0 %v1298
      %v1361 = vpop.f32.mrb[0].mxu0
      %v1362 = vadd.f32 0.0, %v1361
      %v1363 = vpop.f32.mrb[0].mxu0
      %v1364 = vpop.f32.mrb[0].mxu0
      %v1365 = vadd.f32 0.0, %v1364
      %v1366 = vpop.f32.mrb[0].mxu0
      %1367 = vdwg.mxu0
      %v1368 = vadd.f32 %v1151, %v1338
      %v1369 = vadd.f32 %v1152, %v1341
      %v1370 = vadd.f32 %v1153, %v1346
      %v1371 = vadd.f32 %v1154, %v1349
      %v1372 = vadd.f32 %v1155, %v1354
      %v1373 = vadd.f32 %v1156, %v1357
      %v1374 = vadd.f32 %v1157, %v1362
      %v1375 = vadd.f32 %v1158, %v1365
      %s1376 = scalar_lea.vmem %s1, 36
      %v1377 = vld [vmem:[%s1376] sm:$0xf]
      %1378 = vrot.lane.b32.xlu0 %v1284, 120
      %v1379 = vpop.permute.xlu0 %1378
      %1380 = vrot.lane.b32.xlu0 %v1285, 120
      %v1381 = vpop.permute.xlu0 %1380
      %1382 = vrot.lane.b32.xlu0 %v1286, 120
      %v1383 = vpop.permute.xlu0 %1382
      %1384 = vrot.lane.b32.xlu0 %v1287, 120
      %v1385 = vpop.permute.xlu0 %1384
      %v1387 = vsel %vm349, %v1379, 0
      %v1390 = vsel %vm349, %v1381, 0
      %v1393 = vsel %vm349, %v1383, 0
      %v1396 = vsel %vm349, %v1385, 0
      %v1399 = vsel %vm362, %v1377, 0
      %1401 = vmatprep.subr.bf16.mxu0 0
      %1402 = vmatpush1.bf16.msra.mxu0 %v1399
      %1403 = vmatprep.subr.bf16.mxu0 0
      %1404 = vmatpush1.bf16.msra.mxu0 0
      %1405 = vmatprep.subr.bf16.mxu0 0
      %1406 = vmatpush1.bf16.msra.mxu0 0
      %1407 = vmatprep.subr.bf16.mxu0 0
      %1408 = vmatpush1.bf16.msra.mxu0 0
      %1409 = vmatprep.subr.bf16.mxu0 0
      %1410 = vmatpush1.bf16.msra.mxu0 0
      %1411 = vmatprep.subr.bf16.mxu0 0
      %1412 = vmatpush1.bf16.msra.mxu0 0
      %1413 = vmatprep.subr.bf16.mxu0 0
      %1414 = vmatpush1.bf16.msra.mxu0 0
      %1415 = vmatprep.subr.bf16.mxu0 0
      %1416 = vmatpush1.bf16.msra.mxu0 0
      %1417 = vmatprep.subr.bf16.mxu0 0
      %1418 = vmatpush1.bf16.msra.mxu0 0
      %1419 = vmatprep.subr.bf16.mxu0 0
      %1420 = vmatpush1.bf16.msra.mxu0 0
      %1421 = vmatprep.subr.bf16.mxu0 0
      %1422 = vmatpush1.bf16.msra.mxu0 0
      %1423 = vmatprep.subr.bf16.mxu0 0
      %1424 = vmatpush1.bf16.msra.mxu0 0
      %1425 = vmatprep.subr.bf16.mxu0 0
      %1426 = vmatpush1.bf16.msra.mxu0 0
      %1427 = vmatprep.subr.bf16.mxu0 0
      %1428 = vmatpush1.bf16.msra.mxu0 0
      %1429 = vmatprep.subr.bf16.mxu0 0
      %1430 = vmatpush1.bf16.msra.mxu0 0
      %1431 = vmatprep.subr.bf16.mxu0 0
      %1432 = vmatpush1.bf16.msra.mxu0 0
      %1433 = vmatprep.mubr.bf16.mxu0 0
      %1434 = vmatmul.mubr.bf16.gmra.mrb[0].mxu0 %v1387
      %v1435 = vpop.f32.mrb[0].mxu0
      %v1436 = vadd.f32 0.0, %v1435
      %v1437 = vpop.f32.mrb[0].mxu0
      %v1438 = vpop.f32.mrb[0].mxu0
      %v1439 = vadd.f32 0.0, %v1438
      %v1440 = vpop.f32.mrb[0].mxu0
      %1441 = vmatprep.mubr.bf16.mxu0 0
      %1442 = vmatmul.mubr.bf16.gmra.mrb[0].mxu0 %v1390
      %v1443 = vpop.f32.mrb[0].mxu0
      %v1444 = vadd.f32 0.0, %v1443
      %v1445 = vpop.f32.mrb[0].mxu0
      %v1446 = vpop.f32.mrb[0].mxu0
      %v1447 = vadd.f32 0.0, %v1446
      %v1448 = vpop.f32.mrb[0].mxu0
      %1449 = vmatprep.mubr.bf16.mxu0 0
      %1450 = vmatmul.mubr.bf16.gmra.mrb[0].mxu0 %v1393
      %v1451 = vpop.f32.mrb[0].mxu0
      %v1452 = vadd.f32 0.0, %v1451
      %v1453 = vpop.f32.mrb[0].mxu0
      %v1454 = vpop.f32.mrb[0].mxu0
      %v1455 = vadd.f32 0.0, %v1454
      %v1456 = vpop.f32.mrb[0].mxu0
      %1457 = vmatprep.mubr.bf16.mxu0 0
      %1458 = vmatmul.mubr.bf16.gmra.mrb[0].mxu0 %v1396
      %v1459 = vpop.f32.mrb[0].mxu0
      %v1460 = vadd.f32 0.0, %v1459
      %v1461 = vpop.f32.mrb[0].mxu0
      %v1462 = vpop.f32.mrb[0].mxu0
      %v1463 = vadd.f32 0.0, %v1462
      %v1464 = vpop.f32.mrb[0].mxu0
      %1465 = vdwg.mxu0
      %v1466 = vadd.f32 %v1249, %v1436
      %v1467 = vadd.f32 %v1250, %v1439
      %v1468 = vadd.f32 %v1251, %v1444
      %v1469 = vadd.f32 %v1252, %v1447
      %v1470 = vadd.f32 %v1253, %v1452
      %v1471 = vadd.f32 %v1254, %v1455
      %v1472 = vadd.f32 %v1255, %v1460
      %v1473 = vadd.f32 %v1256, %v1463
      %v1474 = vld [vmem:[%s1040] sm:$0xf]
      %v1475 = vld [vmem:[%s1040 + $0x4] sm:$0x1]
      %v1476 = vld [vmem:[%s1040 + $0x8] sm:$0xf]
      %v1477 = vld [vmem:[%s1040 + $0xc] sm:$0x1]
      %v1478 = vld [vmem:[%s1040 + $0x10] sm:$0xf]
      %v1479 = vld [vmem:[%s1040 + $0x14] sm:$0x1]
      %v1480 = vld [vmem:[%s1040 + $0x18] sm:$0xf]
      %v1481 = vld [vmem:[%s1040 + $0x1c] sm:$0x1]
      %v1482 = vld [vmem:[%s1040 + $0x20] sm:$0xf]
      %v1483 = vld [vmem:[%s1040 + $0x24] sm:$0x1]
      %v1484 = vld [vmem:[%s1040 + $0x28] sm:$0xf]
      %v1485 = vld [vmem:[%s1040 + $0x2c] sm:$0x1]
      %v1486 = vld [vmem:[%s1040 + $0x30] sm:$0xf]
      %v1487 = vld [vmem:[%s1040 + $0x34] sm:$0x1]
      %v1488 = vld [vmem:[%s1040 + $0x38] sm:$0xf]
      %v1489 = vld [vmem:[%s1040 + $0x3c] sm:$0x1]
      %v1491 = vshrl.u32 %v1474, 16
      %v1493 = vrot.slane %v1491, 4
      %v1494 = vshll.u32 %v1474, 16
      %v1496 = vrot.slane %v1494, 5
      %v1497 = vor.u32 %v1493, %v1496
      %v1498 = vrot.slane %v1497, 4
      %v1500 = vshll.u32 %v1475, 16
      %v1502 = vrot.slane %v1500, 5
      %v1503 = vsel %vm727, %v1498, %v1502
      %v1505 = vshrl.u32 %v1476, 16
      %v1507 = vrot.slane %v1505, 4
      %v1508 = vshll.u32 %v1476, 16
      %v1510 = vrot.slane %v1508, 5
      %v1511 = vor.u32 %v1507, %v1510
      %v1512 = vrot.slane %v1511, 4
      %v1514 = vshll.u32 %v1477, 16
      %v1516 = vrot.slane %v1514, 5
      %v1517 = vsel %vm727, %v1512, %v1516
      %v1519 = vshrl.u32 %v1478, 16
      %v1521 = vrot.slane %v1519, 4
      %v1522 = vshll.u32 %v1478, 16
      %v1524 = vrot.slane %v1522, 5
      %v1525 = vor.u32 %v1521, %v1524
      %v1526 = vrot.slane %v1525, 4
      %v1528 = vshll.u32 %v1479, 16
      %v1530 = vrot.slane %v1528, 5
      %v1531 = vsel %vm727, %v1526, %v1530
      %v1533 = vshrl.u32 %v1480, 16
      %v1535 = vrot.slane %v1533, 4
      %v1536 = vshll.u32 %v1480, 16
      %v1538 = vrot.slane %v1536, 5
      %v1539 = vor.u32 %v1535, %v1538
      %v1540 = vrot.slane %v1539, 4
      %v1542 = vshll.u32 %v1481, 16
      %v1544 = vrot.slane %v1542, 5
      %v1545 = vsel %vm727, %v1540, %v1544
      %v1547 = vshrl.u32 %v1482, 16
      %v1549 = vrot.slane %v1547, 4
      %v1550 = vshll.u32 %v1482, 16
      %v1552 = vrot.slane %v1550, 5
      %v1553 = vor.u32 %v1549, %v1552
      %v1554 = vrot.slane %v1553, 4
      %v1556 = vshll.u32 %v1483, 16
      %v1558 = vrot.slane %v1556, 5
      %v1559 = vsel %vm727, %v1554, %v1558
      %v1561 = vshrl.u32 %v1484, 16
      %v1563 = vrot.slane %v1561, 4
      %v1564 = vshll.u32 %v1484, 16
      %v1566 = vrot.slane %v1564, 5
      %v1567 = vor.u32 %v1563, %v1566
      %v1568 = vrot.slane %v1567, 4
      %v1570 = vshll.u32 %v1485, 16
      %v1572 = vrot.slane %v1570, 5
      %v1573 = vsel %vm727, %v1568, %v1572
      %v1575 = vshrl.u32 %v1486, 16
      %v1577 = vrot.slane %v1575, 4
      %v1578 = vshll.u32 %v1486, 16
      %v1580 = vrot.slane %v1578, 5
      %v1581 = vor.u32 %v1577, %v1580
      %v1582 = vrot.slane %v1581, 4
      %v1584 = vshll.u32 %v1487, 16
      %v1586 = vrot.slane %v1584, 5
      %v1587 = vsel %vm727, %v1582, %v1586
      %v1589 = vshrl.u32 %v1488, 16
      %v1591 = vrot.slane %v1589, 4
      %v1592 = vshll.u32 %v1488, 16
      %v1594 = vrot.slane %v1592, 5
      %v1595 = vor.u32 %v1591, %v1594
      %v1596 = vrot.slane %v1595, 4
      %v1598 = vshll.u32 %v1489, 16
      %v1600 = vrot.slane %v1598, 5
      %v1601 = vsel %vm727, %v1596, %v1600
      %s1602 = scalar_lea.vmem %s1, 40
      %v1603 = vld [vmem:[%s1602] sm:$0xf]
      %v1604 = vunpack.c.l.b16 %v1503
      %v1605 = vunpack.c.l.b16 %v1517
      %v1606 = vunpack.c.l.b16 %v1531
      %v1607 = vunpack.c.l.b16 %v1545
      %v1608 = vunpack.c.l.b16 %v1559
      %v1609 = vunpack.c.l.b16 %v1573
      %v1610 = vunpack.c.l.b16 %v1587
      %v1611 = vunpack.c.l.b16 %v1601
      %v1612 = vpack.c.b16 %v1605, %v1604
      %v1613 = vpack.c.b16 %v1607, %v1606
      %v1614 = vpack.c.b16 %v1609, %v1608
      %v1615 = vpack.c.b16 %v1611, %v1610
      %v1617 = vsel %vm349, %v1612, 0
      %v1620 = vsel %vm349, %v1613, 0
      %v1623 = vsel %vm349, %v1614, 0
      %v1626 = vsel %vm349, %v1615, 0
      %v1629 = vsel %vm362, %v1603, 0
      %1631 = vmatprep.subr.bf16.mxu0 0
      %1632 = vmatpush1.bf16.msra.mxu0 %v1629
      %1633 = vmatprep.subr.bf16.mxu0 0
      %1634 = vmatpush1.bf16.msra.mxu0 0
      %1635 = vmatprep.subr.bf16.mxu0 0
      %1636 = vmatpush1.bf16.msra.mxu0 0
      %1637 = vmatprep.subr.bf16.mxu0 0
      %1638 = vmatpush1.bf16.msra.mxu0 0
      %1639 = vmatprep.subr.bf16.mxu0 0
      %1640 = vmatpush1.bf16.msra.mxu0 0
      %1641 = vmatprep.subr.bf16.mxu0 0
      %1642 = vmatpush1.bf16.msra.mxu0 0
      %1643 = vmatprep.subr.bf16.mxu0 0
      %1644 = vmatpush1.bf16.msra.mxu0 0
      %1645 = vmatprep.subr.bf16.mxu0 0
      %1646 = vmatpush1.bf16.msra.mxu0 0
      %1647 = vmatprep.subr.bf16.mxu0 0
      %1648 = vmatpush1.bf16.msra.mxu0 0
      %1649 = vmatprep.subr.bf16.mxu0 0
      %1650 = vmatpush1.bf16.msra.mxu0 0
      %1651 = vmatprep.subr.bf16.mxu0 0
      %1652 = vmatpush1.bf16.msra.mxu0 0
      %1653 = vmatprep.subr.bf16.mxu0 0
      %1654 = vmatpush1.bf16.msra.mxu0 0
      %1655 = vmatprep.subr.bf16.mxu0 0
      %1656 = vmatpush1.bf16.msra.mxu0 0
      %1657 = vmatprep.subr.bf16.mxu0 0
      %1658 = vmatpush1.bf16.msra.mxu0 0
      %1659 = vmatprep.subr.bf16.mxu0 0
      %1660 = vmatpush1.bf16.msra.mxu0 0
      %1661 = vmatprep.subr.bf16.mxu0 0
      %1662 = vmatpush1.bf16.msra.mxu0 0
      %1663 = vmatprep.mubr.bf16.mxu0 0
      %1664 = vmatmul.mubr.bf16.gmra.mrb[0].mxu0 %v1617
      %v1665 = vpop.f32.mrb[0].mxu0
      %v1666 = vadd.f32 0.0, %v1665
      %v1667 = vpop.f32.mrb[0].mxu0
      %v1668 = vpop.f32.mrb[0].mxu0
      %v1669 = vadd.f32 0.0, %v1668
      %v1670 = vpop.f32.mrb[0].mxu0
      %1671 = vmatprep.mubr.bf16.mxu0 0
      %1672 = vmatmul.mubr.bf16.gmra.mrb[0].mxu0 %v1620
      %v1673 = vpop.f32.mrb[0].mxu0
      %v1674 = vadd.f32 0.0, %v1673
      %v1675 = vpop.f32.mrb[0].mxu0
      %v1676 = vpop.f32.mrb[0].mxu0
      %v1677 = vadd.f32 0.0, %v1676
      %v1678 = vpop.f32.mrb[0].mxu0
      %1679 = vmatprep.mubr.bf16.mxu0 0
      %1680 = vmatmul.mubr.bf16.gmra.mrb[0].mxu0 %v1623
      %v1681 = vpop.f32.mrb[0].mxu0
      %v1682 = vadd.f32 0.0, %v1681
      %v1683 = vpop.f32.mrb[0].mxu0
      %v1684 = vpop.f32.mrb[0].mxu0
      %v1685 = vadd.f32 0.0, %v1684
      %v1686 = vpop.f32.mrb[0].mxu0
      %1687 = vmatprep.mubr.bf16.mxu0 0
      %1688 = vmatmul.mubr.bf16.gmra.mrb[0].mxu0 %v1626
      %v1689 = vpop.f32.mrb[0].mxu0
      %v1690 = vadd.f32 0.0, %v1689
      %v1691 = vpop.f32.mrb[0].mxu0
      %v1692 = vpop.f32.mrb[0].mxu0
      %v1693 = vadd.f32 0.0, %v1692
      %v1694 = vpop.f32.mrb[0].mxu0
      %1695 = vdwg.mxu0
      %v1696 = vadd.f32 %v1368, %v1666
      %v1697 = vadd.f32 %v1369, %v1669
      %v1698 = vadd.f32 %v1370, %v1674
      %v1699 = vadd.f32 %v1371, %v1677
      %v1700 = vadd.f32 %v1372, %v1682
      %v1701 = vadd.f32 %v1373, %v1685
      %v1702 = vadd.f32 %v1374, %v1690
      %v1703 = vadd.f32 %v1375, %v1693
      %s1704 = scalar_lea.vmem %s1, 44
      %v1705 = vld [vmem:[%s1704] sm:$0xf]
      %1706 = vrot.lane.b32.xlu0 %v1612, 120
      %v1707 = vpop.permute.xlu0 %1706
      %1708 = vrot.lane.b32.xlu0 %v1613, 120
      %v1709 = vpop.permute.xlu0 %1708
      %1710 = vrot.lane.b32.xlu0 %v1614, 120
      %v1711 = vpop.permute.xlu0 %1710
      %1712 = vrot.lane.b32.xlu0 %v1615, 120
      %v1713 = vpop.permute.xlu0 %1712
      %v1715 = vsel %vm349, %v1707, 0
      %v1718 = vsel %vm349, %v1709, 0
      %v1721 = vsel %vm349, %v1711, 0
      %v1724 = vsel %vm349, %v1713, 0
      %v1727 = vsel %vm362, %v1705, 0
      %1729 = vmatprep.subr.bf16.mxu0 0
      %1730 = vmatpush1.bf16.msra.mxu0 %v1727
      %1731 = vmatprep.subr.bf16.mxu0 0
      %1732 = vmatpush1.bf16.msra.mxu0 0
      %1733 = vmatprep.subr.bf16.mxu0 0
      %1734 = vmatpush1.bf16.msra.mxu0 0
      %1735 = vmatprep.subr.bf16.mxu0 0
      %1736 = vmatpush1.bf16.msra.mxu0 0
      %1737 = vmatprep.subr.bf16.mxu0 0
      %1738 = vmatpush1.bf16.msra.mxu0 0
      %1739 = vmatprep.subr.bf16.mxu0 0
      %1740 = vmatpush1.bf16.msra.mxu0 0
      %1741 = vmatprep.subr.bf16.mxu0 0
      %1742 = vmatpush1.bf16.msra.mxu0 0
      %1743 = vmatprep.subr.bf16.mxu0 0
      %1744 = vmatpush1.bf16.msra.mxu0 0
      %1745 = vmatprep.subr.bf16.mxu0 0
      %1746 = vmatpush1.bf16.msra.mxu0 0
      %1747 = vmatprep.subr.bf16.mxu0 0
      %1748 = vmatpush1.bf16.msra.mxu0 0
      %1749 = vmatprep.subr.bf16.mxu0 0
      %1750 = vmatpush1.bf16.msra.mxu0 0
      %1751 = vmatprep.subr.bf16.mxu0 0
      %1752 = vmatpush1.bf16.msra.mxu0 0
      %1753 = vmatprep.subr.bf16.mxu0 0
      %1754 = vmatpush1.bf16.msra.mxu0 0
      %1755 = vmatprep.subr.bf16.mxu0 0
      %1756 = vmatpush1.bf16.msra.mxu0 0
      %1757 = vmatprep.subr.bf16.mxu0 0
      %1758 = vmatpush1.bf16.msra.mxu0 0
      %1759 = vmatprep.subr.bf16.mxu0 0
      %1760 = vmatpush1.bf16.msra.mxu0 0
      %1761 = vmatprep.mubr.bf16.mxu0 0
      %1762 = vmatmul.mubr.bf16.gmra.mrb[0].mxu0 %v1715
      %v1763 = vpop.f32.mrb[0].mxu0
      %v1764 = vadd.f32 0.0, %v1763
      %v1765 = vpop.f32.mrb[0].mxu0
      %v1766 = vpop.f32.mrb[0].mxu0
      %v1767 = vadd.f32 0.0, %v1766
      %v1768 = vpop.f32.mrb[0].mxu0
      %1769 = vmatprep.mubr.bf16.mxu0 0
      %1770 = vmatmul.mubr.bf16.gmra.mrb[0].mxu0 %v1718
      %v1771 = vpop.f32.mrb[0].mxu0
      %v1772 = vadd.f32 0.0, %v1771
      %v1773 = vpop.f32.mrb[0].mxu0
      %v1774 = vpop.f32.mrb[0].mxu0
      %v1775 = vadd.f32 0.0, %v1774
      %v1776 = vpop.f32.mrb[0].mxu0
      %1777 = vmatprep.mubr.bf16.mxu0 0
      %1778 = vmatmul.mubr.bf16.gmra.mrb[0].mxu0 %v1721
      %v1779 = vpop.f32.mrb[0].mxu0
      %v1780 = vadd.f32 0.0, %v1779
      %v1781 = vpop.f32.mrb[0].mxu0
      %v1782 = vpop.f32.mrb[0].mxu0
      %v1783 = vadd.f32 0.0, %v1782
      %v1784 = vpop.f32.mrb[0].mxu0
      %1785 = vmatprep.mubr.bf16.mxu0 0
      %1786 = vmatmul.mubr.bf16.gmra.mrb[0].mxu0 %v1724
      %v1787 = vpop.f32.mrb[0].mxu0
      %v1788 = vadd.f32 0.0, %v1787
      %v1789 = vpop.f32.mrb[0].mxu0
      %v1790 = vpop.f32.mrb[0].mxu0
      %v1791 = vadd.f32 0.0, %v1790
      %v1792 = vpop.f32.mrb[0].mxu0
      %1793 = vdwg.mxu0
      %v1794 = vadd.f32 %v1466, %v1764
      %v1795 = vadd.f32 %v1467, %v1767
      %v1796 = vadd.f32 %v1468, %v1772
      %v1797 = vadd.f32 %v1469, %v1775
      %v1798 = vadd.f32 %v1470, %v1780
      %v1799 = vadd.f32 %v1471, %v1783
      %v1800 = vadd.f32 %v1472, %v1788
      %v1801 = vadd.f32 %v1473, %v1791
      %s1802 = scalar_lea.vmem %s300, 8
      %v1803 = vld [vmem:[%s1802] sm:$0xf]
      %v1804 = vld [vmem:[%s1802 + $0x8] sm:$0xf]
      %v1805 = vld [vmem:[%s1802 + $0x10] sm:$0xf]
      %v1806 = vld [vmem:[%s1802 + $0x18] sm:$0xf]
      %v1807 = vld [vmem:[%s1802 + $0x20] sm:$0xf]
      %v1808 = vld [vmem:[%s1802 + $0x28] sm:$0xf]
      %v1809 = vld [vmem:[%s1802 + $0x30] sm:$0xf]
      %v1810 = vld [vmem:[%s1802 + $0x38] sm:$0xf]
      %s1811 = scalar_lea.vmem %s1, 48
      %v1812 = vld [vmem:[%s1811] sm:$0xf]
      %v1821 = vunpack.c.l.b16 %v1803
      %v1822 = vunpack.c.l.b16 %v1804
      %v1823 = vunpack.c.l.b16 %v1805
      %v1824 = vunpack.c.l.b16 %v1806
      %v1825 = vunpack.c.l.b16 %v1807
      %v1826 = vunpack.c.l.b16 %v1808
      %v1827 = vunpack.c.l.b16 %v1809
      %v1828 = vunpack.c.l.b16 %v1810
      %v1829 = vpack.c.b16 %v1822, %v1821
      %v1830 = vpack.c.b16 %v1824, %v1823
      %v1831 = vpack.c.b16 %v1826, %v1825
      %v1832 = vpack.c.b16 %v1828, %v1827
      %v1834 = vsel %vm349, %v1829, 0
      %v1837 = vsel %vm349, %v1830, 0
      %v1840 = vsel %vm349, %v1831, 0
      %v1843 = vsel %vm349, %v1832, 0
      %v1846 = vsel %vm362, %v1812, 0
      %1848 = vmatprep.subr.bf16.mxu0 0
      %1849 = vmatpush1.bf16.msra.mxu0 %v1846
      %1850 = vmatprep.subr.bf16.mxu0 0
      %1851 = vmatpush1.bf16.msra.mxu0 0
      %1852 = vmatprep.subr.bf16.mxu0 0
      %1853 = vmatpush1.bf16.msra.mxu0 0
      %1854 = vmatprep.subr.bf16.mxu0 0
      %1855 = vmatpush1.bf16.msra.mxu0 0
      %1856 = vmatprep.subr.bf16.mxu0 0
      %1857 = vmatpush1.bf16.msra.mxu0 0
      %1858 = vmatprep.subr.bf16.mxu0 0
      %1859 = vmatpush1.bf16.msra.mxu0 0
      %1860 = vmatprep.subr.bf16.mxu0 0
      %1861 = vmatpush1.bf16.msra.mxu0 0
      %1862 = vmatprep.subr.bf16.mxu0 0
      %1863 = vmatpush1.bf16.msra.mxu0 0
      %1864 = vmatprep.subr.bf16.mxu0 0
      %1865 = vmatpush1.bf16.msra.mxu0 0
      %1866 = vmatprep.subr.bf16.mxu0 0
      %1867 = vmatpush1.bf16.msra.mxu0 0
      %1868 = vmatprep.subr.bf16.mxu0 0
      %1869 = vmatpush1.bf16.msra.mxu0 0
      %1870 = vmatprep.subr.bf16.mxu0 0
      %1871 = vmatpush1.bf16.msra.mxu0 0
      %1872 = vmatprep.subr.bf16.mxu0 0
      %1873 = vmatpush1.bf16.msra.mxu0 0
      %1874 = vmatprep.subr.bf16.mxu0 0
      %1875 = vmatpush1.bf16.msra.mxu0 0
      %1876 = vmatprep.subr.bf16.mxu0 0
      %1877 = vmatpush1.bf16.msra.mxu0 0
      %1878 = vmatprep.subr.bf16.mxu0 0
      %1879 = vmatpush1.bf16.msra.mxu0 0
      %1880 = vmatprep.mubr.bf16.mxu0 0
      %1881 = vmatmul.mubr.bf16.gmra.mrb[0].mxu0 %v1834
      %v1882 = vpop.f32.mrb[0].mxu0
      %v1883 = vadd.f32 0.0, %v1882
      %v1884 = vpop.f32.mrb[0].mxu0
      %v1885 = vpop.f32.mrb[0].mxu0
      %v1886 = vadd.f32 0.0, %v1885
      %v1887 = vpop.f32.mrb[0].mxu0
      %1888 = vmatprep.mubr.bf16.mxu0 0
      %1889 = vmatmul.mubr.bf16.gmra.mrb[0].mxu0 %v1837
      %v1890 = vpop.f32.mrb[0].mxu0
      %v1891 = vadd.f32 0.0, %v1890
      %v1892 = vpop.f32.mrb[0].mxu0
      %v1893 = vpop.f32.mrb[0].mxu0
      %v1894 = vadd.f32 0.0, %v1893
      %v1895 = vpop.f32.mrb[0].mxu0
      %1896 = vmatprep.mubr.bf16.mxu0 0
      %1897 = vmatmul.mubr.bf16.gmra.mrb[0].mxu0 %v1840
      %v1898 = vpop.f32.mrb[0].mxu0
      %v1899 = vadd.f32 0.0, %v1898
      %v1900 = vpop.f32.mrb[0].mxu0
      %v1901 = vpop.f32.mrb[0].mxu0
      %v1902 = vadd.f32 0.0, %v1901
      %v1903 = vpop.f32.mrb[0].mxu0
      %1904 = vmatprep.mubr.bf16.mxu0 0
      %1905 = vmatmul.mubr.bf16.gmra.mrb[0].mxu0 %v1843
      %v1906 = vpop.f32.mrb[0].mxu0
      %v1907 = vadd.f32 0.0, %v1906
      %v1908 = vpop.f32.mrb[0].mxu0
      %v1909 = vpop.f32.mrb[0].mxu0
      %v1910 = vadd.f32 0.0, %v1909
      %v1911 = vpop.f32.mrb[0].mxu0
      %1912 = vdwg.mxu0
      %v1913 = vadd.f32 %v1696, %v1883
      %v1914 = vadd.f32 %v1697, %v1886
      %v1915 = vadd.f32 %v1698, %v1891
      %v1916 = vadd.f32 %v1699, %v1894
      %v1917 = vadd.f32 %v1700, %v1899
      %v1918 = vadd.f32 %v1701, %v1902
      %v1919 = vadd.f32 %v1702, %v1907
      %v1920 = vadd.f32 %v1703, %v1910
      %s1921 = scalar_lea.vmem %s1, 52
      %v1922 = vld [vmem:[%s1921] sm:$0xf]
      %1923 = vrot.lane.b32.xlu0 %v1829, 120
      %v1924 = vpop.permute.xlu0 %1923
      %1925 = vrot.lane.b32.xlu0 %v1830, 120
      %v1926 = vpop.permute.xlu0 %1925
      %1927 = vrot.lane.b32.xlu0 %v1831, 120
      %v1928 = vpop.permute.xlu0 %1927
      %1929 = vrot.lane.b32.xlu0 %v1832, 120
      %v1930 = vpop.permute.xlu0 %1929
      %v1932 = vsel %vm349, %v1924, 0
      %v1935 = vsel %vm349, %v1926, 0
      %v1938 = vsel %vm349, %v1928, 0
      %v1941 = vsel %vm349, %v1930, 0
      %v1944 = vsel %vm362, %v1922, 0
      %1946 = vmatprep.subr.bf16.mxu0 0
      %1947 = vmatpush1.bf16.msra.mxu0 %v1944
      %1948 = vmatprep.subr.bf16.mxu0 0
      %1949 = vmatpush1.bf16.msra.mxu0 0
      %1950 = vmatprep.subr.bf16.mxu0 0
      %1951 = vmatpush1.bf16.msra.mxu0 0
      %1952 = vmatprep.subr.bf16.mxu0 0
      %1953 = vmatpush1.bf16.msra.mxu0 0
      %1954 = vmatprep.subr.bf16.mxu0 0
      %1955 = vmatpush1.bf16.msra.mxu0 0
      %1956 = vmatprep.subr.bf16.mxu0 0
      %1957 = vmatpush1.bf16.msra.mxu0 0
      %1958 = vmatprep.subr.bf16.mxu0 0
      %1959 = vmatpush1.bf16.msra.mxu0 0
      %1960 = vmatprep.subr.bf16.mxu0 0
      %1961 = vmatpush1.bf16.msra.mxu0 0
      %1962 = vmatprep.subr.bf16.mxu0 0
      %1963 = vmatpush1.bf16.msra.mxu0 0
      %1964 = vmatprep.subr.bf16.mxu0 0
      %1965 = vmatpush1.bf16.msra.mxu0 0
      %1966 = vmatprep.subr.bf16.mxu0 0
      %1967 = vmatpush1.bf16.msra.mxu0 0
      %1968 = vmatprep.subr.bf16.mxu0 0
      %1969 = vmatpush1.bf16.msra.mxu0 0
      %1970 = vmatprep.subr.bf16.mxu0 0
      %1971 = vmatpush1.bf16.msra.mxu0 0
      %1972 = vmatprep.subr.bf16.mxu0 0
      %1973 = vmatpush1.bf16.msra.mxu0 0
      %1974 = vmatprep.subr.bf16.mxu0 0
      %1975 = vmatpush1.bf16.msra.mxu0 0
      %1976 = vmatprep.subr.bf16.mxu0 0
      %1977 = vmatpush1.bf16.msra.mxu0 0
      %1978 = vmatprep.mubr.bf16.mxu0 0
      %1979 = vmatmul.mubr.bf16.gmra.mrb[0].mxu0 %v1932
      %v1980 = vpop.f32.mrb[0].mxu0
      %v1981 = vadd.f32 0.0, %v1980
      %v1982 = vpop.f32.mrb[0].mxu0
      %v1983 = vpop.f32.mrb[0].mxu0
      %v1984 = vadd.f32 0.0, %v1983
      %v1985 = vpop.f32.mrb[0].mxu0
      %1986 = vmatprep.mubr.bf16.mxu0 0
      %1987 = vmatmul.mubr.bf16.gmra.mrb[0].mxu0 %v1935
      %v1988 = vpop.f32.mrb[0].mxu0
      %v1989 = vadd.f32 0.0, %v1988
      %v1990 = vpop.f32.mrb[0].mxu0
      %v1991 = vpop.f32.mrb[0].mxu0
      %v1992 = vadd.f32 0.0, %v1991
      %v1993 = vpop.f32.mrb[0].mxu0
      %1994 = vmatprep.mubr.bf16.mxu0 0
      %1995 = vmatmul.mubr.bf16.gmra.mrb[0].mxu0 %v1938
      %v1996 = vpop.f32.mrb[0].mxu0
      %v1997 = vadd.f32 0.0, %v1996
      %v1998 = vpop.f32.mrb[0].mxu0
      %v1999 = vpop.f32.mrb[0].mxu0
      %v2000 = vadd.f32 0.0, %v1999
      %v2001 = vpop.f32.mrb[0].mxu0
      %2002 = vmatprep.mubr.bf16.mxu0 0
      %2003 = vmatmul.mubr.bf16.gmra.mrb[0].mxu0 %v1941
      %v2004 = vpop.f32.mrb[0].mxu0
      %v2005 = vadd.f32 0.0, %v2004
      %v2006 = vpop.f32.mrb[0].mxu0
      %v2007 = vpop.f32.mrb[0].mxu0
      %v2008 = vadd.f32 0.0, %v2007
      %v2009 = vpop.f32.mrb[0].mxu0
      %2010 = vdwg.mxu0
      %v2011 = vadd.f32 %v1794, %v1981
      %v2012 = vadd.f32 %v1795, %v1984
      %v2013 = vadd.f32 %v1796, %v1989
      %v2014 = vadd.f32 %v1797, %v1992
      %v2015 = vadd.f32 %v1798, %v1997
      %v2016 = vadd.f32 %v1799, %v2000
      %v2017 = vadd.f32 %v1800, %v2005
      %v2018 = vadd.f32 %v1801, %v2008
      %s2019 = scalar_lea.vmem %s300, 80
      %v2020 = vld [vmem:[%s2019] sm:$0xf]
      %v2021 = vld [vmem:[%s2019 + $0x8] sm:$0xf]
      %v2022 = vld [vmem:[%s2019 + $0x10] sm:$0xf]
      %v2023 = vld [vmem:[%s2019 + $0x18] sm:$0xf]
      %v2024 = vld [vmem:[%s2019 + $0x20] sm:$0xf]
      %v2025 = vld [vmem:[%s2019 + $0x28] sm:$0xf]
      %v2026 = vld [vmem:[%s2019 + $0x30] sm:$0xf]
      %v2027 = vld [vmem:[%s2019 + $0x38] sm:$0xf]
      %s2028 = scalar_lea.vmem %s1, 56
      %v2029 = vld [vmem:[%s2028] sm:$0xf]
      %v2038 = vunpack.c.l.b16 %v2020
      %v2039 = vunpack.c.l.b16 %v2021
      %v2040 = vunpack.c.l.b16 %v2022
      %v2041 = vunpack.c.l.b16 %v2023
      %v2042 = vunpack.c.l.b16 %v2024
      %v2043 = vunpack.c.l.b16 %v2025
      %v2044 = vunpack.c.l.b16 %v2026
      %v2045 = vunpack.c.l.b16 %v2027
      %v2046 = vpack.c.b16 %v2039, %v2038
      %v2047 = vpack.c.b16 %v2041, %v2040
      %v2048 = vpack.c.b16 %v2043, %v2042
      %v2049 = vpack.c.b16 %v2045, %v2044
      %v2051 = vsel %vm349, %v2046, 0
      %v2054 = vsel %vm349, %v2047, 0
      %v2057 = vsel %vm349, %v2048, 0
      %v2060 = vsel %vm349, %v2049, 0
      %v2063 = vsel %vm362, %v2029, 0
      %2065 = vmatprep.subr.bf16.mxu0 0
      %2066 = vmatpush1.bf16.msra.mxu0 %v2063
      %2067 = vmatprep.subr.bf16.mxu0 0
      %2068 = vmatpush1.bf16.msra.mxu0 0
      %2069 = vmatprep.subr.bf16.mxu0 0
      %2070 = vmatpush1.bf16.msra.mxu0 0
      %2071 = vmatprep.subr.bf16.mxu0 0
      %2072 = vmatpush1.bf16.msra.mxu0 0
      %2073 = vmatprep.subr.bf16.mxu0 0
      %2074 = vmatpush1.bf16.msra.mxu0 0
      %2075 = vmatprep.subr.bf16.mxu0 0
      %2076 = vmatpush1.bf16.msra.mxu0 0
      %2077 = vmatprep.subr.bf16.mxu0 0
      %2078 = vmatpush1.bf16.msra.mxu0 0
      %2079 = vmatprep.subr.bf16.mxu0 0
      %2080 = vmatpush1.bf16.msra.mxu0 0
      %2081 = vmatprep.subr.bf16.mxu0 0
      %2082 = vmatpush1.bf16.msra.mxu0 0
      %2083 = vmatprep.subr.bf16.mxu0 0
      %2084 = vmatpush1.bf16.msra.mxu0 0
      %2085 = vmatprep.subr.bf16.mxu0 0
      %2086 = vmatpush1.bf16.msra.mxu0 0
      %2087 = vmatprep.subr.bf16.mxu0 0
      %2088 = vmatpush1.bf16.msra.mxu0 0
      %2089 = vmatprep.subr.bf16.mxu0 0
      %2090 = vmatpush1.bf16.msra.mxu0 0
      %2091 = vmatprep.subr.bf16.mxu0 0
      %2092 = vmatpush1.bf16.msra.mxu0 0
      %2093 = vmatprep.subr.bf16.mxu0 0
      %2094 = vmatpush1.bf16.msra.mxu0 0
      %2095 = vmatprep.subr.bf16.mxu0 0
      %2096 = vmatpush1.bf16.msra.mxu0 0
      %2097 = vmatprep.mubr.bf16.mxu0 0
      %2098 = vmatmul.mubr.bf16.gmra.mrb[0].mxu0 %v2051
      %v2099 = vpop.f32.mrb[0].mxu0
      %v2100 = vadd.f32 0.0, %v2099
      %v2101 = vpop.f32.mrb[0].mxu0
      %v2102 = vpop.f32.mrb[0].mxu0
      %v2103 = vadd.f32 0.0, %v2102
      %v2104 = vpop.f32.mrb[0].mxu0
      %2105 = vmatprep.mubr.bf16.mxu0 0
      %2106 = vmatmul.mubr.bf16.gmra.mrb[0].mxu0 %v2054
      %v2107 = vpop.f32.mrb[0].mxu0
      %v2108 = vadd.f32 0.0, %v2107
      %v2109 = vpop.f32.mrb[0].mxu0
      %v2110 = vpop.f32.mrb[0].mxu0
      %v2111 = vadd.f32 0.0, %v2110
      %v2112 = vpop.f32.mrb[0].mxu0
      %2113 = vmatprep.mubr.bf16.mxu0 0
      %2114 = vmatmul.mubr.bf16.gmra.mrb[0].mxu0 %v2057
      %v2115 = vpop.f32.mrb[0].mxu0
      %v2116 = vadd.f32 0.0, %v2115
      %v2117 = vpop.f32.mrb[0].mxu0
      %v2118 = vpop.f32.mrb[0].mxu0
      %v2119 = vadd.f32 0.0, %v2118
      %v2120 = vpop.f32.mrb[0].mxu0
      %2121 = vmatprep.mubr.bf16.mxu0 0
      %2122 = vmatmul.mubr.bf16.gmra.mrb[0].mxu0 %v2060
      %v2123 = vpop.f32.mrb[0].mxu0
      %v2124 = vadd.f32 0.0, %v2123
      %v2125 = vpop.f32.mrb[0].mxu0
      %v2126 = vpop.f32.mrb[0].mxu0
      %v2127 = vadd.f32 0.0, %v2126
      %v2128 = vpop.f32.mrb[0].mxu0
      %2129 = vdwg.mxu0
      %v2130 = vadd.f32 %v1913, %v2100
      %v2131 = vadd.f32 %v1914, %v2103
      %v2132 = vadd.f32 %v1915, %v2108
      %v2133 = vadd.f32 %v1916, %v2111
      %v2134 = vadd.f32 %v1917, %v2116
      %v2135 = vadd.f32 %v1918, %v2119
      %v2136 = vadd.f32 %v1919, %v2124
      %v2137 = vadd.f32 %v1920, %v2127
      %s2138 = scalar_lea.vmem %s1, 60
      %v2139 = vld [vmem:[%s2138] sm:$0xf]
      %2140 = vrot.lane.b32.xlu0 %v2046, 120
      %v2141 = vpop.permute.xlu0 %2140
      %2142 = vrot.lane.b32.xlu0 %v2047, 120
      %v2143 = vpop.permute.xlu0 %2142
      %2144 = vrot.lane.b32.xlu0 %v2048, 120
      %v2145 = vpop.permute.xlu0 %2144
      %2146 = vrot.lane.b32.xlu0 %v2049, 120
      %v2147 = vpop.permute.xlu0 %2146
      %v2149 = vsel %vm349, %v2141, 0
      %v2152 = vsel %vm349, %v2143, 0
      %v2155 = vsel %vm349, %v2145, 0
      %v2158 = vsel %vm349, %v2147, 0
      %v2161 = vsel %vm362, %v2139, 0
      %2163 = vmatprep.subr.bf16.mxu0 0
      %2164 = vmatpush1.bf16.msra.mxu0 %v2161
      %2165 = vmatprep.subr.bf16.mxu0 0
      %2166 = vmatpush1.bf16.msra.mxu0 0
      %2167 = vmatprep.subr.bf16.mxu0 0
      %2168 = vmatpush1.bf16.msra.mxu0 0
      %2169 = vmatprep.subr.bf16.mxu0 0
      %2170 = vmatpush1.bf16.msra.mxu0 0
      %2171 = vmatprep.subr.bf16.mxu0 0
      %2172 = vmatpush1.bf16.msra.mxu0 0
      %2173 = vmatprep.subr.bf16.mxu0 0
      %2174 = vmatpush1.bf16.msra.mxu0 0
      %2175 = vmatprep.subr.bf16.mxu0 0
      %2176 = vmatpush1.bf16.msra.mxu0 0
      %2177 = vmatprep.subr.bf16.mxu0 0
      %2178 = vmatpush1.bf16.msra.mxu0 0
      %2179 = vmatprep.subr.bf16.mxu0 0
      %2180 = vmatpush1.bf16.msra.mxu0 0
      %2181 = vmatprep.subr.bf16.mxu0 0
      %2182 = vmatpush1.bf16.msra.mxu0 0
      %2183 = vmatprep.subr.bf16.mxu0 0
      %2184 = vmatpush1.bf16.msra.mxu0 0
      %2185 = vmatprep.subr.bf16.mxu0 0
      %2186 = vmatpush1.bf16.msra.mxu0 0
      %2187 = vmatprep.subr.bf16.mxu0 0
      %2188 = vmatpush1.bf16.msra.mxu0 0
      %2189 = vmatprep.subr.bf16.mxu0 0
      %2190 = vmatpush1.bf16.msra.mxu0 0
      %2191 = vmatprep.subr.bf16.mxu0 0
      %2192 = vmatpush1.bf16.msra.mxu0 0
      %2193 = vmatprep.subr.bf16.mxu0 0
      %2194 = vmatpush1.bf16.msra.mxu0 0
      %2195 = vmatprep.mubr.bf16.mxu0 0
      %2196 = vmatmul.mubr.bf16.gmra.mrb[0].mxu0 %v2149
      %v2197 = vpop.f32.mrb[0].mxu0
      %v2198 = vadd.f32 0.0, %v2197
      %v2199 = vpop.f32.mrb[0].mxu0
      %v2200 = vpop.f32.mrb[0].mxu0
      %v2201 = vadd.f32 0.0, %v2200
      %v2202 = vpop.f32.mrb[0].mxu0
      %2203 = vmatprep.mubr.bf16.mxu0 0
      %2204 = vmatmul.mubr.bf16.gmra.mrb[0].mxu0 %v2152
      %v2205 = vpop.f32.mrb[0].mxu0
      %v2206 = vadd.f32 0.0, %v2205
      %v2207 = vpop.f32.mrb[0].mxu0
      %v2208 = vpop.f32.mrb[0].mxu0
      %v2209 = vadd.f32 0.0, %v2208
      %v2210 = vpop.f32.mrb[0].mxu0
      %2211 = vmatprep.mubr.bf16.mxu0 0
      %2212 = vmatmul.mubr.bf16.gmra.mrb[0].mxu0 %v2155
      %v2213 = vpop.f32.mrb[0].mxu0
      %v2214 = vadd.f32 0.0, %v2213
      %v2215 = vpop.f32.mrb[0].mxu0
      %v2216 = vpop.f32.mrb[0].mxu0
      %v2217 = vadd.f32 0.0, %v2216
      %v2218 = vpop.f32.mrb[0].mxu0
      %2219 = vmatprep.mubr.bf16.mxu0 0
      %2220 = vmatmul.mubr.bf16.gmra.mrb[0].mxu0 %v2158
      %v2221 = vpop.f32.mrb[0].mxu0
      %v2222 = vadd.f32 0.0, %v2221
      %v2223 = vpop.f32.mrb[0].mxu0
      %v2224 = vpop.f32.mrb[0].mxu0
      %v2225 = vadd.f32 0.0, %v2224
      %v2226 = vpop.f32.mrb[0].mxu0
      %2227 = vdwg.mxu0
      %v2228 = vadd.f32 %v2011, %v2198
      %v2229 = vadd.f32 %v2012, %v2201
      %v2230 = vadd.f32 %v2013, %v2206
      %v2231 = vadd.f32 %v2014, %v2209
      %v2232 = vadd.f32 %v2015, %v2214
      %v2233 = vadd.f32 %v2016, %v2217
      %v2234 = vadd.f32 %v2017, %v2222
      %v2235 = vadd.f32 %v2018, %v2225
      %v2236 = vld [vmem:[%s1802] sm:$0xf]
      %v2237 = vld [vmem:[%s1802 + $0x4] sm:$0x1]
      %v2238 = vld [vmem:[%s1802 + $0x8] sm:$0xf]
      %v2239 = vld [vmem:[%s1802 + $0xc] sm:$0x1]
      %v2240 = vld [vmem:[%s1802 + $0x10] sm:$0xf]
      %v2241 = vld [vmem:[%s1802 + $0x14] sm:$0x1]
      %v2242 = vld [vmem:[%s1802 + $0x18] sm:$0xf]
      %v2243 = vld [vmem:[%s1802 + $0x1c] sm:$0x1]
      %v2244 = vld [vmem:[%s1802 + $0x20] sm:$0xf]
      %v2245 = vld [vmem:[%s1802 + $0x24] sm:$0x1]
      %v2246 = vld [vmem:[%s1802 + $0x28] sm:$0xf]
      %v2247 = vld [vmem:[%s1802 + $0x2c] sm:$0x1]
      %v2248 = vld [vmem:[%s1802 + $0x30] sm:$0xf]
      %v2249 = vld [vmem:[%s1802 + $0x34] sm:$0x1]
      %v2250 = vld [vmem:[%s1802 + $0x38] sm:$0xf]
      %v2251 = vld [vmem:[%s1802 + $0x3c] sm:$0x1]
      %v2253 = vshrl.u32 %v2236, 16
      %v2255 = vrot.slane %v2253, 4
      %v2256 = vshll.u32 %v2236, 16
      %v2258 = vrot.slane %v2256, 5
      %v2259 = vor.u32 %v2255, %v2258
      %v2260 = vrot.slane %v2259, 4
      %v2262 = vshll.u32 %v2237, 16
      %v2264 = vrot.slane %v2262, 5
      %v2265 = vsel %vm727, %v2260, %v2264
      %v2267 = vshrl.u32 %v2238, 16
      %v2269 = vrot.slane %v2267, 4
      %v2270 = vshll.u32 %v2238, 16
      %v2272 = vrot.slane %v2270, 5
      %v2273 = vor.u32 %v2269, %v2272
      %v2274 = vrot.slane %v2273, 4
      %v2276 = vshll.u32 %v2239, 16
      %v2278 = vrot.slane %v2276, 5
      %v2279 = vsel %vm727, %v2274, %v2278
      %v2281 = vshrl.u32 %v2240, 16
      %v2283 = vrot.slane %v2281, 4
      %v2284 = vshll.u32 %v2240, 16
      %v2286 = vrot.slane %v2284, 5
      %v2287 = vor.u32 %v2283, %v2286
      %v2288 = vrot.slane %v2287, 4
      %v2290 = vshll.u32 %v2241, 16
      %v2292 = vrot.slane %v2290, 5
      %v2293 = vsel %vm727, %v2288, %v2292
      %v2295 = vshrl.u32 %v2242, 16
      %v2297 = vrot.slane %v2295, 4
      %v2298 = vshll.u32 %v2242, 16
      %v2300 = vrot.slane %v2298, 5
      %v2301 = vor.u32 %v2297, %v2300
      %v2302 = vrot.slane %v2301, 4
      %v2304 = vshll.u32 %v2243, 16
      %v2306 = vrot.slane %v2304, 5
      %v2307 = vsel %vm727, %v2302, %v2306
      %v2309 = vshrl.u32 %v2244, 16
      %v2311 = vrot.slane %v2309, 4
      %v2312 = vshll.u32 %v2244, 16
      %v2314 = vrot.slane %v2312, 5
      %v2315 = vor.u32 %v2311, %v2314
      %v2316 = vrot.slane %v2315, 4
      %v2318 = vshll.u32 %v2245, 16
      %v2320 = vrot.slane %v2318, 5
      %v2321 = vsel %vm727, %v2316, %v2320
      %v2323 = vshrl.u32 %v2246, 16
      %v2325 = vrot.slane %v2323, 4
      %v2326 = vshll.u32 %v2246, 16
      %v2328 = vrot.slane %v2326, 5
      %v2329 = vor.u32 %v2325, %v2328
      %v2330 = vrot.slane %v2329, 4
      %v2332 = vshll.u32 %v2247, 16
      %v2334 = vrot.slane %v2332, 5
      %v2335 = vsel %vm727, %v2330, %v2334
      %v2337 = vshrl.u32 %v2248, 16
      %v2339 = vrot.slane %v2337, 4
      %v2340 = vshll.u32 %v2248, 16
      %v2342 = vrot.slane %v2340, 5
      %v2343 = vor.u32 %v2339, %v2342
      %v2344 = vrot.slane %v2343, 4
      %v2346 = vshll.u32 %v2249, 16
      %v2348 = vrot.slane %v2346, 5
      %v2349 = vsel %vm727, %v2344, %v2348
      %v2351 = vshrl.u32 %v2250, 16
      %v2353 = vrot.slane %v2351, 4
      %v2354 = vshll.u32 %v2250, 16
      %v2356 = vrot.slane %v2354, 5
      %v2357 = vor.u32 %v2353, %v2356
      %v2358 = vrot.slane %v2357, 4
      %v2360 = vshll.u32 %v2251, 16
      %v2362 = vrot.slane %v2360, 5
      %v2363 = vsel %vm727, %v2358, %v2362
      %s2364 = scalar_lea.vmem %s1, 64
      %v2365 = vld [vmem:[%s2364] sm:$0xf]
      %v2366 = vunpack.c.l.b16 %v2265
      %v2367 = vunpack.c.l.b16 %v2279
      %v2368 = vunpack.c.l.b16 %v2293
      %v2369 = vunpack.c.l.b16 %v2307
      %v2370 = vunpack.c.l.b16 %v2321
      %v2371 = vunpack.c.l.b16 %v2335
      %v2372 = vunpack.c.l.b16 %v2349
      %v2373 = vunpack.c.l.b16 %v2363
      %v2374 = vpack.c.b16 %v2367, %v2366
      %v2375 = vpack.c.b16 %v2369, %v2368
      %v2376 = vpack.c.b16 %v2371, %v2370
      %v2377 = vpack.c.b16 %v2373, %v2372
      %v2379 = vsel %vm349, %v2374, 0
      %v2382 = vsel %vm349, %v2375, 0
      %v2385 = vsel %vm349, %v2376, 0
      %v2388 = vsel %vm349, %v2377, 0
      %v2391 = vsel %vm362, %v2365, 0
      %2393 = vmatprep.subr.bf16.mxu0 0
      %2394 = vmatpush1.bf16.msra.mxu0 %v2391
      %2395 = vmatprep.subr.bf16.mxu0 0
      %2396 = vmatpush1.bf16.msra.mxu0 0
      %2397 = vmatprep.subr.bf16.mxu0 0
      %2398 = vmatpush1.bf16.msra.mxu0 0
      %2399 = vmatprep.subr.bf16.mxu0 0
      %2400 = vmatpush1.bf16.msra.mxu0 0
      %2401 = vmatprep.subr.bf16.mxu0 0
      %2402 = vmatpush1.bf16.msra.mxu0 0
      %2403 = vmatprep.subr.bf16.mxu0 0
      %2404 = vmatpush1.bf16.msra.mxu0 0
      %2405 = vmatprep.subr.bf16.mxu0 0
      %2406 = vmatpush1.bf16.msra.mxu0 0
      %2407 = vmatprep.subr.bf16.mxu0 0
      %2408 = vmatpush1.bf16.msra.mxu0 0
      %2409 = vmatprep.subr.bf16.mxu0 0
      %2410 = vmatpush1.bf16.msra.mxu0 0
      %2411 = vmatprep.subr.bf16.mxu0 0
      %2412 = vmatpush1.bf16.msra.mxu0 0
      %2413 = vmatprep.subr.bf16.mxu0 0
      %2414 = vmatpush1.bf16.msra.mxu0 0
      %2415 = vmatprep.subr.bf16.mxu0 0
      %2416 = vmatpush1.bf16.msra.mxu0 0
      %2417 = vmatprep.subr.bf16.mxu0 0
      %2418 = vmatpush1.bf16.msra.mxu0 0
      %2419 = vmatprep.subr.bf16.mxu0 0
      %2420 = vmatpush1.bf16.msra.mxu0 0
      %2421 = vmatprep.subr.bf16.mxu0 0
      %2422 = vmatpush1.bf16.msra.mxu0 0
      %2423 = vmatprep.subr.bf16.mxu0 0
      %2424 = vmatpush1.bf16.msra.mxu0 0
      %2425 = vmatprep.mubr.bf16.mxu0 0
      %2426 = vmatmul.mubr.bf16.gmra.mrb[0].mxu0 %v2379
      %v2427 = vpop.f32.mrb[0].mxu0
      %v2428 = vadd.f32 0.0, %v2427
      %v2429 = vpop.f32.mrb[0].mxu0
      %v2430 = vpop.f32.mrb[0].mxu0
      %v2431 = vadd.f32 0.0, %v2430
      %v2432 = vpop.f32.mrb[0].mxu0
      %2433 = vmatprep.mubr.bf16.mxu0 0
      %2434 = vmatmul.mubr.bf16.gmra.mrb[0].mxu0 %v2382
      %v2435 = vpop.f32.mrb[0].mxu0
      %v2436 = vadd.f32 0.0, %v2435
      %v2437 = vpop.f32.mrb[0].mxu0
      %v2438 = vpop.f32.mrb[0].mxu0
      %v2439 = vadd.f32 0.0, %v2438
      %v2440 = vpop.f32.mrb[0].mxu0
      %2441 = vmatprep.mubr.bf16.mxu0 0
      %2442 = vmatmul.mubr.bf16.gmra.mrb[0].mxu0 %v2385
      %v2443 = vpop.f32.mrb[0].mxu0
      %v2444 = vadd.f32 0.0, %v2443
      %v2445 = vpop.f32.mrb[0].mxu0
      %v2446 = vpop.f32.mrb[0].mxu0
      %v2447 = vadd.f32 0.0, %v2446
      %v2448 = vpop.f32.mrb[0].mxu0
      %2449 = vmatprep.mubr.bf16.mxu0 0
      %2450 = vmatmul.mubr.bf16.gmra.mrb[0].mxu0 %v2388
      %v2451 = vpop.f32.mrb[0].mxu0
      %v2452 = vadd.f32 0.0, %v2451
      %v2453 = vpop.f32.mrb[0].mxu0
      %v2454 = vpop.f32.mrb[0].mxu0
      %v2455 = vadd.f32 0.0, %v2454
      %v2456 = vpop.f32.mrb[0].mxu0
      %2457 = vdwg.mxu0
      %v2458 = vadd.f32 %v2130, %v2428
      %v2459 = vadd.f32 %v2131, %v2431
      %v2460 = vadd.f32 %v2132, %v2436
      %v2461 = vadd.f32 %v2133, %v2439
      %v2462 = vadd.f32 %v2134, %v2444
      %v2463 = vadd.f32 %v2135, %v2447
      %v2464 = vadd.f32 %v2136, %v2452
      %v2465 = vadd.f32 %v2137, %v2455
      %s2466 = scalar_lea.vmem %s1, 68
      %v2467 = vld [vmem:[%s2466] sm:$0xf]
      %2468 = vrot.lane.b32.xlu0 %v2374, 120
      %v2469 = vpop.permute.xlu0 %2468
      %2470 = vrot.lane.b32.xlu0 %v2375, 120
      %v2471 = vpop.permute.xlu0 %2470
      %2472 = vrot.lane.b32.xlu0 %v2376, 120
      %v2473 = vpop.permute.xlu0 %2472
      %2474 = vrot.lane.b32.xlu0 %v2377, 120
      %v2475 = vpop.permute.xlu0 %2474
      %v2477 = vsel %vm349, %v2469, 0
      %v2480 = vsel %vm349, %v2471, 0
      %v2483 = vsel %vm349, %v2473, 0
      %v2486 = vsel %vm349, %v2475, 0
      %v2489 = vsel %vm362, %v2467, 0
      %2491 = vmatprep.subr.bf16.mxu0 0
      %2492 = vmatpush1.bf16.msra.mxu0 %v2489
      %2493 = vmatprep.subr.bf16.mxu0 0
      %2494 = vmatpush1.bf16.msra.mxu0 0
      %2495 = vmatprep.subr.bf16.mxu0 0
      %2496 = vmatpush1.bf16.msra.mxu0 0
      %2497 = vmatprep.subr.bf16.mxu0 0
      %2498 = vmatpush1.bf16.msra.mxu0 0
      %2499 = vmatprep.subr.bf16.mxu0 0
      %2500 = vmatpush1.bf16.msra.mxu0 0
      %2501 = vmatprep.subr.bf16.mxu0 0
      %2502 = vmatpush1.bf16.msra.mxu0 0
      %2503 = vmatprep.subr.bf16.mxu0 0
      %2504 = vmatpush1.bf16.msra.mxu0 0
      %2505 = vmatprep.subr.bf16.mxu0 0
      %2506 = vmatpush1.bf16.msra.mxu0 0
      %2507 = vmatprep.subr.bf16.mxu0 0
      %2508 = vmatpush1.bf16.msra.mxu0 0
      %2509 = vmatprep.subr.bf16.mxu0 0
      %2510 = vmatpush1.bf16.msra.mxu0 0
      %2511 = vmatprep.subr.bf16.mxu0 0
      %2512 = vmatpush1.bf16.msra.mxu0 0
      %2513 = vmatprep.subr.bf16.mxu0 0
      %2514 = vmatpush1.bf16.msra.mxu0 0
      %2515 = vmatprep.subr.bf16.mxu0 0
      %2516 = vmatpush1.bf16.msra.mxu0 0
      %2517 = vmatprep.subr.bf16.mxu0 0
      %2518 = vmatpush1.bf16.msra.mxu0 0
      %2519 = vmatprep.subr.bf16.mxu0 0
      %2520 = vmatpush1.bf16.msra.mxu0 0
      %2521 = vmatprep.subr.bf16.mxu0 0
      %2522 = vmatpush1.bf16.msra.mxu0 0
      %2523 = vmatprep.mubr.bf16.mxu0 0
      %2524 = vmatmul.mubr.bf16.gmra.mrb[0].mxu0 %v2477
      %v2525 = vpop.f32.mrb[0].mxu0
      %v2526 = vadd.f32 0.0, %v2525
      %v2527 = vpop.f32.mrb[0].mxu0
      %v2528 = vpop.f32.mrb[0].mxu0
      %v2529 = vadd.f32 0.0, %v2528
      %v2530 = vpop.f32.mrb[0].mxu0
      %2531 = vmatprep.mubr.bf16.mxu0 0
      %2532 = vmatmul.mubr.bf16.gmra.mrb[0].mxu0 %v2480
      %v2533 = vpop.f32.mrb[0].mxu0
      %v2534 = vadd.f32 0.0, %v2533
      %v2535 = vpop.f32.mrb[0].mxu0
      %v2536 = vpop.f32.mrb[0].mxu0
      %v2537 = vadd.f32 0.0, %v2536
      %v2538 = vpop.f32.mrb[0].mxu0
      %2539 = vmatprep.mubr.bf16.mxu0 0
      %2540 = vmatmul.mubr.bf16.gmra.mrb[0].mxu0 %v2483
      %v2541 = vpop.f32.mrb[0].mxu0
      %v2542 = vadd.f32 0.0, %v2541
      %v2543 = vpop.f32.mrb[0].mxu0
      %v2544 = vpop.f32.mrb[0].mxu0
      %v2545 = vadd.f32 0.0, %v2544
      %v2546 = vpop.f32.mrb[0].mxu0
      %2547 = vmatprep.mubr.bf16.mxu0 0
      %2548 = vmatmul.mubr.bf16.gmra.mrb[0].mxu0 %v2486
      %v2549 = vpop.f32.mrb[0].mxu0
      %v2550 = vadd.f32 0.0, %v2549
      %v2551 = vpop.f32.mrb[0].mxu0
      %v2552 = vpop.f32.mrb[0].mxu0
      %v2553 = vadd.f32 0.0, %v2552
      %v2554 = vpop.f32.mrb[0].mxu0
      %2555 = vdwg.mxu0
      %v2556 = vadd.f32 %v2228, %v2526
      %v2557 = vadd.f32 %v2229, %v2529
      %v2558 = vadd.f32 %v2230, %v2534
      %v2559 = vadd.f32 %v2231, %v2537
      %v2560 = vadd.f32 %v2232, %v2542
      %v2561 = vadd.f32 %v2233, %v2545
      %v2562 = vadd.f32 %v2234, %v2550
      %v2563 = vadd.f32 %v2235, %v2553
      %2572 = vrot.lane.b32.xlu0 %v2556, 8
      %v2573 = vpop.permute.xlu0 %2572
      %2574 = vrot.lane.b32.xlu0 %v2557, 8
      %v2575 = vpop.permute.xlu0 %2574
      %2576 = vrot.lane.b32.xlu0 %v2558, 8
      %v2577 = vpop.permute.xlu0 %2576
      %2578 = vrot.lane.b32.xlu0 %v2559, 8
      %v2579 = vpop.permute.xlu0 %2578
      %2580 = vrot.lane.b32.xlu0 %v2560, 8
      %v2581 = vpop.permute.xlu0 %2580
      %2582 = vrot.lane.b32.xlu0 %v2561, 8
      %v2583 = vpop.permute.xlu0 %2582
      %2584 = vrot.lane.b32.xlu0 %v2562, 8
      %v2585 = vpop.permute.xlu0 %2584
      %2586 = vrot.lane.b32.xlu0 %v2563, 8
      %v2587 = vpop.permute.xlu0 %2586
      %v2596 = vsel %vm349, %v2458, %v2573
      %v2597 = vsel %vm349, %v2459, %v2575
      %v2598 = vsel %vm349, %v2460, %v2577
      %v2599 = vsel %vm349, %v2461, %v2579
      %v2600 = vsel %vm349, %v2462, %v2581
      %v2601 = vsel %vm349, %v2463, %v2583
      %v2602 = vsel %vm349, %v2464, %v2585
      %v2603 = vsel %vm349, %v2465, %v2587
      %v2604 = vld [vmem:[%s2] sm:$0x1]
      %v2606 = vlaneseq
      %v2607 = vshrl.u32 %v2606, 7
      %v2608 = vsub.s32 0, %v2607
      %v2609 = vrot.slane %v2604, %v2608
      %v2611 = vmul.f32 %v2596, %v2609
      %v2612 = vmul.f32 %v2597, %v2609
      %v2613 = vmul.f32 %v2598, %v2609
      %v2614 = vmul.f32 %v2599, %v2609
      %v2615 = vmul.f32 %v2600, %v2609
      %v2616 = vmul.f32 %v2601, %v2609
      %v2617 = vmul.f32 %v2602, %v2609
      %v2618 = vmul.f32 %v2603, %v2609
      %v2619 = vld [vmem:[%s3] sm:$0x1]
      %v2621 = vlaneseq
      %v2622 = vshrl.u32 %v2621, 7
      %v2623 = vsub.s32 0, %v2622
      %v2624 = vrot.slane %v2619, %v2623
      %v2626 = vadd.f32 %v2611, %v2624
      %v2627 = vadd.f32 %v2612, %v2624
      %v2628 = vadd.f32 %v2613, %v2624
      %v2629 = vadd.f32 %v2614, %v2624
      %v2630 = vadd.f32 %v2615, %v2624
      %v2631 = vadd.f32 %v2616, %v2624
      %v2632 = vadd.f32 %v2617, %v2624
      %v2633 = vadd.f32 %v2618, %v2624
      %v2634 = vmax.f32 %v2626, 0.0
      %v2635 = vmax.f32 %v2627, 0.0
      %v2636 = vmax.f32 %v2628, 0.0
      %v2637 = vmax.f32 %v2629, 0.0
      %v2638 = vmax.f32 %v2630, 0.0
      %v2639 = vmax.f32 %v2631, 0.0
      %v2640 = vmax.f32 %v2632, 0.0
      %v2641 = vmax.f32 %v2633, 0.0
      %vm2642 = vcmask 130048
      %v2643 = vsel %vm2642, %v2634, 0.0
      %v2644 = vsel %vm2642, %v2635, 0.0
      %v2645 = vadd.f32 %v2643, %v2644
      %v2646 = vsel %vm2642, %v2636, 0.0
      %v2647 = vadd.f32 %v2645, %v2646
      %v2648 = vsel %vm2642, %v2637, 0.0
      %v2649 = vadd.f32 %v2647, %v2648
      %v2650 = vsel %vm2642, %v2638, 0.0
      %v2651 = vadd.f32 %v2649, %v2650
      %v2652 = vsel %vm2642, %v2639, 0.0
      %v2653 = vadd.f32 %v2651, %v2652
      %v2654 = vsel %vm2642, %v2640, 0.0
      %v2655 = vadd.f32 %v2653, %v2654
      %v2656 = vsel %vm2642, %v2641, 0.0
      %v2657 = vadd.f32 %v2655, %v2656
      %v2658 = vrot.slane %v2657, 4
      %v2659 = vadd.f32 %v2657, %v2658
      %v2660 = vrot.slane %v2659, 2
      %v2661 = vadd.f32 %v2659, %v2660
      %v2662 = vrot.slane %v2661, 1
      %v2663 = vadd.f32 %v2661, %v2662
      %v2664 = vmul.f32 %v2663, 0.015625
      %v2665 = vld [vmem:[%s4] sm:$0xff]
      %v2666 = vld [vmem:[%s4 + $0x8] sm:$0xff]
      %v2667 = vld [vmem:[%s5] sm:$0x1]
      %v2669 = vsel %vm2642, %v2664, 0
      %2671 = vmatprep.subr.mxu0 0.0
      %2672 = vmatpush1.msra.mxu0 %v2665
      %2673 = vmatprep.subr.mxu0 0.0
      %2674 = vmatpush1.msra.mxu0 %v2666
      %2675 = vmatprep.subr.mxu0 0.0
      %2676 = vmatpush1.msra.mxu0 0.0
      %2677 = vmatprep.subr.mxu0 0.0
      %2678 = vmatpush1.msra.mxu0 0.0
      %2679 = vmatprep.subr.mxu0 0.0
      %2680 = vmatpush1.msra.mxu0 0.0
      %2681 = vmatprep.subr.mxu0 0.0
      %2682 = vmatpush1.msra.mxu0 0.0
      %2683 = vmatprep.subr.mxu0 0.0
      %2684 = vmatpush1.msra.mxu0 0.0
      %2685 = vmatprep.subr.mxu0 0.0
      %2686 = vmatpush1.msra.mxu0 0.0
      %2687 = vmatprep.subr.mxu0 0.0
      %2688 = vmatpush1.msra.mxu0 0.0
      %2689 = vmatprep.subr.mxu0 0.0
      %2690 = vmatpush1.msra.mxu0 0.0
      %2691 = vmatprep.subr.mxu0 0.0
      %2692 = vmatpush1.msra.mxu0 0.0
      %2693 = vmatprep.subr.mxu0 0.0
      %2694 = vmatpush1.msra.mxu0 0.0
      %2695 = vmatprep.subr.mxu0 0.0
      %2696 = vmatpush1.msra.mxu0 0.0
      %2697 = vmatprep.subr.mxu0 0.0
      %2698 = vmatpush1.msra.mxu0 0.0
      %2699 = vmatprep.subr.mxu0 0.0
      %2700 = vmatpush1.msra.mxu0 0.0
      %2701 = vmatprep.subr.mxu0 0.0
      %2702 = vmatpush1.msra.mxu0 0.0
      %2703 = vmatprep.subr.mxu0 0.0
      %2704 = vmatpush1.msra.mxu0 0.0
      %2705 = vmatprep.subr.mxu0 0.0
      %2706 = vmatpush1.msra.mxu0 0.0
      %2707 = vmatprep.subr.mxu0 0.0
      %2708 = vmatpush1.msra.mxu0 0.0
      %2709 = vmatprep.subr.mxu0 0.0
      %2710 = vmatpush1.msra.mxu0 0.0
      %2711 = vmatprep.subr.mxu0 0.0
      %2712 = vmatpush1.msra.mxu0 0.0
      %2713 = vmatprep.subr.mxu0 0.0
      %2714 = vmatpush1.msra.mxu0 0.0
      %2715 = vmatprep.subr.mxu0 0.0
      %2716 = vmatpush1.msra.mxu0 0.0
      %2717 = vmatprep.subr.mxu0 0.0
      %2718 = vmatpush1.msra.mxu0 0.0
      %2719 = vmatprep.subr.mxu0 0.0
      %2720 = vmatpush1.msra.mxu0 0.0
      %2721 = vmatprep.subr.mxu0 0.0
      %2722 = vmatpush1.msra.mxu0 0.0
      %2723 = vmatprep.subr.mxu0 0.0
      %2724 = vmatpush1.msra.mxu0 0.0
      %2725 = vmatprep.subr.mxu0 0.0
      %2726 = vmatpush1.msra.mxu0 0.0
      %2727 = vmatprep.subr.mxu0 0.0
      %2728 = vmatpush1.msra.mxu0 0.0
      %2729 = vmatprep.subr.mxu0 0.0
      %2730 = vmatpush1.msra.mxu0 0.0
      %2731 = vmatprep.subr.mxu0 0.0
      %2732 = vmatpush1.msra.mxu0 0.0
      %2733 = vmatprep.subr.mxu0 0.0
      %2734 = vmatpush1.msra.mxu0 0.0
      %2735 = vmatprep.mubr.f32.mxu0 0.0
      %2736 = vmatmul.mubr.f32.gmra.mrb[0].mxu0 %v2669
      %v2737 = vpop.f32.mrb[0].mxu0
      %v2738 = vadd.f32 %v2667, %v2737
      %v2739 = vpop.f32.mrb[0].mxu0
      %2740 = vdwg.mxu0
      %v2741 = vmax.f32 %v2738, 0.0
      %v2742 = vld [vmem:[%s6] sm:$0x3]
      %v2743 = vld [vmem:[%s7] sm:$0x1]
      %vm2744 = vcmask 15360
      %v2746 = vsel %vm2744, %v2741, 0
      %vm2748 = vcmask 1041408
      %v2750 = vsel %vm2748, %v2742, 0
      %2752 = vmatprep.subr.mxu0 0.0
      %2753 = vmatpush1.msra.mxu0 %v2750
      %2754 = vmatprep.subr.mxu0 0.0
      %2755 = vmatpush1.msra.mxu0 0.0
      %2756 = vmatprep.subr.mxu0 0.0
      %2757 = vmatpush1.msra.mxu0 0.0
      %2758 = vmatprep.subr.mxu0 0.0
      %2759 = vmatpush1.msra.mxu0 0.0
      %2760 = vmatprep.subr.mxu0 0.0
      %2761 = vmatpush1.msra.mxu0 0.0
      %2762 = vmatprep.subr.mxu0 0.0
      %2763 = vmatpush1.msra.mxu0 0.0
      %2764 = vmatprep.subr.mxu0 0.0
      %2765 = vmatpush1.msra.mxu0 0.0
      %2766 = vmatprep.subr.mxu0 0.0
      %2767 = vmatpush1.msra.mxu0 0.0
      %2768 = vmatprep.subr.mxu0 0.0
      %2769 = vmatpush1.msra.mxu0 0.0
      %2770 = vmatprep.subr.mxu0 0.0
      %2771 = vmatpush1.msra.mxu0 0.0
      %2772 = vmatprep.subr.mxu0 0.0
      %2773 = vmatpush1.msra.mxu0 0.0
      %2774 = vmatprep.subr.mxu0 0.0
      %2775 = vmatpush1.msra.mxu0 0.0
      %2776 = vmatprep.subr.mxu0 0.0
      %2777 = vmatpush1.msra.mxu0 0.0
      %2778 = vmatprep.subr.mxu0 0.0
      %2779 = vmatpush1.msra.mxu0 0.0
      %2780 = vmatprep.subr.mxu0 0.0
      %2781 = vmatpush1.msra.mxu0 0.0
      %2782 = vmatprep.subr.mxu0 0.0
      %2783 = vmatpush1.msra.mxu0 0.0
      %2784 = vmatprep.subr.mxu0 0.0
      %2785 = vmatpush1.msra.mxu0 0.0
      %2786 = vmatprep.subr.mxu0 0.0
      %2787 = vmatpush1.msra.mxu0 0.0
      %2788 = vmatprep.subr.mxu0 0.0
      %2789 = vmatpush1.msra.mxu0 0.0
      %2790 = vmatprep.subr.mxu0 0.0
      %2791 = vmatpush1.msra.mxu0 0.0
      %2792 = vmatprep.subr.mxu0 0.0
      %2793 = vmatpush1.msra.mxu0 0.0
      %2794 = vmatprep.subr.mxu0 0.0
      %2795 = vmatpush1.msra.mxu0 0.0
      %2796 = vmatprep.subr.mxu0 0.0
      %2797 = vmatpush1.msra.mxu0 0.0
      %2798 = vmatprep.subr.mxu0 0.0
      %2799 = vmatpush1.msra.mxu0 0.0
      %2800 = vmatprep.subr.mxu0 0.0
      %2801 = vmatpush1.msra.mxu0 0.0
      %2802 = vmatprep.subr.mxu0 0.0
      %2803 = vmatpush1.msra.mxu0 0.0
      %2804 = vmatprep.subr.mxu0 0.0
      %2805 = vmatpush1.msra.mxu0 0.0
      %2806 = vmatprep.subr.mxu0 0.0
      %2807 = vmatpush1.msra.mxu0 0.0
      %2808 = vmatprep.subr.mxu0 0.0
      %2809 = vmatpush1.msra.mxu0 0.0
      %2810 = vmatprep.subr.mxu0 0.0
      %2811 = vmatpush1.msra.mxu0 0.0
      %2812 = vmatprep.subr.mxu0 0.0
      %2813 = vmatpush1.msra.mxu0 0.0
      %2814 = vmatprep.subr.mxu0 0.0
      %2815 = vmatpush1.msra.mxu0 0.0
      %2816 = vmatprep.mubr.f32.mxu0 0.0
      %2817 = vmatmul.mubr.f32.gmra.mrb[0].mxu0 %v2746
      %v2818 = vpop.f32.mrb[0].mxu0
      %v2819 = vadd.f32 %v2743, %v2818
      %v2820 = vpop.f32.mrb[0].mxu0
      %2821 = vdwg.mxu0
      %v2822 = vsub.f32 0.0, %v2819
      %v2823 = vmul.f32 %v2822, 1.442695
      %v2824 = vpow.pop %v2823
      %v2825 = vadd.f32 %v2824, 1.0
      %v2826 = vrcp.pop %v2825
      %v2827 = vlaneseq
      %v2828 = vshrl.u32 %v2827, 7
      %v2829 = vsub.s32 0, %v2828
      %v2830 = vrot.slane %v2826, %v2829
      %v2831 = vmul.f32 %v2634, %v2830
      %v2832 = vmul.f32 %v2635, %v2830
      %v2833 = vmul.f32 %v2636, %v2830
      %v2834 = vmul.f32 %v2637, %v2830
      %v2835 = vmul.f32 %v2638, %v2830
      %v2836 = vmul.f32 %v2639, %v2830
      %v2837 = vmul.f32 %v2640, %v2830
      %v2838 = vmul.f32 %v2641, %v2830
      %v2839 = vpack.c.bf16 %v2832, %v2831
      %v2840 = vpack.c.bf16 %v2834, %v2833
      %v2841 = vpack.c.bf16 %v2836, %v2835
      %v2842 = vpack.c.bf16 %v2838, %v2837
      %v2847 = vunpack.c.l.b16 %v2839
      %v2848 = vunpack.c.h.b16 %v2839
      %v2849 = vunpack.c.l.b16 %v2840
      %v2850 = vunpack.c.h.b16 %v2840
      %v2851 = vunpack.c.l.b16 %v2841
      %v2852 = vunpack.c.h.b16 %v2841
      %v2853 = vunpack.c.l.b16 %v2842
      %v2854 = vunpack.c.h.b16 %v2842
      %v2855 = vpack.c.b16 %v2847, %v2847
      %v2856 = vpack.c.b16 %v2848, %v2848
      %v2857 = vpack.c.b16 %v2849, %v2849
      %v2858 = vpack.c.b16 %v2850, %v2850
      %v2859 = vpack.c.b16 %v2851, %v2851
      %v2860 = vpack.c.b16 %v2852, %v2852
      %v2861 = vpack.c.b16 %v2853, %v2853
      %v2862 = vpack.c.b16 %v2854, %v2854
      %vm2871 = vcmask 125952
      %2872 = vst.msk [vmem:[%s305] sm:$0xf] %vm2871, %v2855
      %2873 = vst.msk [vmem:[%s305 + $0x4] sm:$0xf] %vm2871, %v2856
      %2874 = vst.msk [vmem:[%s305 + $0x8] sm:$0xf] %vm2871, %v2857
      %2875 = vst.msk [vmem:[%s305 + $0xc] sm:$0xf] %vm2871, %v2858
      %2876 = vst.msk [vmem:[%s305 + $0x10] sm:$0xf] %vm2871, %v2859
      %2877 = vst.msk [vmem:[%s305 + $0x14] sm:$0xf] %vm2871, %v2860
      %2878 = vst.msk [vmem:[%s305 + $0x18] sm:$0xf] %vm2871, %v2861
      %2879 = vst.msk [vmem:[%s305 + $0x1c] sm:$0xf] %vm2871, %v2862
      %p2880 = scmp.lt.s32.totalorder %s19, 1
      %s2881 = scalar_select %p2880, %s19, 1
      %s2882 = smul.addr %s2881, 8
      %s2883 = smul.addr %s2882, 4
      %s2884 = scalar_lea.vmem %s8, %s2883
      // Predicated region
      $region53: #{_lambda_.7} parent=51 // pred_check
        %p2885 = pneg %p210
      $region54: #{_lambda_.7} parent=51 // pred_check_branch
        %2887 = sbr.rel (%p2885) target = $region56
      $region55: #{_lambda_.7} parent=51 // pred_region
        _
      $region56: #{_lambda_.7} parent=51 // pred_fallthru
        _
    $region52: #{_lambda_.7} parent=5 // pred_fallthru
      _
    %p2888 = scmp.le.s32.totalorder 2, %s14
    // Predicated region
    $region57: #{_lambda_.7} parent=5 // pred_check
      %p2889 = pneg %p2888
    $region58: #{_lambda_.7} parent=5 // pred_check_branch
      %2891 = sbr.rel (%p2889) target = $region60
    $region59: #{_lambda_.7} parent=5 // pred_region
      %s2892 = ssub.s32 %s14, 2
      // Predicated region
      $region61: #{_lambda_.7} parent=59 // pred_check
        %p2893 = pneg %p216
      $region62: #{_lambda_.7} parent=59 // pred_check_branch
        %2895 = sbr.rel (%p2893) target = $region64
      $region63: #{_lambda_.7} parent=59 // pred_region
        %p2896 = scmp.lt.s32.totalorder %s20, 1
        %s2897 = scalar_select %p2896, %s20, 1
        %s2898 = smul.addr %s2897, 8
        %s2899 = smul.addr %s2898, 4
        %s2900 = scalar_lea.vmem %s8, %s2899
      $region64: #{_lambda_.7} parent=59 // pred_fallthru
        _
    $region60: #{_lambda_.7} parent=5 // pred_fallthru
      _
  $region6: #{_lambda_.7} parent=0 // loop_footer
    %s18 = sadd.s32 1, %s14
  $region7: #{_lambda_.7} parent=0 // loop_footer_branch
    %13 = sbr.rel target = $region3
  $region8: #{_lambda_.7} parent=0 // loop_exit
    _

// kernel: _lambda_.10
$region0: #{_lambda_.10}
  #allocation0 [shape = 'u32[]', space=smem, size = 0x4, offset = 0x4, fixed_abs, tag = 'smem constant byte address 0x4 - core index']
  #allocation1 [shape = 'u32[144,128]{1,0:T(1,128)}', space=vmem, size = 0x12000, scoped, tag = 'internal scratch']
  %s0 = inlined_call_operand.vmem [shape: bf16[2,10,10,16], index: 0, kind: input, shape index: {}]
  %s1 = inlined_call_operand.vmem [shape: bf16[9,2,8,8], index: 1, kind: input, shape index: {}]
  %s2 = inlined_call_operand.vmem [shape: f32[1,16], index: 2, kind: input, shape index: {}]
  %s3 = inlined_call_operand.vmem [shape: f32[1,16], index: 3, kind: input, shape index: {}]
  %s4 = inlined_call_operand.vmem [shape: f32[16,4], index: 4, kind: input, shape index: {}]
  %s5 = inlined_call_operand.vmem [shape: f32[1,4], index: 5, kind: input, shape index: {}]
  %s6 = inlined_call_operand.vmem [shape: f32[4,16], index: 6, kind: input, shape index: {}]
  %s7 = inlined_call_operand.vmem [shape: f32[1,16], index: 7, kind: input, shape index: {}]
  %s8 = inlined_call_operand.vmem [shape: bf16[2,64,16], index: 8, kind: output, shape index: {}]
  %s9 = sld [smem:[#allocation0]]
  $region65: #{_lambda_.10} parent=0
    _
  %s11 = ssub.s32 1, %s9
  %s12 = scalar_select 0, %s11, %s9
  loop: start=0, step=1, limit=4
  $region2: #{_lambda_.10} parent=0 // loop_pre_header
    _
  $region3: #{_lambda_.10} parent=0 // loop_header
    %s14 = sphi 0, %s18
    %p15 = scmp.ge.s32.totalorder %s14, 4
    %s24 = sphi 0, %s26
    %s27 = sphi 0, %s24
    %s28 = sphi 0, %s27
    %s44 = sphi 0, %s28
    %s48 = sphi 0, %s48
    %s50 = sphi 0, %s48
    %s51 = sphi 0, %s50
    %s65 = sphi 0, %s51
    %s69 = sphi 0, %s69
    %s71 = sphi 0, %s69
    %s72 = sphi 0, %s71
    %s86 = sphi 0, %s72
    %s90 = sphi 0, %s90
    %s92 = sphi 0, %s90
    %s93 = sphi 0, %s92
    %s107 = sphi 0, %s93
    %s111 = sphi 0, %s111
    %s113 = sphi 0, %s111
    %s114 = sphi 0, %s113
    %s128 = sphi 0, %s114
    %s132 = sphi 0, %s132
    %s134 = sphi 0, %s132
    %s135 = sphi 0, %s134
    %s149 = sphi 0, %s135
    %s153 = sphi 0, %s153
    %s155 = sphi 0, %s153
    %s156 = sphi 0, %s155
    %s170 = sphi 0, %s156
    %s174 = sphi 0, %s174
    %s176 = sphi 0, %s174
    %s177 = sphi 0, %s176
    %s191 = sphi 0, %s177
    %s197 = sphi 0, %s199
    %s200 = sphi 0, %s197
    %s201 = sphi 0, %s200
    %s217 = sphi 0, %s201
  $region4: #{_lambda_.10} parent=0 // loop_header_branch
    %17 = sbr.rel (%p15) target = $region8
  $region5: #{_lambda_.10} parent=0 // loop_body
    %s19 = ssub.s32 %s14, 1
    %s20 = ssub.s32 %s14, 2
    %s21 = sadd.s32 %s14, 1
    %s22 = ssub.s32 %s14, %s21
    %p23 = scmp.eq.s32.totalorder %s22, 0
    %s25 = sadd.s32 %s24, 1
    %s26 = scalar_select %p23, %s24, %s25
    %p29 = pneg %p23
    %p30 = scmp.eq.s32.totalorder %s14, 1
    %p31 = por %p29, %p30
    %p32 = scmp.ne.s32.totalorder %s24, %s27
    %p33 = scmp.eq.s32.totalorder %s14, 0
    %p34 = por %p32, %p33
    %p35 = scmp.ne.s32.totalorder %s24, %s27
    %p36 = scmp.eq.s32.totalorder %s19, 1
    %p37 = por %p35, %p36
    %p38 = scmp.ne.s32.totalorder %s27, %s28
    %p39 = scmp.eq.s32.totalorder %s19, 0
    %p40 = por %p38, %p39
    %p41 = scmp.ne.s32.totalorder %s27, %s28
    %p42 = scmp.eq.s32.totalorder %s20, 1
    %p43 = por %p41, %p42
    %p45 = scmp.ne.s32.totalorder %s28, %s44
    %p46 = scmp.eq.s32.totalorder %s20, 0
    %p47 = por %p45, %p46
    %s49 = sadd.s32 %s48, 1
    %p52 = scmp.eq.s32.totalorder %s14, 1
    %p53 = scmp.ne.s32.totalorder %s48, %s50
    %p54 = scmp.eq.s32.totalorder %s14, 0
    %p55 = por %p53, %p54
    %p56 = scmp.ne.s32.totalorder %s48, %s50
    %p57 = scmp.eq.s32.totalorder %s19, 1
    %p58 = por %p56, %p57
    %p59 = scmp.ne.s32.totalorder %s50, %s51
    %p60 = scmp.eq.s32.totalorder %s19, 0
    %p61 = por %p59, %p60
    %p62 = scmp.ne.s32.totalorder %s50, %s51
    %p63 = scmp.eq.s32.totalorder %s20, 1
    %p64 = por %p62, %p63
    %p66 = scmp.ne.s32.totalorder %s51, %s65
    %p67 = scmp.eq.s32.totalorder %s20, 0
    %p68 = por %p66, %p67
    %s70 = sadd.s32 %s69, 1
    %p73 = scmp.eq.s32.totalorder %s14, 1
    %p74 = scmp.ne.s32.totalorder %s69, %s71
    %p75 = scmp.eq.s32.totalorder %s14, 0
    %p76 = por %p74, %p75
    %p77 = scmp.ne.s32.totalorder %s69, %s71
    %p78 = scmp.eq.s32.totalorder %s19, 1
    %p79 = por %p77, %p78
    %p80 = scmp.ne.s32.totalorder %s71, %s72
    %p81 = scmp.eq.s32.totalorder %s19, 0
    %p82 = por %p80, %p81
    %p83 = scmp.ne.s32.totalorder %s71, %s72
    %p84 = scmp.eq.s32.totalorder %s20, 1
    %p85 = por %p83, %p84
    %p87 = scmp.ne.s32.totalorder %s72, %s86
    %p88 = scmp.eq.s32.totalorder %s20, 0
    %p89 = por %p87, %p88
    %s91 = sadd.s32 %s90, 1
    %p94 = scmp.eq.s32.totalorder %s14, 1
    %p95 = scmp.ne.s32.totalorder %s90, %s92
    %p96 = scmp.eq.s32.totalorder %s14, 0
    %p97 = por %p95, %p96
    %p98 = scmp.ne.s32.totalorder %s90, %s92
    %p99 = scmp.eq.s32.totalorder %s19, 1
    %p100 = por %p98, %p99
    %p101 = scmp.ne.s32.totalorder %s92, %s93
    %p102 = scmp.eq.s32.totalorder %s19, 0
    %p103 = por %p101, %p102
    %p104 = scmp.ne.s32.totalorder %s92, %s93
    %p105 = scmp.eq.s32.totalorder %s20, 1
    %p106 = por %p104, %p105
    %p108 = scmp.ne.s32.totalorder %s93, %s107
    %p109 = scmp.eq.s32.totalorder %s20, 0
    %p110 = por %p108, %p109
    %s112 = sadd.s32 %s111, 1
    %p115 = scmp.eq.s32.totalorder %s14, 1
    %p116 = scmp.ne.s32.totalorder %s111, %s113
    %p117 = scmp.eq.s32.totalorder %s14, 0
    %p118 = por %p116, %p117
    %p119 = scmp.ne.s32.totalorder %s111, %s113
    %p120 = scmp.eq.s32.totalorder %s19, 1
    %p121 = por %p119, %p120
    %p122 = scmp.ne.s32.totalorder %s113, %s114
    %p123 = scmp.eq.s32.totalorder %s19, 0
    %p124 = por %p122, %p123
    %p125 = scmp.ne.s32.totalorder %s113, %s114
    %p126 = scmp.eq.s32.totalorder %s20, 1
    %p127 = por %p125, %p126
    %p129 = scmp.ne.s32.totalorder %s114, %s128
    %p130 = scmp.eq.s32.totalorder %s20, 0
    %p131 = por %p129, %p130
    %s133 = sadd.s32 %s132, 1
    %p136 = scmp.eq.s32.totalorder %s14, 1
    %p137 = scmp.ne.s32.totalorder %s132, %s134
    %p138 = scmp.eq.s32.totalorder %s14, 0
    %p139 = por %p137, %p138
    %p140 = scmp.ne.s32.totalorder %s132, %s134
    %p141 = scmp.eq.s32.totalorder %s19, 1
    %p142 = por %p140, %p141
    %p143 = scmp.ne.s32.totalorder %s134, %s135
    %p144 = scmp.eq.s32.totalorder %s19, 0
    %p145 = por %p143, %p144
    %p146 = scmp.ne.s32.totalorder %s134, %s135
    %p147 = scmp.eq.s32.totalorder %s20, 1
    %p148 = por %p146, %p147
    %p150 = scmp.ne.s32.totalorder %s135, %s149
    %p151 = scmp.eq.s32.totalorder %s20, 0
    %p152 = por %p150, %p151
    %s154 = sadd.s32 %s153, 1
    %p157 = scmp.eq.s32.totalorder %s14, 1
    %p158 = scmp.ne.s32.totalorder %s153, %s155
    %p159 = scmp.eq.s32.totalorder %s14, 0
    %p160 = por %p158, %p159
    %p161 = scmp.ne.s32.totalorder %s153, %s155
    %p162 = scmp.eq.s32.totalorder %s19, 1
    %p163 = por %p161, %p162
    %p164 = scmp.ne.s32.totalorder %s155, %s156
    %p165 = scmp.eq.s32.totalorder %s19, 0
    %p166 = por %p164, %p165
    %p167 = scmp.ne.s32.totalorder %s155, %s156
    %p168 = scmp.eq.s32.totalorder %s20, 1
    %p169 = por %p167, %p168
    %p171 = scmp.ne.s32.totalorder %s156, %s170
    %p172 = scmp.eq.s32.totalorder %s20, 0
    %p173 = por %p171, %p172
    %s175 = sadd.s32 %s174, 1
    %p178 = scmp.eq.s32.totalorder %s14, 1
    %p179 = scmp.ne.s32.totalorder %s174, %s176
    %p180 = scmp.eq.s32.totalorder %s14, 0
    %p181 = por %p179, %p180
    %p182 = scmp.ne.s32.totalorder %s174, %s176
    %p183 = scmp.eq.s32.totalorder %s19, 1
    %p184 = por %p182, %p183
    %p185 = scmp.ne.s32.totalorder %s176, %s177
    %p186 = scmp.eq.s32.totalorder %s19, 0
    %p187 = por %p185, %p186
    %p188 = scmp.ne.s32.totalorder %s176, %s177
    %p189 = scmp.eq.s32.totalorder %s20, 1
    %p190 = por %p188, %p189
    %p192 = scmp.ne.s32.totalorder %s177, %s191
    %p193 = scmp.eq.s32.totalorder %s20, 0
    %p194 = por %p192, %p193
    %s195 = ssub.s32 %s14, %s21
    %p196 = scmp.eq.s32.totalorder %s195, 0
    %s198 = sadd.s32 %s197, 1
    %s199 = scalar_select %p196, %s197, %s198
    %p202 = pneg %p196
    %p203 = scmp.eq.s32.totalorder %s14, 1
    %p204 = por %p202, %p203
    %p205 = scmp.ne.s32.totalorder %s197, %s200
    %p206 = scmp.eq.s32.totalorder %s14, 0
    %p207 = por %p205, %p206
    %p208 = scmp.ne.s32.totalorder %s197, %s200
    %p209 = scmp.eq.s32.totalorder %s19, 1
    %p210 = por %p208, %p209
    %p211 = scmp.ne.s32.totalorder %s200, %s201
    %p212 = scmp.eq.s32.totalorder %s19, 0
    %p213 = por %p211, %p212
    %p214 = scmp.ne.s32.totalorder %s200, %s201
    %p215 = scmp.eq.s32.totalorder %s20, 1
    %p216 = por %p214, %p215
    %p218 = scmp.ne.s32.totalorder %s201, %s217
    %p219 = scmp.eq.s32.totalorder %s20, 0
    %p220 = por %p218, %p219
    %p221 = scmp.le.s32.totalorder 1, %s14
    %p222 = scmp.lt.s32.totalorder %s14, 3
    %p223 = pnand %p221, %p222
    %p224 = pneg %p223
    // Predicated region
    $region9: #{_lambda_.10} parent=5 // pred_check
      _
    $region10: #{_lambda_.10} parent=5 // pred_check_branch
      %226 = sbr.rel (%p223) target = $region12
    $region11: #{_lambda_.10} parent=5 // pred_region
      %s227 = ssub.s32 %s14, 1
      // Predicated region
      $region13: #{_lambda_.10} parent=11 // pred_check
        %p228 = pneg %p61
      $region14: #{_lambda_.10} parent=11 // pred_check_branch
        %230 = sbr.rel (%p228) target = $region16
      $region15: #{_lambda_.10} parent=11 // pred_region
        _
      $region16: #{_lambda_.10} parent=11 // pred_fallthru
        _
      // Predicated region
      $region17: #{_lambda_.10} parent=11 // pred_check
        %p231 = pneg %p82
      $region18: #{_lambda_.10} parent=11 // pred_check_branch
        %233 = sbr.rel (%p231) target = $region20
      $region19: #{_lambda_.10} parent=11 // pred_region
        _
      $region20: #{_lambda_.10} parent=11 // pred_fallthru
        _
      // Predicated region
      $region21: #{_lambda_.10} parent=11 // pred_check
        %p234 = pneg %p103
      $region22: #{_lambda_.10} parent=11 // pred_check_branch
        %236 = sbr.rel (%p234) target = $region24
      $region23: #{_lambda_.10} parent=11 // pred_region
        _
      $region24: #{_lambda_.10} parent=11 // pred_fallthru
        _
      // Predicated region
      $region25: #{_lambda_.10} parent=11 // pred_check
        %p237 = pneg %p124
      $region26: #{_lambda_.10} parent=11 // pred_check_branch
        %239 = sbr.rel (%p237) target = $region28
      $region27: #{_lambda_.10} parent=11 // pred_region
        _
      $region28: #{_lambda_.10} parent=11 // pred_fallthru
        _
      // Predicated region
      $region29: #{_lambda_.10} parent=11 // pred_check
        %p240 = pneg %p145
      $region30: #{_lambda_.10} parent=11 // pred_check_branch
        %242 = sbr.rel (%p240) target = $region32
      $region31: #{_lambda_.10} parent=11 // pred_region
        _
      $region32: #{_lambda_.10} parent=11 // pred_fallthru
        _
      // Predicated region
      $region33: #{_lambda_.10} parent=11 // pred_check
        %p243 = pneg %p166
      $region34: #{_lambda_.10} parent=11 // pred_check_branch
        %245 = sbr.rel (%p243) target = $region36
      $region35: #{_lambda_.10} parent=11 // pred_region
        _
      $region36: #{_lambda_.10} parent=11 // pred_fallthru
        _
      // Predicated region
      $region37: #{_lambda_.10} parent=11 // pred_check
        %p246 = pneg %p187
      $region38: #{_lambda_.10} parent=11 // pred_check_branch
        %248 = sbr.rel (%p246) target = $region40
      $region39: #{_lambda_.10} parent=11 // pred_region
        _
      $region40: #{_lambda_.10} parent=11 // pred_fallthru
        _
    $region12: #{_lambda_.10} parent=5 // pred_fallthru
      _
    %p249 = scmp.lt.s32.totalorder %s14, 2
    // Predicated region
    $region41: #{_lambda_.10} parent=5 // pred_check
      %p250 = pneg %p249
    $region42: #{_lambda_.10} parent=5 // pred_check_branch
      %252 = sbr.rel (%p250) target = $region44
    $region43: #{_lambda_.10} parent=5 // pred_region
      // Predicated region
      $region45: #{_lambda_.10} parent=43 // pred_check
        %p253 = pneg %p34
      $region46: #{_lambda_.10} parent=43 // pred_check_branch
        %255 = sbr.rel (%p253) target = $region48
      $region47: #{_lambda_.10} parent=43 // pred_region
        %p256 = scmp.lt.s32.totalorder %s14, 1
        %s257 = scalar_select %p256, %s14, 1
        %s258 = smul.addr %s257, 20
        %s259 = smul.addr %s258, 4
        %s260 = scalar_lea.vmem %s0, %s259
      $region48: #{_lambda_.10} parent=43 // pred_fallthru
        _
    $region44: #{_lambda_.10} parent=5 // pred_fallthru
      _
    %p261 = scmp.le.s32.totalorder 1, %s14
    %p262 = scmp.lt.s32.totalorder %s14, 3
    %p263 = pnand %p261, %p262
    %p264 = pneg %p263
    // Predicated region
    $region49: #{_lambda_.10} parent=5 // pred_check
      _
    $region50: #{_lambda_.10} parent=5 // pred_check_branch
      %266 = sbr.rel (%p263) target = $region52
    $region51: #{_lambda_.10} parent=5 // pred_region
      %s267 = ssub.s32 %s14, 1
      %p268 = scmp.lt.s32.totalorder %s19, 1
      %s269 = scalar_select %p268, %s19, 1
      %s270 = smul.addr %s269, 20
      %s271 = smul.addr %s270, 4
      %s272 = scalar_lea.vmem %s0, %s271
      %p273 = pneg %p40
      %p274 = pneg %p37
      %p275 = pneg %p61
      %p276 = pneg %p58
      %p277 = pneg %p82
      %p278 = pneg %p79
      %p279 = pneg %p103
      %p280 = pneg %p100
      %p281 = pneg %p124
      %p282 = pneg %p121
      %p283 = pneg %p145
      %p284 = pneg %p142
      %p285 = pneg %p166
      %p286 = pneg %p163
      %p287 = pneg %p187
      %p288 = pneg %p184
      %p289 = pneg %p213
      %p290 = pneg %p210
      %p291 = scmp.lt.s32.totalorder %s19, 1
      %s292 = scalar_select %p291, %s19, 1
      %s293 = smul.addr %s292, 8
      %s294 = smul.addr %s293, 4
      %s295 = scalar_lea.vmem %s8, %s294
      %p296 = scmp.lt.s32.totalorder %s19, 1
      %s297 = scalar_select %p296, %s19, 1
      %s298 = smul.addr %s297, 20
      %s299 = smul.addr %s298, 4
      %s300 = scalar_lea.vmem %s0, %s299
      %p301 = scmp.lt.s32.totalorder %s19, 1
      %s302 = scalar_select %p301, %s19, 1
      %s303 = smul.addr %s302, 8
      %s304 = smul.addr %s303, 4
      %s305 = scalar_lea.vmem %s8, %s304
      %v307 = vld [vmem:[%s300] sm:$0xf]
      %v308 = vld [vmem:[%s300 + $0x8] sm:$0xf]
      %v309 = vld [vmem:[%s300 + $0x10] sm:$0xf]
      %v310 = vld [vmem:[%s300 + $0x18] sm:$0xf]
      %v311 = vld [vmem:[%s300 + $0x20] sm:$0xf]
      %v312 = vld [vmem:[%s300 + $0x28] sm:$0xf]
      %v313 = vld [vmem:[%s300 + $0x30] sm:$0xf]
      %v314 = vld [vmem:[%s300 + $0x38] sm:$0xf]
      %v315 = vld [vmem:[%s1] sm:$0xf]
      %s316 = scalar_lea.vmem %s1, 4
      %v317 = vld [vmem:[%s316] sm:$0xf]
      %v318 = vld [vmem:[%s300 + $0x4] sm:$0x1]
      %v319 = vld [vmem:[%s300 + $0xc] sm:$0x1]
      %v320 = vld [vmem:[%s300 + $0x14] sm:$0x1]
      %v321 = vld [vmem:[%s300 + $0x1c] sm:$0x1]
      %v322 = vld [vmem:[%s300 + $0x24] sm:$0x1]
      %v323 = vld [vmem:[%s300 + $0x2c] sm:$0x1]
      %v324 = vld [vmem:[%s300 + $0x34] sm:$0x1]
      %v325 = vld [vmem:[%s300 + $0x3c] sm:$0x1]
      %vm326 = vsmask.f32 3328
      %vm327 = vsmask.f32 7440
      %vm328 = vmor %vm326, %vm327
      %v330 = vshrl.u32 %v307, 16
      %v332 = vrot.slane %v330, 4
      %v333 = vshll.u32 %v307, 16
      %v335 = vrot.slane %v333, 5
      %v336 = vor.u32 %v332, %v335
      %v337 = vrot.slane %v336, 4
      %v339 = vshll.u32 %v318, 16
      %v341 = vrot.slane %v339, 5
      %v342 = vsel %vm328, %v337, %v341
      %v344 = vshrl.u32 %v308, 16
      %v346 = vrot.slane %v344, 4
      %v347 = vshll.u32 %v308, 16
      %v349 = vrot.slane %v347, 5
      %v350 = vor.u32 %v346, %v349
      %v351 = vrot.slane %v350, 4
      %v353 = vshll.u32 %v319, 16
      %v355 = vrot.slane %v353, 5
      %v356 = vsel %vm328, %v351, %v355
      %v358 = vshrl.u32 %v309, 16
      %v360 = vrot.slane %v358, 4
      %v361 = vshll.u32 %v309, 16
      %v363 = vrot.slane %v361, 5
      %v364 = vor.u32 %v360, %v363
      %v365 = vrot.slane %v364, 4
      %v367 = vshll.u32 %v320, 16
      %v369 = vrot.slane %v367, 5
      %v370 = vsel %vm328, %v365, %v369
      %v372 = vshrl.u32 %v310, 16
      %v374 = vrot.slane %v372, 4
      %v375 = vshll.u32 %v310, 16
      %v377 = vrot.slane %v375, 5
      %v378 = vor.u32 %v374, %v377
      %v379 = vrot.slane %v378, 4
      %v381 = vshll.u32 %v321, 16
      %v383 = vrot.slane %v381, 5
      %v384 = vsel %vm328, %v379, %v383
      %v386 = vshrl.u32 %v311, 16
      %v388 = vrot.slane %v386, 4
      %v389 = vshll.u32 %v311, 16
      %v391 = vrot.slane %v389, 5
      %v392 = vor.u32 %v388, %v391
      %v393 = vrot.slane %v392, 4
      %v395 = vshll.u32 %v322, 16
      %v397 = vrot.slane %v395, 5
      %v398 = vsel %vm328, %v393, %v397
      %v400 = vshrl.u32 %v312, 16
      %v402 = vrot.slane %v400, 4
      %v403 = vshll.u32 %v312, 16
      %v405 = vrot.slane %v403, 5
      %v406 = vor.u32 %v402, %v405
      %v407 = vrot.slane %v406, 4
      %v409 = vshll.u32 %v323, 16
      %v411 = vrot.slane %v409, 5
      %v412 = vsel %vm328, %v407, %v411
      %v414 = vshrl.u32 %v313, 16
      %v416 = vrot.slane %v414, 4
      %v417 = vshll.u32 %v313, 16
      %v419 = vrot.slane %v417, 5
      %v420 = vor.u32 %v416, %v419
      %v421 = vrot.slane %v420, 4
      %v423 = vshll.u32 %v324, 16
      %v425 = vrot.slane %v423, 5
      %v426 = vsel %vm328, %v421, %v425
      %v428 = vshrl.u32 %v314, 16
      %v430 = vrot.slane %v428, 4
      %v431 = vshll.u32 %v314, 16
      %v433 = vrot.slane %v431, 5
      %v434 = vor.u32 %v430, %v433
      %v435 = vrot.slane %v434, 4
      %v437 = vshll.u32 %v325, 16
      %v439 = vrot.slane %v437, 5
      %v440 = vsel %vm328, %v435, %v439
      %s441 = scalar_lea.vmem %s1, 8
      %v442 = vld [vmem:[%s441] sm:$0xf]
      %v443 = vunpack.c.l.b16 %v342
      %v444 = vunpack.c.l.b16 %v356
      %v445 = vunpack.c.l.b16 %v370
      %v446 = vunpack.c.l.b16 %v384
      %v447 = vunpack.c.l.b16 %v398
      %v448 = vunpack.c.l.b16 %v412
      %v449 = vunpack.c.l.b16 %v426
      %v450 = vunpack.c.l.b16 %v440
      %v451 = vpack.c.b16 %v444, %v443
      %v452 = vpack.c.b16 %v446, %v445
      %v453 = vpack.c.b16 %v448, %v447
      %v454 = vpack.c.b16 %v450, %v449
      %vm455 = vcmask 64512
      %v457 = vsel %vm455, %v451, 0
      %v460 = vsel %vm455, %v452, 0
      %v463 = vsel %vm455, %v453, 0
      %v466 = vsel %vm455, %v454, 0
      %vm468 = vcmask 1043456
      %v470 = vsel %vm468, %v442, 0
      %472 = vmatprep.subr.bf16.mxu0 0
      %473 = vmatpush1.bf16.msra.mxu0 %v470
      %474 = vmatprep.subr.bf16.mxu0 0
      %475 = vmatpush1.bf16.msra.mxu0 0
      %476 = vmatprep.subr.bf16.mxu0 0
      %477 = vmatpush1.bf16.msra.mxu0 0
      %478 = vmatprep.subr.bf16.mxu0 0
      %479 = vmatpush1.bf16.msra.mxu0 0
      %480 = vmatprep.subr.bf16.mxu0 0
      %481 = vmatpush1.bf16.msra.mxu0 0
      %482 = vmatprep.subr.bf16.mxu0 0
      %483 = vmatpush1.bf16.msra.mxu0 0
      %484 = vmatprep.subr.bf16.mxu0 0
      %485 = vmatpush1.bf16.msra.mxu0 0
      %486 = vmatprep.subr.bf16.mxu0 0
      %487 = vmatpush1.bf16.msra.mxu0 0
      %488 = vmatprep.subr.bf16.mxu0 0
      %489 = vmatpush1.bf16.msra.mxu0 0
      %490 = vmatprep.subr.bf16.mxu0 0
      %491 = vmatpush1.bf16.msra.mxu0 0
      %492 = vmatprep.subr.bf16.mxu0 0
      %493 = vmatpush1.bf16.msra.mxu0 0
      %494 = vmatprep.subr.bf16.mxu0 0
      %495 = vmatpush1.bf16.msra.mxu0 0
      %496 = vmatprep.subr.bf16.mxu0 0
      %497 = vmatpush1.bf16.msra.mxu0 0
      %498 = vmatprep.subr.bf16.mxu0 0
      %499 = vmatpush1.bf16.msra.mxu0 0
      %500 = vmatprep.subr.bf16.mxu0 0
      %501 = vmatpush1.bf16.msra.mxu0 0
      %502 = vmatprep.subr.bf16.mxu0 0
      %503 = vmatpush1.bf16.msra.mxu0 0
      %504 = vmatprep.mubr.bf16.mxu0 0
      %505 = vmatmul.mubr.bf16.gmra.mrb[0].mxu0 %v457
      %v506 = vpop.f32.mrb[0].mxu0
      %v507 = vadd.f32 0.0, %v506
      %v508 = vpop.f32.mrb[0].mxu0
      %v509 = vpop.f32.mrb[0].mxu0
      %v510 = vadd.f32 0.0, %v509
      %v511 = vpop.f32.mrb[0].mxu0
      %512 = vmatprep.mubr.bf16.mxu0 0
      %513 = vmatmul.mubr.bf16.gmra.mrb[0].mxu0 %v460
      %v514 = vpop.f32.mrb[0].mxu0
      %v515 = vadd.f32 0.0, %v514
      %v516 = vpop.f32.mrb[0].mxu0
      %v517 = vpop.f32.mrb[0].mxu0
      %v518 = vadd.f32 0.0, %v517
      %v519 = vpop.f32.mrb[0].mxu0
      %520 = vmatprep.mubr.bf16.mxu0 0
      %521 = vmatmul.mubr.bf16.gmra.mrb[0].mxu0 %v463
      %v522 = vpop.f32.mrb[0].mxu0
      %v523 = vadd.f32 0.0, %v522
      %v524 = vpop.f32.mrb[0].mxu0
      %v525 = vpop.f32.mrb[0].mxu0
      %v526 = vadd.f32 0.0, %v525
      %v527 = vpop.f32.mrb[0].mxu0
      %528 = vmatprep.mubr.bf16.mxu0 0
      %529 = vmatmul.mubr.bf16.gmra.mrb[0].mxu0 %v466
      %v530 = vpop.f32.mrb[0].mxu0
      %v531 = vadd.f32 0.0, %v530
      %v532 = vpop.f32.mrb[0].mxu0
      %v533 = vpop.f32.mrb[0].mxu0
      %v534 = vadd.f32 0.0, %v533
      %v535 = vpop.f32.mrb[0].mxu0
      %536 = vdwg.mxu0
      %v545 = vunpack.c.l.b16 %v307
      %v546 = vunpack.c.l.b16 %v308
      %v547 = vunpack.c.l.b16 %v309
      %v548 = vunpack.c.l.b16 %v310
      %v549 = vunpack.c.l.b16 %v311
      %v550 = vunpack.c.l.b16 %v312
      %v551 = vunpack.c.l.b16 %v313
      %v552 = vunpack.c.l.b16 %v314
      %v553 = vpack.c.b16 %v546, %v545
      %v554 = vpack.c.b16 %v548, %v547
      %v555 = vpack.c.b16 %v550, %v549
      %v556 = vpack.c.b16 %v552, %v551
      %v558 = vsel %vm455, %v553, 0
      %v561 = vsel %vm455, %v554, 0
      %v564 = vsel %vm455, %v555, 0
      %v567 = vsel %vm455, %v556, 0
      %v570 = vsel %vm468, %v315, 0
      %572 = vmatprep.subr.bf16.mxu0 0
      %573 = vmatpush1.bf16.msra.mxu0 %v570
      %574 = vmatprep.subr.bf16.mxu0 0
      %575 = vmatpush1.bf16.msra.mxu0 0
      %576 = vmatprep.subr.bf16.mxu0 0
      %577 = vmatpush1.bf16.msra.mxu0 0
      %578 = vmatprep.subr.bf16.mxu0 0
      %579 = vmatpush1.bf16.msra.mxu0 0
      %580 = vmatprep.subr.bf16.mxu0 0
      %581 = vmatpush1.bf16.msra.mxu0 0
      %582 = vmatprep.subr.bf16.mxu0 0
      %583 = vmatpush1.bf16.msra.mxu0 0
      %584 = vmatprep.subr.bf16.mxu0 0
      %585 = vmatpush1.bf16.msra.mxu0 0
      %586 = vmatprep.subr.bf16.mxu0 0
      %587 = vmatpush1.bf16.msra.mxu0 0
      %588 = vmatprep.subr.bf16.mxu0 0
      %589 = vmatpush1.bf16.msra.mxu0 0
      %590 = vmatprep.subr.bf16.mxu0 0
      %591 = vmatpush1.bf16.msra.mxu0 0
      %592 = vmatprep.subr.bf16.mxu0 0
      %593 = vmatpush1.bf16.msra.mxu0 0
      %594 = vmatprep.subr.bf16.mxu0 0
      %595 = vmatpush1.bf16.msra.mxu0 0
      %596 = vmatprep.subr.bf16.mxu0 0
      %597 = vmatpush1.bf16.msra.mxu0 0
      %598 = vmatprep.subr.bf16.mxu0 0
      %599 = vmatpush1.bf16.msra.mxu0 0
      %600 = vmatprep.subr.bf16.mxu0 0
      %601 = vmatpush1.bf16.msra.mxu0 0
      %602 = vmatprep.subr.bf16.mxu0 0
      %603 = vmatpush1.bf16.msra.mxu0 0
      %604 = vmatprep.mubr.bf16.mxu0 0
      %605 = vmatmul.mubr.bf16.gmra.mrb[0].mxu0 %v558
      %v606 = vpop.f32.mrb[0].mxu0
      %v607 = vadd.f32 %v507, %v606
      %v608 = vpop.f32.mrb[0].mxu0
      %v609 = vpop.f32.mrb[0].mxu0
      %v610 = vadd.f32 %v510, %v609
      %v611 = vpop.f32.mrb[0].mxu0
      %612 = vmatprep.mubr.bf16.mxu0 0
      %613 = vmatmul.mubr.bf16.gmra.mrb[0].mxu0 %v561
      %v614 = vpop.f32.mrb[0].mxu0
      %v615 = vadd.f32 %v515, %v614
      %v616 = vpop.f32.mrb[0].mxu0
      %v617 = vpop.f32.mrb[0].mxu0
      %v618 = vadd.f32 %v518, %v617
      %v619 = vpop.f32.mrb[0].mxu0
      %620 = vmatprep.mubr.bf16.mxu0 0
      %621 = vmatmul.mubr.bf16.gmra.mrb[0].mxu0 %v564
      %v622 = vpop.f32.mrb[0].mxu0
      %v623 = vadd.f32 %v523, %v622
      %v624 = vpop.f32.mrb[0].mxu0
      %v625 = vpop.f32.mrb[0].mxu0
      %v626 = vadd.f32 %v526, %v625
      %v627 = vpop.f32.mrb[0].mxu0
      %628 = vmatprep.mubr.bf16.mxu0 0
      %629 = vmatmul.mubr.bf16.gmra.mrb[0].mxu0 %v567
      %v630 = vpop.f32.mrb[0].mxu0
      %v631 = vadd.f32 %v531, %v630
      %v632 = vpop.f32.mrb[0].mxu0
      %v633 = vpop.f32.mrb[0].mxu0
      %v634 = vadd.f32 %v534, %v633
      %v635 = vpop.f32.mrb[0].mxu0
      %636 = vdwg.mxu0
      %s637 = scalar_lea.vmem %s1, 12
      %v638 = vld [vmem:[%s637] sm:$0xf]
      %639 = vrot.lane.b32.xlu0 %v451, 120
      %v640 = vpop.permute.xlu0 %639
      %641 = vrot.lane.b32.xlu0 %v452, 120
      %v642 = vpop.permute.xlu0 %641
      %643 = vrot.lane.b32.xlu0 %v453, 120
      %v644 = vpop.permute.xlu0 %643
      %645 = vrot.lane.b32.xlu0 %v454, 120
      %v646 = vpop.permute.xlu0 %645
      %v648 = vsel %vm455, %v640, 0
      %v651 = vsel %vm455, %v642, 0
      %v654 = vsel %vm455, %v644, 0
      %v657 = vsel %vm455, %v646, 0
      %v660 = vsel %vm468, %v638, 0
      %662 = vmatprep.subr.bf16.mxu0 0
      %663 = vmatpush1.bf16.msra.mxu0 %v660
      %664 = vmatprep.subr.bf16.mxu0 0
      %665 = vmatpush1.bf16.msra.mxu0 0
      %666 = vmatprep.subr.bf16.mxu0 0
      %667 = vmatpush1.bf16.msra.mxu0 0
      %668 = vmatprep.subr.bf16.mxu0 0
      %669 = vmatpush1.bf16.msra.mxu0 0
      %670 = vmatprep.subr.bf16.mxu0 0
      %671 = vmatpush1.bf16.msra.mxu0 0
      %672 = vmatprep.subr.bf16.mxu0 0
      %673 = vmatpush1.bf16.msra.mxu0 0
      %674 = vmatprep.subr.bf16.mxu0 0
      %675 = vmatpush1.bf16.msra.mxu0 0
      %676 = vmatprep.subr.bf16.mxu0 0
      %677 = vmatpush1.bf16.msra.mxu0 0
      %678 = vmatprep.subr.bf16.mxu0 0
      %679 = vmatpush1.bf16.msra.mxu0 0
      %680 = vmatprep.subr.bf16.mxu0 0
      %681 = vmatpush1.bf16.msra.mxu0 0
      %682 = vmatprep.subr.bf16.mxu0 0
      %683 = vmatpush1.bf16.msra.mxu0 0
      %684 = vmatprep.subr.bf16.mxu0 0
      %685 = vmatpush1.bf16.msra.mxu0 0
      %686 = vmatprep.subr.bf16.mxu0 0
      %687 = vmatpush1.bf16.msra.mxu0 0
      %688 = vmatprep.subr.bf16.mxu0 0
      %689 = vmatpush1.bf16.msra.mxu0 0
      %690 = vmatprep.subr.bf16.mxu0 0
      %691 = vmatpush1.bf16.msra.mxu0 0
      %692 = vmatprep.subr.bf16.mxu0 0
      %693 = vmatpush1.bf16.msra.mxu0 0
      %694 = vmatprep.mubr.bf16.mxu0 0
      %695 = vmatmul.mubr.bf16.gmra.mrb[0].mxu0 %v648
      %v696 = vpop.f32.mrb[0].mxu0
      %v697 = vadd.f32 0.0, %v696
      %v698 = vpop.f32.mrb[0].mxu0
      %v699 = vpop.f32.mrb[0].mxu0
      %v700 = vadd.f32 0.0, %v699
      %v701 = vpop.f32.mrb[0].mxu0
      %702 = vmatprep.mubr.bf16.mxu0 0
      %703 = vmatmul.mubr.bf16.gmra.mrb[0].mxu0 %v651
      %v704 = vpop.f32.mrb[0].mxu0
      %v705 = vadd.f32 0.0, %v704
      %v706 = vpop.f32.mrb[0].mxu0
      %v707 = vpop.f32.mrb[0].mxu0
      %v708 = vadd.f32 0.0, %v707
      %v709 = vpop.f32.mrb[0].mxu0
      %710 = vmatprep.mubr.bf16.mxu0 0
      %711 = vmatmul.mubr.bf16.gmra.mrb[0].mxu0 %v654
      %v712 = vpop.f32.mrb[0].mxu0
      %v713 = vadd.f32 0.0, %v712
      %v714 = vpop.f32.mrb[0].mxu0
      %v715 = vpop.f32.mrb[0].mxu0
      %v716 = vadd.f32 0.0, %v715
      %v717 = vpop.f32.mrb[0].mxu0
      %718 = vmatprep.mubr.bf16.mxu0 0
      %719 = vmatmul.mubr.bf16.gmra.mrb[0].mxu0 %v657
      %v720 = vpop.f32.mrb[0].mxu0
      %v721 = vadd.f32 0.0, %v720
      %v722 = vpop.f32.mrb[0].mxu0
      %v723 = vpop.f32.mrb[0].mxu0
      %v724 = vadd.f32 0.0, %v723
      %v725 = vpop.f32.mrb[0].mxu0
      %726 = vdwg.mxu0
      %727 = vrot.lane.b32.xlu0 %v553, 120
      %v728 = vpop.permute.xlu0 %727
      %729 = vrot.lane.b32.xlu0 %v554, 120
      %v730 = vpop.permute.xlu0 %729
      %731 = vrot.lane.b32.xlu0 %v555, 120
      %v732 = vpop.permute.xlu0 %731
      %733 = vrot.lane.b32.xlu0 %v556, 120
      %v734 = vpop.permute.xlu0 %733
      %v736 = vsel %vm455, %v728, 0
      %v739 = vsel %vm455, %v730, 0
      %v742 = vsel %vm455, %v732, 0
      %v745 = vsel %vm455, %v734, 0
      %v748 = vsel %vm468, %v317, 0
      %750 = vmatprep.subr.bf16.mxu0 0
      %751 = vmatpush1.bf16.msra.mxu0 %v748
      %752 = vmatprep.subr.bf16.mxu0 0
      %753 = vmatpush1.bf16.msra.mxu0 0
      %754 = vmatprep.subr.bf16.mxu0 0
      %755 = vmatpush1.bf16.msra.mxu0 0
      %756 = vmatprep.subr.bf16.mxu0 0
      %757 = vmatpush1.bf16.msra.mxu0 0
      %758 = vmatprep.subr.bf16.mxu0 0
      %759 = vmatpush1.bf16.msra.mxu0 0
      %760 = vmatprep.subr.bf16.mxu0 0
      %761 = vmatpush1.bf16.msra.mxu0 0
      %762 = vmatprep.subr.bf16.mxu0 0
      %763 = vmatpush1.bf16.msra.mxu0 0
      %764 = vmatprep.subr.bf16.mxu0 0
      %765 = vmatpush1.bf16.msra.mxu0 0
      %766 = vmatprep.subr.bf16.mxu0 0
      %767 = vmatpush1.bf16.msra.mxu0 0
      %768 = vmatprep.subr.bf16.mxu0 0
      %769 = vmatpush1.bf16.msra.mxu0 0
      %770 = vmatprep.subr.bf16.mxu0 0
      %771 = vmatpush1.bf16.msra.mxu0 0
      %772 = vmatprep.subr.bf16.mxu0 0
      %773 = vmatpush1.bf16.msra.mxu0 0
      %774 = vmatprep.subr.bf16.mxu0 0
      %775 = vmatpush1.bf16.msra.mxu0 0
      %776 = vmatprep.subr.bf16.mxu0 0
      %777 = vmatpush1.bf16.msra.mxu0 0
      %778 = vmatprep.subr.bf16.mxu0 0
      %779 = vmatpush1.bf16.msra.mxu0 0
      %780 = vmatprep.subr.bf16.mxu0 0
      %781 = vmatpush1.bf16.msra.mxu0 0
      %782 = vmatprep.mubr.bf16.mxu0 0
      %783 = vmatmul.mubr.bf16.gmra.mrb[0].mxu0 %v736
      %v784 = vpop.f32.mrb[0].mxu0
      %v785 = vadd.f32 %v697, %v784
      %v786 = vpop.f32.mrb[0].mxu0
      %v787 = vpop.f32.mrb[0].mxu0
      %v788 = vadd.f32 %v700, %v787
      %v789 = vpop.f32.mrb[0].mxu0
      %790 = vmatprep.mubr.bf16.mxu0 0
      %791 = vmatmul.mubr.bf16.gmra.mrb[0].mxu0 %v739
      %v792 = vpop.f32.mrb[0].mxu0
      %v793 = vadd.f32 %v705, %v792
      %v794 = vpop.f32.mrb[0].mxu0
      %v795 = vpop.f32.mrb[0].mxu0
      %v796 = vadd.f32 %v708, %v795
      %v797 = vpop.f32.mrb[0].mxu0
      %798 = vmatprep.mubr.bf16.mxu0 0
      %799 = vmatmul.mubr.bf16.gmra.mrb[0].mxu0 %v742
      %v800 = vpop.f32.mrb[0].mxu0
      %v801 = vadd.f32 %v713, %v800
      %v802 = vpop.f32.mrb[0].mxu0
      %v803 = vpop.f32.mrb[0].mxu0
      %v804 = vadd.f32 %v716, %v803
      %v805 = vpop.f32.mrb[0].mxu0
      %806 = vmatprep.mubr.bf16.mxu0 0
      %807 = vmatmul.mubr.bf16.gmra.mrb[0].mxu0 %v745
      %v808 = vpop.f32.mrb[0].mxu0
      %v809 = vadd.f32 %v721, %v808
      %v810 = vpop.f32.mrb[0].mxu0
      %v811 = vpop.f32.mrb[0].mxu0
      %v812 = vadd.f32 %v724, %v811
      %v813 = vpop.f32.mrb[0].mxu0
      %814 = vdwg.mxu0
      %v815 = vld [vmem:[%s300] sm:$0xe]
      %v816 = vld [vmem:[%s300 + $0x8] sm:$0xe]
      %v817 = vld [vmem:[%s300 + $0x10] sm:$0xe]
      %v818 = vld [vmem:[%s300 + $0x18] sm:$0xe]
      %v819 = vld [vmem:[%s300 + $0x20] sm:$0xe]
      %v820 = vld [vmem:[%s300 + $0x28] sm:$0xe]
      %v821 = vld [vmem:[%s300 + $0x30] sm:$0xe]
      %v822 = vld [vmem:[%s300 + $0x38] sm:$0xe]
      %vm839 = vcmask 1042432
      %vm840 = vcmask 1046532
      %vm841 = vmor %vm839, %vm840
      %v842 = vrot.slane %v815, 5
      %v843 = vrot.slane %v842, 4
      %v844 = vrot.slane %v318, 5
      %v845 = vsel %vm841, %v843, %v844
      %v846 = vrot.slane %v816, 5
      %v847 = vrot.slane %v846, 4
      %v848 = vrot.slane %v319, 5
      %v849 = vsel %vm841, %v847, %v848
      %v850 = vrot.slane %v817, 5
      %v851 = vrot.slane %v850, 4
      %v852 = vrot.slane %v320, 5
      %v853 = vsel %vm841, %v851, %v852
      %v854 = vrot.slane %v818, 5
      %v855 = vrot.slane %v854, 4
      %v856 = vrot.slane %v321, 5
      %v857 = vsel %vm841, %v855, %v856
      %v858 = vrot.slane %v819, 5
      %v859 = vrot.slane %v858, 4
      %v860 = vrot.slane %v322, 5
      %v861 = vsel %vm841, %v859, %v860
      %v862 = vrot.slane %v820, 5
      %v863 = vrot.slane %v862, 4
      %v864 = vrot.slane %v323, 5
      %v865 = vsel %vm841, %v863, %v864
      %v866 = vrot.slane %v821, 5
      %v867 = vrot.slane %v866, 4
      %v868 = vrot.slane %v324, 5
      %v869 = vsel %vm841, %v867, %v868
      %v870 = vrot.slane %v822, 5
      %v871 = vrot.slane %v870, 4
      %v872 = vrot.slane %v325, 5
      %v873 = vsel %vm841, %v871, %v872
      %s874 = scalar_lea.vmem %s1, 16
      %v875 = vld [vmem:[%s874] sm:$0xf]
      %v876 = vunpack.c.l.b16 %v845
      %v877 = vunpack.c.l.b16 %v849
      %v878 = vunpack.c.l.b16 %v853
      %v879 = vunpack.c.l.b16 %v857
      %v880 = vunpack.c.l.b16 %v861
      %v881 = vunpack.c.l.b16 %v865
      %v882 = vunpack.c.l.b16 %v869
      %v883 = vunpack.c.l.b16 %v873
      %v884 = vpack.c.b16 %v877, %v876
      %v885 = vpack.c.b16 %v879, %v878
      %v886 = vpack.c.b16 %v881, %v880
      %v887 = vpack.c.b16 %v883, %v882
      %v889 = vsel %vm455, %v884, 0
      %v892 = vsel %vm455, %v885, 0
      %v895 = vsel %vm455, %v886, 0
      %v898 = vsel %vm455, %v887, 0
      %v901 = vsel %vm468, %v875, 0
      %903 = vmatprep.subr.bf16.mxu0 0
      %904 = vmatpush1.bf16.msra.mxu0 %v901
      %905 = vmatprep.subr.bf16.mxu0 0
      %906 = vmatpush1.bf16.msra.mxu0 0
      %907 = vmatprep.subr.bf16.mxu0 0
      %908 = vmatpush1.bf16.msra.mxu0 0
      %909 = vmatprep.subr.bf16.mxu0 0
      %910 = vmatpush1.bf16.msra.mxu0 0
      %911 = vmatprep.subr.bf16.mxu0 0
      %912 = vmatpush1.bf16.msra.mxu0 0
      %913 = vmatprep.subr.bf16.mxu0 0
      %914 = vmatpush1.bf16.msra.mxu0 0
      %915 = vmatprep.subr.bf16.mxu0 0
      %916 = vmatpush1.bf16.msra.mxu0 0
      %917 = vmatprep.subr.bf16.mxu0 0
      %918 = vmatpush1.bf16.msra.mxu0 0
      %919 = vmatprep.subr.bf16.mxu0 0
      %920 = vmatpush1.bf16.msra.mxu0 0
      %921 = vmatprep.subr.bf16.mxu0 0
      %922 = vmatpush1.bf16.msra.mxu0 0
      %923 = vmatprep.subr.bf16.mxu0 0
      %924 = vmatpush1.bf16.msra.mxu0 0
      %925 = vmatprep.subr.bf16.mxu0 0
      %926 = vmatpush1.bf16.msra.mxu0 0
      %927 = vmatprep.subr.bf16.mxu0 0
      %928 = vmatpush1.bf16.msra.mxu0 0
      %929 = vmatprep.subr.bf16.mxu0 0
      %930 = vmatpush1.bf16.msra.mxu0 0
      %931 = vmatprep.subr.bf16.mxu0 0
      %932 = vmatpush1.bf16.msra.mxu0 0
      %933 = vmatprep.subr.bf16.mxu0 0
      %934 = vmatpush1.bf16.msra.mxu0 0
      %935 = vmatprep.mubr.bf16.mxu0 0
      %936 = vmatmul.mubr.bf16.gmra.mrb[0].mxu0 %v889
      %v937 = vpop.f32.mrb[0].mxu0
      %v938 = vadd.f32 0.0, %v937
      %v939 = vpop.f32.mrb[0].mxu0
      %v940 = vpop.f32.mrb[0].mxu0
      %v941 = vadd.f32 0.0, %v940
      %v942 = vpop.f32.mrb[0].mxu0
      %943 = vmatprep.mubr.bf16.mxu0 0
      %944 = vmatmul.mubr.bf16.gmra.mrb[0].mxu0 %v892
      %v945 = vpop.f32.mrb[0].mxu0
      %v946 = vadd.f32 0.0, %v945
      %v947 = vpop.f32.mrb[0].mxu0
      %v948 = vpop.f32.mrb[0].mxu0
      %v949 = vadd.f32 0.0, %v948
      %v950 = vpop.f32.mrb[0].mxu0
      %951 = vmatprep.mubr.bf16.mxu0 0
      %952 = vmatmul.mubr.bf16.gmra.mrb[0].mxu0 %v895
      %v953 = vpop.f32.mrb[0].mxu0
      %v954 = vadd.f32 0.0, %v953
      %v955 = vpop.f32.mrb[0].mxu0
      %v956 = vpop.f32.mrb[0].mxu0
      %v957 = vadd.f32 0.0, %v956
      %v958 = vpop.f32.mrb[0].mxu0
      %959 = vmatprep.mubr.bf16.mxu0 0
      %960 = vmatmul.mubr.bf16.gmra.mrb[0].mxu0 %v898
      %v961 = vpop.f32.mrb[0].mxu0
      %v962 = vadd.f32 0.0, %v961
      %v963 = vpop.f32.mrb[0].mxu0
      %v964 = vpop.f32.mrb[0].mxu0
      %v965 = vadd.f32 0.0, %v964
      %v966 = vpop.f32.mrb[0].mxu0
      %967 = vdwg.mxu0
      %v968 = vadd.f32 %v607, %v938
      %v969 = vadd.f32 %v610, %v941
      %v970 = vadd.f32 %v615, %v946
      %v971 = vadd.f32 %v618, %v949
      %v972 = vadd.f32 %v623, %v954
      %v973 = vadd.f32 %v626, %v957
      %v974 = vadd.f32 %v631, %v962
      %v975 = vadd.f32 %v634, %v965
      %s976 = scalar_lea.vmem %s1, 20
      %v977 = vld [vmem:[%s976] sm:$0xf]
      %978 = vrot.lane.b32.xlu0 %v884, 120
      %v979 = vpop.permute.xlu0 %978
      %980 = vrot.lane.b32.xlu0 %v885, 120
      %v981 = vpop.permute.xlu0 %980
      %982 = vrot.lane.b32.xlu0 %v886, 120
      %v983 = vpop.permute.xlu0 %982
      %984 = vrot.lane.b32.xlu0 %v887, 120
      %v985 = vpop.permute.xlu0 %984
      %v987 = vsel %vm455, %v979, 0
      %v990 = vsel %vm455, %v981, 0
      %v993 = vsel %vm455, %v983, 0
      %v996 = vsel %vm455, %v985, 0
      %v999 = vsel %vm468, %v977, 0
      %1001 = vmatprep.subr.bf16.mxu0 0
      %1002 = vmatpush1.bf16.msra.mxu0 %v999
      %1003 = vmatprep.subr.bf16.mxu0 0
      %1004 = vmatpush1.bf16.msra.mxu0 0
      %1005 = vmatprep.subr.bf16.mxu0 0
      %1006 = vmatpush1.bf16.msra.mxu0 0
      %1007 = vmatprep.subr.bf16.mxu0 0
      %1008 = vmatpush1.bf16.msra.mxu0 0
      %1009 = vmatprep.subr.bf16.mxu0 0
      %1010 = vmatpush1.bf16.msra.mxu0 0
      %1011 = vmatprep.subr.bf16.mxu0 0
      %1012 = vmatpush1.bf16.msra.mxu0 0
      %1013 = vmatprep.subr.bf16.mxu0 0
      %1014 = vmatpush1.bf16.msra.mxu0 0
      %1015 = vmatprep.subr.bf16.mxu0 0
      %1016 = vmatpush1.bf16.msra.mxu0 0
      %1017 = vmatprep.subr.bf16.mxu0 0
      %1018 = vmatpush1.bf16.msra.mxu0 0
      %1019 = vmatprep.subr.bf16.mxu0 0
      %1020 = vmatpush1.bf16.msra.mxu0 0
      %1021 = vmatprep.subr.bf16.mxu0 0
      %1022 = vmatpush1.bf16.msra.mxu0 0
      %1023 = vmatprep.subr.bf16.mxu0 0
      %1024 = vmatpush1.bf16.msra.mxu0 0
      %1025 = vmatprep.subr.bf16.mxu0 0
      %1026 = vmatpush1.bf16.msra.mxu0 0
      %1027 = vmatprep.subr.bf16.mxu0 0
      %1028 = vmatpush1.bf16.msra.mxu0 0
      %1029 = vmatprep.subr.bf16.mxu0 0
      %1030 = vmatpush1.bf16.msra.mxu0 0
      %1031 = vmatprep.subr.bf16.mxu0 0
      %1032 = vmatpush1.bf16.msra.mxu0 0
      %1033 = vmatprep.mubr.bf16.mxu0 0
      %1034 = vmatmul.mubr.bf16.gmra.mrb[0].mxu0 %v987
      %v1035 = vpop.f32.mrb[0].mxu0
      %v1036 = vadd.f32 0.0, %v1035
      %v1037 = vpop.f32.mrb[0].mxu0
      %v1038 = vpop.f32.mrb[0].mxu0
      %v1039 = vadd.f32 0.0, %v1038
      %v1040 = vpop.f32.mrb[0].mxu0
      %1041 = vmatprep.mubr.bf16.mxu0 0
      %1042 = vmatmul.mubr.bf16.gmra.mrb[0].mxu0 %v990
      %v1043 = vpop.f32.mrb[0].mxu0
      %v1044 = vadd.f32 0.0, %v1043
      %v1045 = vpop.f32.mrb[0].mxu0
      %v1046 = vpop.f32.mrb[0].mxu0
      %v1047 = vadd.f32 0.0, %v1046
      %v1048 = vpop.f32.mrb[0].mxu0
      %1049 = vmatprep.mubr.bf16.mxu0 0
      %1050 = vmatmul.mubr.bf16.gmra.mrb[0].mxu0 %v993
      %v1051 = vpop.f32.mrb[0].mxu0
      %v1052 = vadd.f32 0.0, %v1051
      %v1053 = vpop.f32.mrb[0].mxu0
      %v1054 = vpop.f32.mrb[0].mxu0
      %v1055 = vadd.f32 0.0, %v1054
      %v1056 = vpop.f32.mrb[0].mxu0
      %1057 = vmatprep.mubr.bf16.mxu0 0
      %1058 = vmatmul.mubr.bf16.gmra.mrb[0].mxu0 %v996
      %v1059 = vpop.f32.mrb[0].mxu0
      %v1060 = vadd.f32 0.0, %v1059
      %v1061 = vpop.f32.mrb[0].mxu0
      %v1062 = vpop.f32.mrb[0].mxu0
      %v1063 = vadd.f32 0.0, %v1062
      %v1064 = vpop.f32.mrb[0].mxu0
      %1065 = vdwg.mxu0
      %v1066 = vadd.f32 %v785, %v1036
      %v1067 = vadd.f32 %v788, %v1039
      %v1068 = vadd.f32 %v793, %v1044
      %v1069 = vadd.f32 %v796, %v1047
      %v1070 = vadd.f32 %v801, %v1052
      %v1071 = vadd.f32 %v804, %v1055
      %v1072 = vadd.f32 %v809, %v1060
      %v1073 = vadd.f32 %v812, %v1063
      %s1074 = scalar_lea.vmem %s300, 8
      %v1075 = vld [vmem:[%s1074] sm:$0xf]
      %v1076 = vld [vmem:[%s1074 + $0x8] sm:$0xf]
      %v1077 = vld [vmem:[%s1074 + $0x10] sm:$0xf]
      %v1078 = vld [vmem:[%s1074 + $0x18] sm:$0xf]
      %v1079 = vld [vmem:[%s1074 + $0x20] sm:$0xf]
      %v1080 = vld [vmem:[%s1074 + $0x28] sm:$0xf]
      %v1081 = vld [vmem:[%s1074 + $0x30] sm:$0xf]
      %v1082 = vld [vmem:[%s1074 + $0x38] sm:$0xf]
      %s1083 = scalar_lea.vmem %s1, 24
      %v1084 = vld [vmem:[%s1083] sm:$0xf]
      %v1093 = vunpack.c.l.b16 %v1075
      %v1094 = vunpack.c.l.b16 %v1076
      %v1095 = vunpack.c.l.b16 %v1077
      %v1096 = vunpack.c.l.b16 %v1078
      %v1097 = vunpack.c.l.b16 %v1079
      %v1098 = vunpack.c.l.b16 %v1080
      %v1099 = vunpack.c.l.b16 %v1081
      %v1100 = vunpack.c.l.b16 %v1082
      %v1101 = vpack.c.b16 %v1094, %v1093
      %v1102 = vpack.c.b16 %v1096, %v1095
      %v1103 = vpack.c.b16 %v1098, %v1097
      %v1104 = vpack.c.b16 %v1100, %v1099
      %v1106 = vsel %vm455, %v1101, 0
      %v1109 = vsel %vm455, %v1102, 0
      %v1112 = vsel %vm455, %v1103, 0
      %v1115 = vsel %vm455, %v1104, 0
      %v1118 = vsel %vm468, %v1084, 0
      %1120 = vmatprep.subr.bf16.mxu0 0
      %1121 = vmatpush1.bf16.msra.mxu0 %v1118
      %1122 = vmatprep.subr.bf16.mxu0 0
      %1123 = vmatpush1.bf16.msra.mxu0 0
      %1124 = vmatprep.subr.bf16.mxu0 0
      %1125 = vmatpush1.bf16.msra.mxu0 0
      %1126 = vmatprep.subr.bf16.mxu0 0
      %1127 = vmatpush1.bf16.msra.mxu0 0
      %1128 = vmatprep.subr.bf16.mxu0 0
      %1129 = vmatpush1.bf16.msra.mxu0 0
      %1130 = vmatprep.subr.bf16.mxu0 0
      %1131 = vmatpush1.bf16.msra.mxu0 0
      %1132 = vmatprep.subr.bf16.mxu0 0
      %1133 = vmatpush1.bf16.msra.mxu0 0
      %1134 = vmatprep.subr.bf16.mxu0 0
      %1135 = vmatpush1.bf16.msra.mxu0 0
      %1136 = vmatprep.subr.bf16.mxu0 0
      %1137 = vmatpush1.bf16.msra.mxu0 0
      %1138 = vmatprep.subr.bf16.mxu0 0
      %1139 = vmatpush1.bf16.msra.mxu0 0
      %1140 = vmatprep.subr.bf16.mxu0 0
      %1141 = vmatpush1.bf16.msra.mxu0 0
      %1142 = vmatprep.subr.bf16.mxu0 0
      %1143 = vmatpush1.bf16.msra.mxu0 0
      %1144 = vmatprep.subr.bf16.mxu0 0
      %1145 = vmatpush1.bf16.msra.mxu0 0
      %1146 = vmatprep.subr.bf16.mxu0 0
      %1147 = vmatpush1.bf16.msra.mxu0 0
      %1148 = vmatprep.subr.bf16.mxu0 0
      %1149 = vmatpush1.bf16.msra.mxu0 0
      %1150 = vmatprep.subr.bf16.mxu0 0
      %1151 = vmatpush1.bf16.msra.mxu0 0
      %1152 = vmatprep.mubr.bf16.mxu0 0
      %1153 = vmatmul.mubr.bf16.gmra.mrb[0].mxu0 %v1106
      %v1154 = vpop.f32.mrb[0].mxu0
      %v1155 = vadd.f32 0.0, %v1154
      %v1156 = vpop.f32.mrb[0].mxu0
      %v1157 = vpop.f32.mrb[0].mxu0
      %v1158 = vadd.f32 0.0, %v1157
      %v1159 = vpop.f32.mrb[0].mxu0
      %1160 = vmatprep.mubr.bf16.mxu0 0
      %1161 = vmatmul.mubr.bf16.gmra.mrb[0].mxu0 %v1109
      %v1162 = vpop.f32.mrb[0].mxu0
      %v1163 = vadd.f32 0.0, %v1162
      %v1164 = vpop.f32.mrb[0].mxu0
      %v1165 = vpop.f32.mrb[0].mxu0
      %v1166 = vadd.f32 0.0, %v1165
      %v1167 = vpop.f32.mrb[0].mxu0
      %1168 = vmatprep.mubr.bf16.mxu0 0
      %1169 = vmatmul.mubr.bf16.gmra.mrb[0].mxu0 %v1112
      %v1170 = vpop.f32.mrb[0].mxu0
      %v1171 = vadd.f32 0.0, %v1170
      %v1172 = vpop.f32.mrb[0].mxu0
      %v1173 = vpop.f32.mrb[0].mxu0
      %v1174 = vadd.f32 0.0, %v1173
      %v1175 = vpop.f32.mrb[0].mxu0
      %1176 = vmatprep.mubr.bf16.mxu0 0
      %1177 = vmatmul.mubr.bf16.gmra.mrb[0].mxu0 %v1115
      %v1178 = vpop.f32.mrb[0].mxu0
      %v1179 = vadd.f32 0.0, %v1178
      %v1180 = vpop.f32.mrb[0].mxu0
      %v1181 = vpop.f32.mrb[0].mxu0
      %v1182 = vadd.f32 0.0, %v1181
      %v1183 = vpop.f32.mrb[0].mxu0
      %1184 = vdwg.mxu0
      %v1185 = vadd.f32 %v968, %v1155
      %v1186 = vadd.f32 %v969, %v1158
      %v1187 = vadd.f32 %v970, %v1163
      %v1188 = vadd.f32 %v971, %v1166
      %v1189 = vadd.f32 %v972, %v1171
      %v1190 = vadd.f32 %v973, %v1174
      %v1191 = vadd.f32 %v974, %v1179
      %v1192 = vadd.f32 %v975, %v1182
      %s1193 = scalar_lea.vmem %s1, 28
      %v1194 = vld [vmem:[%s1193] sm:$0xf]
      %1195 = vrot.lane.b32.xlu0 %v1101, 120
      %v1196 = vpop.permute.xlu0 %1195
      %1197 = vrot.lane.b32.xlu0 %v1102, 120
      %v1198 = vpop.permute.xlu0 %1197
      %1199 = vrot.lane.b32.xlu0 %v1103, 120
      %v1200 = vpop.permute.xlu0 %1199
      %1201 = vrot.lane.b32.xlu0 %v1104, 120
      %v1202 = vpop.permute.xlu0 %1201
      %v1204 = vsel %vm455, %v1196, 0
      %v1207 = vsel %vm455, %v1198, 0
      %v1210 = vsel %vm455, %v1200, 0
      %v1213 = vsel %vm455, %v1202, 0
      %v1216 = vsel %vm468, %v1194, 0
      %1218 = vmatprep.subr.bf16.mxu0 0
      %1219 = vmatpush1.bf16.msra.mxu0 %v1216
      %1220 = vmatprep.subr.bf16.mxu0 0
      %1221 = vmatpush1.bf16.msra.mxu0 0
      %1222 = vmatprep.subr.bf16.mxu0 0
      %1223 = vmatpush1.bf16.msra.mxu0 0
      %1224 = vmatprep.subr.bf16.mxu0 0
      %1225 = vmatpush1.bf16.msra.mxu0 0
      %1226 = vmatprep.subr.bf16.mxu0 0
      %1227 = vmatpush1.bf16.msra.mxu0 0
      %1228 = vmatprep.subr.bf16.mxu0 0
      %1229 = vmatpush1.bf16.msra.mxu0 0
      %1230 = vmatprep.subr.bf16.mxu0 0
      %1231 = vmatpush1.bf16.msra.mxu0 0
      %1232 = vmatprep.subr.bf16.mxu0 0
      %1233 = vmatpush1.bf16.msra.mxu0 0
      %1234 = vmatprep.subr.bf16.mxu0 0
      %1235 = vmatpush1.bf16.msra.mxu0 0
      %1236 = vmatprep.subr.bf16.mxu0 0
      %1237 = vmatpush1.bf16.msra.mxu0 0
      %1238 = vmatprep.subr.bf16.mxu0 0
      %1239 = vmatpush1.bf16.msra.mxu0 0
      %1240 = vmatprep.subr.bf16.mxu0 0
      %1241 = vmatpush1.bf16.msra.mxu0 0
      %1242 = vmatprep.subr.bf16.mxu0 0
      %1243 = vmatpush1.bf16.msra.mxu0 0
      %1244 = vmatprep.subr.bf16.mxu0 0
      %1245 = vmatpush1.bf16.msra.mxu0 0
      %1246 = vmatprep.subr.bf16.mxu0 0
      %1247 = vmatpush1.bf16.msra.mxu0 0
      %1248 = vmatprep.subr.bf16.mxu0 0
      %1249 = vmatpush1.bf16.msra.mxu0 0
      %1250 = vmatprep.mubr.bf16.mxu0 0
      %1251 = vmatmul.mubr.bf16.gmra.mrb[0].mxu0 %v1204
      %v1252 = vpop.f32.mrb[0].mxu0
      %v1253 = vadd.f32 0.0, %v1252
      %v1254 = vpop.f32.mrb[0].mxu0
      %v1255 = vpop.f32.mrb[0].mxu0
      %v1256 = vadd.f32 0.0, %v1255
      %v1257 = vpop.f32.mrb[0].mxu0
      %1258 = vmatprep.mubr.bf16.mxu0 0
      %1259 = vmatmul.mubr.bf16.gmra.mrb[0].mxu0 %v1207
      %v1260 = vpop.f32.mrb[0].mxu0
      %v1261 = vadd.f32 0.0, %v1260
      %v1262 = vpop.f32.mrb[0].mxu0
      %v1263 = vpop.f32.mrb[0].mxu0
      %v1264 = vadd.f32 0.0, %v1263
      %v1265 = vpop.f32.mrb[0].mxu0
      %1266 = vmatprep.mubr.bf16.mxu0 0
      %1267 = vmatmul.mubr.bf16.gmra.mrb[0].mxu0 %v1210
      %v1268 = vpop.f32.mrb[0].mxu0
      %v1269 = vadd.f32 0.0, %v1268
      %v1270 = vpop.f32.mrb[0].mxu0
      %v1271 = vpop.f32.mrb[0].mxu0
      %v1272 = vadd.f32 0.0, %v1271
      %v1273 = vpop.f32.mrb[0].mxu0
      %1274 = vmatprep.mubr.bf16.mxu0 0
      %1275 = vmatmul.mubr.bf16.gmra.mrb[0].mxu0 %v1213
      %v1276 = vpop.f32.mrb[0].mxu0
      %v1277 = vadd.f32 0.0, %v1276
      %v1278 = vpop.f32.mrb[0].mxu0
      %v1279 = vpop.f32.mrb[0].mxu0
      %v1280 = vadd.f32 0.0, %v1279
      %v1281 = vpop.f32.mrb[0].mxu0
      %1282 = vdwg.mxu0
      %v1283 = vadd.f32 %v1066, %v1253
      %v1284 = vadd.f32 %v1067, %v1256
      %v1285 = vadd.f32 %v1068, %v1261
      %v1286 = vadd.f32 %v1069, %v1264
      %v1287 = vadd.f32 %v1070, %v1269
      %v1288 = vadd.f32 %v1071, %v1272
      %v1289 = vadd.f32 %v1072, %v1277
      %v1290 = vadd.f32 %v1073, %v1280
      %v1291 = vld [vmem:[%s1074] sm:$0xf]
      %v1292 = vld [vmem:[%s1074 + $0x4] sm:$0x1]
      %v1293 = vld [vmem:[%s1074 + $0x8] sm:$0xf]
      %v1294 = vld [vmem:[%s1074 + $0xc] sm:$0x1]
      %v1295 = vld [vmem:[%s1074 + $0x10] sm:$0xf]
      %v1296 = vld [vmem:[%s1074 + $0x14] sm:$0x1]
      %v1297 = vld [vmem:[%s1074 + $0x18] sm:$0xf]
      %v1298 = vld [vmem:[%s1074 + $0x1c] sm:$0x1]
      %v1299 = vld [vmem:[%s1074 + $0x20] sm:$0xf]
      %v1300 = vld [vmem:[%s1074 + $0x24] sm:$0x1]
      %v1301 = vld [vmem:[%s1074 + $0x28] sm:$0xf]
      %v1302 = vld [vmem:[%s1074 + $0x2c] sm:$0x1]
      %v1303 = vld [vmem:[%s1074 + $0x30] sm:$0xf]
      %v1304 = vld [vmem:[%s1074 + $0x34] sm:$0x1]
      %v1305 = vld [vmem:[%s1074 + $0x38] sm:$0xf]
      %v1306 = vld [vmem:[%s1074 + $0x3c] sm:$0x1]
      %v1308 = vshrl.u32 %v1291, 16
      %v1310 = vrot.slane %v1308, 4
      %v1311 = vshll.u32 %v1291, 16
      %v1313 = vrot.slane %v1311, 5
      %v1314 = vor.u32 %v1310, %v1313
      %v1315 = vrot.slane %v1314, 4
      %v1317 = vshll.u32 %v1292, 16
      %v1319 = vrot.slane %v1317, 5
      %v1320 = vsel %vm328, %v1315, %v1319
      %v1322 = vshrl.u32 %v1293, 16
      %v1324 = vrot.slane %v1322, 4
      %v1325 = vshll.u32 %v1293, 16
      %v1327 = vrot.slane %v1325, 5
      %v1328 = vor.u32 %v1324, %v1327
      %v1329 = vrot.slane %v1328, 4
      %v1331 = vshll.u32 %v1294, 16
      %v1333 = vrot.slane %v1331, 5
      %v1334 = vsel %vm328, %v1329, %v1333
      %v1336 = vshrl.u32 %v1295, 16
      %v1338 = vrot.slane %v1336, 4
      %v1339 = vshll.u32 %v1295, 16
      %v1341 = vrot.slane %v1339, 5
      %v1342 = vor.u32 %v1338, %v1341
      %v1343 = vrot.slane %v1342, 4
      %v1345 = vshll.u32 %v1296, 16
      %v1347 = vrot.slane %v1345, 5
      %v1348 = vsel %vm328, %v1343, %v1347
      %v1350 = vshrl.u32 %v1297, 16
      %v1352 = vrot.slane %v1350, 4
      %v1353 = vshll.u32 %v1297, 16
      %v1355 = vrot.slane %v1353, 5
      %v1356 = vor.u32 %v1352, %v1355
      %v1357 = vrot.slane %v1356, 4
      %v1359 = vshll.u32 %v1298, 16
      %v1361 = vrot.slane %v1359, 5
      %v1362 = vsel %vm328, %v1357, %v1361
      %v1364 = vshrl.u32 %v1299, 16
      %v1366 = vrot.slane %v1364, 4
      %v1367 = vshll.u32 %v1299, 16
      %v1369 = vrot.slane %v1367, 5
      %v1370 = vor.u32 %v1366, %v1369
      %v1371 = vrot.slane %v1370, 4
      %v1373 = vshll.u32 %v1300, 16
      %v1375 = vrot.slane %v1373, 5
      %v1376 = vsel %vm328, %v1371, %v1375
      %v1378 = vshrl.u32 %v1301, 16
      %v1380 = vrot.slane %v1378, 4
      %v1381 = vshll.u32 %v1301, 16
      %v1383 = vrot.slane %v1381, 5
      %v1384 = vor.u32 %v1380, %v1383
      %v1385 = vrot.slane %v1384, 4
      %v1387 = vshll.u32 %v1302, 16
      %v1389 = vrot.slane %v1387, 5
      %v1390 = vsel %vm328, %v1385, %v1389
      %v1392 = vshrl.u32 %v1303, 16
      %v1394 = vrot.slane %v1392, 4
      %v1395 = vshll.u32 %v1303, 16
      %v1397 = vrot.slane %v1395, 5
      %v1398 = vor.u32 %v1394, %v1397
      %v1399 = vrot.slane %v1398, 4
      %v1401 = vshll.u32 %v1304, 16
      %v1403 = vrot.slane %v1401, 5
      %v1404 = vsel %vm328, %v1399, %v1403
      %v1406 = vshrl.u32 %v1305, 16
      %v1408 = vrot.slane %v1406, 4
      %v1409 = vshll.u32 %v1305, 16
      %v1411 = vrot.slane %v1409, 5
      %v1412 = vor.u32 %v1408, %v1411
      %v1413 = vrot.slane %v1412, 4
      %v1415 = vshll.u32 %v1306, 16
      %v1417 = vrot.slane %v1415, 5
      %v1418 = vsel %vm328, %v1413, %v1417
      %s1419 = scalar_lea.vmem %s1, 32
      %v1420 = vld [vmem:[%s1419] sm:$0xf]
      %v1421 = vunpack.c.l.b16 %v1320
      %v1422 = vunpack.c.l.b16 %v1334
      %v1423 = vunpack.c.l.b16 %v1348
      %v1424 = vunpack.c.l.b16 %v1362
      %v1425 = vunpack.c.l.b16 %v1376
      %v1426 = vunpack.c.l.b16 %v1390
      %v1427 = vunpack.c.l.b16 %v1404
      %v1428 = vunpack.c.l.b16 %v1418
      %v1429 = vpack.c.b16 %v1422, %v1421
      %v1430 = vpack.c.b16 %v1424, %v1423
      %v1431 = vpack.c.b16 %v1426, %v1425
      %v1432 = vpack.c.b16 %v1428, %v1427
      %v1434 = vsel %vm455, %v1429, 0
      %v1437 = vsel %vm455, %v1430, 0
      %v1440 = vsel %vm455, %v1431, 0
      %v1443 = vsel %vm455, %v1432, 0
      %v1446 = vsel %vm468, %v1420, 0
      %1448 = vmatprep.subr.bf16.mxu0 0
      %1449 = vmatpush1.bf16.msra.mxu0 %v1446
      %1450 = vmatprep.subr.bf16.mxu0 0
      %1451 = vmatpush1.bf16.msra.mxu0 0
      %1452 = vmatprep.subr.bf16.mxu0 0
      %1453 = vmatpush1.bf16.msra.mxu0 0
      %1454 = vmatprep.subr.bf16.mxu0 0
      %1455 = vmatpush1.bf16.msra.mxu0 0
      %1456 = vmatprep.subr.bf16.mxu0 0
      %1457 = vmatpush1.bf16.msra.mxu0 0
      %1458 = vmatprep.subr.bf16.mxu0 0
      %1459 = vmatpush1.bf16.msra.mxu0 0
      %1460 = vmatprep.subr.bf16.mxu0 0
      %1461 = vmatpush1.bf16.msra.mxu0 0
      %1462 = vmatprep.subr.bf16.mxu0 0
      %1463 = vmatpush1.bf16.msra.mxu0 0
      %1464 = vmatprep.subr.bf16.mxu0 0
      %1465 = vmatpush1.bf16.msra.mxu0 0
      %1466 = vmatprep.subr.bf16.mxu0 0
      %1467 = vmatpush1.bf16.msra.mxu0 0
      %1468 = vmatprep.subr.bf16.mxu0 0
      %1469 = vmatpush1.bf16.msra.mxu0 0
      %1470 = vmatprep.subr.bf16.mxu0 0
      %1471 = vmatpush1.bf16.msra.mxu0 0
      %1472 = vmatprep.subr.bf16.mxu0 0
      %1473 = vmatpush1.bf16.msra.mxu0 0
      %1474 = vmatprep.subr.bf16.mxu0 0
      %1475 = vmatpush1.bf16.msra.mxu0 0
      %1476 = vmatprep.subr.bf16.mxu0 0
      %1477 = vmatpush1.bf16.msra.mxu0 0
      %1478 = vmatprep.subr.bf16.mxu0 0
      %1479 = vmatpush1.bf16.msra.mxu0 0
      %1480 = vmatprep.mubr.bf16.mxu0 0
      %1481 = vmatmul.mubr.bf16.gmra.mrb[0].mxu0 %v1434
      %v1482 = vpop.f32.mrb[0].mxu0
      %v1483 = vadd.f32 0.0, %v1482
      %v1484 = vpop.f32.mrb[0].mxu0
      %v1485 = vpop.f32.mrb[0].mxu0
      %v1486 = vadd.f32 0.0, %v1485
      %v1487 = vpop.f32.mrb[0].mxu0
      %1488 = vmatprep.mubr.bf16.mxu0 0
      %1489 = vmatmul.mubr.bf16.gmra.mrb[0].mxu0 %v1437
      %v1490 = vpop.f32.mrb[0].mxu0
      %v1491 = vadd.f32 0.0, %v1490
      %v1492 = vpop.f32.mrb[0].mxu0
      %v1493 = vpop.f32.mrb[0].mxu0
      %v1494 = vadd.f32 0.0, %v1493
      %v1495 = vpop.f32.mrb[0].mxu0
      %1496 = vmatprep.mubr.bf16.mxu0 0
      %1497 = vmatmul.mubr.bf16.gmra.mrb[0].mxu0 %v1440
      %v1498 = vpop.f32.mrb[0].mxu0
      %v1499 = vadd.f32 0.0, %v1498
      %v1500 = vpop.f32.mrb[0].mxu0
      %v1501 = vpop.f32.mrb[0].mxu0
      %v1502 = vadd.f32 0.0, %v1501
      %v1503 = vpop.f32.mrb[0].mxu0
      %1504 = vmatprep.mubr.bf16.mxu0 0
      %1505 = vmatmul.mubr.bf16.gmra.mrb[0].mxu0 %v1443
      %v1506 = vpop.f32.mrb[0].mxu0
      %v1507 = vadd.f32 0.0, %v1506
      %v1508 = vpop.f32.mrb[0].mxu0
      %v1509 = vpop.f32.mrb[0].mxu0
      %v1510 = vadd.f32 0.0, %v1509
      %v1511 = vpop.f32.mrb[0].mxu0
      %1512 = vdwg.mxu0
      %v1513 = vadd.f32 %v1185, %v1483
      %v1514 = vadd.f32 %v1186, %v1486
      %v1515 = vadd.f32 %v1187, %v1491
      %v1516 = vadd.f32 %v1188, %v1494
      %v1517 = vadd.f32 %v1189, %v1499
      %v1518 = vadd.f32 %v1190, %v1502
      %v1519 = vadd.f32 %v1191, %v1507
      %v1520 = vadd.f32 %v1192, %v1510
      %s1521 = scalar_lea.vmem %s1, 36
      %v1522 = vld [vmem:[%s1521] sm:$0xf]
      %1523 = vrot.lane.b32.xlu0 %v1429, 120
      %v1524 = vpop.permute.xlu0 %1523
      %1525 = vrot.lane.b32.xlu0 %v1430, 120
      %v1526 = vpop.permute.xlu0 %1525
      %1527 = vrot.lane.b32.xlu0 %v1431, 120
      %v1528 = vpop.permute.xlu0 %1527
      %1529 = vrot.lane.b32.xlu0 %v1432, 120
      %v1530 = vpop.permute.xlu0 %1529
      %v1532 = vsel %vm455, %v1524, 0
      %v1535 = vsel %vm455, %v1526, 0
      %v1538 = vsel %vm455, %v1528, 0
      %v1541 = vsel %vm455, %v1530, 0
      %v1544 = vsel %vm468, %v1522, 0
      %1546 = vmatprep.subr.bf16.mxu0 0
      %1547 = vmatpush1.bf16.msra.mxu0 %v1544
      %1548 = vmatprep.subr.bf16.mxu0 0
      %1549 = vmatpush1.bf16.msra.mxu0 0
      %1550 = vmatprep.subr.bf16.mxu0 0
      %1551 = vmatpush1.bf16.msra.mxu0 0
      %1552 = vmatprep.subr.bf16.mxu0 0
      %1553 = vmatpush1.bf16.msra.mxu0 0
      %1554 = vmatprep.subr.bf16.mxu0 0
      %1555 = vmatpush1.bf16.msra.mxu0 0
      %1556 = vmatprep.subr.bf16.mxu0 0
      %1557 = vmatpush1.bf16.msra.mxu0 0
      %1558 = vmatprep.subr.bf16.mxu0 0
      %1559 = vmatpush1.bf16.msra.mxu0 0
      %1560 = vmatprep.subr.bf16.mxu0 0
      %1561 = vmatpush1.bf16.msra.mxu0 0
      %1562 = vmatprep.subr.bf16.mxu0 0
      %1563 = vmatpush1.bf16.msra.mxu0 0
      %1564 = vmatprep.subr.bf16.mxu0 0
      %1565 = vmatpush1.bf16.msra.mxu0 0
      %1566 = vmatprep.subr.bf16.mxu0 0
      %1567 = vmatpush1.bf16.msra.mxu0 0
      %1568 = vmatprep.subr.bf16.mxu0 0
      %1569 = vmatpush1.bf16.msra.mxu0 0
      %1570 = vmatprep.subr.bf16.mxu0 0
      %1571 = vmatpush1.bf16.msra.mxu0 0
      %1572 = vmatprep.subr.bf16.mxu0 0
      %1573 = vmatpush1.bf16.msra.mxu0 0
      %1574 = vmatprep.subr.bf16.mxu0 0
      %1575 = vmatpush1.bf16.msra.mxu0 0
      %1576 = vmatprep.subr.bf16.mxu0 0
      %1577 = vmatpush1.bf16.msra.mxu0 0
      %1578 = vmatprep.mubr.bf16.mxu0 0
      %1579 = vmatmul.mubr.bf16.gmra.mrb[0].mxu0 %v1532
      %v1580 = vpop.f32.mrb[0].mxu0
      %v1581 = vadd.f32 0.0, %v1580
      %v1582 = vpop.f32.mrb[0].mxu0
      %v1583 = vpop.f32.mrb[0].mxu0
      %v1584 = vadd.f32 0.0, %v1583
      %v1585 = vpop.f32.mrb[0].mxu0
      %1586 = vmatprep.mubr.bf16.mxu0 0
      %1587 = vmatmul.mubr.bf16.gmra.mrb[0].mxu0 %v1535
      %v1588 = vpop.f32.mrb[0].mxu0
      %v1589 = vadd.f32 0.0, %v1588
      %v1590 = vpop.f32.mrb[0].mxu0
      %v1591 = vpop.f32.mrb[0].mxu0
      %v1592 = vadd.f32 0.0, %v1591
      %v1593 = vpop.f32.mrb[0].mxu0
      %1594 = vmatprep.mubr.bf16.mxu0 0
      %1595 = vmatmul.mubr.bf16.gmra.mrb[0].mxu0 %v1538
      %v1596 = vpop.f32.mrb[0].mxu0
      %v1597 = vadd.f32 0.0, %v1596
      %v1598 = vpop.f32.mrb[0].mxu0
      %v1599 = vpop.f32.mrb[0].mxu0
      %v1600 = vadd.f32 0.0, %v1599
      %v1601 = vpop.f32.mrb[0].mxu0
      %1602 = vmatprep.mubr.bf16.mxu0 0
      %1603 = vmatmul.mubr.bf16.gmra.mrb[0].mxu0 %v1541
      %v1604 = vpop.f32.mrb[0].mxu0
      %v1605 = vadd.f32 0.0, %v1604
      %v1606 = vpop.f32.mrb[0].mxu0
      %v1607 = vpop.f32.mrb[0].mxu0
      %v1608 = vadd.f32 0.0, %v1607
      %v1609 = vpop.f32.mrb[0].mxu0
      %1610 = vdwg.mxu0
      %v1611 = vadd.f32 %v1283, %v1581
      %v1612 = vadd.f32 %v1284, %v1584
      %v1613 = vadd.f32 %v1285, %v1589
      %v1614 = vadd.f32 %v1286, %v1592
      %v1615 = vadd.f32 %v1287, %v1597
      %v1616 = vadd.f32 %v1288, %v1600
      %v1617 = vadd.f32 %v1289, %v1605
      %v1618 = vadd.f32 %v1290, %v1608
      %v1619 = vld [vmem:[%s1074] sm:$0xe]
      %v1620 = vld [vmem:[%s1074 + $0x8] sm:$0xe]
      %v1621 = vld [vmem:[%s1074 + $0x10] sm:$0xe]
      %v1622 = vld [vmem:[%s1074 + $0x18] sm:$0xe]
      %v1623 = vld [vmem:[%s1074 + $0x20] sm:$0xe]
      %v1624 = vld [vmem:[%s1074 + $0x28] sm:$0xe]
      %v1625 = vld [vmem:[%s1074 + $0x30] sm:$0xe]
      %v1626 = vld [vmem:[%s1074 + $0x38] sm:$0xe]
      %v1643 = vrot.slane %v1619, 5
      %v1644 = vrot.slane %v1643, 4
      %v1645 = vrot.slane %v1292, 5
      %v1646 = vsel %vm841, %v1644, %v1645
      %v1647 = vrot.slane %v1620, 5
      %v1648 = vrot.slane %v1647, 4
      %v1649 = vrot.slane %v1294, 5
      %v1650 = vsel %vm841, %v1648, %v1649
      %v1651 = vrot.slane %v1621, 5
      %v1652 = vrot.slane %v1651, 4
      %v1653 = vrot.slane %v1296, 5
      %v1654 = vsel %vm841, %v1652, %v1653
      %v1655 = vrot.slane %v1622, 5
      %v1656 = vrot.slane %v1655, 4
      %v1657 = vrot.slane %v1298, 5
      %v1658 = vsel %vm841, %v1656, %v1657
      %v1659 = vrot.slane %v1623, 5
      %v1660 = vrot.slane %v1659, 4
      %v1661 = vrot.slane %v1300, 5
      %v1662 = vsel %vm841, %v1660, %v1661
      %v1663 = vrot.slane %v1624, 5
      %v1664 = vrot.slane %v1663, 4
      %v1665 = vrot.slane %v1302, 5
      %v1666 = vsel %vm841, %v1664, %v1665
      %v1667 = vrot.slane %v1625, 5
      %v1668 = vrot.slane %v1667, 4
      %v1669 = vrot.slane %v1304, 5
      %v1670 = vsel %vm841, %v1668, %v1669
      %v1671 = vrot.slane %v1626, 5
      %v1672 = vrot.slane %v1671, 4
      %v1673 = vrot.slane %v1306, 5
      %v1674 = vsel %vm841, %v1672, %v1673
      %s1675 = scalar_lea.vmem %s1, 40
      %v1676 = vld [vmem:[%s1675] sm:$0xf]
      %v1677 = vunpack.c.l.b16 %v1646
      %v1678 = vunpack.c.l.b16 %v1650
      %v1679 = vunpack.c.l.b16 %v1654
      %v1680 = vunpack.c.l.b16 %v1658
      %v1681 = vunpack.c.l.b16 %v1662
      %v1682 = vunpack.c.l.b16 %v1666
      %v1683 = vunpack.c.l.b16 %v1670
      %v1684 = vunpack.c.l.b16 %v1674
      %v1685 = vpack.c.b16 %v1678, %v1677
      %v1686 = vpack.c.b16 %v1680, %v1679
      %v1687 = vpack.c.b16 %v1682, %v1681
      %v1688 = vpack.c.b16 %v1684, %v1683
      %v1690 = vsel %vm455, %v1685, 0
      %v1693 = vsel %vm455, %v1686, 0
      %v1696 = vsel %vm455, %v1687, 0
      %v1699 = vsel %vm455, %v1688, 0
      %v1702 = vsel %vm468, %v1676, 0
      %1704 = vmatprep.subr.bf16.mxu0 0
      %1705 = vmatpush1.bf16.msra.mxu0 %v1702
      %1706 = vmatprep.subr.bf16.mxu0 0
      %1707 = vmatpush1.bf16.msra.mxu0 0
      %1708 = vmatprep.subr.bf16.mxu0 0
      %1709 = vmatpush1.bf16.msra.mxu0 0
      %1710 = vmatprep.subr.bf16.mxu0 0
      %1711 = vmatpush1.bf16.msra.mxu0 0
      %1712 = vmatprep.subr.bf16.mxu0 0
      %1713 = vmatpush1.bf16.msra.mxu0 0
      %1714 = vmatprep.subr.bf16.mxu0 0
      %1715 = vmatpush1.bf16.msra.mxu0 0
      %1716 = vmatprep.subr.bf16.mxu0 0
      %1717 = vmatpush1.bf16.msra.mxu0 0
      %1718 = vmatprep.subr.bf16.mxu0 0
      %1719 = vmatpush1.bf16.msra.mxu0 0
      %1720 = vmatprep.subr.bf16.mxu0 0
      %1721 = vmatpush1.bf16.msra.mxu0 0
      %1722 = vmatprep.subr.bf16.mxu0 0
      %1723 = vmatpush1.bf16.msra.mxu0 0
      %1724 = vmatprep.subr.bf16.mxu0 0
      %1725 = vmatpush1.bf16.msra.mxu0 0
      %1726 = vmatprep.subr.bf16.mxu0 0
      %1727 = vmatpush1.bf16.msra.mxu0 0
      %1728 = vmatprep.subr.bf16.mxu0 0
      %1729 = vmatpush1.bf16.msra.mxu0 0
      %1730 = vmatprep.subr.bf16.mxu0 0
      %1731 = vmatpush1.bf16.msra.mxu0 0
      %1732 = vmatprep.subr.bf16.mxu0 0
      %1733 = vmatpush1.bf16.msra.mxu0 0
      %1734 = vmatprep.subr.bf16.mxu0 0
      %1735 = vmatpush1.bf16.msra.mxu0 0
      %1736 = vmatprep.mubr.bf16.mxu0 0
      %1737 = vmatmul.mubr.bf16.gmra.mrb[0].mxu0 %v1690
      %v1738 = vpop.f32.mrb[0].mxu0
      %v1739 = vadd.f32 0.0, %v1738
      %v1740 = vpop.f32.mrb[0].mxu0
      %v1741 = vpop.f32.mrb[0].mxu0
      %v1742 = vadd.f32 0.0, %v1741
      %v1743 = vpop.f32.mrb[0].mxu0
      %1744 = vmatprep.mubr.bf16.mxu0 0
      %1745 = vmatmul.mubr.bf16.gmra.mrb[0].mxu0 %v1693
      %v1746 = vpop.f32.mrb[0].mxu0
      %v1747 = vadd.f32 0.0, %v1746
      %v1748 = vpop.f32.mrb[0].mxu0
      %v1749 = vpop.f32.mrb[0].mxu0
      %v1750 = vadd.f32 0.0, %v1749
      %v1751 = vpop.f32.mrb[0].mxu0
      %1752 = vmatprep.mubr.bf16.mxu0 0
      %1753 = vmatmul.mubr.bf16.gmra.mrb[0].mxu0 %v1696
      %v1754 = vpop.f32.mrb[0].mxu0
      %v1755 = vadd.f32 0.0, %v1754
      %v1756 = vpop.f32.mrb[0].mxu0
      %v1757 = vpop.f32.mrb[0].mxu0
      %v1758 = vadd.f32 0.0, %v1757
      %v1759 = vpop.f32.mrb[0].mxu0
      %1760 = vmatprep.mubr.bf16.mxu0 0
      %1761 = vmatmul.mubr.bf16.gmra.mrb[0].mxu0 %v1699
      %v1762 = vpop.f32.mrb[0].mxu0
      %v1763 = vadd.f32 0.0, %v1762
      %v1764 = vpop.f32.mrb[0].mxu0
      %v1765 = vpop.f32.mrb[0].mxu0
      %v1766 = vadd.f32 0.0, %v1765
      %v1767 = vpop.f32.mrb[0].mxu0
      %1768 = vdwg.mxu0
      %v1769 = vadd.f32 %v1513, %v1739
      %v1770 = vadd.f32 %v1514, %v1742
      %v1771 = vadd.f32 %v1515, %v1747
      %v1772 = vadd.f32 %v1516, %v1750
      %v1773 = vadd.f32 %v1517, %v1755
      %v1774 = vadd.f32 %v1518, %v1758
      %v1775 = vadd.f32 %v1519, %v1763
      %v1776 = vadd.f32 %v1520, %v1766
      %s1777 = scalar_lea.vmem %s1, 44
      %v1778 = vld [vmem:[%s1777] sm:$0xf]
      %1779 = vrot.lane.b32.xlu0 %v1685, 120
      %v1780 = vpop.permute.xlu0 %1779
      %1781 = vrot.lane.b32.xlu0 %v1686, 120
      %v1782 = vpop.permute.xlu0 %1781
      %1783 = vrot.lane.b32.xlu0 %v1687, 120
      %v1784 = vpop.permute.xlu0 %1783
      %1785 = vrot.lane.b32.xlu0 %v1688, 120
      %v1786 = vpop.permute.xlu0 %1785
      %v1788 = vsel %vm455, %v1780, 0
      %v1791 = vsel %vm455, %v1782, 0
      %v1794 = vsel %vm455, %v1784, 0
      %v1797 = vsel %vm455, %v1786, 0
      %v1800 = vsel %vm468, %v1778, 0
      %1802 = vmatprep.subr.bf16.mxu0 0
      %1803 = vmatpush1.bf16.msra.mxu0 %v1800
      %1804 = vmatprep.subr.bf16.mxu0 0
      %1805 = vmatpush1.bf16.msra.mxu0 0
      %1806 = vmatprep.subr.bf16.mxu0 0
      %1807 = vmatpush1.bf16.msra.mxu0 0
      %1808 = vmatprep.subr.bf16.mxu0 0
      %1809 = vmatpush1.bf16.msra.mxu0 0
      %1810 = vmatprep.subr.bf16.mxu0 0
      %1811 = vmatpush1.bf16.msra.mxu0 0
      %1812 = vmatprep.subr.bf16.mxu0 0
      %1813 = vmatpush1.bf16.msra.mxu0 0
      %1814 = vmatprep.subr.bf16.mxu0 0
      %1815 = vmatpush1.bf16.msra.mxu0 0
      %1816 = vmatprep.subr.bf16.mxu0 0
      %1817 = vmatpush1.bf16.msra.mxu0 0
      %1818 = vmatprep.subr.bf16.mxu0 0
      %1819 = vmatpush1.bf16.msra.mxu0 0
      %1820 = vmatprep.subr.bf16.mxu0 0
      %1821 = vmatpush1.bf16.msra.mxu0 0
      %1822 = vmatprep.subr.bf16.mxu0 0
      %1823 = vmatpush1.bf16.msra.mxu0 0
      %1824 = vmatprep.subr.bf16.mxu0 0
      %1825 = vmatpush1.bf16.msra.mxu0 0
      %1826 = vmatprep.subr.bf16.mxu0 0
      %1827 = vmatpush1.bf16.msra.mxu0 0
      %1828 = vmatprep.subr.bf16.mxu0 0
      %1829 = vmatpush1.bf16.msra.mxu0 0
      %1830 = vmatprep.subr.bf16.mxu0 0
      %1831 = vmatpush1.bf16.msra.mxu0 0
      %1832 = vmatprep.subr.bf16.mxu0 0
      %1833 = vmatpush1.bf16.msra.mxu0 0
      %1834 = vmatprep.mubr.bf16.mxu0 0
      %1835 = vmatmul.mubr.bf16.gmra.mrb[0].mxu0 %v1788
      %v1836 = vpop.f32.mrb[0].mxu0
      %v1837 = vadd.f32 0.0, %v1836
      %v1838 = vpop.f32.mrb[0].mxu0
      %v1839 = vpop.f32.mrb[0].mxu0
      %v1840 = vadd.f32 0.0, %v1839
      %v1841 = vpop.f32.mrb[0].mxu0
      %1842 = vmatprep.mubr.bf16.mxu0 0
      %1843 = vmatmul.mubr.bf16.gmra.mrb[0].mxu0 %v1791
      %v1844 = vpop.f32.mrb[0].mxu0
      %v1845 = vadd.f32 0.0, %v1844
      %v1846 = vpop.f32.mrb[0].mxu0
      %v1847 = vpop.f32.mrb[0].mxu0
      %v1848 = vadd.f32 0.0, %v1847
      %v1849 = vpop.f32.mrb[0].mxu0
      %1850 = vmatprep.mubr.bf16.mxu0 0
      %1851 = vmatmul.mubr.bf16.gmra.mrb[0].mxu0 %v1794
      %v1852 = vpop.f32.mrb[0].mxu0
      %v1853 = vadd.f32 0.0, %v1852
      %v1854 = vpop.f32.mrb[0].mxu0
      %v1855 = vpop.f32.mrb[0].mxu0
      %v1856 = vadd.f32 0.0, %v1855
      %v1857 = vpop.f32.mrb[0].mxu0
      %1858 = vmatprep.mubr.bf16.mxu0 0
      %1859 = vmatmul.mubr.bf16.gmra.mrb[0].mxu0 %v1797
      %v1860 = vpop.f32.mrb[0].mxu0
      %v1861 = vadd.f32 0.0, %v1860
      %v1862 = vpop.f32.mrb[0].mxu0
      %v1863 = vpop.f32.mrb[0].mxu0
      %v1864 = vadd.f32 0.0, %v1863
      %v1865 = vpop.f32.mrb[0].mxu0
      %1866 = vdwg.mxu0
      %v1867 = vadd.f32 %v1611, %v1837
      %v1868 = vadd.f32 %v1612, %v1840
      %v1869 = vadd.f32 %v1613, %v1845
      %v1870 = vadd.f32 %v1614, %v1848
      %v1871 = vadd.f32 %v1615, %v1853
      %v1872 = vadd.f32 %v1616, %v1856
      %v1873 = vadd.f32 %v1617, %v1861
      %v1874 = vadd.f32 %v1618, %v1864
      %s1875 = scalar_lea.vmem %s300, 16
      %v1876 = vld [vmem:[%s1875] sm:$0xf]
      %v1877 = vld [vmem:[%s1875 + $0x8] sm:$0xf]
      %v1878 = vld [vmem:[%s1875 + $0x10] sm:$0xf]
      %v1879 = vld [vmem:[%s1875 + $0x18] sm:$0xf]
      %v1880 = vld [vmem:[%s1875 + $0x20] sm:$0xf]
      %v1881 = vld [vmem:[%s1875 + $0x28] sm:$0xf]
      %v1882 = vld [vmem:[%s1875 + $0x30] sm:$0xf]
      %v1883 = vld [vmem:[%s1875 + $0x38] sm:$0xf]
      %s1884 = scalar_lea.vmem %s1, 48
      %v1885 = vld [vmem:[%s1884] sm:$0xf]
      %v1894 = vunpack.c.l.b16 %v1876
      %v1895 = vunpack.c.l.b16 %v1877
      %v1896 = vunpack.c.l.b16 %v1878
      %v1897 = vunpack.c.l.b16 %v1879
      %v1898 = vunpack.c.l.b16 %v1880
      %v1899 = vunpack.c.l.b16 %v1881
      %v1900 = vunpack.c.l.b16 %v1882
      %v1901 = vunpack.c.l.b16 %v1883
      %v1902 = vpack.c.b16 %v1895, %v1894
      %v1903 = vpack.c.b16 %v1897, %v1896
      %v1904 = vpack.c.b16 %v1899, %v1898
      %v1905 = vpack.c.b16 %v1901, %v1900
      %v1907 = vsel %vm455, %v1902, 0
      %v1910 = vsel %vm455, %v1903, 0
      %v1913 = vsel %vm455, %v1904, 0
      %v1916 = vsel %vm455, %v1905, 0
      %v1919 = vsel %vm468, %v1885, 0
      %1921 = vmatprep.subr.bf16.mxu0 0
      %1922 = vmatpush1.bf16.msra.mxu0 %v1919
      %1923 = vmatprep.subr.bf16.mxu0 0
      %1924 = vmatpush1.bf16.msra.mxu0 0
      %1925 = vmatprep.subr.bf16.mxu0 0
      %1926 = vmatpush1.bf16.msra.mxu0 0
      %1927 = vmatprep.subr.bf16.mxu0 0
      %1928 = vmatpush1.bf16.msra.mxu0 0
      %1929 = vmatprep.subr.bf16.mxu0 0
      %1930 = vmatpush1.bf16.msra.mxu0 0
      %1931 = vmatprep.subr.bf16.mxu0 0
      %1932 = vmatpush1.bf16.msra.mxu0 0
      %1933 = vmatprep.subr.bf16.mxu0 0
      %1934 = vmatpush1.bf16.msra.mxu0 0
      %1935 = vmatprep.subr.bf16.mxu0 0
      %1936 = vmatpush1.bf16.msra.mxu0 0
      %1937 = vmatprep.subr.bf16.mxu0 0
      %1938 = vmatpush1.bf16.msra.mxu0 0
      %1939 = vmatprep.subr.bf16.mxu0 0
      %1940 = vmatpush1.bf16.msra.mxu0 0
      %1941 = vmatprep.subr.bf16.mxu0 0
      %1942 = vmatpush1.bf16.msra.mxu0 0
      %1943 = vmatprep.subr.bf16.mxu0 0
      %1944 = vmatpush1.bf16.msra.mxu0 0
      %1945 = vmatprep.subr.bf16.mxu0 0
      %1946 = vmatpush1.bf16.msra.mxu0 0
      %1947 = vmatprep.subr.bf16.mxu0 0
      %1948 = vmatpush1.bf16.msra.mxu0 0
      %1949 = vmatprep.subr.bf16.mxu0 0
      %1950 = vmatpush1.bf16.msra.mxu0 0
      %1951 = vmatprep.subr.bf16.mxu0 0
      %1952 = vmatpush1.bf16.msra.mxu0 0
      %1953 = vmatprep.mubr.bf16.mxu0 0
      %1954 = vmatmul.mubr.bf16.gmra.mrb[0].mxu0 %v1907
      %v1955 = vpop.f32.mrb[0].mxu0
      %v1956 = vadd.f32 0.0, %v1955
      %v1957 = vpop.f32.mrb[0].mxu0
      %v1958 = vpop.f32.mrb[0].mxu0
      %v1959 = vadd.f32 0.0, %v1958
      %v1960 = vpop.f32.mrb[0].mxu0
      %1961 = vmatprep.mubr.bf16.mxu0 0
      %1962 = vmatmul.mubr.bf16.gmra.mrb[0].mxu0 %v1910
      %v1963 = vpop.f32.mrb[0].mxu0
      %v1964 = vadd.f32 0.0, %v1963
      %v1965 = vpop.f32.mrb[0].mxu0
      %v1966 = vpop.f32.mrb[0].mxu0
      %v1967 = vadd.f32 0.0, %v1966
      %v1968 = vpop.f32.mrb[0].mxu0
      %1969 = vmatprep.mubr.bf16.mxu0 0
      %1970 = vmatmul.mubr.bf16.gmra.mrb[0].mxu0 %v1913
      %v1971 = vpop.f32.mrb[0].mxu0
      %v1972 = vadd.f32 0.0, %v1971
      %v1973 = vpop.f32.mrb[0].mxu0
      %v1974 = vpop.f32.mrb[0].mxu0
      %v1975 = vadd.f32 0.0, %v1974
      %v1976 = vpop.f32.mrb[0].mxu0
      %1977 = vmatprep.mubr.bf16.mxu0 0
      %1978 = vmatmul.mubr.bf16.gmra.mrb[0].mxu0 %v1916
      %v1979 = vpop.f32.mrb[0].mxu0
      %v1980 = vadd.f32 0.0, %v1979
      %v1981 = vpop.f32.mrb[0].mxu0
      %v1982 = vpop.f32.mrb[0].mxu0
      %v1983 = vadd.f32 0.0, %v1982
      %v1984 = vpop.f32.mrb[0].mxu0
      %1985 = vdwg.mxu0
      %v1986 = vadd.f32 %v1769, %v1956
      %v1987 = vadd.f32 %v1770, %v1959
      %v1988 = vadd.f32 %v1771, %v1964
      %v1989 = vadd.f32 %v1772, %v1967
      %v1990 = vadd.f32 %v1773, %v1972
      %v1991 = vadd.f32 %v1774, %v1975
      %v1992 = vadd.f32 %v1775, %v1980
      %v1993 = vadd.f32 %v1776, %v1983
      %s1994 = scalar_lea.vmem %s1, 52
      %v1995 = vld [vmem:[%s1994] sm:$0xf]
      %1996 = vrot.lane.b32.xlu0 %v1902, 120
      %v1997 = vpop.permute.xlu0 %1996
      %1998 = vrot.lane.b32.xlu0 %v1903, 120
      %v1999 = vpop.permute.xlu0 %1998
      %2000 = vrot.lane.b32.xlu0 %v1904, 120
      %v2001 = vpop.permute.xlu0 %2000
      %2002 = vrot.lane.b32.xlu0 %v1905, 120
      %v2003 = vpop.permute.xlu0 %2002
      %v2005 = vsel %vm455, %v1997, 0
      %v2008 = vsel %vm455, %v1999, 0
      %v2011 = vsel %vm455, %v2001, 0
      %v2014 = vsel %vm455, %v2003, 0
      %v2017 = vsel %vm468, %v1995, 0
      %2019 = vmatprep.subr.bf16.mxu0 0
      %2020 = vmatpush1.bf16.msra.mxu0 %v2017
      %2021 = vmatprep.subr.bf16.mxu0 0
      %2022 = vmatpush1.bf16.msra.mxu0 0
      %2023 = vmatprep.subr.bf16.mxu0 0
      %2024 = vmatpush1.bf16.msra.mxu0 0
      %2025 = vmatprep.subr.bf16.mxu0 0
      %2026 = vmatpush1.bf16.msra.mxu0 0
      %2027 = vmatprep.subr.bf16.mxu0 0
      %2028 = vmatpush1.bf16.msra.mxu0 0
      %2029 = vmatprep.subr.bf16.mxu0 0
      %2030 = vmatpush1.bf16.msra.mxu0 0
      %2031 = vmatprep.subr.bf16.mxu0 0
      %2032 = vmatpush1.bf16.msra.mxu0 0
      %2033 = vmatprep.subr.bf16.mxu0 0
      %2034 = vmatpush1.bf16.msra.mxu0 0
      %2035 = vmatprep.subr.bf16.mxu0 0
      %2036 = vmatpush1.bf16.msra.mxu0 0
      %2037 = vmatprep.subr.bf16.mxu0 0
      %2038 = vmatpush1.bf16.msra.mxu0 0
      %2039 = vmatprep.subr.bf16.mxu0 0
      %2040 = vmatpush1.bf16.msra.mxu0 0
      %2041 = vmatprep.subr.bf16.mxu0 0
      %2042 = vmatpush1.bf16.msra.mxu0 0
      %2043 = vmatprep.subr.bf16.mxu0 0
      %2044 = vmatpush1.bf16.msra.mxu0 0
      %2045 = vmatprep.subr.bf16.mxu0 0
      %2046 = vmatpush1.bf16.msra.mxu0 0
      %2047 = vmatprep.subr.bf16.mxu0 0
      %2048 = vmatpush1.bf16.msra.mxu0 0
      %2049 = vmatprep.subr.bf16.mxu0 0
      %2050 = vmatpush1.bf16.msra.mxu0 0
      %2051 = vmatprep.mubr.bf16.mxu0 0
      %2052 = vmatmul.mubr.bf16.gmra.mrb[0].mxu0 %v2005
      %v2053 = vpop.f32.mrb[0].mxu0
      %v2054 = vadd.f32 0.0, %v2053
      %v2055 = vpop.f32.mrb[0].mxu0
      %v2056 = vpop.f32.mrb[0].mxu0
      %v2057 = vadd.f32 0.0, %v2056
      %v2058 = vpop.f32.mrb[0].mxu0
      %2059 = vmatprep.mubr.bf16.mxu0 0
      %2060 = vmatmul.mubr.bf16.gmra.mrb[0].mxu0 %v2008
      %v2061 = vpop.f32.mrb[0].mxu0
      %v2062 = vadd.f32 0.0, %v2061
      %v2063 = vpop.f32.mrb[0].mxu0
      %v2064 = vpop.f32.mrb[0].mxu0
      %v2065 = vadd.f32 0.0, %v2064
      %v2066 = vpop.f32.mrb[0].mxu0
      %2067 = vmatprep.mubr.bf16.mxu0 0
      %2068 = vmatmul.mubr.bf16.gmra.mrb[0].mxu0 %v2011
      %v2069 = vpop.f32.mrb[0].mxu0
      %v2070 = vadd.f32 0.0, %v2069
      %v2071 = vpop.f32.mrb[0].mxu0
      %v2072 = vpop.f32.mrb[0].mxu0
      %v2073 = vadd.f32 0.0, %v2072
      %v2074 = vpop.f32.mrb[0].mxu0
      %2075 = vmatprep.mubr.bf16.mxu0 0
      %2076 = vmatmul.mubr.bf16.gmra.mrb[0].mxu0 %v2014
      %v2077 = vpop.f32.mrb[0].mxu0
      %v2078 = vadd.f32 0.0, %v2077
      %v2079 = vpop.f32.mrb[0].mxu0
      %v2080 = vpop.f32.mrb[0].mxu0
      %v2081 = vadd.f32 0.0, %v2080
      %v2082 = vpop.f32.mrb[0].mxu0
      %2083 = vdwg.mxu0
      %v2084 = vadd.f32 %v1867, %v2054
      %v2085 = vadd.f32 %v1868, %v2057
      %v2086 = vadd.f32 %v1869, %v2062
      %v2087 = vadd.f32 %v1870, %v2065
      %v2088 = vadd.f32 %v1871, %v2070
      %v2089 = vadd.f32 %v1872, %v2073
      %v2090 = vadd.f32 %v1873, %v2078
      %v2091 = vadd.f32 %v1874, %v2081
      %v2092 = vld [vmem:[%s1875] sm:$0xf]
      %v2093 = vld [vmem:[%s1875 + $0x4] sm:$0x1]
      %v2094 = vld [vmem:[%s1875 + $0x8] sm:$0xf]
      %v2095 = vld [vmem:[%s1875 + $0xc] sm:$0x1]
      %v2096 = vld [vmem:[%s1875 + $0x10] sm:$0xf]
      %v2097 = vld [vmem:[%s1875 + $0x14] sm:$0x1]
      %v2098 = vld [vmem:[%s1875 + $0x18] sm:$0xf]
      %v2099 = vld [vmem:[%s1875 + $0x1c] sm:$0x1]
      %v2100 = vld [vmem:[%s1875 + $0x20] sm:$0xf]
      %v2101 = vld [vmem:[%s1875 + $0x24] sm:$0x1]
      %v2102 = vld [vmem:[%s1875 + $0x28] sm:$0xf]
      %v2103 = vld [vmem:[%s1875 + $0x2c] sm:$0x1]
      %v2104 = vld [vmem:[%s1875 + $0x30] sm:$0xf]
      %v2105 = vld [vmem:[%s1875 + $0x34] sm:$0x1]
      %v2106 = vld [vmem:[%s1875 + $0x38] sm:$0xf]
      %v2107 = vld [vmem:[%s1875 + $0x3c] sm:$0x1]
      %v2109 = vshrl.u32 %v2092, 16
      %v2111 = vrot.slane %v2109, 4
      %v2112 = vshll.u32 %v2092, 16
      %v2114 = vrot.slane %v2112, 5
      %v2115 = vor.u32 %v2111, %v2114
      %v2116 = vrot.slane %v2115, 4
      %v2118 = vshll.u32 %v2093, 16
      %v2120 = vrot.slane %v2118, 5
      %v2121 = vsel %vm328, %v2116, %v2120
      %v2123 = vshrl.u32 %v2094, 16
      %v2125 = vrot.slane %v2123, 4
      %v2126 = vshll.u32 %v2094, 16
      %v2128 = vrot.slane %v2126, 5
      %v2129 = vor.u32 %v2125, %v2128
      %v2130 = vrot.slane %v2129, 4
      %v2132 = vshll.u32 %v2095, 16
      %v2134 = vrot.slane %v2132, 5
      %v2135 = vsel %vm328, %v2130, %v2134
      %v2137 = vshrl.u32 %v2096, 16
      %v2139 = vrot.slane %v2137, 4
      %v2140 = vshll.u32 %v2096, 16
      %v2142 = vrot.slane %v2140, 5
      %v2143 = vor.u32 %v2139, %v2142
      %v2144 = vrot.slane %v2143, 4
      %v2146 = vshll.u32 %v2097, 16
      %v2148 = vrot.slane %v2146, 5
      %v2149 = vsel %vm328, %v2144, %v2148
      %v2151 = vshrl.u32 %v2098, 16
      %v2153 = vrot.slane %v2151, 4
      %v2154 = vshll.u32 %v2098, 16
      %v2156 = vrot.slane %v2154, 5
      %v2157 = vor.u32 %v2153, %v2156
      %v2158 = vrot.slane %v2157, 4
      %v2160 = vshll.u32 %v2099, 16
      %v2162 = vrot.slane %v2160, 5
      %v2163 = vsel %vm328, %v2158, %v2162
      %v2165 = vshrl.u32 %v2100, 16
      %v2167 = vrot.slane %v2165, 4
      %v2168 = vshll.u32 %v2100, 16
      %v2170 = vrot.slane %v2168, 5
      %v2171 = vor.u32 %v2167, %v2170
      %v2172 = vrot.slane %v2171, 4
      %v2174 = vshll.u32 %v2101, 16
      %v2176 = vrot.slane %v2174, 5
      %v2177 = vsel %vm328, %v2172, %v2176
      %v2179 = vshrl.u32 %v2102, 16
      %v2181 = vrot.slane %v2179, 4
      %v2182 = vshll.u32 %v2102, 16
      %v2184 = vrot.slane %v2182, 5
      %v2185 = vor.u32 %v2181, %v2184
      %v2186 = vrot.slane %v2185, 4
      %v2188 = vshll.u32 %v2103, 16
      %v2190 = vrot.slane %v2188, 5
      %v2191 = vsel %vm328, %v2186, %v2190
      %v2193 = vshrl.u32 %v2104, 16
      %v2195 = vrot.slane %v2193, 4
      %v2196 = vshll.u32 %v2104, 16
      %v2198 = vrot.slane %v2196, 5
      %v2199 = vor.u32 %v2195, %v2198
      %v2200 = vrot.slane %v2199, 4
      %v2202 = vshll.u32 %v2105, 16
      %v2204 = vrot.slane %v2202, 5
      %v2205 = vsel %vm328, %v2200, %v2204
      %v2207 = vshrl.u32 %v2106, 16
      %v2209 = vrot.slane %v2207, 4
      %v2210 = vshll.u32 %v2106, 16
      %v2212 = vrot.slane %v2210, 5
      %v2213 = vor.u32 %v2209, %v2212
      %v2214 = vrot.slane %v2213, 4
      %v2216 = vshll.u32 %v2107, 16
      %v2218 = vrot.slane %v2216, 5
      %v2219 = vsel %vm328, %v2214, %v2218
      %s2220 = scalar_lea.vmem %s1, 56
      %v2221 = vld [vmem:[%s2220] sm:$0xf]
      %v2222 = vunpack.c.l.b16 %v2121
      %v2223 = vunpack.c.l.b16 %v2135
      %v2224 = vunpack.c.l.b16 %v2149
      %v2225 = vunpack.c.l.b16 %v2163
      %v2226 = vunpack.c.l.b16 %v2177
      %v2227 = vunpack.c.l.b16 %v2191
      %v2228 = vunpack.c.l.b16 %v2205
      %v2229 = vunpack.c.l.b16 %v2219
      %v2230 = vpack.c.b16 %v2223, %v2222
      %v2231 = vpack.c.b16 %v2225, %v2224
      %v2232 = vpack.c.b16 %v2227, %v2226
      %v2233 = vpack.c.b16 %v2229, %v2228
      %v2235 = vsel %vm455, %v2230, 0
      %v2238 = vsel %vm455, %v2231, 0
      %v2241 = vsel %vm455, %v2232, 0
      %v2244 = vsel %vm455, %v2233, 0
      %v2247 = vsel %vm468, %v2221, 0
      %2249 = vmatprep.subr.bf16.mxu0 0
      %2250 = vmatpush1.bf16.msra.mxu0 %v2247
      %2251 = vmatprep.subr.bf16.mxu0 0
      %2252 = vmatpush1.bf16.msra.mxu0 0
      %2253 = vmatprep.subr.bf16.mxu0 0
      %2254 = vmatpush1.bf16.msra.mxu0 0
      %2255 = vmatprep.subr.bf16.mxu0 0
      %2256 = vmatpush1.bf16.msra.mxu0 0
      %2257 = vmatprep.subr.bf16.mxu0 0
      %2258 = vmatpush1.bf16.msra.mxu0 0
      %2259 = vmatprep.subr.bf16.mxu0 0
      %2260 = vmatpush1.bf16.msra.mxu0 0
      %2261 = vmatprep.subr.bf16.mxu0 0
      %2262 = vmatpush1.bf16.msra.mxu0 0
      %2263 = vmatprep.subr.bf16.mxu0 0
      %2264 = vmatpush1.bf16.msra.mxu0 0
      %2265 = vmatprep.subr.bf16.mxu0 0
      %2266 = vmatpush1.bf16.msra.mxu0 0
      %2267 = vmatprep.subr.bf16.mxu0 0
      %2268 = vmatpush1.bf16.msra.mxu0 0
      %2269 = vmatprep.subr.bf16.mxu0 0
      %2270 = vmatpush1.bf16.msra.mxu0 0
      %2271 = vmatprep.subr.bf16.mxu0 0
      %2272 = vmatpush1.bf16.msra.mxu0 0
      %2273 = vmatprep.subr.bf16.mxu0 0
      %2274 = vmatpush1.bf16.msra.mxu0 0
      %2275 = vmatprep.subr.bf16.mxu0 0
      %2276 = vmatpush1.bf16.msra.mxu0 0
      %2277 = vmatprep.subr.bf16.mxu0 0
      %2278 = vmatpush1.bf16.msra.mxu0 0
      %2279 = vmatprep.subr.bf16.mxu0 0
      %2280 = vmatpush1.bf16.msra.mxu0 0
      %2281 = vmatprep.mubr.bf16.mxu0 0
      %2282 = vmatmul.mubr.bf16.gmra.mrb[0].mxu0 %v2235
      %v2283 = vpop.f32.mrb[0].mxu0
      %v2284 = vadd.f32 0.0, %v2283
      %v2285 = vpop.f32.mrb[0].mxu0
      %v2286 = vpop.f32.mrb[0].mxu0
      %v2287 = vadd.f32 0.0, %v2286
      %v2288 = vpop.f32.mrb[0].mxu0
      %2289 = vmatprep.mubr.bf16.mxu0 0
      %2290 = vmatmul.mubr.bf16.gmra.mrb[0].mxu0 %v2238
      %v2291 = vpop.f32.mrb[0].mxu0
      %v2292 = vadd.f32 0.0, %v2291
      %v2293 = vpop.f32.mrb[0].mxu0
      %v2294 = vpop.f32.mrb[0].mxu0
      %v2295 = vadd.f32 0.0, %v2294
      %v2296 = vpop.f32.mrb[0].mxu0
      %2297 = vmatprep.mubr.bf16.mxu0 0
      %2298 = vmatmul.mubr.bf16.gmra.mrb[0].mxu0 %v2241
      %v2299 = vpop.f32.mrb[0].mxu0
      %v2300 = vadd.f32 0.0, %v2299
      %v2301 = vpop.f32.mrb[0].mxu0
      %v2302 = vpop.f32.mrb[0].mxu0
      %v2303 = vadd.f32 0.0, %v2302
      %v2304 = vpop.f32.mrb[0].mxu0
      %2305 = vmatprep.mubr.bf16.mxu0 0
      %2306 = vmatmul.mubr.bf16.gmra.mrb[0].mxu0 %v2244
      %v2307 = vpop.f32.mrb[0].mxu0
      %v2308 = vadd.f32 0.0, %v2307
      %v2309 = vpop.f32.mrb[0].mxu0
      %v2310 = vpop.f32.mrb[0].mxu0
      %v2311 = vadd.f32 0.0, %v2310
      %v2312 = vpop.f32.mrb[0].mxu0
      %2313 = vdwg.mxu0
      %v2314 = vadd.f32 %v1986, %v2284
      %v2315 = vadd.f32 %v1987, %v2287
      %v2316 = vadd.f32 %v1988, %v2292
      %v2317 = vadd.f32 %v1989, %v2295
      %v2318 = vadd.f32 %v1990, %v2300
      %v2319 = vadd.f32 %v1991, %v2303
      %v2320 = vadd.f32 %v1992, %v2308
      %v2321 = vadd.f32 %v1993, %v2311
      %s2322 = scalar_lea.vmem %s1, 60
      %v2323 = vld [vmem:[%s2322] sm:$0xf]
      %2324 = vrot.lane.b32.xlu0 %v2230, 120
      %v2325 = vpop.permute.xlu0 %2324
      %2326 = vrot.lane.b32.xlu0 %v2231, 120
      %v2327 = vpop.permute.xlu0 %2326
      %2328 = vrot.lane.b32.xlu0 %v2232, 120
      %v2329 = vpop.permute.xlu0 %2328
      %2330 = vrot.lane.b32.xlu0 %v2233, 120
      %v2331 = vpop.permute.xlu0 %2330
      %v2333 = vsel %vm455, %v2325, 0
      %v2336 = vsel %vm455, %v2327, 0
      %v2339 = vsel %vm455, %v2329, 0
      %v2342 = vsel %vm455, %v2331, 0
      %v2345 = vsel %vm468, %v2323, 0
      %2347 = vmatprep.subr.bf16.mxu0 0
      %2348 = vmatpush1.bf16.msra.mxu0 %v2345
      %2349 = vmatprep.subr.bf16.mxu0 0
      %2350 = vmatpush1.bf16.msra.mxu0 0
      %2351 = vmatprep.subr.bf16.mxu0 0
      %2352 = vmatpush1.bf16.msra.mxu0 0
      %2353 = vmatprep.subr.bf16.mxu0 0
      %2354 = vmatpush1.bf16.msra.mxu0 0
      %2355 = vmatprep.subr.bf16.mxu0 0
      %2356 = vmatpush1.bf16.msra.mxu0 0
      %2357 = vmatprep.subr.bf16.mxu0 0
      %2358 = vmatpush1.bf16.msra.mxu0 0
      %2359 = vmatprep.subr.bf16.mxu0 0
      %2360 = vmatpush1.bf16.msra.mxu0 0
      %2361 = vmatprep.subr.bf16.mxu0 0
      %2362 = vmatpush1.bf16.msra.mxu0 0
      %2363 = vmatprep.subr.bf16.mxu0 0
      %2364 = vmatpush1.bf16.msra.mxu0 0
      %2365 = vmatprep.subr.bf16.mxu0 0
      %2366 = vmatpush1.bf16.msra.mxu0 0
      %2367 = vmatprep.subr.bf16.mxu0 0
      %2368 = vmatpush1.bf16.msra.mxu0 0
      %2369 = vmatprep.subr.bf16.mxu0 0
      %2370 = vmatpush1.bf16.msra.mxu0 0
      %2371 = vmatprep.subr.bf16.mxu0 0
      %2372 = vmatpush1.bf16.msra.mxu0 0
      %2373 = vmatprep.subr.bf16.mxu0 0
      %2374 = vmatpush1.bf16.msra.mxu0 0
      %2375 = vmatprep.subr.bf16.mxu0 0
      %2376 = vmatpush1.bf16.msra.mxu0 0
      %2377 = vmatprep.subr.bf16.mxu0 0
      %2378 = vmatpush1.bf16.msra.mxu0 0
      %2379 = vmatprep.mubr.bf16.mxu0 0
      %2380 = vmatmul.mubr.bf16.gmra.mrb[0].mxu0 %v2333
      %v2381 = vpop.f32.mrb[0].mxu0
      %v2382 = vadd.f32 0.0, %v2381
      %v2383 = vpop.f32.mrb[0].mxu0
      %v2384 = vpop.f32.mrb[0].mxu0
      %v2385 = vadd.f32 0.0, %v2384
      %v2386 = vpop.f32.mrb[0].mxu0
      %2387 = vmatprep.mubr.bf16.mxu0 0
      %2388 = vmatmul.mubr.bf16.gmra.mrb[0].mxu0 %v2336
      %v2389 = vpop.f32.mrb[0].mxu0
      %v2390 = vadd.f32 0.0, %v2389
      %v2391 = vpop.f32.mrb[0].mxu0
      %v2392 = vpop.f32.mrb[0].mxu0
      %v2393 = vadd.f32 0.0, %v2392
      %v2394 = vpop.f32.mrb[0].mxu0
      %2395 = vmatprep.mubr.bf16.mxu0 0
      %2396 = vmatmul.mubr.bf16.gmra.mrb[0].mxu0 %v2339
      %v2397 = vpop.f32.mrb[0].mxu0
      %v2398 = vadd.f32 0.0, %v2397
      %v2399 = vpop.f32.mrb[0].mxu0
      %v2400 = vpop.f32.mrb[0].mxu0
      %v2401 = vadd.f32 0.0, %v2400
      %v2402 = vpop.f32.mrb[0].mxu0
      %2403 = vmatprep.mubr.bf16.mxu0 0
      %2404 = vmatmul.mubr.bf16.gmra.mrb[0].mxu0 %v2342
      %v2405 = vpop.f32.mrb[0].mxu0
      %v2406 = vadd.f32 0.0, %v2405
      %v2407 = vpop.f32.mrb[0].mxu0
      %v2408 = vpop.f32.mrb[0].mxu0
      %v2409 = vadd.f32 0.0, %v2408
      %v2410 = vpop.f32.mrb[0].mxu0
      %2411 = vdwg.mxu0
      %v2412 = vadd.f32 %v2084, %v2382
      %v2413 = vadd.f32 %v2085, %v2385
      %v2414 = vadd.f32 %v2086, %v2390
      %v2415 = vadd.f32 %v2087, %v2393
      %v2416 = vadd.f32 %v2088, %v2398
      %v2417 = vadd.f32 %v2089, %v2401
      %v2418 = vadd.f32 %v2090, %v2406
      %v2419 = vadd.f32 %v2091, %v2409
      %v2420 = vld [vmem:[%s1875] sm:$0xe]
      %v2421 = vld [vmem:[%s1875 + $0x8] sm:$0xe]
      %v2422 = vld [vmem:[%s1875 + $0x10] sm:$0xe]
      %v2423 = vld [vmem:[%s1875 + $0x18] sm:$0xe]
      %v2424 = vld [vmem:[%s1875 + $0x20] sm:$0xe]
      %v2425 = vld [vmem:[%s1875 + $0x28] sm:$0xe]
      %v2426 = vld [vmem:[%s1875 + $0x30] sm:$0xe]
      %v2427 = vld [vmem:[%s1875 + $0x38] sm:$0xe]
      %v2444 = vrot.slane %v2420, 5
      %v2445 = vrot.slane %v2444, 4
      %v2446 = vrot.slane %v2093, 5
      %v2447 = vsel %vm841, %v2445, %v2446
      %v2448 = vrot.slane %v2421, 5
      %v2449 = vrot.slane %v2448, 4
      %v2450 = vrot.slane %v2095, 5
      %v2451 = vsel %vm841, %v2449, %v2450
      %v2452 = vrot.slane %v2422, 5
      %v2453 = vrot.slane %v2452, 4
      %v2454 = vrot.slane %v2097, 5
      %v2455 = vsel %vm841, %v2453, %v2454
      %v2456 = vrot.slane %v2423, 5
      %v2457 = vrot.slane %v2456, 4
      %v2458 = vrot.slane %v2099, 5
      %v2459 = vsel %vm841, %v2457, %v2458
      %v2460 = vrot.slane %v2424, 5
      %v2461 = vrot.slane %v2460, 4
      %v2462 = vrot.slane %v2101, 5
      %v2463 = vsel %vm841, %v2461, %v2462
      %v2464 = vrot.slane %v2425, 5
      %v2465 = vrot.slane %v2464, 4
      %v2466 = vrot.slane %v2103, 5
      %v2467 = vsel %vm841, %v2465, %v2466
      %v2468 = vrot.slane %v2426, 5
      %v2469 = vrot.slane %v2468, 4
      %v2470 = vrot.slane %v2105, 5
      %v2471 = vsel %vm841, %v2469, %v2470
      %v2472 = vrot.slane %v2427, 5
      %v2473 = vrot.slane %v2472, 4
      %v2474 = vrot.slane %v2107, 5
      %v2475 = vsel %vm841, %v2473, %v2474
      %s2476 = scalar_lea.vmem %s1, 64
      %v2477 = vld [vmem:[%s2476] sm:$0xf]
      %v2478 = vunpack.c.l.b16 %v2447
      %v2479 = vunpack.c.l.b16 %v2451
      %v2480 = vunpack.c.l.b16 %v2455
      %v2481 = vunpack.c.l.b16 %v2459
      %v2482 = vunpack.c.l.b16 %v2463
      %v2483 = vunpack.c.l.b16 %v2467
      %v2484 = vunpack.c.l.b16 %v2471
      %v2485 = vunpack.c.l.b16 %v2475
      %v2486 = vpack.c.b16 %v2479, %v2478
      %v2487 = vpack.c.b16 %v2481, %v2480
      %v2488 = vpack.c.b16 %v2483, %v2482
      %v2489 = vpack.c.b16 %v2485, %v2484
      %v2491 = vsel %vm455, %v2486, 0
      %v2494 = vsel %vm455, %v2487, 0
      %v2497 = vsel %vm455, %v2488, 0
      %v2500 = vsel %vm455, %v2489, 0
      %v2503 = vsel %vm468, %v2477, 0
      %2505 = vmatprep.subr.bf16.mxu0 0
      %2506 = vmatpush1.bf16.msra.mxu0 %v2503
      %2507 = vmatprep.subr.bf16.mxu0 0
      %2508 = vmatpush1.bf16.msra.mxu0 0
      %2509 = vmatprep.subr.bf16.mxu0 0
      %2510 = vmatpush1.bf16.msra.mxu0 0
      %2511 = vmatprep.subr.bf16.mxu0 0
      %2512 = vmatpush1.bf16.msra.mxu0 0
      %2513 = vmatprep.subr.bf16.mxu0 0
      %2514 = vmatpush1.bf16.msra.mxu0 0
      %2515 = vmatprep.subr.bf16.mxu0 0
      %2516 = vmatpush1.bf16.msra.mxu0 0
      %2517 = vmatprep.subr.bf16.mxu0 0
      %2518 = vmatpush1.bf16.msra.mxu0 0
      %2519 = vmatprep.subr.bf16.mxu0 0
      %2520 = vmatpush1.bf16.msra.mxu0 0
      %2521 = vmatprep.subr.bf16.mxu0 0
      %2522 = vmatpush1.bf16.msra.mxu0 0
      %2523 = vmatprep.subr.bf16.mxu0 0
      %2524 = vmatpush1.bf16.msra.mxu0 0
      %2525 = vmatprep.subr.bf16.mxu0 0
      %2526 = vmatpush1.bf16.msra.mxu0 0
      %2527 = vmatprep.subr.bf16.mxu0 0
      %2528 = vmatpush1.bf16.msra.mxu0 0
      %2529 = vmatprep.subr.bf16.mxu0 0
      %2530 = vmatpush1.bf16.msra.mxu0 0
      %2531 = vmatprep.subr.bf16.mxu0 0
      %2532 = vmatpush1.bf16.msra.mxu0 0
      %2533 = vmatprep.subr.bf16.mxu0 0
      %2534 = vmatpush1.bf16.msra.mxu0 0
      %2535 = vmatprep.subr.bf16.mxu0 0
      %2536 = vmatpush1.bf16.msra.mxu0 0
      %2537 = vmatprep.mubr.bf16.mxu0 0
      %2538 = vmatmul.mubr.bf16.gmra.mrb[0].mxu0 %v2491
      %v2539 = vpop.f32.mrb[0].mxu0
      %v2540 = vadd.f32 0.0, %v2539
      %v2541 = vpop.f32.mrb[0].mxu0
      %v2542 = vpop.f32.mrb[0].mxu0
      %v2543 = vadd.f32 0.0, %v2542
      %v2544 = vpop.f32.mrb[0].mxu0
      %2545 = vmatprep.mubr.bf16.mxu0 0
      %2546 = vmatmul.mubr.bf16.gmra.mrb[0].mxu0 %v2494
      %v2547 = vpop.f32.mrb[0].mxu0
      %v2548 = vadd.f32 0.0, %v2547
      %v2549 = vpop.f32.mrb[0].mxu0
      %v2550 = vpop.f32.mrb[0].mxu0
      %v2551 = vadd.f32 0.0, %v2550
      %v2552 = vpop.f32.mrb[0].mxu0
      %2553 = vmatprep.mubr.bf16.mxu0 0
      %2554 = vmatmul.mubr.bf16.gmra.mrb[0].mxu0 %v2497
      %v2555 = vpop.f32.mrb[0].mxu0
      %v2556 = vadd.f32 0.0, %v2555
      %v2557 = vpop.f32.mrb[0].mxu0
      %v2558 = vpop.f32.mrb[0].mxu0
      %v2559 = vadd.f32 0.0, %v2558
      %v2560 = vpop.f32.mrb[0].mxu0
      %2561 = vmatprep.mubr.bf16.mxu0 0
      %2562 = vmatmul.mubr.bf16.gmra.mrb[0].mxu0 %v2500
      %v2563 = vpop.f32.mrb[0].mxu0
      %v2564 = vadd.f32 0.0, %v2563
      %v2565 = vpop.f32.mrb[0].mxu0
      %v2566 = vpop.f32.mrb[0].mxu0
      %v2567 = vadd.f32 0.0, %v2566
      %v2568 = vpop.f32.mrb[0].mxu0
      %2569 = vdwg.mxu0
      %v2570 = vadd.f32 %v2314, %v2540
      %v2571 = vadd.f32 %v2315, %v2543
      %v2572 = vadd.f32 %v2316, %v2548
      %v2573 = vadd.f32 %v2317, %v2551
      %v2574 = vadd.f32 %v2318, %v2556
      %v2575 = vadd.f32 %v2319, %v2559
      %v2576 = vadd.f32 %v2320, %v2564
      %v2577 = vadd.f32 %v2321, %v2567
      %s2578 = scalar_lea.vmem %s1, 68
      %v2579 = vld [vmem:[%s2578] sm:$0xf]
      %2580 = vrot.lane.b32.xlu0 %v2486, 120
      %v2581 = vpop.permute.xlu0 %2580
      %2582 = vrot.lane.b32.xlu0 %v2487, 120
      %v2583 = vpop.permute.xlu0 %2582
      %2584 = vrot.lane.b32.xlu0 %v2488, 120
      %v2585 = vpop.permute.xlu0 %2584
      %2586 = vrot.lane.b32.xlu0 %v2489, 120
      %v2587 = vpop.permute.xlu0 %2586
      %v2589 = vsel %vm455, %v2581, 0
      %v2592 = vsel %vm455, %v2583, 0
      %v2595 = vsel %vm455, %v2585, 0
      %v2598 = vsel %vm455, %v2587, 0
      %v2601 = vsel %vm468, %v2579, 0
      %2603 = vmatprep.subr.bf16.mxu0 0
      %2604 = vmatpush1.bf16.msra.mxu0 %v2601
      %2605 = vmatprep.subr.bf16.mxu0 0
      %2606 = vmatpush1.bf16.msra.mxu0 0
      %2607 = vmatprep.subr.bf16.mxu0 0
      %2608 = vmatpush1.bf16.msra.mxu0 0
      %2609 = vmatprep.subr.bf16.mxu0 0
      %2610 = vmatpush1.bf16.msra.mxu0 0
      %2611 = vmatprep.subr.bf16.mxu0 0
      %2612 = vmatpush1.bf16.msra.mxu0 0
      %2613 = vmatprep.subr.bf16.mxu0 0
      %2614 = vmatpush1.bf16.msra.mxu0 0
      %2615 = vmatprep.subr.bf16.mxu0 0
      %2616 = vmatpush1.bf16.msra.mxu0 0
      %2617 = vmatprep.subr.bf16.mxu0 0
      %2618 = vmatpush1.bf16.msra.mxu0 0
      %2619 = vmatprep.subr.bf16.mxu0 0
      %2620 = vmatpush1.bf16.msra.mxu0 0
      %2621 = vmatprep.subr.bf16.mxu0 0
      %2622 = vmatpush1.bf16.msra.mxu0 0
      %2623 = vmatprep.subr.bf16.mxu0 0
      %2624 = vmatpush1.bf16.msra.mxu0 0
      %2625 = vmatprep.subr.bf16.mxu0 0
      %2626 = vmatpush1.bf16.msra.mxu0 0
      %2627 = vmatprep.subr.bf16.mxu0 0
      %2628 = vmatpush1.bf16.msra.mxu0 0
      %2629 = vmatprep.subr.bf16.mxu0 0
      %2630 = vmatpush1.bf16.msra.mxu0 0
      %2631 = vmatprep.subr.bf16.mxu0 0
      %2632 = vmatpush1.bf16.msra.mxu0 0
      %2633 = vmatprep.subr.bf16.mxu0 0
      %2634 = vmatpush1.bf16.msra.mxu0 0
      %2635 = vmatprep.mubr.bf16.mxu0 0
      %2636 = vmatmul.mubr.bf16.gmra.mrb[0].mxu0 %v2589
      %v2637 = vpop.f32.mrb[0].mxu0
      %v2638 = vadd.f32 0.0, %v2637
      %v2639 = vpop.f32.mrb[0].mxu0
      %v2640 = vpop.f32.mrb[0].mxu0
      %v2641 = vadd.f32 0.0, %v2640
      %v2642 = vpop.f32.mrb[0].mxu0
      %2643 = vmatprep.mubr.bf16.mxu0 0
      %2644 = vmatmul.mubr.bf16.gmra.mrb[0].mxu0 %v2592
      %v2645 = vpop.f32.mrb[0].mxu0
      %v2646 = vadd.f32 0.0, %v2645
      %v2647 = vpop.f32.mrb[0].mxu0
      %v2648 = vpop.f32.mrb[0].mxu0
      %v2649 = vadd.f32 0.0, %v2648
      %v2650 = vpop.f32.mrb[0].mxu0
      %2651 = vmatprep.mubr.bf16.mxu0 0
      %2652 = vmatmul.mubr.bf16.gmra.mrb[0].mxu0 %v2595
      %v2653 = vpop.f32.mrb[0].mxu0
      %v2654 = vadd.f32 0.0, %v2653
      %v2655 = vpop.f32.mrb[0].mxu0
      %v2656 = vpop.f32.mrb[0].mxu0
      %v2657 = vadd.f32 0.0, %v2656
      %v2658 = vpop.f32.mrb[0].mxu0
      %2659 = vmatprep.mubr.bf16.mxu0 0
      %2660 = vmatmul.mubr.bf16.gmra.mrb[0].mxu0 %v2598
      %v2661 = vpop.f32.mrb[0].mxu0
      %v2662 = vadd.f32 0.0, %v2661
      %v2663 = vpop.f32.mrb[0].mxu0
      %v2664 = vpop.f32.mrb[0].mxu0
      %v2665 = vadd.f32 0.0, %v2664
      %v2666 = vpop.f32.mrb[0].mxu0
      %2667 = vdwg.mxu0
      %v2668 = vadd.f32 %v2412, %v2638
      %v2669 = vadd.f32 %v2413, %v2641
      %v2670 = vadd.f32 %v2414, %v2646
      %v2671 = vadd.f32 %v2415, %v2649
      %v2672 = vadd.f32 %v2416, %v2654
      %v2673 = vadd.f32 %v2417, %v2657
      %v2674 = vadd.f32 %v2418, %v2662
      %v2675 = vadd.f32 %v2419, %v2665
      %2684 = vrot.lane.b32.xlu0 %v2668, 8
      %v2685 = vpop.permute.xlu0 %2684
      %2686 = vrot.lane.b32.xlu0 %v2669, 8
      %v2687 = vpop.permute.xlu0 %2686
      %2688 = vrot.lane.b32.xlu0 %v2670, 8
      %v2689 = vpop.permute.xlu0 %2688
      %2690 = vrot.lane.b32.xlu0 %v2671, 8
      %v2691 = vpop.permute.xlu0 %2690
      %2692 = vrot.lane.b32.xlu0 %v2672, 8
      %v2693 = vpop.permute.xlu0 %2692
      %2694 = vrot.lane.b32.xlu0 %v2673, 8
      %v2695 = vpop.permute.xlu0 %2694
      %2696 = vrot.lane.b32.xlu0 %v2674, 8
      %v2697 = vpop.permute.xlu0 %2696
      %2698 = vrot.lane.b32.xlu0 %v2675, 8
      %v2699 = vpop.permute.xlu0 %2698
      %v2708 = vsel %vm455, %v2570, %v2685
      %v2709 = vsel %vm455, %v2571, %v2687
      %v2710 = vsel %vm455, %v2572, %v2689
      %v2711 = vsel %vm455, %v2573, %v2691
      %v2712 = vsel %vm455, %v2574, %v2693
      %v2713 = vsel %vm455, %v2575, %v2695
      %v2714 = vsel %vm455, %v2576, %v2697
      %v2715 = vsel %vm455, %v2577, %v2699
      %v2716 = vld [vmem:[%s2] sm:$0x1]
      %v2718 = vlaneseq
      %v2719 = vshrl.u32 %v2718, 7
      %v2720 = vsub.s32 0, %v2719
      %v2721 = vrot.slane %v2716, %v2720
      %v2723 = vmul.f32 %v2708, %v2721
      %v2724 = vmul.f32 %v2709, %v2721
      %v2725 = vmul.f32 %v2710, %v2721
      %v2726 = vmul.f32 %v2711, %v2721
      %v2727 = vmul.f32 %v2712, %v2721
      %v2728 = vmul.f32 %v2713, %v2721
      %v2729 = vmul.f32 %v2714, %v2721
      %v2730 = vmul.f32 %v2715, %v2721
      %v2731 = vld [vmem:[%s3] sm:$0x1]
      %v2733 = vlaneseq
      %v2734 = vshrl.u32 %v2733, 7
      %v2735 = vsub.s32 0, %v2734
      %v2736 = vrot.slane %v2731, %v2735
      %v2738 = vadd.f32 %v2723, %v2736
      %v2739 = vadd.f32 %v2724, %v2736
      %v2740 = vadd.f32 %v2725, %v2736
      %v2741 = vadd.f32 %v2726, %v2736
      %v2742 = vadd.f32 %v2727, %v2736
      %v2743 = vadd.f32 %v2728, %v2736
      %v2744 = vadd.f32 %v2729, %v2736
      %v2745 = vadd.f32 %v2730, %v2736
      %v2746 = vmax.f32 %v2738, 0.0
      %v2747 = vmax.f32 %v2739, 0.0
      %v2748 = vmax.f32 %v2740, 0.0
      %v2749 = vmax.f32 %v2741, 0.0
      %v2750 = vmax.f32 %v2742, 0.0
      %v2751 = vmax.f32 %v2743, 0.0
      %v2752 = vmax.f32 %v2744, 0.0
      %v2753 = vmax.f32 %v2745, 0.0
      %vm2754 = vcmask 130048
      %v2755 = vsel %vm2754, %v2746, 0.0
      %v2756 = vsel %vm2754, %v2747, 0.0
      %v2757 = vadd.f32 %v2755, %v2756
      %v2758 = vsel %vm2754, %v2748, 0.0
      %v2759 = vadd.f32 %v2757, %v2758
      %v2760 = vsel %vm2754, %v2749, 0.0
      %v2761 = vadd.f32 %v2759, %v2760
      %v2762 = vsel %vm2754, %v2750, 0.0
      %v2763 = vadd.f32 %v2761, %v2762
      %v2764 = vsel %vm2754, %v2751, 0.0
      %v2765 = vadd.f32 %v2763, %v2764
      %v2766 = vsel %vm2754, %v2752, 0.0
      %v2767 = vadd.f32 %v2765, %v2766
      %v2768 = vsel %vm2754, %v2753, 0.0
      %v2769 = vadd.f32 %v2767, %v2768
      %v2770 = vrot.slane %v2769, 4
      %v2771 = vadd.f32 %v2769, %v2770
      %v2772 = vrot.slane %v2771, 2
      %v2773 = vadd.f32 %v2771, %v2772
      %v2774 = vrot.slane %v2773, 1
      %v2775 = vadd.f32 %v2773, %v2774
      %v2776 = vmul.f32 %v2775, 0.015625
      %v2777 = vld [vmem:[%s4] sm:$0xff]
      %v2778 = vld [vmem:[%s4 + $0x8] sm:$0xff]
      %v2779 = vld [vmem:[%s5] sm:$0x1]
      %v2781 = vsel %vm2754, %v2776, 0
      %2783 = vmatprep.subr.mxu0 0.0
      %2784 = vmatpush1.msra.mxu0 %v2777
      %2785 = vmatprep.subr.mxu0 0.0
      %2786 = vmatpush1.msra.mxu0 %v2778
      %2787 = vmatprep.subr.mxu0 0.0
      %2788 = vmatpush1.msra.mxu0 0.0
      %2789 = vmatprep.subr.mxu0 0.0
      %2790 = vmatpush1.msra.mxu0 0.0
      %2791 = vmatprep.subr.mxu0 0.0
      %2792 = vmatpush1.msra.mxu0 0.0
      %2793 = vmatprep.subr.mxu0 0.0
      %2794 = vmatpush1.msra.mxu0 0.0
      %2795 = vmatprep.subr.mxu0 0.0
      %2796 = vmatpush1.msra.mxu0 0.0
      %2797 = vmatprep.subr.mxu0 0.0
      %2798 = vmatpush1.msra.mxu0 0.0
      %2799 = vmatprep.subr.mxu0 0.0
      %2800 = vmatpush1.msra.mxu0 0.0
      %2801 = vmatprep.subr.mxu0 0.0
      %2802 = vmatpush1.msra.mxu0 0.0
      %2803 = vmatprep.subr.mxu0 0.0
      %2804 = vmatpush1.msra.mxu0 0.0
      %2805 = vmatprep.subr.mxu0 0.0
      %2806 = vmatpush1.msra.mxu0 0.0
      %2807 = vmatprep.subr.mxu0 0.0
      %2808 = vmatpush1.msra.mxu0 0.0
      %2809 = vmatprep.subr.mxu0 0.0
      %2810 = vmatpush1.msra.mxu0 0.0
      %2811 = vmatprep.subr.mxu0 0.0
      %2812 = vmatpush1.msra.mxu0 0.0
      %2813 = vmatprep.subr.mxu0 0.0
      %2814 = vmatpush1.msra.mxu0 0.0
      %2815 = vmatprep.subr.mxu0 0.0
      %2816 = vmatpush1.msra.mxu0 0.0
      %2817 = vmatprep.subr.mxu0 0.0
      %2818 = vmatpush1.msra.mxu0 0.0
      %2819 = vmatprep.subr.mxu0 0.0
      %2820 = vmatpush1.msra.mxu0 0.0
      %2821 = vmatprep.subr.mxu0 0.0
      %2822 = vmatpush1.msra.mxu0 0.0
      %2823 = vmatprep.subr.mxu0 0.0
      %2824 = vmatpush1.msra.mxu0 0.0
      %2825 = vmatprep.subr.mxu0 0.0
      %2826 = vmatpush1.msra.mxu0 0.0
      %2827 = vmatprep.subr.mxu0 0.0
      %2828 = vmatpush1.msra.mxu0 0.0
      %2829 = vmatprep.subr.mxu0 0.0
      %2830 = vmatpush1.msra.mxu0 0.0
      %2831 = vmatprep.subr.mxu0 0.0
      %2832 = vmatpush1.msra.mxu0 0.0
      %2833 = vmatprep.subr.mxu0 0.0
      %2834 = vmatpush1.msra.mxu0 0.0
      %2835 = vmatprep.subr.mxu0 0.0
      %2836 = vmatpush1.msra.mxu0 0.0
      %2837 = vmatprep.subr.mxu0 0.0
      %2838 = vmatpush1.msra.mxu0 0.0
      %2839 = vmatprep.subr.mxu0 0.0
      %2840 = vmatpush1.msra.mxu0 0.0
      %2841 = vmatprep.subr.mxu0 0.0
      %2842 = vmatpush1.msra.mxu0 0.0
      %2843 = vmatprep.subr.mxu0 0.0
      %2844 = vmatpush1.msra.mxu0 0.0
      %2845 = vmatprep.subr.mxu0 0.0
      %2846 = vmatpush1.msra.mxu0 0.0
      %2847 = vmatprep.mubr.f32.mxu0 0.0
      %2848 = vmatmul.mubr.f32.gmra.mrb[0].mxu0 %v2781
      %v2849 = vpop.f32.mrb[0].mxu0
      %v2850 = vadd.f32 %v2779, %v2849
      %v2851 = vpop.f32.mrb[0].mxu0
      %2852 = vdwg.mxu0
      %v2853 = vmax.f32 %v2850, 0.0
      %v2854 = vld [vmem:[%s6] sm:$0xf]
      %v2855 = vld [vmem:[%s7] sm:$0x1]
      %vm2856 = vcmask 31744
      %v2858 = vsel %vm2856, %v2853, 0
      %v2861 = vsel %vm468, %v2854, 0
      %2863 = vmatprep.subr.mxu0 0.0
      %2864 = vmatpush1.msra.mxu0 %v2861
      %2865 = vmatprep.subr.mxu0 0.0
      %2866 = vmatpush1.msra.mxu0 0.0
      %2867 = vmatprep.subr.mxu0 0.0
      %2868 = vmatpush1.msra.mxu0 0.0
      %2869 = vmatprep.subr.mxu0 0.0
      %2870 = vmatpush1.msra.mxu0 0.0
      %2871 = vmatprep.subr.mxu0 0.0
      %2872 = vmatpush1.msra.mxu0 0.0
      %2873 = vmatprep.subr.mxu0 0.0
      %2874 = vmatpush1.msra.mxu0 0.0
      %2875 = vmatprep.subr.mxu0 0.0
      %2876 = vmatpush1.msra.mxu0 0.0
      %2877 = vmatprep.subr.mxu0 0.0
      %2878 = vmatpush1.msra.mxu0 0.0
      %2879 = vmatprep.subr.mxu0 0.0
      %2880 = vmatpush1.msra.mxu0 0.0
      %2881 = vmatprep.subr.mxu0 0.0
      %2882 = vmatpush1.msra.mxu0 0.0
      %2883 = vmatprep.subr.mxu0 0.0
      %2884 = vmatpush1.msra.mxu0 0.0
      %2885 = vmatprep.subr.mxu0 0.0
      %2886 = vmatpush1.msra.mxu0 0.0
      %2887 = vmatprep.subr.mxu0 0.0
      %2888 = vmatpush1.msra.mxu0 0.0
      %2889 = vmatprep.subr.mxu0 0.0
      %2890 = vmatpush1.msra.mxu0 0.0
      %2891 = vmatprep.subr.mxu0 0.0
      %2892 = vmatpush1.msra.mxu0 0.0
      %2893 = vmatprep.subr.mxu0 0.0
      %2894 = vmatpush1.msra.mxu0 0.0
      %2895 = vmatprep.subr.mxu0 0.0
      %2896 = vmatpush1.msra.mxu0 0.0
      %2897 = vmatprep.subr.mxu0 0.0
      %2898 = vmatpush1.msra.mxu0 0.0
      %2899 = vmatprep.subr.mxu0 0.0
      %2900 = vmatpush1.msra.mxu0 0.0
      %2901 = vmatprep.subr.mxu0 0.0
      %2902 = vmatpush1.msra.mxu0 0.0
      %2903 = vmatprep.subr.mxu0 0.0
      %2904 = vmatpush1.msra.mxu0 0.0
      %2905 = vmatprep.subr.mxu0 0.0
      %2906 = vmatpush1.msra.mxu0 0.0
      %2907 = vmatprep.subr.mxu0 0.0
      %2908 = vmatpush1.msra.mxu0 0.0
      %2909 = vmatprep.subr.mxu0 0.0
      %2910 = vmatpush1.msra.mxu0 0.0
      %2911 = vmatprep.subr.mxu0 0.0
      %2912 = vmatpush1.msra.mxu0 0.0
      %2913 = vmatprep.subr.mxu0 0.0
      %2914 = vmatpush1.msra.mxu0 0.0
      %2915 = vmatprep.subr.mxu0 0.0
      %2916 = vmatpush1.msra.mxu0 0.0
      %2917 = vmatprep.subr.mxu0 0.0
      %2918 = vmatpush1.msra.mxu0 0.0
      %2919 = vmatprep.subr.mxu0 0.0
      %2920 = vmatpush1.msra.mxu0 0.0
      %2921 = vmatprep.subr.mxu0 0.0
      %2922 = vmatpush1.msra.mxu0 0.0
      %2923 = vmatprep.subr.mxu0 0.0
      %2924 = vmatpush1.msra.mxu0 0.0
      %2925 = vmatprep.subr.mxu0 0.0
      %2926 = vmatpush1.msra.mxu0 0.0
      %2927 = vmatprep.mubr.f32.mxu0 0.0
      %2928 = vmatmul.mubr.f32.gmra.mrb[0].mxu0 %v2858
      %v2929 = vpop.f32.mrb[0].mxu0
      %v2930 = vadd.f32 %v2855, %v2929
      %v2931 = vpop.f32.mrb[0].mxu0
      %2932 = vdwg.mxu0
      %v2933 = vsub.f32 0.0, %v2930
      %v2934 = vmul.f32 %v2933, 1.442695
      %v2935 = vpow.pop %v2934
      %v2936 = vadd.f32 %v2935, 1.0
      %v2937 = vrcp.pop %v2936
      %v2938 = vlaneseq
      %v2939 = vshrl.u32 %v2938, 7
      %v2940 = vsub.s32 0, %v2939
      %v2941 = vrot.slane %v2937, %v2940
      %v2942 = vmul.f32 %v2746, %v2941
      %v2943 = vmul.f32 %v2747, %v2941
      %v2944 = vmul.f32 %v2748, %v2941
      %v2945 = vmul.f32 %v2749, %v2941
      %v2946 = vmul.f32 %v2750, %v2941
      %v2947 = vmul.f32 %v2751, %v2941
      %v2948 = vmul.f32 %v2752, %v2941
      %v2949 = vmul.f32 %v2753, %v2941
      %v2950 = vpack.c.bf16 %v2943, %v2942
      %v2951 = vpack.c.bf16 %v2945, %v2944
      %v2952 = vpack.c.bf16 %v2947, %v2946
      %v2953 = vpack.c.bf16 %v2949, %v2948
      %v2958 = vunpack.c.l.b16 %v2950
      %v2959 = vunpack.c.h.b16 %v2950
      %v2960 = vunpack.c.l.b16 %v2951
      %v2961 = vunpack.c.h.b16 %v2951
      %v2962 = vunpack.c.l.b16 %v2952
      %v2963 = vunpack.c.h.b16 %v2952
      %v2964 = vunpack.c.l.b16 %v2953
      %v2965 = vunpack.c.h.b16 %v2953
      %v2966 = vpack.c.b16 %v2958, %v2958
      %v2967 = vpack.c.b16 %v2959, %v2959
      %v2968 = vpack.c.b16 %v2960, %v2960
      %v2969 = vpack.c.b16 %v2961, %v2961
      %v2970 = vpack.c.b16 %v2962, %v2962
      %v2971 = vpack.c.b16 %v2963, %v2963
      %v2972 = vpack.c.b16 %v2964, %v2964
      %v2973 = vpack.c.b16 %v2965, %v2965
      %vm2982 = vcmask 125952
      %2983 = vst.msk [vmem:[%s305] sm:$0xf] %vm2982, %v2966
      %2984 = vst.msk [vmem:[%s305 + $0x4] sm:$0xf] %vm2982, %v2967
      %2985 = vst.msk [vmem:[%s305 + $0x8] sm:$0xf] %vm2982, %v2968
      %2986 = vst.msk [vmem:[%s305 + $0xc] sm:$0xf] %vm2982, %v2969
      %2987 = vst.msk [vmem:[%s305 + $0x10] sm:$0xf] %vm2982, %v2970
      %2988 = vst.msk [vmem:[%s305 + $0x14] sm:$0xf] %vm2982, %v2971
      %2989 = vst.msk [vmem:[%s305 + $0x18] sm:$0xf] %vm2982, %v2972
      %2990 = vst.msk [vmem:[%s305 + $0x1c] sm:$0xf] %vm2982, %v2973
      %p2991 = scmp.lt.s32.totalorder %s19, 1
      %s2992 = scalar_select %p2991, %s19, 1
      %s2993 = smul.addr %s2992, 8
      %s2994 = smul.addr %s2993, 4
      %s2995 = scalar_lea.vmem %s8, %s2994
      // Predicated region
      $region53: #{_lambda_.10} parent=51 // pred_check
        %p2996 = pneg %p210
      $region54: #{_lambda_.10} parent=51 // pred_check_branch
        %2998 = sbr.rel (%p2996) target = $region56
      $region55: #{_lambda_.10} parent=51 // pred_region
        _
      $region56: #{_lambda_.10} parent=51 // pred_fallthru
        _
    $region52: #{_lambda_.10} parent=5 // pred_fallthru
      _
    %p2999 = scmp.le.s32.totalorder 2, %s14
    // Predicated region
    $region57: #{_lambda_.10} parent=5 // pred_check
      %p3000 = pneg %p2999
    $region58: #{_lambda_.10} parent=5 // pred_check_branch
      %3002 = sbr.rel (%p3000) target = $region60
    $region59: #{_lambda_.10} parent=5 // pred_region
      %s3003 = ssub.s32 %s14, 2
      // Predicated region
      $region61: #{_lambda_.10} parent=59 // pred_check
        %p3004 = pneg %p216
      $region62: #{_lambda_.10} parent=59 // pred_check_branch
        %3006 = sbr.rel (%p3004) target = $region64
      $region63: #{_lambda_.10} parent=59 // pred_region
        %p3007 = scmp.lt.s32.totalorder %s20, 1
        %s3008 = scalar_select %p3007, %s20, 1
        %s3009 = smul.addr %s3008, 8
        %s3010 = smul.addr %s3009, 4
        %s3011 = scalar_lea.vmem %s8, %s3010
      $region64: #{_lambda_.10} parent=59 // pred_fallthru
        _
    $region60: #{_lambda_.10} parent=5 // pred_fallthru
      _
  $region6: #{_lambda_.10} parent=0 // loop_footer
    %s18 = sadd.s32 1, %s14
  $region7: #{_lambda_.10} parent=0 // loop_footer_branch
    %13 = sbr.rel target = $region3
  $region8: #{_lambda_.10} parent=0 // loop_exit
    _

</llo_original>
